<compile_context>
chip_gen: v5e
topology: v5e:2x2
jax: 0.10.0
libtpu: 0.0.40
codegen_flags: <defaults>
</compile_context>

<pallas_src>
import functools

import numpy as np
import jax
import jax.numpy as jnp
from jax import lax
from jax.experimental import pallas as pl
from jax.experimental.pallas import tpu as pltpu


# ---------------------------------------------------------------------------
# Host-side constants (trace-time numpy, tiny)
# ---------------------------------------------------------------------------
def _tap_masks(T, H, W):
    """(27, T*H*W) f32: 1 where a 3x3x3 tap reads an in-bounds voxel."""
    t = np.arange(T)[:, None, None]
    h = np.arange(H)[None, :, None]
    w = np.arange(W)[None, None, :]
    rows = []
    for kt in range(3):
        for kh in range(3):
            for kw in range(3):
                dt, dh, dw = kt - 1, kh - 1, kw - 1
                ok = ((t + dt >= 0) & (t + dt < T) &
                      (h + dh >= 0) & (h + dh < H) &
                      (w + dw >= 0) & (w + dw < W))
                rows.append(ok.reshape(-1).astype(np.float32))
    return jnp.asarray(np.stack(rows))


def _gap_conv1d_mats(T, H, W):
    """(3, T*H*W, T) f32: fused AdaptiveAvgPool((T,1,1)) + temporal-shift
    matrices so that GAP + Conv1d(pad=1) become three small MXU dots."""
    M = T * H * W
    mats = np.zeros((3, M, T), np.float32)
    for k in range(3):
        for t in range(T):
            src = t + k - 1
            if 0 <= src < T:
                mats[k, src * H * W:(src + 1) * H * W, t] = 1.0 / (H * W)
    return jnp.asarray(mats)


# ---------------------------------------------------------------------------
# Fused Pallas kernel: conv3d -> conv3d -> GAP -> conv1d -> softmax
# ---------------------------------------------------------------------------
def _gating_kernel(x_ref, w1_ref, b1_ref, w2_ref, b2_ref, w1d_ref, b1d_ref,
                   mask_ref, gap_ref, o_ref, xpad_ref, *, T, H, W, C, PAD, B):
    """One batch block.

    x_ref   : (B, C, M)       channels on sublanes, flattened T*H*W on lanes
    w1_ref  : (27, C, C)      conv1 per-tap (C_out, C_in) weights
    b1_ref  : (C, 1)
    w2_ref  : (27, C, C)      conv2 per-tap weights
    b2_ref  : (C, 1)
    w1d_ref : (3, 4, C)       Conv1d per-tap (C_out=4, C_in) weights
    b1d_ref : (4, 1)
    mask_ref: (27, M)         per-tap validity masks
    gap_ref : (3, M, T)       fused GAP + temporal-shift matrices
    o_ref   : (B, 4, T)       softmax over the 4 experts, per time step
    xpad_ref: (C, M + 2*PAD)  flat zero-padded staging scratch
    """
    M = T * H * W

    # Re-zero the halos every grid step (two lane-aligned stores; per-step so
    # it stays correct under megacore "parallel" scheduling of the grid).
    xpad_ref[:, :PAD] = jnp.zeros((C, PAD), jnp.float32)
    xpad_ref[:, PAD + M:] = jnp.zeros((C, PAD), jnp.float32)

    def conv3x3x3_relu(x_cm, w_ref, b_ref):
        # Single aligned interior store into the zero-padded staging buffer.
        xpad_ref[:, PAD:PAD + M] = x_cm
        acc = None
        k = 0
        for kt in range(3):
            for kh in range(3):
                for kw in range(3):
                    s = (kt - 1) * H * W + (kh - 1) * W + (kw - 1)
                    # Shifted window: static-lane-offset load; halo zeros
                    # already give zero for temporal out-of-range reads.
                    xs = xpad_ref[:, PAD + s:PAD + s + M]
                    if kh != 1 or kw != 1:       # h/w edges wrap inside a row
                        xs = xs * mask_ref[k:k + 1, :]
                    d = jnp.dot(w_ref[k], xs,
                                preferred_element_type=jnp.float32)   # (C, M)
                    acc = d if acc is None else acc + d
                    k += 1
        return jnp.maximum(acc + b_ref[...], 0.0)

    for b in range(B):                            # static per-block batch loop
        feat = conv3x3x3_relu(x_ref[b], w1_ref, b1_ref)
        feat = conv3x3x3_relu(feat, w2_ref, b2_ref)

        # GAP over (H, W) + Conv1d(C->4, k=3, pad=1), fused as MXU dots.
        logits = b1d_ref[...]                     # (4, 1) broadcasts over T
        for k in range(3):
            gk = jnp.dot(feat, gap_ref[k],
                         preferred_element_type=jnp.float32)          # (C, T)
            logits = logits + jnp.dot(w1d_ref[k], gk,
                                      preferred_element_type=jnp.float32)

        # Softmax over the 4 experts (sublane axis) == PyTorch Softmax(dim=1).
        mx = jnp.max(logits, axis=0, keepdims=True)
        e = jnp.exp(logits - mx)
        o_ref[b] = e / jnp.sum(e, axis=0, keepdims=True)


# ---------------------------------------------------------------------------
# Wrapper
# ---------------------------------------------------------------------------
def gating_pallas(params, x_ncdhw, video_length, *, batch_block=1):
    """x_ncdhw: (N, C, T, H, W)  ->  (N, 4, T) softmax gating weights."""
    N, C, T, H, W = x_ncdhw.shape
    assert T == video_length, "AdaptiveAvgPool3d simplification needs T == video_length"
    assert N % batch_block == 0
    M = T * H * W
    # Halo width >= max |tap lane shift| (H*W + W + 1), rounded to 128 lanes.
    PAD = ((H * W + W + 1 + 127) // 128) * 128

    # Trailing-dim merge only (no HBM transpose): channels stay on sublanes.
    x = x_ncdhw.reshape(N, C, M).astype(jnp.float32)

    # PyTorch Conv3d weight (C_out, C_in, kt, kh, kw) -> per-tap (27, C_out, C_in).
    def tapw(w):
        return jnp.transpose(w, (2, 3, 4, 0, 1)).reshape(27, C, C).astype(jnp.float32)

    w1 = tapw(params["conv1_w"])
    b1 = params["conv1_b"].reshape(C, 1).astype(jnp.float32)
    w2 = tapw(params["conv2_w"])
    b2 = params["conv2_b"].reshape(C, 1).astype(jnp.float32)
    # PyTorch Conv1d weight (4, C_in, k) -> per-tap (3, 4, C_in).
    w1d = jnp.transpose(params["cov1d_w"], (2, 0, 1)).astype(jnp.float32)
    b1d = params["cov1d_b"].reshape(4, 1).astype(jnp.float32)

    masks = _tap_masks(T, H, W)
    gapm = _gap_conv1d_mats(T, H, W)

    kernel = functools.partial(_gating_kernel, T=T, H=H, W=W, C=C, PAD=PAD,
                               B=batch_block)
    c2 = lambda n: (0, 0)
    c3 = lambda n: (0, 0, 0)
    out = pl.pallas_call(
        kernel,
        out_shape=jax.ShapeDtypeStruct((N, 4, T), jnp.float32),
        grid=(N // batch_block,),
        in_specs=[
            pl.BlockSpec((batch_block, C, M), lambda n: (n, 0, 0)),   # x
            pl.BlockSpec((27, C, C), c3),                             # conv1 taps
            pl.BlockSpec((C, 1), c2),                                 # conv1 bias
            pl.BlockSpec((27, C, C), c3),                             # conv2 taps
            pl.BlockSpec((C, 1), c2),                                 # conv2 bias
            pl.BlockSpec((3, 4, C), c3),                              # conv1d taps
            pl.BlockSpec((4, 1), c2),                                 # conv1d bias
            pl.BlockSpec((27, M), c2),                                # tap masks
            pl.BlockSpec((3, M, T), c3),                              # GAP mats
        ],
        out_specs=pl.BlockSpec((batch_block, 4, T), lambda n: (n, 0, 0)),
        scratch_shapes=[pltpu.VMEM((C, M + 2 * PAD), jnp.float32)],
        compiler_params=pltpu.CompilerParams(
            dimension_semantics=("parallel",),     # batch split across v7x cores
            vmem_limit_bytes=32 * 1024 * 1024),
    )(x, w1, b1, w2, b2, w1d, b1d, masks, gapm)
    return out                                     # (N, 4, T) == PyTorch layout


# --------------------------- pure-JAX reference ----------------------------
def _conv3d_relu_ref(x_nthwc, w_pt, b_pt):
    w = jnp.transpose(w_pt, (2, 3, 4, 1, 0))       # (kt,kh,kw,cin,cout)
    y = lax.conv_general_dilated(
        x_nthwc, w, window_strides=(1, 1, 1), padding=((1, 1), (1, 1), (1, 1)),
        dimension_numbers=("NDHWC", "DHWIO", "NDHWC"))
    return jnp.maximum(y + b_pt.reshape(1, 1, 1, 1, -1), 0.0)


def gating_reference(params, x_ncdhw, video_length):
    x = jnp.transpose(x_ncdhw, (0, 2, 3, 4, 1)).astype(jnp.float32)   # NTHWC
    f = _conv3d_relu_ref(x, params["conv1_w"], params["conv1_b"])
    f = _conv3d_relu_ref(f, params["conv2_w"], params["conv2_b"])
    g = jnp.mean(f, axis=(2, 3))                                      # (N, T, C)
    w1d = jnp.transpose(params["cov1d_w"], (2, 1, 0))                 # (k, cin, cout)
    y = lax.conv_general_dilated(g, w1d, window_strides=(1,), padding=((1, 1),),
                                 dimension_numbers=("NWC", "WIO", "NWC"))
    y = y + params["cov1d_b"].reshape(1, 1, -1)                       # (N, T, 4)
    probs = jax.nn.softmax(y, axis=-1)                                # Softmax(dim=1)
    return jnp.transpose(probs, (0, 2, 1))                            # (N, 4, T)


# ---------------------------------------------------------------------------
# Deterministic parameter init (PyTorch weight layouts; shapes from __init__)
# ---------------------------------------------------------------------------
def init_params(key, base_filter, n_out=4):
    ks = jax.random.split(key, 6)
    C = base_filter

    def w3(k):  # PyTorch Conv3d layout (C_out, C_in, kt, kh, kw)
        return jax.random.normal(k, (C, C, 3, 3, 3), jnp.float32) / jnp.sqrt(27.0 * C)

    def bias(k, n):
        return jax.random.normal(k, (n,), jnp.float32) * 0.01

    return {
        "conv1_w": w3(ks[0]), "conv1_b": bias(ks[1], C),
        "conv2_w": w3(ks[2]), "conv2_b": bias(ks[3], C),
        # PyTorch Conv1d layout (C_out=4, C_in, k=3)
        "cov1d_w": jax.random.normal(ks[4], (n_out, C, 3), jnp.float32)
                   / jnp.sqrt(3.0 * C),
        "cov1d_b": bias(ks[5], n_out),
    }


# ---------------------------------------------------------------------------
if __name__ == "__main__":
    base_filter = 32
    video_length = 4
    N, T, H, W = 2, video_length, 8, 8

    key = jax.random.PRNGKey(0)
    kx, kp = jax.random.split(key)
    x_ncdhw = jax.random.normal(kx, (N, base_filter, T, H, W), jnp.float32)
    params = init_params(kp, base_filter)

    fwd = jax.jit(functools.partial(gating_pallas, video_length=video_length))
    out = jax.block_until_ready(fwd(params, x_ncdhw))
    assert out.shape == (N, 4, T), out.shape

    ref = jax.block_until_ready(gating_reference(params, x_ncdhw, video_length))
    max_err = float(jnp.max(jnp.abs(out - ref)))
    assert max_err < 1e-3, f"Pallas vs reference mismatch: {max_err}"

    # Gating weights must sum to 1 across the 4 experts.
    sum_err = float(jnp.max(jnp.abs(jnp.sum(out, axis=1) - 1.0)))
    assert sum_err < 1e-4, f"softmax rows do not sum to 1: {sum_err}"

    print("KERNEL_OK")
</pallas_src>

<mosaic_0001>
module attributes {stable_mosaic.version = 11 : i64} {
  func.func @_gating_kernel(%arg0: i32, %arg1: memref<1x32x256xf32, #tpu.memory_space<vmem>>, %arg2: memref<27x32x32xf32, #tpu.memory_space<vmem>>, %arg3: memref<32x1xf32, #tpu.memory_space<vmem>>, %arg4: memref<27x32x32xf32, #tpu.memory_space<vmem>>, %arg5: memref<32x1xf32, #tpu.memory_space<vmem>>, %arg6: memref<3x4x32xf32, #tpu.memory_space<vmem>>, %arg7: memref<4x1xf32, #tpu.memory_space<vmem>>, %arg8: memref<27x256xf32, #tpu.memory_space<vmem>>, %arg9: memref<3x256x4xf32, #tpu.memory_space<vmem>>, %arg10: memref<1x4x4xf32, #tpu.memory_space<vmem>>, %arg11: memref<32x512xf32, #tpu.memory_space<vmem>>) attributes {dimension_semantics = [#tpu.dimension_semantics<parallel>], iteration_bounds = array<i64: 2>, scalar_prefetch = 0 : i64, scratch_operands = 1 : i64, tpu.core_type = #tpu.core_type<tc>, window_params = [{transform_indices = @transform_0, window_bounds = array<i64: 1, 32, 256>}, {pipeline_mode = #tpu.pipeline_mode<synchronous>, transform_indices = @transform_1, window_bounds = array<i64: 27, 32, 32>}, {pipeline_mode = #tpu.pipeline_mode<synchronous>, transform_indices = @transform_2, window_bounds = array<i64: 32, 1>}, {pipeline_mode = #tpu.pipeline_mode<synchronous>, transform_indices = @transform_3, window_bounds = array<i64: 27, 32, 32>}, {pipeline_mode = #tpu.pipeline_mode<synchronous>, transform_indices = @transform_4, window_bounds = array<i64: 32, 1>}, {pipeline_mode = #tpu.pipeline_mode<synchronous>, transform_indices = @transform_5, window_bounds = array<i64: 3, 4, 32>}, {pipeline_mode = #tpu.pipeline_mode<synchronous>, transform_indices = @transform_6, window_bounds = array<i64: 4, 1>}, {pipeline_mode = #tpu.pipeline_mode<synchronous>, transform_indices = @transform_7, window_bounds = array<i64: 27, 256>}, {pipeline_mode = #tpu.pipeline_mode<synchronous>, transform_indices = @transform_8, window_bounds = array<i64: 3, 256, 4>}, {transform_indices = @transform_9, window_bounds = array<i64: 1, 4, 4>}]} {
    %cst = arith.constant 0.000000e+00 : f32
    %0 = vector.broadcast %cst : f32 to vector<32x128xf32>
    %c0 = arith.constant 0 : index
    %c0_0 = arith.constant 0 : index
    %1 = vector.load %arg11[%c0, %c0_0] : memref<32x512xf32, #tpu.memory_space<vmem>>, vector<32x128xf32>
    tpu.vector_store %arg11[%c0, %c0_0], %0 {strides = array<i32>} : memref<32x512xf32, #tpu.memory_space<vmem>>, vector<32x128xf32>,
    %cst_1 = arith.constant 0.000000e+00 : f32
    %2 = vector.broadcast %cst_1 : f32 to vector<32x128xf32>
    %c0_2 = arith.constant 0 : index
    %c384 = arith.constant 384 : index
    %3 = vector.load %arg11[%c0_2, %c384] : memref<32x512xf32, #tpu.memory_space<vmem>>, vector<32x128xf32>
    tpu.vector_store %arg11[%c0_2, %c384], %2 {strides = array<i32>} : memref<32x512xf32, #tpu.memory_space<vmem>>, vector<32x128xf32>,
    %c0_3 = arith.constant 0 : index
    %c0_4 = arith.constant 0 : index
    %c0_5 = arith.constant 0 : index
    %4 = vector.load %arg1[%c0_3, %c0_4, %c0_5] : memref<1x32x256xf32, #tpu.memory_space<vmem>>, vector<1x32x256xf32>
    %5 = vector.shape_cast %4 : vector<1x32x256xf32> to vector<32x256xf32>
    %c0_6 = arith.constant 0 : index
    %c128 = arith.constant 128 : index
    %6 = vector.load %arg11[%c0_6, %c128] : memref<32x512xf32, #tpu.memory_space<vmem>>, vector<32x256xf32>
    tpu.vector_store %arg11[%c0_6, %c128], %5 {strides = array<i32>} : memref<32x512xf32, #tpu.memory_space<vmem>>, vector<32x256xf32>,
    %c0_7 = arith.constant 0 : index
    %c55 = arith.constant 55 : index
    %7 = vector.load %arg11[%c0_7, %c55] : memref<32x512xf32, #tpu.memory_space<vmem>>, vector<32x256xf32>
    %c0_8 = arith.constant 0 : index
    %c0_9 = arith.constant 0 : index
    %8 = vector.load %arg8[%c0_8, %c0_9] : memref<27x256xf32, #tpu.memory_space<vmem>>, vector<1x256xf32>
    %9 = vector.broadcast %8 : vector<1x256xf32> to vector<32x256xf32>
    %10 = arith.mulf %7, %9 : vector<32x256xf32>
    %c0_10 = arith.constant 0 : index
    %c0_11 = arith.constant 0 : index
    %c0_12 = arith.constant 0 : index
    %11 = vector.load %arg2[%c0_10, %c0_11, %c0_12] : memref<27x32x32xf32, #tpu.memory_space<vmem>>, vector<1x32x32xf32>
    %12 = vector.shape_cast %11 : vector<1x32x32xf32> to vector<32x32xf32>
    %cst_13 = arith.constant dense<0.000000e+00> : vector<32x256xf32>
    %13 = tpu.matmul %12, %10, %cst_13 {dimension_numbers = #tpu.dot_dimension_numbers<[1], [0], [0], [1], [0, 0, 1, 1], [], []>} : vector<32x32xf32>, vector<32x256xf32>, vector<32x256xf32> -> vector<32x256xf32>
    %c0_14 = arith.constant 0 : index
    %c56 = arith.constant 56 : index
    %14 = vector.load %arg11[%c0_14, %c56] : memref<32x512xf32, #tpu.memory_space<vmem>>, vector<32x256xf32>
    %c1 = arith.constant 1 : index
    %c0_15 = arith.constant 0 : index
    %15 = vector.load %arg8[%c1, %c0_15] : memref<27x256xf32, #tpu.memory_space<vmem>>, vector<1x256xf32>
    %16 = vector.broadcast %15 : vector<1x256xf32> to vector<32x256xf32>
    %17 = arith.mulf %14, %16 : vector<32x256xf32>
    %c1_16 = arith.constant 1 : index
    %c0_17 = arith.constant 0 : index
    %c0_18 = arith.constant 0 : index
    %18 = vector.load %arg2[%c1_16, %c0_17, %c0_18] : memref<27x32x32xf32, #tpu.memory_space<vmem>>, vector<1x32x32xf32>
    %19 = vector.shape_cast %18 : vector<1x32x32xf32> to vector<32x32xf32>
    %cst_19 = arith.constant dense<0.000000e+00> : vector<32x256xf32>
    %20 = tpu.matmul %19, %17, %cst_19 {dimension_numbers = #tpu.dot_dimension_numbers<[1], [0], [0], [1], [0, 0, 1, 1], [], []>} : vector<32x32xf32>, vector<32x256xf32>, vector<32x256xf32> -> vector<32x256xf32>
    %21 = arith.addf %13, %20 : vector<32x256xf32>
    %c0_20 = arith.constant 0 : index
    %c57 = arith.constant 57 : index
    %22 = vector.load %arg11[%c0_20, %c57] : memref<32x512xf32, #tpu.memory_space<vmem>>, vector<32x256xf32>
    %c2 = arith.constant 2 : index
    %c0_21 = arith.constant 0 : index
    %23 = vector.load %arg8[%c2, %c0_21] : memref<27x256xf32, #tpu.memory_space<vmem>>, vector<1x256xf32>
    %24 = vector.broadcast %23 : vector<1x256xf32> to vector<32x256xf32>
    %25 = arith.mulf %22, %24 : vector<32x256xf32>
    %c2_22 = arith.constant 2 : index
    %c0_23 = arith.constant 0 : index
    %c0_24 = arith.constant 0 : index
    %26 = vector.load %arg2[%c2_22, %c0_23, %c0_24] : memref<27x32x32xf32, #tpu.memory_space<vmem>>, vector<1x32x32xf32>
    %27 = vector.shape_cast %26 : vector<1x32x32xf32> to vector<32x32xf32>
    %cst_25 = arith.constant dense<0.000000e+00> : vector<32x256xf32>
    %28 = tpu.matmul %27, %25, %cst_25 {dimension_numbers = #tpu.dot_dimension_numbers<[1], [0], [0], [1], [0, 0, 1, 1], [], []>} : vector<32x32xf32>, vector<32x256xf32>, vector<32x256xf32> -> vector<32x256xf32>
    %29 = arith.addf %21, %28 : vector<32x256xf32>
    %c0_26 = arith.constant 0 : index
    %c63 = arith.constant 63 : index
    %30 = vector.load %arg11[%c0_26, %c63] : memref<32x512xf32, #tpu.memory_space<vmem>>, vector<32x256xf32>
    %c3 = arith.constant 3 : index
    %c0_27 = arith.constant 0 : index
    %31 = vector.load %arg8[%c3, %c0_27] : memref<27x256xf32, #tpu.memory_space<vmem>>, vector<1x256xf32>
    %32 = vector.broadcast %31 : vector<1x256xf32> to vector<32x256xf32>
    %33 = arith.mulf %30, %32 : vector<32x256xf32>
    %c3_28 = arith.constant 3 : index
    %c0_29 = arith.constant 0 : index
    %c0_30 = arith.constant 0 : index
    %34 = vector.load %arg2[%c3_28, %c0_29, %c0_30] : memref<27x32x32xf32, #tpu.memory_space<vmem>>, vector<1x32x32xf32>
    %35 = vector.shape_cast %34 : vector<1x32x32xf32> to vector<32x32xf32>
    %cst_31 = arith.constant dense<0.000000e+00> : vector<32x256xf32>
    %36 = tpu.matmul %35, %33, %cst_31 {dimension_numbers = #tpu.dot_dimension_numbers<[1], [0], [0], [1], [0, 0, 1, 1], [], []>} : vector<32x32xf32>, vector<32x256xf32>, vector<32x256xf32> -> vector<32x256xf32>
    %37 = arith.addf %29, %36 : vector<32x256xf32>
    %c0_32 = arith.constant 0 : index
    %c64 = arith.constant 64 : index
    %38 = vector.load %arg11[%c0_32, %c64] : memref<32x512xf32, #tpu.memory_space<vmem>>, vector<32x256xf32>
    %c4 = arith.constant 4 : index
    %c0_33 = arith.constant 0 : index
    %c0_34 = arith.constant 0 : index
    %39 = vector.load %arg2[%c4, %c0_33, %c0_34] : memref<27x32x32xf32, #tpu.memory_space<vmem>>, vector<1x32x32xf32>
    %40 = vector.shape_cast %39 : vector<1x32x32xf32> to vector<32x32xf32>
    %cst_35 = arith.constant dense<0.000000e+00> : vector<32x256xf32>
    %41 = tpu.matmul %40, %38, %cst_35 {dimension_numbers = #tpu.dot_dimension_numbers<[1], [0], [0], [1], [0, 0, 1, 1], [], []>} : vector<32x32xf32>, vector<32x256xf32>, vector<32x256xf32> -> vector<32x256xf32>
    %42 = arith.addf %37, %41 : vector<32x256xf32>
    %c0_36 = arith.constant 0 : index
    %c65 = arith.constant 65 : index
    %43 = vector.load %arg11[%c0_36, %c65] : memref<32x512xf32, #tpu.memory_space<vmem>>, vector<32x256xf32>
    %c5 = arith.constant 5 : index
    %c0_37 = arith.constant 0 : index
    %44 = vector.load %arg8[%c5, %c0_37] : memref<27x256xf32, #tpu.memory_space<vmem>>, vector<1x256xf32>
    %45 = vector.broadcast %44 : vector<1x256xf32> to vector<32x256xf32>
    %46 = arith.mulf %43, %45 : vector<32x256xf32>
    %c5_38 = arith.constant 5 : index
    %c0_39 = arith.constant 0 : index
    %c0_40 = arith.constant 0 : index
    %47 = vector.load %arg2[%c5_38, %c0_39, %c0_40] : memref<27x32x32xf32, #tpu.memory_space<vmem>>, vector<1x32x32xf32>
    %48 = vector.shape_cast %47 : vector<1x32x32xf32> to vector<32x32xf32>
    %cst_41 = arith.constant dense<0.000000e+00> : vector<32x256xf32>
    %49 = tpu.matmul %48, %46, %cst_41 {dimension_numbers = #tpu.dot_dimension_numbers<[1], [0], [0], [1], [0, 0, 1, 1], [], []>} : vector<32x32xf32>, vector<32x256xf32>, vector<32x256xf32> -> vector<32x256xf32>
    %50 = arith.addf %42, %49 : vector<32x256xf32>
    %c0_42 = arith.constant 0 : index
    %c71 = arith.constant 71 : index
    %51 = vector.load %arg11[%c0_42, %c71] : memref<32x512xf32, #tpu.memory_space<vmem>>, vector<32x256xf32>
    %c6 = arith.constant 6 : index
    %c0_43 = arith.constant 0 : index
    %52 = vector.load %arg8[%c6, %c0_43] : memref<27x256xf32, #tpu.memory_space<vmem>>, vector<1x256xf32>
    %53 = vector.broadcast %52 : vector<1x256xf32> to vector<32x256xf32>
    %54 = arith.mulf %51, %53 : vector<32x256xf32>
    %c6_44 = arith.constant 6 : index
    %c0_45 = arith.constant 0 : index
    %c0_46 = arith.constant 0 : index
    %55 = vector.load %arg2[%c6_44, %c0_45, %c0_46] : memref<27x32x32xf32, #tpu.memory_space<vmem>>, vector<1x32x32xf32>
    %56 = vector.shape_cast %55 : vector<1x32x32xf32> to vector<32x32xf32>
    %cst_47 = arith.constant dense<0.000000e+00> : vector<32x256xf32>
    %57 = tpu.matmul %56, %54, %cst_47 {dimension_numbers = #tpu.dot_dimension_numbers<[1], [0], [0], [1], [0, 0, 1, 1], [], []>} : vector<32x32xf32>, vector<32x256xf32>, vector<32x256xf32> -> vector<32x256xf32>
    %58 = arith.addf %50, %57 : vector<32x256xf32>
    %c0_48 = arith.constant 0 : index
    %c72 = arith.constant 72 : index
    %59 = vector.load %arg11[%c0_48, %c72] : memref<32x512xf32, #tpu.memory_space<vmem>>, vector<32x256xf32>
    %c7 = arith.constant 7 : index
    %c0_49 = arith.constant 0 : index
    %60 = vector.load %arg8[%c7, %c0_49] : memref<27x256xf32, #tpu.memory_space<vmem>>, vector<1x256xf32>
    %61 = vector.broadcast %60 : vector<1x256xf32> to vector<32x256xf32>
    %62 = arith.mulf %59, %61 : vector<32x256xf32>
    %c7_50 = arith.constant 7 : index
    %c0_51 = arith.constant 0 : index
    %c0_52 = arith.constant 0 : index
    %63 = vector.load %arg2[%c7_50, %c0_51, %c0_52] : memref<27x32x32xf32, #tpu.memory_space<vmem>>, vector<1x32x32xf32>
    %64 = vector.shape_cast %63 : vector<1x32x32xf32> to vector<32x32xf32>
    %cst_53 = arith.constant dense<0.000000e+00> : vector<32x256xf32>
    %65 = tpu.matmul %64, %62, %cst_53 {dimension_numbers = #tpu.dot_dimension_numbers<[1], [0], [0], [1], [0, 0, 1, 1], [], []>} : vector<32x32xf32>, vector<32x256xf32>, vector<32x256xf32> -> vector<32x256xf32>
    %66 = arith.addf %58, %65 : vector<32x256xf32>
    %c0_54 = arith.constant 0 : index
    %c73 = arith.constant 73 : index
    %67 = vector.load %arg11[%c0_54, %c73] : memref<32x512xf32, #tpu.memory_space<vmem>>, vector<32x256xf32>
    %c8 = arith.constant 8 : index
    %c0_55 = arith.constant 0 : index
    %68 = vector.load %arg8[%c8, %c0_55] : memref<27x256xf32, #tpu.memory_space<vmem>>, vector<1x256xf32>
    %69 = vector.broadcast %68 : vector<1x256xf32> to vector<32x256xf32>
    %70 = arith.mulf %67, %69 : vector<32x256xf32>
    %c8_56 = arith.constant 8 : index
    %c0_57 = arith.constant 0 : index
    %c0_58 = arith.constant 0 : index
    %71 = vector.load %arg2[%c8_56, %c0_57, %c0_58] : memref<27x32x32xf32, #tpu.memory_space<vmem>>, vector<1x32x32xf32>
    %72 = vector.shape_cast %71 : vector<1x32x32xf32> to vector<32x32xf32>
    %cst_59 = arith.constant dense<0.000000e+00> : vector<32x256xf32>
    %73 = tpu.matmul %72, %70, %cst_59 {dimension_numbers = #tpu.dot_dimension_numbers<[1], [0], [0], [1], [0, 0, 1, 1], [], []>} : vector<32x32xf32>, vector<32x256xf32>, vector<32x256xf32> -> vector<32x256xf32>
    %74 = arith.addf %66, %73 : vector<32x256xf32>
    %c0_60 = arith.constant 0 : index
    %c119 = arith.constant 119 : index
    %75 = vector.load %arg11[%c0_60, %c119] : memref<32x512xf32, #tpu.memory_space<vmem>>, vector<32x256xf32>
    %c9 = arith.constant 9 : index
    %c0_61 = arith.constant 0 : index
    %76 = vector.load %arg8[%c9, %c0_61] : memref<27x256xf32, #tpu.memory_space<vmem>>, vector<1x256xf32>
    %77 = vector.broadcast %76 : vector<1x256xf32> to vector<32x256xf32>
    %78 = arith.mulf %75, %77 : vector<32x256xf32>
    %c9_62 = arith.constant 9 : index
    %c0_63 = arith.constant 0 : index
    %c0_64 = arith.constant 0 : index
    %79 = vector.load %arg2[%c9_62, %c0_63, %c0_64] : memref<27x32x32xf32, #tpu.memory_space<vmem>>, vector<1x32x32xf32>
    %80 = vector.shape_cast %79 : vector<1x32x32xf32> to vector<32x32xf32>
    %cst_65 = arith.constant dense<0.000000e+00> : vector<32x256xf32>
    %81 = tpu.matmul %80, %78, %cst_65 {dimension_numbers = #tpu.dot_dimension_numbers<[1], [0], [0], [1], [0, 0, 1, 1], [], []>} : vector<32x32xf32>, vector<32x256xf32>, vector<32x256xf32> -> vector<32x256xf32>
    %82 = arith.addf %74, %81 : vector<32x256xf32>
    %c0_66 = arith.constant 0 : index
    %c120 = arith.constant 120 : index
    %83 = vector.load %arg11[%c0_66, %c120] : memref<32x512xf32, #tpu.memory_space<vmem>>, vector<32x256xf32>
    %c10 = arith.constant 10 : index
    %c0_67 = arith.constant 0 : index
    %84 = vector.load %arg8[%c10, %c0_67] : memref<27x256xf32, #tpu.memory_space<vmem>>, vector<1x256xf32>
    %85 = vector.broadcast %84 : vector<1x256xf32> to vector<32x256xf32>
    %86 = arith.mulf %83, %85 : vector<32x256xf32>
    %c10_68 = arith.constant 10 : index
    %c0_69 = arith.constant 0 : index
    %c0_70 = arith.constant 0 : index
    %87 = vector.load %arg2[%c10_68, %c0_69, %c0_70] : memref<27x32x32xf32, #tpu.memory_space<vmem>>, vector<1x32x32xf32>
    %88 = vector.shape_cast %87 : vector<1x32x32xf32> to vector<32x32xf32>
    %cst_71 = arith.constant dense<0.000000e+00> : vector<32x256xf32>
    %89 = tpu.matmul %88, %86, %cst_71 {dimension_numbers = #tpu.dot_dimension_numbers<[1], [0], [0], [1], [0, 0, 1, 1], [], []>} : vector<32x32xf32>, vector<32x256xf32>, vector<32x256xf32> -> vector<32x256xf32>
    %90 = arith.addf %82, %89 : vector<32x256xf32>
    %c0_72 = arith.constant 0 : index
    %c121 = arith.constant 121 : index
    %91 = vector.load %arg11[%c0_72, %c121] : memref<32x512xf32, #tpu.memory_space<vmem>>, vector<32x256xf32>
    %c11 = arith.constant 11 : index
    %c0_73 = arith.constant 0 : index
    %92 = vector.load %arg8[%c11, %c0_73] : memref<27x256xf32, #tpu.memory_space<vmem>>, vector<1x256xf32>
    %93 = vector.broadcast %92 : vector<1x256xf32> to vector<32x256xf32>
    %94 = arith.mulf %91, %93 : vector<32x256xf32>
    %c11_74 = arith.constant 11 : index
    %c0_75 = arith.constant 0 : index
    %c0_76 = arith.constant 0 : index
    %95 = vector.load %arg2[%c11_74, %c0_75, %c0_76] : memref<27x32x32xf32, #tpu.memory_space<vmem>>, vector<1x32x32xf32>
    %96 = vector.shape_cast %95 : vector<1x32x32xf32> to vector<32x32xf32>
    %cst_77 = arith.constant dense<0.000000e+00> : vector<32x256xf32>
    %97 = tpu.matmul %96, %94, %cst_77 {dimension_numbers = #tpu.dot_dimension_numbers<[1], [0], [0], [1], [0, 0, 1, 1], [], []>} : vector<32x32xf32>, vector<32x256xf32>, vector<32x256xf32> -> vector<32x256xf32>
    %98 = arith.addf %90, %97 : vector<32x256xf32>
    %c0_78 = arith.constant 0 : index
    %c127 = arith.constant 127 : index
    %99 = vector.load %arg11[%c0_78, %c127] : memref<32x512xf32, #tpu.memory_space<vmem>>, vector<32x256xf32>
    %c12 = arith.constant 12 : index
    %c0_79 = arith.constant 0 : index
    %100 = vector.load %arg8[%c12, %c0_79] : memref<27x256xf32, #tpu.memory_space<vmem>>, vector<1x256xf32>
    %101 = vector.broadcast %100 : vector<1x256xf32> to vector<32x256xf32>
    %102 = arith.mulf %99, %101 : vector<32x256xf32>
    %c12_80 = arith.constant 12 : index
    %c0_81 = arith.constant 0 : index
    %c0_82 = arith.constant 0 : index
    %103 = vector.load %arg2[%c12_80, %c0_81, %c0_82] : memref<27x32x32xf32, #tpu.memory_space<vmem>>, vector<1x32x32xf32>
    %104 = vector.shape_cast %103 : vector<1x32x32xf32> to vector<32x32xf32>
    %cst_83 = arith.constant dense<0.000000e+00> : vector<32x256xf32>
    %105 = tpu.matmul %104, %102, %cst_83 {dimension_numbers = #tpu.dot_dimension_numbers<[1], [0], [0], [1], [0, 0, 1, 1], [], []>} : vector<32x32xf32>, vector<32x256xf32>, vector<32x256xf32> -> vector<32x256xf32>
    %106 = arith.addf %98, %105 : vector<32x256xf32>
    %c0_84 = arith.constant 0 : index
    %c128_85 = arith.constant 128 : index
    %107 = vector.load %arg11[%c0_84, %c128_85] : memref<32x512xf32, #tpu.memory_space<vmem>>, vector<32x256xf32>
    %c13 = arith.constant 13 : index
    %c0_86 = arith.constant 0 : index
    %c0_87 = arith.constant 0 : index
    %108 = vector.load %arg2[%c13, %c0_86, %c0_87] : memref<27x32x32xf32, #tpu.memory_space<vmem>>, vector<1x32x32xf32>
    %109 = vector.shape_cast %108 : vector<1x32x32xf32> to vector<32x32xf32>
    %cst_88 = arith.constant dense<0.000000e+00> : vector<32x256xf32>
    %110 = tpu.matmul %109, %107, %cst_88 {dimension_numbers = #tpu.dot_dimension_numbers<[1], [0], [0], [1], [0, 0, 1, 1], [], []>} : vector<32x32xf32>, vector<32x256xf32>, vector<32x256xf32> -> vector<32x256xf32>
    %111 = arith.addf %106, %110 : vector<32x256xf32>
    %c0_89 = arith.constant 0 : index
    %c129 = arith.constant 129 : index
    %112 = vector.load %arg11[%c0_89, %c129] : memref<32x512xf32, #tpu.memory_space<vmem>>, vector<32x256xf32>
    %c14 = arith.constant 14 : index
    %c0_90 = arith.constant 0 : index
    %113 = vector.load %arg8[%c14, %c0_90] : memref<27x256xf32, #tpu.memory_space<vmem>>, vector<1x256xf32>
    %114 = vector.broadcast %113 : vector<1x256xf32> to vector<32x256xf32>
    %115 = arith.mulf %112, %114 : vector<32x256xf32>
    %c14_91 = arith.constant 14 : index
    %c0_92 = arith.constant 0 : index
    %c0_93 = arith.constant 0 : index
    %116 = vector.load %arg2[%c14_91, %c0_92, %c0_93] : memref<27x32x32xf32, #tpu.memory_space<vmem>>, vector<1x32x32xf32>
    %117 = vector.shape_cast %116 : vector<1x32x32xf32> to vector<32x32xf32>
    %cst_94 = arith.constant dense<0.000000e+00> : vector<32x256xf32>
    %118 = tpu.matmul %117, %115, %cst_94 {dimension_numbers = #tpu.dot_dimension_numbers<[1], [0], [0], [1], [0, 0, 1, 1], [], []>} : vector<32x32xf32>, vector<32x256xf32>, vector<32x256xf32> -> vector<32x256xf32>
    %119 = arith.addf %111, %118 : vector<32x256xf32>
    %c0_95 = arith.constant 0 : index
    %c135 = arith.constant 135 : index
    %120 = vector.load %arg11[%c0_95, %c135] : memref<32x512xf32, #tpu.memory_space<vmem>>, vector<32x256xf32>
    %c15 = arith.constant 15 : index
    %c0_96 = arith.constant 0 : index
    %121 = vector.load %arg8[%c15, %c0_96] : memref<27x256xf32, #tpu.memory_space<vmem>>, vector<1x256xf32>
    %122 = vector.broadcast %121 : vector<1x256xf32> to vector<32x256xf32>
    %123 = arith.mulf %120, %122 : vector<32x256xf32>
    %c15_97 = arith.constant 15 : index
    %c0_98 = arith.constant 0 : index
    %c0_99 = arith.constant 0 : index
    %124 = vector.load %arg2[%c15_97, %c0_98, %c0_99] : memref<27x32x32xf32, #tpu.memory_space<vmem>>, vector<1x32x32xf32>
    %125 = vector.shape_cast %124 : vector<1x32x32xf32> to vector<32x32xf32>
    %cst_100 = arith.constant dense<0.000000e+00> : vector<32x256xf32>
    %126 = tpu.matmul %125, %123, %cst_100 {dimension_numbers = #tpu.dot_dimension_numbers<[1], [0], [0], [1], [0, 0, 1, 1], [], []>} : vector<32x32xf32>, vector<32x256xf32>, vector<32x256xf32> -> vector<32x256xf32>
    %127 = arith.addf %119, %126 : vector<32x256xf32>
    %c0_101 = arith.constant 0 : index
    %c136 = arith.constant 136 : index
    %128 = vector.load %arg11[%c0_101, %c136] : memref<32x512xf32, #tpu.memory_space<vmem>>, vector<32x256xf32>
    %c16 = arith.constant 16 : index
    %c0_102 = arith.constant 0 : index
    %129 = vector.load %arg8[%c16, %c0_102] : memref<27x256xf32, #tpu.memory_space<vmem>>, vector<1x256xf32>
    %130 = vector.broadcast %129 : vector<1x256xf32> to vector<32x256xf32>
    %131 = arith.mulf %128, %130 : vector<32x256xf32>
    %c16_103 = arith.constant 16 : index
    %c0_104 = arith.constant 0 : index
    %c0_105 = arith.constant 0 : index
    %132 = vector.load %arg2[%c16_103, %c0_104, %c0_105] : memref<27x32x32xf32, #tpu.memory_space<vmem>>, vector<1x32x32xf32>
    %133 = vector.shape_cast %132 : vector<1x32x32xf32> to vector<32x32xf32>
    %cst_106 = arith.constant dense<0.000000e+00> : vector<32x256xf32>
    %134 = tpu.matmul %133, %131, %cst_106 {dimension_numbers = #tpu.dot_dimension_numbers<[1], [0], [0], [1], [0, 0, 1, 1], [], []>} : vector<32x32xf32>, vector<32x256xf32>, vector<32x256xf32> -> vector<32x256xf32>
    %135 = arith.addf %127, %134 : vector<32x256xf32>
    %c0_107 = arith.constant 0 : index
    %c137 = arith.constant 137 : index
    %136 = vector.load %arg11[%c0_107, %c137] : memref<32x512xf32, #tpu.memory_space<vmem>>, vector<32x256xf32>
    %c17 = arith.constant 17 : index
    %c0_108 = arith.constant 0 : index
    %137 = vector.load %arg8[%c17, %c0_108] : memref<27x256xf32, #tpu.memory_space<vmem>>, vector<1x256xf32>
    %138 = vector.broadcast %137 : vector<1x256xf32> to vector<32x256xf32>
    %139 = arith.mulf %136, %138 : vector<32x256xf32>
    %c17_109 = arith.constant 17 : index
    %c0_110 = arith.constant 0 : index
    %c0_111 = arith.constant 0 : index
    %140 = vector.load %arg2[%c17_109, %c0_110, %c0_111] : memref<27x32x32xf32, #tpu.memory_space<vmem>>, vector<1x32x32xf32>
    %141 = vector.shape_cast %140 : vector<1x32x32xf32> to vector<32x32xf32>
    %cst_112 = arith.constant dense<0.000000e+00> : vector<32x256xf32>
    %142 = tpu.matmul %141, %139, %cst_112 {dimension_numbers = #tpu.dot_dimension_numbers<[1], [0], [0], [1], [0, 0, 1, 1], [], []>} : vector<32x32xf32>, vector<32x256xf32>, vector<32x256xf32> -> vector<32x256xf32>
    %143 = arith.addf %135, %142 : vector<32x256xf32>
    %c0_113 = arith.constant 0 : index
    %c183 = arith.constant 183 : index
    %144 = vector.load %arg11[%c0_113, %c183] : memref<32x512xf32, #tpu.memory_space<vmem>>, vector<32x256xf32>
    %c18 = arith.constant 18 : index
    %c0_114 = arith.constant 0 : index
    %145 = vector.load %arg8[%c18, %c0_114] : memref<27x256xf32, #tpu.memory_space<vmem>>, vector<1x256xf32>
    %146 = vector.broadcast %145 : vector<1x256xf32> to vector<32x256xf32>
    %147 = arith.mulf %144, %146 : vector<32x256xf32>
    %c18_115 = arith.constant 18 : index
    %c0_116 = arith.constant 0 : index
    %c0_117 = arith.constant 0 : index
    %148 = vector.load %arg2[%c18_115, %c0_116, %c0_117] : memref<27x32x32xf32, #tpu.memory_space<vmem>>, vector<1x32x32xf32>
    %149 = vector.shape_cast %148 : vector<1x32x32xf32> to vector<32x32xf32>
    %cst_118 = arith.constant dense<0.000000e+00> : vector<32x256xf32>
    %150 = tpu.matmul %149, %147, %cst_118 {dimension_numbers = #tpu.dot_dimension_numbers<[1], [0], [0], [1], [0, 0, 1, 1], [], []>} : vector<32x32xf32>, vector<32x256xf32>, vector<32x256xf32> -> vector<32x256xf32>
    %151 = arith.addf %143, %150 : vector<32x256xf32>
    %c0_119 = arith.constant 0 : index
    %c184 = arith.constant 184 : index
    %152 = vector.load %arg11[%c0_119, %c184] : memref<32x512xf32, #tpu.memory_space<vmem>>, vector<32x256xf32>
    %c19 = arith.constant 19 : index
    %c0_120 = arith.constant 0 : index
    %153 = vector.load %arg8[%c19, %c0_120] : memref<27x256xf32, #tpu.memory_space<vmem>>, vector<1x256xf32>
    %154 = vector.broadcast %153 : vector<1x256xf32> to vector<32x256xf32>
    %155 = arith.mulf %152, %154 : vector<32x256xf32>
    %c19_121 = arith.constant 19 : index
    %c0_122 = arith.constant 0 : index
    %c0_123 = arith.constant 0 : index
    %156 = vector.load %arg2[%c19_121, %c0_122, %c0_123] : memref<27x32x32xf32, #tpu.memory_space<vmem>>, vector<1x32x32xf32>
    %157 = vector.shape_cast %156 : vector<1x32x32xf32> to vector<32x32xf32>
    %cst_124 = arith.constant dense<0.000000e+00> : vector<32x256xf32>
    %158 = tpu.matmul %157, %155, %cst_124 {dimension_numbers = #tpu.dot_dimension_numbers<[1], [0], [0], [1], [0, 0, 1, 1], [], []>} : vector<32x32xf32>, vector<32x256xf32>, vector<32x256xf32> -> vector<32x256xf32>
    %159 = arith.addf %151, %158 : vector<32x256xf32>
    %c0_125 = arith.constant 0 : index
    %c185 = arith.constant 185 : index
    %160 = vector.load %arg11[%c0_125, %c185] : memref<32x512xf32, #tpu.memory_space<vmem>>, vector<32x256xf32>
    %c20 = arith.constant 20 : index
    %c0_126 = arith.constant 0 : index
    %161 = vector.load %arg8[%c20, %c0_126] : memref<27x256xf32, #tpu.memory_space<vmem>>, vector<1x256xf32>
    %162 = vector.broadcast %161 : vector<1x256xf32> to vector<32x256xf32>
    %163 = arith.mulf %160, %162 : vector<32x256xf32>
    %c20_127 = arith.constant 20 : index
    %c0_128 = arith.constant 0 : index
    %c0_129 = arith.constant 0 : index
    %164 = vector.load %arg2[%c20_127, %c0_128, %c0_129] : memref<27x32x32xf32, #tpu.memory_space<vmem>>, vector<1x32x32xf32>
    %165 = vector.shape_cast %164 : vector<1x32x32xf32> to vector<32x32xf32>
    %cst_130 = arith.constant dense<0.000000e+00> : vector<32x256xf32>
    %166 = tpu.matmul %165, %163, %cst_130 {dimension_numbers = #tpu.dot_dimension_numbers<[1], [0], [0], [1], [0, 0, 1, 1], [], []>} : vector<32x32xf32>, vector<32x256xf32>, vector<32x256xf32> -> vector<32x256xf32>
    %167 = arith.addf %159, %166 : vector<32x256xf32>
    %c0_131 = arith.constant 0 : index
    %c191 = arith.constant 191 : index
    %168 = vector.load %arg11[%c0_131, %c191] : memref<32x512xf32, #tpu.memory_space<vmem>>, vector<32x256xf32>
    %c21 = arith.constant 21 : index
    %c0_132 = arith.constant 0 : index
    %169 = vector.load %arg8[%c21, %c0_132] : memref<27x256xf32, #tpu.memory_space<vmem>>, vector<1x256xf32>
    %170 = vector.broadcast %169 : vector<1x256xf32> to vector<32x256xf32>
    %171 = arith.mulf %168, %170 : vector<32x256xf32>
    %c21_133 = arith.constant 21 : index
    %c0_134 = arith.constant 0 : index
    %c0_135 = arith.constant 0 : index
    %172 = vector.load %arg2[%c21_133, %c0_134, %c0_135] : memref<27x32x32xf32, #tpu.memory_space<vmem>>, vector<1x32x32xf32>
    %173 = vector.shape_cast %172 : vector<1x32x32xf32> to vector<32x32xf32>
    %cst_136 = arith.constant dense<0.000000e+00> : vector<32x256xf32>
    %174 = tpu.matmul %173, %171, %cst_136 {dimension_numbers = #tpu.dot_dimension_numbers<[1], [0], [0], [1], [0, 0, 1, 1], [], []>} : vector<32x32xf32>, vector<32x256xf32>, vector<32x256xf32> -> vector<32x256xf32>
    %175 = arith.addf %167, %174 : vector<32x256xf32>
    %c0_137 = arith.constant 0 : index
    %c192 = arith.constant 192 : index
    %176 = vector.load %arg11[%c0_137, %c192] : memref<32x512xf32, #tpu.memory_space<vmem>>, vector<32x256xf32>
    %c22 = arith.constant 22 : index
    %c0_138 = arith.constant 0 : index
    %c0_139 = arith.constant 0 : index
    %177 = vector.load %arg2[%c22, %c0_138, %c0_139] : memref<27x32x32xf32, #tpu.memory_space<vmem>>, vector<1x32x32xf32>
    %178 = vector.shape_cast %177 : vector<1x32x32xf32> to vector<32x32xf32>
    %cst_140 = arith.constant dense<0.000000e+00> : vector<32x256xf32>
    %179 = tpu.matmul %178, %176, %cst_140 {dimension_numbers = #tpu.dot_dimension_numbers<[1], [0], [0], [1], [0, 0, 1, 1], [], []>} : vector<32x32xf32>, vector<32x256xf32>, vector<32x256xf32> -> vector<32x256xf32>
    %180 = arith.addf %175, %179 : vector<32x256xf32>
    %c0_141 = arith.constant 0 : index
    %c193 = arith.constant 193 : index
    %181 = vector.load %arg11[%c0_141, %c193] : memref<32x512xf32, #tpu.memory_space<vmem>>, vector<32x256xf32>
    %c23 = arith.constant 23 : index
    %c0_142 = arith.constant 0 : index
    %182 = vector.load %arg8[%c23, %c0_142] : memref<27x256xf32, #tpu.memory_space<vmem>>, vector<1x256xf32>
    %183 = vector.broadcast %182 : vector<1x256xf32> to vector<32x256xf32>
    %184 = arith.mulf %181, %183 : vector<32x256xf32>
    %c23_143 = arith.constant 23 : index
    %c0_144 = arith.constant 0 : index
    %c0_145 = arith.constant 0 : index
    %185 = vector.load %arg2[%c23_143, %c0_144, %c0_145] : memref<27x32x32xf32, #tpu.memory_space<vmem>>, vector<1x32x32xf32>
    %186 = vector.shape_cast %185 : vector<1x32x32xf32> to vector<32x32xf32>
    %cst_146 = arith.constant dense<0.000000e+00> : vector<32x256xf32>
    %187 = tpu.matmul %186, %184, %cst_146 {dimension_numbers = #tpu.dot_dimension_numbers<[1], [0], [0], [1], [0, 0, 1, 1], [], []>} : vector<32x32xf32>, vector<32x256xf32>, vector<32x256xf32> -> vector<32x256xf32>
    %188 = arith.addf %180, %187 : vector<32x256xf32>
    %c0_147 = arith.constant 0 : index
    %c199 = arith.constant 199 : index
    %189 = vector.load %arg11[%c0_147, %c199] : memref<32x512xf32, #tpu.memory_space<vmem>>, vector<32x256xf32>
    %c24 = arith.constant 24 : index
    %c0_148 = arith.constant 0 : index
    %190 = vector.load %arg8[%c24, %c0_148] : memref<27x256xf32, #tpu.memory_space<vmem>>, vector<1x256xf32>
    %191 = vector.broadcast %190 : vector<1x256xf32> to vector<32x256xf32>
    %192 = arith.mulf %189, %191 : vector<32x256xf32>
    %c24_149 = arith.constant 24 : index
    %c0_150 = arith.constant 0 : index
    %c0_151 = arith.constant 0 : index
    %193 = vector.load %arg2[%c24_149, %c0_150, %c0_151] : memref<27x32x32xf32, #tpu.memory_space<vmem>>, vector<1x32x32xf32>
    %194 = vector.shape_cast %193 : vector<1x32x32xf32> to vector<32x32xf32>
    %cst_152 = arith.constant dense<0.000000e+00> : vector<32x256xf32>
    %195 = tpu.matmul %194, %192, %cst_152 {dimension_numbers = #tpu.dot_dimension_numbers<[1], [0], [0], [1], [0, 0, 1, 1], [], []>} : vector<32x32xf32>, vector<32x256xf32>, vector<32x256xf32> -> vector<32x256xf32>
    %196 = arith.addf %188, %195 : vector<32x256xf32>
    %c0_153 = arith.constant 0 : index
    %c200 = arith.constant 200 : index
    %197 = vector.load %arg11[%c0_153, %c200] : memref<32x512xf32, #tpu.memory_space<vmem>>, vector<32x256xf32>
    %c25 = arith.constant 25 : index
    %c0_154 = arith.constant 0 : index
    %198 = vector.load %arg8[%c25, %c0_154] : memref<27x256xf32, #tpu.memory_space<vmem>>, vector<1x256xf32>
    %199 = vector.broadcast %198 : vector<1x256xf32> to vector<32x256xf32>
    %200 = arith.mulf %197, %199 : vector<32x256xf32>
    %c25_155 = arith.constant 25 : index
    %c0_156 = arith.constant 0 : index
    %c0_157 = arith.constant 0 : index
    %201 = vector.load %arg2[%c25_155, %c0_156, %c0_157] : memref<27x32x32xf32, #tpu.memory_space<vmem>>, vector<1x32x32xf32>
    %202 = vector.shape_cast %201 : vector<1x32x32xf32> to vector<32x32xf32>
    %cst_158 = arith.constant dense<0.000000e+00> : vector<32x256xf32>
    %203 = tpu.matmul %202, %200, %cst_158 {dimension_numbers = #tpu.dot_dimension_numbers<[1], [0], [0], [1], [0, 0, 1, 1], [], []>} : vector<32x32xf32>, vector<32x256xf32>, vector<32x256xf32> -> vector<32x256xf32>
    %204 = arith.addf %196, %203 : vector<32x256xf32>
    %c0_159 = arith.constant 0 : index
    %c201 = arith.constant 201 : index
    %205 = vector.load %arg11[%c0_159, %c201] : memref<32x512xf32, #tpu.memory_space<vmem>>, vector<32x256xf32>
    %c26 = arith.constant 26 : index
    %c0_160 = arith.constant 0 : index
    %206 = vector.load %arg8[%c26, %c0_160] : memref<27x256xf32, #tpu.memory_space<vmem>>, vector<1x256xf32>
    %207 = vector.broadcast %206 : vector<1x256xf32> to vector<32x256xf32>
    %208 = arith.mulf %205, %207 : vector<32x256xf32>
    %c26_161 = arith.constant 26 : index
    %c0_162 = arith.constant 0 : index
    %c0_163 = arith.constant 0 : index
    %209 = vector.load %arg2[%c26_161, %c0_162, %c0_163] : memref<27x32x32xf32, #tpu.memory_space<vmem>>, vector<1x32x32xf32>
    %210 = vector.shape_cast %209 : vector<1x32x32xf32> to vector<32x32xf32>
    %cst_164 = arith.constant dense<0.000000e+00> : vector<32x256xf32>
    %211 = tpu.matmul %210, %208, %cst_164 {dimension_numbers = #tpu.dot_dimension_numbers<[1], [0], [0], [1], [0, 0, 1, 1], [], []>} : vector<32x32xf32>, vector<32x256xf32>, vector<32x256xf32> -> vector<32x256xf32>
    %212 = arith.addf %204, %211 : vector<32x256xf32>
    %c0_165 = arith.constant 0 : index
    %c0_166 = arith.constant 0 : index
    %213 = vector.load %arg3[%c0_165, %c0_166] : memref<32x1xf32, #tpu.memory_space<vmem>>, vector<32x1xf32>
    %214 = vector.broadcast %213 : vector<32x1xf32> to vector<32x256xf32>
    %215 = arith.addf %212, %214 : vector<32x256xf32>
    %cst_167 = arith.constant 0.000000e+00 : f32
    %216 = vector.broadcast %cst_167 : f32 to vector<32x256xf32>
    %217 = arith.maximumf %215, %216 : vector<32x256xf32>
    %c0_168 = arith.constant 0 : index
    %c128_169 = arith.constant 128 : index
    %218 = vector.load %arg11[%c0_168, %c128_169] : memref<32x512xf32, #tpu.memory_space<vmem>>, vector<32x256xf32>
    tpu.vector_store %arg11[%c0_168, %c128_169], %217 {strides = array<i32>} : memref<32x512xf32, #tpu.memory_space<vmem>>, vector<32x256xf32>,
    %c0_170 = arith.constant 0 : index
    %c55_171 = arith.constant 55 : index
    %219 = vector.load %arg11[%c0_170, %c55_171] : memref<32x512xf32, #tpu.memory_space<vmem>>, vector<32x256xf32>
    %c0_172 = arith.constant 0 : index
    %c0_173 = arith.constant 0 : index
    %220 = vector.load %arg8[%c0_172, %c0_173] : memref<27x256xf32, #tpu.memory_space<vmem>>, vector<1x256xf32>
    %221 = vector.broadcast %220 : vector<1x256xf32> to vector<32x256xf32>
    %222 = arith.mulf %219, %221 : vector<32x256xf32>
    %c0_174 = arith.constant 0 : index
    %c0_175 = arith.constant 0 : index
    %c0_176 = arith.constant 0 : index
    %223 = vector.load %arg4[%c0_174, %c0_175, %c0_176] : memref<27x32x32xf32, #tpu.memory_space<vmem>>, vector<1x32x32xf32>
    %224 = vector.shape_cast %223 : vector<1x32x32xf32> to vector<32x32xf32>
    %cst_177 = arith.constant dense<0.000000e+00> : vector<32x256xf32>
    %225 = tpu.matmul %224, %222, %cst_177 {dimension_numbers = #tpu.dot_dimension_numbers<[1], [0], [0], [1], [0, 0, 1, 1], [], []>} : vector<32x32xf32>, vector<32x256xf32>, vector<32x256xf32> -> vector<32x256xf32>
    %c0_178 = arith.constant 0 : index
    %c56_179 = arith.constant 56 : index
    %226 = vector.load %arg11[%c0_178, %c56_179] : memref<32x512xf32, #tpu.memory_space<vmem>>, vector<32x256xf32>
    %c1_180 = arith.constant 1 : index
    %c0_181 = arith.constant 0 : index
    %227 = vector.load %arg8[%c1_180, %c0_181] : memref<27x256xf32, #tpu.memory_space<vmem>>, vector<1x256xf32>
    %228 = vector.broadcast %227 : vector<1x256xf32> to vector<32x256xf32>
    %229 = arith.mulf %226, %228 : vector<32x256xf32>
    %c1_182 = arith.constant 1 : index
    %c0_183 = arith.constant 0 : index
    %c0_184 = arith.constant 0 : index
    %230 = vector.load %arg4[%c1_182, %c0_183, %c0_184] : memref<27x32x32xf32, #tpu.memory_space<vmem>>, vector<1x32x32xf32>
    %231 = vector.shape_cast %230 : vector<1x32x32xf32> to vector<32x32xf32>
    %cst_185 = arith.constant dense<0.000000e+00> : vector<32x256xf32>
    %232 = tpu.matmul %231, %229, %cst_185 {dimension_numbers = #tpu.dot_dimension_numbers<[1], [0], [0], [1], [0, 0, 1, 1], [], []>} : vector<32x32xf32>, vector<32x256xf32>, vector<32x256xf32> -> vector<32x256xf32>
    %233 = arith.addf %225, %232 : vector<32x256xf32>
    %c0_186 = arith.constant 0 : index
    %c57_187 = arith.constant 57 : index
    %234 = vector.load %arg11[%c0_186, %c57_187] : memref<32x512xf32, #tpu.memory_space<vmem>>, vector<32x256xf32>
    %c2_188 = arith.constant 2 : index
    %c0_189 = arith.constant 0 : index
    %235 = vector.load %arg8[%c2_188, %c0_189] : memref<27x256xf32, #tpu.memory_space<vmem>>, vector<1x256xf32>
    %236 = vector.broadcast %235 : vector<1x256xf32> to vector<32x256xf32>
    %237 = arith.mulf %234, %236 : vector<32x256xf32>
    %c2_190 = arith.constant 2 : index
    %c0_191 = arith.constant 0 : index
    %c0_192 = arith.constant 0 : index
    %238 = vector.load %arg4[%c2_190, %c0_191, %c0_192] : memref<27x32x32xf32, #tpu.memory_space<vmem>>, vector<1x32x32xf32>
    %239 = vector.shape_cast %238 : vector<1x32x32xf32> to vector<32x32xf32>
    %cst_193 = arith.constant dense<0.000000e+00> : vector<32x256xf32>
    %240 = tpu.matmul %239, %237, %cst_193 {dimension_numbers = #tpu.dot_dimension_numbers<[1], [0], [0], [1], [0, 0, 1, 1], [], []>} : vector<32x32xf32>, vector<32x256xf32>, vector<32x256xf32> -> vector<32x256xf32>
    %241 = arith.addf %233, %240 : vector<32x256xf32>
    %c0_194 = arith.constant 0 : index
    %c63_195 = arith.constant 63 : index
    %242 = vector.load %arg11[%c0_194, %c63_195] : memref<32x512xf32, #tpu.memory_space<vmem>>, vector<32x256xf32>
    %c3_196 = arith.constant 3 : index
    %c0_197 = arith.constant 0 : index
    %243 = vector.load %arg8[%c3_196, %c0_197] : memref<27x256xf32, #tpu.memory_space<vmem>>, vector<1x256xf32>
    %244 = vector.broadcast %243 : vector<1x256xf32> to vector<32x256xf32>
    %245 = arith.mulf %242, %244 : vector<32x256xf32>
    %c3_198 = arith.constant 3 : index
    %c0_199 = arith.constant 0 : index
    %c0_200 = arith.constant 0 : index
    %246 = vector.load %arg4[%c3_198, %c0_199, %c0_200] : memref<27x32x32xf32, #tpu.memory_space<vmem>>, vector<1x32x32xf32>
    %247 = vector.shape_cast %246 : vector<1x32x32xf32> to vector<32x32xf32>
    %cst_201 = arith.constant dense<0.000000e+00> : vector<32x256xf32>
    %248 = tpu.matmul %247, %245, %cst_201 {dimension_numbers = #tpu.dot_dimension_numbers<[1], [0], [0], [1], [0, 0, 1, 1], [], []>} : vector<32x32xf32>, vector<32x256xf32>, vector<32x256xf32> -> vector<32x256xf32>
    %249 = arith.addf %241, %248 : vector<32x256xf32>
    %c0_202 = arith.constant 0 : index
    %c64_203 = arith.constant 64 : index
    %250 = vector.load %arg11[%c0_202, %c64_203] : memref<32x512xf32, #tpu.memory_space<vmem>>, vector<32x256xf32>
    %c4_204 = arith.constant 4 : index
    %c0_205 = arith.constant 0 : index
    %c0_206 = arith.constant 0 : index
    %251 = vector.load %arg4[%c4_204, %c0_205, %c0_206] : memref<27x32x32xf32, #tpu.memory_space<vmem>>, vector<1x32x32xf32>
    %252 = vector.shape_cast %251 : vector<1x32x32xf32> to vector<32x32xf32>
    %cst_207 = arith.constant dense<0.000000e+00> : vector<32x256xf32>
    %253 = tpu.matmul %252, %250, %cst_207 {dimension_numbers = #tpu.dot_dimension_numbers<[1], [0], [0], [1], [0, 0, 1, 1], [], []>} : vector<32x32xf32>, vector<32x256xf32>, vector<32x256xf32> -> vector<32x256xf32>
    %254 = arith.addf %249, %253 : vector<32x256xf32>
    %c0_208 = arith.constant 0 : index
    %c65_209 = arith.constant 65 : index
    %255 = vector.load %arg11[%c0_208, %c65_209] : memref<32x512xf32, #tpu.memory_space<vmem>>, vector<32x256xf32>
    %c5_210 = arith.constant 5 : index
    %c0_211 = arith.constant 0 : index
    %256 = vector.load %arg8[%c5_210, %c0_211] : memref<27x256xf32, #tpu.memory_space<vmem>>, vector<1x256xf32>
    %257 = vector.broadcast %256 : vector<1x256xf32> to vector<32x256xf32>
    %258 = arith.mulf %255, %257 : vector<32x256xf32>
    %c5_212 = arith.constant 5 : index
    %c0_213 = arith.constant 0 : index
    %c0_214 = arith.constant 0 : index
    %259 = vector.load %arg4[%c5_212, %c0_213, %c0_214] : memref<27x32x32xf32, #tpu.memory_space<vmem>>, vector<1x32x32xf32>
    %260 = vector.shape_cast %259 : vector<1x32x32xf32> to vector<32x32xf32>
    %cst_215 = arith.constant dense<0.000000e+00> : vector<32x256xf32>
    %261 = tpu.matmul %260, %258, %cst_215 {dimension_numbers = #tpu.dot_dimension_numbers<[1], [0], [0], [1], [0, 0, 1, 1], [], []>} : vector<32x32xf32>, vector<32x256xf32>, vector<32x256xf32> -> vector<32x256xf32>
    %262 = arith.addf %254, %261 : vector<32x256xf32>
    %c0_216 = arith.constant 0 : index
    %c71_217 = arith.constant 71 : index
    %263 = vector.load %arg11[%c0_216, %c71_217] : memref<32x512xf32, #tpu.memory_space<vmem>>, vector<32x256xf32>
    %c6_218 = arith.constant 6 : index
    %c0_219 = arith.constant 0 : index
    %264 = vector.load %arg8[%c6_218, %c0_219] : memref<27x256xf32, #tpu.memory_space<vmem>>, vector<1x256xf32>
    %265 = vector.broadcast %264 : vector<1x256xf32> to vector<32x256xf32>
    %266 = arith.mulf %263, %265 : vector<32x256xf32>
    %c6_220 = arith.constant 6 : index
    %c0_221 = arith.constant 0 : index
    %c0_222 = arith.constant 0 : index
    %267 = vector.load %arg4[%c6_220, %c0_221, %c0_222] : memref<27x32x32xf32, #tpu.memory_space<vmem>>, vector<1x32x32xf32>
    %268 = vector.shape_cast %267 : vector<1x32x32xf32> to vector<32x32xf32>
    %cst_223 = arith.constant dense<0.000000e+00> : vector<32x256xf32>
    %269 = tpu.matmul %268, %266, %cst_223 {dimension_numbers = #tpu.dot_dimension_numbers<[1], [0], [0], [1], [0, 0, 1, 1], [], []>} : vector<32x32xf32>, vector<32x256xf32>, vector<32x256xf32> -> vector<32x256xf32>
    %270 = arith.addf %262, %269 : vector<32x256xf32>
    %c0_224 = arith.constant 0 : index
    %c72_225 = arith.constant 72 : index
    %271 = vector.load %arg11[%c0_224, %c72_225] : memref<32x512xf32, #tpu.memory_space<vmem>>, vector<32x256xf32>
    %c7_226 = arith.constant 7 : index
    %c0_227 = arith.constant 0 : index
    %272 = vector.load %arg8[%c7_226, %c0_227] : memref<27x256xf32, #tpu.memory_space<vmem>>, vector<1x256xf32>
    %273 = vector.broadcast %272 : vector<1x256xf32> to vector<32x256xf32>
    %274 = arith.mulf %271, %273 : vector<32x256xf32>
    %c7_228 = arith.constant 7 : index
    %c0_229 = arith.constant 0 : index
    %c0_230 = arith.constant 0 : index
    %275 = vector.load %arg4[%c7_228, %c0_229, %c0_230] : memref<27x32x32xf32, #tpu.memory_space<vmem>>, vector<1x32x32xf32>
    %276 = vector.shape_cast %275 : vector<1x32x32xf32> to vector<32x32xf32>
    %cst_231 = arith.constant dense<0.000000e+00> : vector<32x256xf32>
    %277 = tpu.matmul %276, %274, %cst_231 {dimension_numbers = #tpu.dot_dimension_numbers<[1], [0], [0], [1], [0, 0, 1, 1], [], []>} : vector<32x32xf32>, vector<32x256xf32>, vector<32x256xf32> -> vector<32x256xf32>
    %278 = arith.addf %270, %277 : vector<32x256xf32>
    %c0_232 = arith.constant 0 : index
    %c73_233 = arith.constant 73 : index
    %279 = vector.load %arg11[%c0_232, %c73_233] : memref<32x512xf32, #tpu.memory_space<vmem>>, vector<32x256xf32>
    %c8_234 = arith.constant 8 : index
    %c0_235 = arith.constant 0 : index
    %280 = vector.load %arg8[%c8_234, %c0_235] : memref<27x256xf32, #tpu.memory_space<vmem>>, vector<1x256xf32>
    %281 = vector.broadcast %280 : vector<1x256xf32> to vector<32x256xf32>
    %282 = arith.mulf %279, %281 : vector<32x256xf32>
    %c8_236 = arith.constant 8 : index
    %c0_237 = arith.constant 0 : index
    %c0_238 = arith.constant 0 : index
    %283 = vector.load %arg4[%c8_236, %c0_237, %c0_238] : memref<27x32x32xf32, #tpu.memory_space<vmem>>, vector<1x32x32xf32>
    %284 = vector.shape_cast %283 : vector<1x32x32xf32> to vector<32x32xf32>
    %cst_239 = arith.constant dense<0.000000e+00> : vector<32x256xf32>
    %285 = tpu.matmul %284, %282, %cst_239 {dimension_numbers = #tpu.dot_dimension_numbers<[1], [0], [0], [1], [0, 0, 1, 1], [], []>} : vector<32x32xf32>, vector<32x256xf32>, vector<32x256xf32> -> vector<32x256xf32>
    %286 = arith.addf %278, %285 : vector<32x256xf32>
    %c0_240 = arith.constant 0 : index
    %c119_241 = arith.constant 119 : index
    %287 = vector.load %arg11[%c0_240, %c119_241] : memref<32x512xf32, #tpu.memory_space<vmem>>, vector<32x256xf32>
    %c9_242 = arith.constant 9 : index
    %c0_243 = arith.constant 0 : index
    %288 = vector.load %arg8[%c9_242, %c0_243] : memref<27x256xf32, #tpu.memory_space<vmem>>, vector<1x256xf32>
    %289 = vector.broadcast %288 : vector<1x256xf32> to vector<32x256xf32>
    %290 = arith.mulf %287, %289 : vector<32x256xf32>
    %c9_244 = arith.constant 9 : index
    %c0_245 = arith.constant 0 : index
    %c0_246 = arith.constant 0 : index
    %291 = vector.load %arg4[%c9_244, %c0_245, %c0_246] : memref<27x32x32xf32, #tpu.memory_space<vmem>>, vector<1x32x32xf32>
    %292 = vector.shape_cast %291 : vector<1x32x32xf32> to vector<32x32xf32>
    %cst_247 = arith.constant dense<0.000000e+00> : vector<32x256xf32>
    %293 = tpu.matmul %292, %290, %cst_247 {dimension_numbers = #tpu.dot_dimension_numbers<[1], [0], [0], [1], [0, 0, 1, 1], [], []>} : vector<32x32xf32>, vector<32x256xf32>, vector<32x256xf32> -> vector<32x256xf32>
    %294 = arith.addf %286, %293 : vector<32x256xf32>
    %c0_248 = arith.constant 0 : index
    %c120_249 = arith.constant 120 : index
    %295 = vector.load %arg11[%c0_248, %c120_249] : memref<32x512xf32, #tpu.memory_space<vmem>>, vector<32x256xf32>
    %c10_250 = arith.constant 10 : index
    %c0_251 = arith.constant 0 : index
    %296 = vector.load %arg8[%c10_250, %c0_251] : memref<27x256xf32, #tpu.memory_space<vmem>>, vector<1x256xf32>
    %297 = vector.broadcast %296 : vector<1x256xf32> to vector<32x256xf32>
    %298 = arith.mulf %295, %297 : vector<32x256xf32>
    %c10_252 = arith.constant 10 : index
    %c0_253 = arith.constant 0 : index
    %c0_254 = arith.constant 0 : index
    %299 = vector.load %arg4[%c10_252, %c0_253, %c0_254] : memref<27x32x32xf32, #tpu.memory_space<vmem>>, vector<1x32x32xf32>
    %300 = vector.shape_cast %299 : vector<1x32x32xf32> to vector<32x32xf32>
    %cst_255 = arith.constant dense<0.000000e+00> : vector<32x256xf32>
    %301 = tpu.matmul %300, %298, %cst_255 {dimension_numbers = #tpu.dot_dimension_numbers<[1], [0], [0], [1], [0, 0, 1, 1], [], []>} : vector<32x32xf32>, vector<32x256xf32>, vector<32x256xf32> -> vector<32x256xf32>
    %302 = arith.addf %294, %301 : vector<32x256xf32>
    %c0_256 = arith.constant 0 : index
    %c121_257 = arith.constant 121 : index
    %303 = vector.load %arg11[%c0_256, %c121_257] : memref<32x512xf32, #tpu.memory_space<vmem>>, vector<32x256xf32>
    %c11_258 = arith.constant 11 : index
    %c0_259 = arith.constant 0 : index
    %304 = vector.load %arg8[%c11_258, %c0_259] : memref<27x256xf32, #tpu.memory_space<vmem>>, vector<1x256xf32>
    %305 = vector.broadcast %304 : vector<1x256xf32> to vector<32x256xf32>
    %306 = arith.mulf %303, %305 : vector<32x256xf32>
    %c11_260 = arith.constant 11 : index
    %c0_261 = arith.constant 0 : index
    %c0_262 = arith.constant 0 : index
    %307 = vector.load %arg4[%c11_260, %c0_261, %c0_262] : memref<27x32x32xf32, #tpu.memory_space<vmem>>, vector<1x32x32xf32>
    %308 = vector.shape_cast %307 : vector<1x32x32xf32> to vector<32x32xf32>
    %cst_263 = arith.constant dense<0.000000e+00> : vector<32x256xf32>
    %309 = tpu.matmul %308, %306, %cst_263 {dimension_numbers = #tpu.dot_dimension_numbers<[1], [0], [0], [1], [0, 0, 1, 1], [], []>} : vector<32x32xf32>, vector<32x256xf32>, vector<32x256xf32> -> vector<32x256xf32>
    %310 = arith.addf %302, %309 : vector<32x256xf32>
    %c0_264 = arith.constant 0 : index
    %c127_265 = arith.constant 127 : index
    %311 = vector.load %arg11[%c0_264, %c127_265] : memref<32x512xf32, #tpu.memory_space<vmem>>, vector<32x256xf32>
    %c12_266 = arith.constant 12 : index
    %c0_267 = arith.constant 0 : index
    %312 = vector.load %arg8[%c12_266, %c0_267] : memref<27x256xf32, #tpu.memory_space<vmem>>, vector<1x256xf32>
    %313 = vector.broadcast %312 : vector<1x256xf32> to vector<32x256xf32>
    %314 = arith.mulf %311, %313 : vector<32x256xf32>
    %c12_268 = arith.constant 12 : index
    %c0_269 = arith.constant 0 : index
    %c0_270 = arith.constant 0 : index
    %315 = vector.load %arg4[%c12_268, %c0_269, %c0_270] : memref<27x32x32xf32, #tpu.memory_space<vmem>>, vector<1x32x32xf32>
    %316 = vector.shape_cast %315 : vector<1x32x32xf32> to vector<32x32xf32>
    %cst_271 = arith.constant dense<0.000000e+00> : vector<32x256xf32>
    %317 = tpu.matmul %316, %314, %cst_271 {dimension_numbers = #tpu.dot_dimension_numbers<[1], [0], [0], [1], [0, 0, 1, 1], [], []>} : vector<32x32xf32>, vector<32x256xf32>, vector<32x256xf32> -> vector<32x256xf32>
    %318 = arith.addf %310, %317 : vector<32x256xf32>
    %c0_272 = arith.constant 0 : index
    %c128_273 = arith.constant 128 : index
    %319 = vector.load %arg11[%c0_272, %c128_273] : memref<32x512xf32, #tpu.memory_space<vmem>>, vector<32x256xf32>
    %c13_274 = arith.constant 13 : index
    %c0_275 = arith.constant 0 : index
    %c0_276 = arith.constant 0 : index
    %320 = vector.load %arg4[%c13_274, %c0_275, %c0_276] : memref<27x32x32xf32, #tpu.memory_space<vmem>>, vector<1x32x32xf32>
    %321 = vector.shape_cast %320 : vector<1x32x32xf32> to vector<32x32xf32>
    %cst_277 = arith.constant dense<0.000000e+00> : vector<32x256xf32>
    %322 = tpu.matmul %321, %319, %cst_277 {dimension_numbers = #tpu.dot_dimension_numbers<[1], [0], [0], [1], [0, 0, 1, 1], [], []>} : vector<32x32xf32>, vector<32x256xf32>, vector<32x256xf32> -> vector<32x256xf32>
    %323 = arith.addf %318, %322 : vector<32x256xf32>
    %c0_278 = arith.constant 0 : index
    %c129_279 = arith.constant 129 : index
    %324 = vector.load %arg11[%c0_278, %c129_279] : memref<32x512xf32, #tpu.memory_space<vmem>>, vector<32x256xf32>
    %c14_280 = arith.constant 14 : index
    %c0_281 = arith.constant 0 : index
    %325 = vector.load %arg8[%c14_280, %c0_281] : memref<27x256xf32, #tpu.memory_space<vmem>>, vector<1x256xf32>
    %326 = vector.broadcast %325 : vector<1x256xf32> to vector<32x256xf32>
    %327 = arith.mulf %324, %326 : vector<32x256xf32>
    %c14_282 = arith.constant 14 : index
    %c0_283 = arith.constant 0 : index
    %c0_284 = arith.constant 0 : index
    %328 = vector.load %arg4[%c14_282, %c0_283, %c0_284] : memref<27x32x32xf32, #tpu.memory_space<vmem>>, vector<1x32x32xf32>
    %329 = vector.shape_cast %328 : vector<1x32x32xf32> to vector<32x32xf32>
    %cst_285 = arith.constant dense<0.000000e+00> : vector<32x256xf32>
    %330 = tpu.matmul %329, %327, %cst_285 {dimension_numbers = #tpu.dot_dimension_numbers<[1], [0], [0], [1], [0, 0, 1, 1], [], []>} : vector<32x32xf32>, vector<32x256xf32>, vector<32x256xf32> -> vector<32x256xf32>
    %331 = arith.addf %323, %330 : vector<32x256xf32>
    %c0_286 = arith.constant 0 : index
    %c135_287 = arith.constant 135 : index
    %332 = vector.load %arg11[%c0_286, %c135_287] : memref<32x512xf32, #tpu.memory_space<vmem>>, vector<32x256xf32>
    %c15_288 = arith.constant 15 : index
    %c0_289 = arith.constant 0 : index
    %333 = vector.load %arg8[%c15_288, %c0_289] : memref<27x256xf32, #tpu.memory_space<vmem>>, vector<1x256xf32>
    %334 = vector.broadcast %333 : vector<1x256xf32> to vector<32x256xf32>
    %335 = arith.mulf %332, %334 : vector<32x256xf32>
    %c15_290 = arith.constant 15 : index
    %c0_291 = arith.constant 0 : index
    %c0_292 = arith.constant 0 : index
    %336 = vector.load %arg4[%c15_290, %c0_291, %c0_292] : memref<27x32x32xf32, #tpu.memory_space<vmem>>, vector<1x32x32xf32>
    %337 = vector.shape_cast %336 : vector<1x32x32xf32> to vector<32x32xf32>
    %cst_293 = arith.constant dense<0.000000e+00> : vector<32x256xf32>
    %338 = tpu.matmul %337, %335, %cst_293 {dimension_numbers = #tpu.dot_dimension_numbers<[1], [0], [0], [1], [0, 0, 1, 1], [], []>} : vector<32x32xf32>, vector<32x256xf32>, vector<32x256xf32> -> vector<32x256xf32>
    %339 = arith.addf %331, %338 : vector<32x256xf32>
    %c0_294 = arith.constant 0 : index
    %c136_295 = arith.constant 136 : index
    %340 = vector.load %arg11[%c0_294, %c136_295] : memref<32x512xf32, #tpu.memory_space<vmem>>, vector<32x256xf32>
    %c16_296 = arith.constant 16 : index
    %c0_297 = arith.constant 0 : index
    %341 = vector.load %arg8[%c16_296, %c0_297] : memref<27x256xf32, #tpu.memory_space<vmem>>, vector<1x256xf32>
    %342 = vector.broadcast %341 : vector<1x256xf32> to vector<32x256xf32>
    %343 = arith.mulf %340, %342 : vector<32x256xf32>
    %c16_298 = arith.constant 16 : index
    %c0_299 = arith.constant 0 : index
    %c0_300 = arith.constant 0 : index
    %344 = vector.load %arg4[%c16_298, %c0_299, %c0_300] : memref<27x32x32xf32, #tpu.memory_space<vmem>>, vector<1x32x32xf32>
    %345 = vector.shape_cast %344 : vector<1x32x32xf32> to vector<32x32xf32>
    %cst_301 = arith.constant dense<0.000000e+00> : vector<32x256xf32>
    %346 = tpu.matmul %345, %343, %cst_301 {dimension_numbers = #tpu.dot_dimension_numbers<[1], [0], [0], [1], [0, 0, 1, 1], [], []>} : vector<32x32xf32>, vector<32x256xf32>, vector<32x256xf32> -> vector<32x256xf32>
    %347 = arith.addf %339, %346 : vector<32x256xf32>
    %c0_302 = arith.constant 0 : index
    %c137_303 = arith.constant 137 : index
    %348 = vector.load %arg11[%c0_302, %c137_303] : memref<32x512xf32, #tpu.memory_space<vmem>>, vector<32x256xf32>
    %c17_304 = arith.constant 17 : index
    %c0_305 = arith.constant 0 : index
    %349 = vector.load %arg8[%c17_304, %c0_305] : memref<27x256xf32, #tpu.memory_space<vmem>>, vector<1x256xf32>
    %350 = vector.broadcast %349 : vector<1x256xf32> to vector<32x256xf32>
    %351 = arith.mulf %348, %350 : vector<32x256xf32>
    %c17_306 = arith.constant 17 : index
    %c0_307 = arith.constant 0 : index
    %c0_308 = arith.constant 0 : index
    %352 = vector.load %arg4[%c17_306, %c0_307, %c0_308] : memref<27x32x32xf32, #tpu.memory_space<vmem>>, vector<1x32x32xf32>
    %353 = vector.shape_cast %352 : vector<1x32x32xf32> to vector<32x32xf32>
    %cst_309 = arith.constant dense<0.000000e+00> : vector<32x256xf32>
    %354 = tpu.matmul %353, %351, %cst_309 {dimension_numbers = #tpu.dot_dimension_numbers<[1], [0], [0], [1], [0, 0, 1, 1], [], []>} : vector<32x32xf32>, vector<32x256xf32>, vector<32x256xf32> -> vector<32x256xf32>
    %355 = arith.addf %347, %354 : vector<32x256xf32>
    %c0_310 = arith.constant 0 : index
    %c183_311 = arith.constant 183 : index
    %356 = vector.load %arg11[%c0_310, %c183_311] : memref<32x512xf32, #tpu.memory_space<vmem>>, vector<32x256xf32>
    %c18_312 = arith.constant 18 : index
    %c0_313 = arith.constant 0 : index
    %357 = vector.load %arg8[%c18_312, %c0_313] : memref<27x256xf32, #tpu.memory_space<vmem>>, vector<1x256xf32>
    %358 = vector.broadcast %357 : vector<1x256xf32> to vector<32x256xf32>
    %359 = arith.mulf %356, %358 : vector<32x256xf32>
    %c18_314 = arith.constant 18 : index
    %c0_315 = arith.constant 0 : index
    %c0_316 = arith.constant 0 : index
    %360 = vector.load %arg4[%c18_314, %c0_315, %c0_316] : memref<27x32x32xf32, #tpu.memory_space<vmem>>, vector<1x32x32xf32>
    %361 = vector.shape_cast %360 : vector<1x32x32xf32> to vector<32x32xf32>
    %cst_317 = arith.constant dense<0.000000e+00> : vector<32x256xf32>
    %362 = tpu.matmul %361, %359, %cst_317 {dimension_numbers = #tpu.dot_dimension_numbers<[1], [0], [0], [1], [0, 0, 1, 1], [], []>} : vector<32x32xf32>, vector<32x256xf32>, vector<32x256xf32> -> vector<32x256xf32>
    %363 = arith.addf %355, %362 : vector<32x256xf32>
    %c0_318 = arith.constant 0 : index
    %c184_319 = arith.constant 184 : index
    %364 = vector.load %arg11[%c0_318, %c184_319] : memref<32x512xf32, #tpu.memory_space<vmem>>, vector<32x256xf32>
    %c19_320 = arith.constant 19 : index
    %c0_321 = arith.constant 0 : index
    %365 = vector.load %arg8[%c19_320, %c0_321] : memref<27x256xf32, #tpu.memory_space<vmem>>, vector<1x256xf32>
    %366 = vector.broadcast %365 : vector<1x256xf32> to vector<32x256xf32>
    %367 = arith.mulf %364, %366 : vector<32x256xf32>
    %c19_322 = arith.constant 19 : index
    %c0_323 = arith.constant 0 : index
    %c0_324 = arith.constant 0 : index
    %368 = vector.load %arg4[%c19_322, %c0_323, %c0_324] : memref<27x32x32xf32, #tpu.memory_space<vmem>>, vector<1x32x32xf32>
    %369 = vector.shape_cast %368 : vector<1x32x32xf32> to vector<32x32xf32>
    %cst_325 = arith.constant dense<0.000000e+00> : vector<32x256xf32>
    %370 = tpu.matmul %369, %367, %cst_325 {dimension_numbers = #tpu.dot_dimension_numbers<[1], [0], [0], [1], [0, 0, 1, 1], [], []>} : vector<32x32xf32>, vector<32x256xf32>, vector<32x256xf32> -> vector<32x256xf32>
    %371 = arith.addf %363, %370 : vector<32x256xf32>
    %c0_326 = arith.constant 0 : index
    %c185_327 = arith.constant 185 : index
    %372 = vector.load %arg11[%c0_326, %c185_327] : memref<32x512xf32, #tpu.memory_space<vmem>>, vector<32x256xf32>
    %c20_328 = arith.constant 20 : index
    %c0_329 = arith.constant 0 : index
    %373 = vector.load %arg8[%c20_328, %c0_329] : memref<27x256xf32, #tpu.memory_space<vmem>>, vector<1x256xf32>
    %374 = vector.broadcast %373 : vector<1x256xf32> to vector<32x256xf32>
    %375 = arith.mulf %372, %374 : vector<32x256xf32>
    %c20_330 = arith.constant 20 : index
    %c0_331 = arith.constant 0 : index
    %c0_332 = arith.constant 0 : index
    %376 = vector.load %arg4[%c20_330, %c0_331, %c0_332] : memref<27x32x32xf32, #tpu.memory_space<vmem>>, vector<1x32x32xf32>
    %377 = vector.shape_cast %376 : vector<1x32x32xf32> to vector<32x32xf32>
    %cst_333 = arith.constant dense<0.000000e+00> : vector<32x256xf32>
    %378 = tpu.matmul %377, %375, %cst_333 {dimension_numbers = #tpu.dot_dimension_numbers<[1], [0], [0], [1], [0, 0, 1, 1], [], []>} : vector<32x32xf32>, vector<32x256xf32>, vector<32x256xf32> -> vector<32x256xf32>
    %379 = arith.addf %371, %378 : vector<32x256xf32>
    %c0_334 = arith.constant 0 : index
    %c191_335 = arith.constant 191 : index
    %380 = vector.load %arg11[%c0_334, %c191_335] : memref<32x512xf32, #tpu.memory_space<vmem>>, vector<32x256xf32>
    %c21_336 = arith.constant 21 : index
    %c0_337 = arith.constant 0 : index
    %381 = vector.load %arg8[%c21_336, %c0_337] : memref<27x256xf32, #tpu.memory_space<vmem>>, vector<1x256xf32>
    %382 = vector.broadcast %381 : vector<1x256xf32> to vector<32x256xf32>
    %383 = arith.mulf %380, %382 : vector<32x256xf32>
    %c21_338 = arith.constant 21 : index
    %c0_339 = arith.constant 0 : index
    %c0_340 = arith.constant 0 : index
    %384 = vector.load %arg4[%c21_338, %c0_339, %c0_340] : memref<27x32x32xf32, #tpu.memory_space<vmem>>, vector<1x32x32xf32>
    %385 = vector.shape_cast %384 : vector<1x32x32xf32> to vector<32x32xf32>
    %cst_341 = arith.constant dense<0.000000e+00> : vector<32x256xf32>
    %386 = tpu.matmul %385, %383, %cst_341 {dimension_numbers = #tpu.dot_dimension_numbers<[1], [0], [0], [1], [0, 0, 1, 1], [], []>} : vector<32x32xf32>, vector<32x256xf32>, vector<32x256xf32> -> vector<32x256xf32>
    %387 = arith.addf %379, %386 : vector<32x256xf32>
    %c0_342 = arith.constant 0 : index
    %c192_343 = arith.constant 192 : index
    %388 = vector.load %arg11[%c0_342, %c192_343] : memref<32x512xf32, #tpu.memory_space<vmem>>, vector<32x256xf32>
    %c22_344 = arith.constant 22 : index
    %c0_345 = arith.constant 0 : index
    %c0_346 = arith.constant 0 : index
    %389 = vector.load %arg4[%c22_344, %c0_345, %c0_346] : memref<27x32x32xf32, #tpu.memory_space<vmem>>, vector<1x32x32xf32>
    %390 = vector.shape_cast %389 : vector<1x32x32xf32> to vector<32x32xf32>
    %cst_347 = arith.constant dense<0.000000e+00> : vector<32x256xf32>
    %391 = tpu.matmul %390, %388, %cst_347 {dimension_numbers = #tpu.dot_dimension_numbers<[1], [0], [0], [1], [0, 0, 1, 1], [], []>} : vector<32x32xf32>, vector<32x256xf32>, vector<32x256xf32> -> vector<32x256xf32>
    %392 = arith.addf %387, %391 : vector<32x256xf32>
    %c0_348 = arith.constant 0 : index
    %c193_349 = arith.constant 193 : index
    %393 = vector.load %arg11[%c0_348, %c193_349] : memref<32x512xf32, #tpu.memory_space<vmem>>, vector<32x256xf32>
    %c23_350 = arith.constant 23 : index
    %c0_351 = arith.constant 0 : index
    %394 = vector.load %arg8[%c23_350, %c0_351] : memref<27x256xf32, #tpu.memory_space<vmem>>, vector<1x256xf32>
    %395 = vector.broadcast %394 : vector<1x256xf32> to vector<32x256xf32>
    %396 = arith.mulf %393, %395 : vector<32x256xf32>
    %c23_352 = arith.constant 23 : index
    %c0_353 = arith.constant 0 : index
    %c0_354 = arith.constant 0 : index
    %397 = vector.load %arg4[%c23_352, %c0_353, %c0_354] : memref<27x32x32xf32, #tpu.memory_space<vmem>>, vector<1x32x32xf32>
    %398 = vector.shape_cast %397 : vector<1x32x32xf32> to vector<32x32xf32>
    %cst_355 = arith.constant dense<0.000000e+00> : vector<32x256xf32>
    %399 = tpu.matmul %398, %396, %cst_355 {dimension_numbers = #tpu.dot_dimension_numbers<[1], [0], [0], [1], [0, 0, 1, 1], [], []>} : vector<32x32xf32>, vector<32x256xf32>, vector<32x256xf32> -> vector<32x256xf32>
    %400 = arith.addf %392, %399 : vector<32x256xf32>
    %c0_356 = arith.constant 0 : index
    %c199_357 = arith.constant 199 : index
    %401 = vector.load %arg11[%c0_356, %c199_357] : memref<32x512xf32, #tpu.memory_space<vmem>>, vector<32x256xf32>
    %c24_358 = arith.constant 24 : index
    %c0_359 = arith.constant 0 : index
    %402 = vector.load %arg8[%c24_358, %c0_359] : memref<27x256xf32, #tpu.memory_space<vmem>>, vector<1x256xf32>
    %403 = vector.broadcast %402 : vector<1x256xf32> to vector<32x256xf32>
    %404 = arith.mulf %401, %403 : vector<32x256xf32>
    %c24_360 = arith.constant 24 : index
    %c0_361 = arith.constant 0 : index
    %c0_362 = arith.constant 0 : index
    %405 = vector.load %arg4[%c24_360, %c0_361, %c0_362] : memref<27x32x32xf32, #tpu.memory_space<vmem>>, vector<1x32x32xf32>
    %406 = vector.shape_cast %405 : vector<1x32x32xf32> to vector<32x32xf32>
    %cst_363 = arith.constant dense<0.000000e+00> : vector<32x256xf32>
    %407 = tpu.matmul %406, %404, %cst_363 {dimension_numbers = #tpu.dot_dimension_numbers<[1], [0], [0], [1], [0, 0, 1, 1], [], []>} : vector<32x32xf32>, vector<32x256xf32>, vector<32x256xf32> -> vector<32x256xf32>
    %408 = arith.addf %400, %407 : vector<32x256xf32>
    %c0_364 = arith.constant 0 : index
    %c200_365 = arith.constant 200 : index
    %409 = vector.load %arg11[%c0_364, %c200_365] : memref<32x512xf32, #tpu.memory_space<vmem>>, vector<32x256xf32>
    %c25_366 = arith.constant 25 : index
    %c0_367 = arith.constant 0 : index
    %410 = vector.load %arg8[%c25_366, %c0_367] : memref<27x256xf32, #tpu.memory_space<vmem>>, vector<1x256xf32>
    %411 = vector.broadcast %410 : vector<1x256xf32> to vector<32x256xf32>
    %412 = arith.mulf %409, %411 : vector<32x256xf32>
    %c25_368 = arith.constant 25 : index
    %c0_369 = arith.constant 0 : index
    %c0_370 = arith.constant 0 : index
    %413 = vector.load %arg4[%c25_368, %c0_369, %c0_370] : memref<27x32x32xf32, #tpu.memory_space<vmem>>, vector<1x32x32xf32>
    %414 = vector.shape_cast %413 : vector<1x32x32xf32> to vector<32x32xf32>
    %cst_371 = arith.constant dense<0.000000e+00> : vector<32x256xf32>
    %415 = tpu.matmul %414, %412, %cst_371 {dimension_numbers = #tpu.dot_dimension_numbers<[1], [0], [0], [1], [0, 0, 1, 1], [], []>} : vector<32x32xf32>, vector<32x256xf32>, vector<32x256xf32> -> vector<32x256xf32>
    %416 = arith.addf %408, %415 : vector<32x256xf32>
    %c0_372 = arith.constant 0 : index
    %c201_373 = arith.constant 201 : index
    %417 = vector.load %arg11[%c0_372, %c201_373] : memref<32x512xf32, #tpu.memory_space<vmem>>, vector<32x256xf32>
    %c26_374 = arith.constant 26 : index
    %c0_375 = arith.constant 0 : index
    %418 = vector.load %arg8[%c26_374, %c0_375] : memref<27x256xf32, #tpu.memory_space<vmem>>, vector<1x256xf32>
    %419 = vector.broadcast %418 : vector<1x256xf32> to vector<32x256xf32>
    %420 = arith.mulf %417, %419 : vector<32x256xf32>
    %c26_376 = arith.constant 26 : index
    %c0_377 = arith.constant 0 : index
    %c0_378 = arith.constant 0 : index
    %421 = vector.load %arg4[%c26_376, %c0_377, %c0_378] : memref<27x32x32xf32, #tpu.memory_space<vmem>>, vector<1x32x32xf32>
    %422 = vector.shape_cast %421 : vector<1x32x32xf32> to vector<32x32xf32>
    %cst_379 = arith.constant dense<0.000000e+00> : vector<32x256xf32>
    %423 = tpu.matmul %422, %420, %cst_379 {dimension_numbers = #tpu.dot_dimension_numbers<[1], [0], [0], [1], [0, 0, 1, 1], [], []>} : vector<32x32xf32>, vector<32x256xf32>, vector<32x256xf32> -> vector<32x256xf32>
    %424 = arith.addf %416, %423 : vector<32x256xf32>
    %c0_380 = arith.constant 0 : index
    %c0_381 = arith.constant 0 : index
    %425 = vector.load %arg5[%c0_380, %c0_381] : memref<32x1xf32, #tpu.memory_space<vmem>>, vector<32x1xf32>
    %426 = vector.broadcast %425 : vector<32x1xf32> to vector<32x256xf32>
    %427 = arith.addf %424, %426 : vector<32x256xf32>
    %cst_382 = arith.constant 0.000000e+00 : f32
    %428 = vector.broadcast %cst_382 : f32 to vector<32x256xf32>
    %429 = arith.maximumf %427, %428 : vector<32x256xf32>
    %c0_383 = arith.constant 0 : index
    %c0_384 = arith.constant 0 : index
    %430 = vector.load %arg7[%c0_383, %c0_384] : memref<4x1xf32, #tpu.memory_space<vmem>>, vector<4x1xf32>
    %c0_385 = arith.constant 0 : index
    %c0_386 = arith.constant 0 : index
    %c0_387 = arith.constant 0 : index
    %431 = vector.load %arg9[%c0_385, %c0_386, %c0_387] : memref<3x256x4xf32, #tpu.memory_space<vmem>>, vector<1x256x4xf32>
    %432 = vector.shape_cast %431 : vector<1x256x4xf32> to vector<256x4xf32>
    %cst_388 = arith.constant dense<0.000000e+00> : vector<32x4xf32>
    %433 = tpu.matmul %429, %432, %cst_388 {dimension_numbers = #tpu.dot_dimension_numbers<[1], [0], [0], [1], [0, 0, 1, 1], [], []>} : vector<32x256xf32>, vector<256x4xf32>, vector<32x4xf32> -> vector<32x4xf32>
    %c0_389 = arith.constant 0 : index
    %c0_390 = arith.constant 0 : index
    %c0_391 = arith.constant 0 : index
    %434 = vector.load %arg6[%c0_389, %c0_390, %c0_391] : memref<3x4x32xf32, #tpu.memory_space<vmem>>, vector<1x4x32xf32>
    %435 = vector.shape_cast %434 : vector<1x4x32xf32> to vector<4x32xf32>
    %cst_392 = arith.constant dense<0.000000e+00> : vector<4x4xf32>
    %436 = tpu.matmul %435, %433, %cst_392 {dimension_numbers = #tpu.dot_dimension_numbers<[1], [0], [0], [1], [0, 0, 1, 1], [], []>} : vector<4x32xf32>, vector<32x4xf32>, vector<4x4xf32> -> vector<4x4xf32>
    %437 = vector.broadcast %430 : vector<4x1xf32> to vector<4x4xf32>
    %438 = arith.addf %437, %436 : vector<4x4xf32>
    %c1_393 = arith.constant 1 : index
    %c0_394 = arith.constant 0 : index
    %c0_395 = arith.constant 0 : index
    %439 = vector.load %arg9[%c1_393, %c0_394, %c0_395] : memref<3x256x4xf32, #tpu.memory_space<vmem>>, vector<1x256x4xf32>
    %440 = vector.shape_cast %439 : vector<1x256x4xf32> to vector<256x4xf32>
    %cst_396 = arith.constant dense<0.000000e+00> : vector<32x4xf32>
    %441 = tpu.matmul %429, %440, %cst_396 {dimension_numbers = #tpu.dot_dimension_numbers<[1], [0], [0], [1], [0, 0, 1, 1], [], []>} : vector<32x256xf32>, vector<256x4xf32>, vector<32x4xf32> -> vector<32x4xf32>
    %c1_397 = arith.constant 1 : index
    %c0_398 = arith.constant 0 : index
    %c0_399 = arith.constant 0 : index
    %442 = vector.load %arg6[%c1_397, %c0_398, %c0_399] : memref<3x4x32xf32, #tpu.memory_space<vmem>>, vector<1x4x32xf32>
    %443 = vector.shape_cast %442 : vector<1x4x32xf32> to vector<4x32xf32>
    %cst_400 = arith.constant dense<0.000000e+00> : vector<4x4xf32>
    %444 = tpu.matmul %443, %441, %cst_400 {dimension_numbers = #tpu.dot_dimension_numbers<[1], [0], [0], [1], [0, 0, 1, 1], [], []>} : vector<4x32xf32>, vector<32x4xf32>, vector<4x4xf32> -> vector<4x4xf32>
    %445 = arith.addf %438, %444 : vector<4x4xf32>
    %c2_401 = arith.constant 2 : index
    %c0_402 = arith.constant 0 : index
    %c0_403 = arith.constant 0 : index
    %446 = vector.load %arg9[%c2_401, %c0_402, %c0_403] : memref<3x256x4xf32, #tpu.memory_space<vmem>>, vector<1x256x4xf32>
    %447 = vector.shape_cast %446 : vector<1x256x4xf32> to vector<256x4xf32>
    %cst_404 = arith.constant dense<0.000000e+00> : vector<32x4xf32>
    %448 = tpu.matmul %429, %447, %cst_404 {dimension_numbers = #tpu.dot_dimension_numbers<[1], [0], [0], [1], [0, 0, 1, 1], [], []>} : vector<32x256xf32>, vector<256x4xf32>, vector<32x4xf32> -> vector<32x4xf32>
    %c2_405 = arith.constant 2 : index
    %c0_406 = arith.constant 0 : index
    %c0_407 = arith.constant 0 : index
    %449 = vector.load %arg6[%c2_405, %c0_406, %c0_407] : memref<3x4x32xf32, #tpu.memory_space<vmem>>, vector<1x4x32xf32>
    %450 = vector.shape_cast %449 : vector<1x4x32xf32> to vector<4x32xf32>
    %cst_408 = arith.constant dense<0.000000e+00> : vector<4x4xf32>
    %451 = tpu.matmul %450, %448, %cst_408 {dimension_numbers = #tpu.dot_dimension_numbers<[1], [0], [0], [1], [0, 0, 1, 1], [], []>} : vector<4x32xf32>, vector<32x4xf32>, vector<4x4xf32> -> vector<4x4xf32>
    %452 = arith.addf %445, %451 : vector<4x4xf32>
    %cst_409 = arith.constant dense<0xFF800000> : vector<4xf32>
    %453 = vector.multi_reduction <maximumf>, %452, %cst_409 [0] : vector<4x4xf32> to vector<4xf32>
    %454 = vector.shape_cast %453 : vector<4xf32> to vector<1x4xf32>
    %455 = vector.broadcast %454 : vector<1x4xf32> to vector<4x4xf32>
    %456 = arith.subf %452, %455 : vector<4x4xf32>
    %457 = math.exp %456 : vector<4x4xf32>
    %cst_410 = arith.constant dense<0.000000e+00> : vector<4xf32>
    %458 = vector.multi_reduction <add>, %457, %cst_410 [0] : vector<4x4xf32> to vector<4xf32>
    %459 = vector.shape_cast %458 : vector<4xf32> to vector<1x4xf32>
    %460 = vector.broadcast %459 : vector<1x4xf32> to vector<4x4xf32>
    %461 = arith.divf %457, %460 : vector<4x4xf32>
    %c0_411 = arith.constant 0 : index
    %c0_412 = arith.constant 0 : index
    %c0_413 = arith.constant 0 : index
    %462 = vector.load %arg10[%c0_411, %c0_412, %c0_413] : memref<1x4x4xf32, #tpu.memory_space<vmem>>, vector<1x4x4xf32>
    %463 = vector.shape_cast %462 : vector<1x4x4xf32> to vector<4x4xf32>
    %464 = vector.shape_cast %461 : vector<4x4xf32> to vector<1x4x4xf32>
    tpu.vector_store %arg10[%c0_411, %c0_412, %c0_413], %464 {strides = array<i32>} : memref<1x4x4xf32, #tpu.memory_space<vmem>>, vector<1x4x4xf32>,
    return
  }
  func.func @transform_0(%arg0: i32) -> (i32, i32, i32) {
    %c0_i32 = arith.constant 0 : i32
    %c0_i32_0 = arith.constant 0 : i32
    %c0_i32_1 = arith.constant 0 : i32
    return %arg0, %c0_i32, %c0_i32_0 : i32, i32, i32
  }
  func.func @transform_1(%arg0: i32) -> (i32, i32, i32) {
    %c0_i32 = arith.constant 0 : i32
    %c0_i32_0 = arith.constant 0 : i32
    %c0_i32_1 = arith.constant 0 : i32
    %c0_i32_2 = arith.constant 0 : i32
    return %c0_i32, %c0_i32_0, %c0_i32_1 : i32, i32, i32
  }
  func.func @transform_2(%arg0: i32) -> (i32, i32) {
    %c0_i32 = arith.constant 0 : i32
    %c0_i32_0 = arith.constant 0 : i32
    %c0_i32_1 = arith.constant 0 : i32
    return %c0_i32, %c0_i32_0 : i32, i32
  }
  func.func @transform_3(%arg0: i32) -> (i32, i32, i32) {
    %c0_i32 = arith.constant 0 : i32
    %c0_i32_0 = arith.constant 0 : i32
    %c0_i32_1 = arith.constant 0 : i32
    %c0_i32_2 = arith.constant 0 : i32
    return %c0_i32, %c0_i32_0, %c0_i32_1 : i32, i32, i32
  }
  func.func @transform_4(%arg0: i32) -> (i32, i32) {
    %c0_i32 = arith.constant 0 : i32
    %c0_i32_0 = arith.constant 0 : i32
    %c0_i32_1 = arith.constant 0 : i32
    return %c0_i32, %c0_i32_0 : i32, i32
  }
  func.func @transform_5(%arg0: i32) -> (i32, i32, i32) {
    %c0_i32 = arith.constant 0 : i32
    %c0_i32_0 = arith.constant 0 : i32
    %c0_i32_1 = arith.constant 0 : i32
    %c0_i32_2 = arith.constant 0 : i32
    return %c0_i32, %c0_i32_0, %c0_i32_1 : i32, i32, i32
  }
  func.func @transform_6(%arg0: i32) -> (i32, i32) {
    %c0_i32 = arith.constant 0 : i32
    %c0_i32_0 = arith.constant 0 : i32
    %c0_i32_1 = arith.constant 0 : i32
    return %c0_i32, %c0_i32_0 : i32, i32
  }
  func.func @transform_7(%arg0: i32) -> (i32, i32) {
    %c0_i32 = arith.constant 0 : i32
    %c0_i32_0 = arith.constant 0 : i32
    %c0_i32_1 = arith.constant 0 : i32
    return %c0_i32, %c0_i32_0 : i32, i32
  }
  func.func @transform_8(%arg0: i32) -> (i32, i32, i32) {
    %c0_i32 = arith.constant 0 : i32
    %c0_i32_0 = arith.constant 0 : i32
    %c0_i32_1 = arith.constant 0 : i32
    %c0_i32_2 = arith.constant 0 : i32
    return %c0_i32, %c0_i32_0, %c0_i32_1 : i32, i32, i32
  }
  func.func @transform_9(%arg0: i32) -> (i32, i32, i32) {
    %c0_i32 = arith.constant 0 : i32
    %c0_i32_0 = arith.constant 0 : i32
    %c0_i32_1 = arith.constant 0 : i32
    return %arg0, %c0_i32, %c0_i32_0 : i32, i32, i32
  }
}

</mosaic_0001>

<llo_original>
// kernel: gating_pallas.1
$region0: #{gating_pallas.1}
  #allocation0 [shape = 'u32[]', space=smem, size = 0x4, offset = 0x4, fixed_abs, tag = 'smem constant byte address 0x4 - core index']
  #allocation1 [shape = 'u32[72,128]{1,0:T(1,128)}', space=vmem, size = 0x9000, scoped, tag = 'internal scratch']
  #allocation2 [shape = 'f32[32,512]{1,0:T(8,128)}', space=vmem, size = 0x10000, scoped, tag = 'scratch operand']
  %s0 = inlined_call_operand.vmem [shape: f32[2,32,256], index: 0, kind: input, shape index: {}]
  %s1 = inlined_call_operand.hbm [shape: f32[27,32,32], index: 1, kind: input, shape index: {}]
  %s2 = inlined_call_operand.vmem [shape: f32[32,1], index: 2, kind: input, shape index: {}]
  %s3 = inlined_call_operand.hbm [shape: f32[27,32,32], index: 3, kind: input, shape index: {}]
  %s4 = inlined_call_operand.vmem [shape: f32[32,1], index: 4, kind: input, shape index: {}]
  %s5 = inlined_call_operand.vmem [shape: f32[3,4,32], index: 5, kind: input, shape index: {}]
  %s6 = inlined_call_operand.vmem [shape: f32[4,1], index: 6, kind: input, shape index: {}]
  %s7 = inlined_call_operand.vmem [shape: f32[27,256], index: 7, kind: input, shape index: {}]
  %s8 = inlined_call_operand.hbm [shape: f32[3,256,4], index: 8, kind: input, shape index: {}]
  %s9 = inlined_call_operand.hbm [shape: f32[2,4,4], index: 9, kind: output, shape index: {}]
  %s10 = sld [smem:[#allocation0]]
  $region81: #{gating_pallas.1} parent=0
    _
  %s12 = ssub.s32 1, %s10
  %s13 = scalar_select 0, %s12, %s10
  $region1: #{gating_pallas.1} parent=0
    #allocation3 [shape = 'u8[442368]{0}', space=vmem, size = 0x6c000, scoped, tag = 'input window, operand 1, single buffered']
    #allocation4 [shape = 's32[2]{0}', space=sflag, size = 0x8, scoped, tag = 'scoped memory for gating_pallas.1']
    #allocation5 [shape = 's32[2]{0}', space=sflag, size = 0x8, scoped, tag = 'scoped memory for gating_pallas.1']
    #allocation6 [shape = 'u8[442368]{0}', space=vmem, size = 0x6c000, scoped, tag = 'input window, operand 3, single buffered']
    #allocation7 [shape = 's32[1]{0}', space=sflag, size = 0x4, scoped, tag = 'scoped memory for gating_pallas.1']
    #allocation8 [shape = 'u8[393216]{0}', space=vmem, size = 0x60000, scoped, tag = 'input window, operand 8, single buffered']
    #allocation9 [shape = 'u8[4096]{0}', space=vmem, size = 0x1000, scoped, tag = 'output window, operand 0']
    %14 = vsyncpa [#allocation4], 0
    %15 = vsyncpa [#allocation7], 0
    %16 = vsyncpa [#allocation5], 0
    %s17 = scalar_lea.sflag [#allocation5], 1
    %18 = vsyncpa %s17, 0
    loop: start=0, step=1, limit=4
    $region2: #{gating_pallas.1} parent=1 // loop_pre_header
      _
    $region3: #{gating_pallas.1} parent=1 // loop_header
      %s20 = sphi 0, %s24
      %p21 = scmp.ge.s32.totalorder %s20, 4
      %s30 = sphi 0, %s32
      %s33 = sphi 0, %s30
      %s34 = sphi 0, %s33
      %s50 = sphi 0, %s34
      %s54 = sphi 0, %s54
      %s56 = sphi 0, %s54
      %s57 = sphi 0, %s56
      %s71 = sphi 0, %s57
      %s75 = sphi 0, %s75
      %s77 = sphi 0, %s75
      %s78 = sphi 0, %s77
      %s92 = sphi 0, %s78
      %s96 = sphi 0, %s96
      %s98 = sphi 0, %s96
      %s99 = sphi 0, %s98
      %s113 = sphi 0, %s99
      %s117 = sphi 0, %s117
      %s119 = sphi 0, %s117
      %s120 = sphi 0, %s119
      %s134 = sphi 0, %s120
      %s138 = sphi 0, %s138
      %s140 = sphi 0, %s138
      %s141 = sphi 0, %s140
      %s155 = sphi 0, %s141
      %s159 = sphi 0, %s159
      %s161 = sphi 0, %s159
      %s162 = sphi 0, %s161
      %s176 = sphi 0, %s162
      %s180 = sphi 0, %s180
      %s182 = sphi 0, %s180
      %s183 = sphi 0, %s182
      %s197 = sphi 0, %s183
      %s201 = sphi 0, %s201
      %s203 = sphi 0, %s201
      %s204 = sphi 0, %s203
      %s218 = sphi 0, %s204
      %s224 = sphi 0, %s226
      %s227 = sphi 0, %s224
      %s228 = sphi 0, %s227
      %s244 = sphi 0, %s228
    $region4: #{gating_pallas.1} parent=1 // loop_header_branch
      %23 = sbr.rel (%p21) target = $region8
    $region5: #{gating_pallas.1} parent=1 // loop_body
      %s25 = ssub.s32 %s20, 1
      %s26 = ssub.s32 %s20, 2
      %s27 = sadd.s32 %s20, 1
      %s28 = ssub.s32 %s20, %s27
      %p29 = scmp.eq.s32.totalorder %s28, 0
      %s31 = sadd.s32 %s30, 1
      %s32 = scalar_select %p29, %s30, %s31
      %p35 = pneg %p29
      %p36 = scmp.eq.s32.totalorder %s20, 1
      %p37 = por %p35, %p36
      %p38 = scmp.ne.s32.totalorder %s30, %s33
      %p39 = scmp.eq.s32.totalorder %s20, 0
      %p40 = por %p38, %p39
      %p41 = scmp.ne.s32.totalorder %s30, %s33
      %p42 = scmp.eq.s32.totalorder %s25, 1
      %p43 = por %p41, %p42
      %p44 = scmp.ne.s32.totalorder %s33, %s34
      %p45 = scmp.eq.s32.totalorder %s25, 0
      %p46 = por %p44, %p45
      %p47 = scmp.ne.s32.totalorder %s33, %s34
      %p48 = scmp.eq.s32.totalorder %s26, 1
      %p49 = por %p47, %p48
      %p51 = scmp.ne.s32.totalorder %s34, %s50
      %p52 = scmp.eq.s32.totalorder %s26, 0
      %p53 = por %p51, %p52
      %s55 = sadd.s32 %s54, 1
      %p58 = scmp.eq.s32.totalorder %s20, 1
      %p59 = scmp.ne.s32.totalorder %s54, %s56
      %p60 = scmp.eq.s32.totalorder %s20, 0
      %p61 = por %p59, %p60
      %p62 = scmp.ne.s32.totalorder %s54, %s56
      %p63 = scmp.eq.s32.totalorder %s25, 1
      %p64 = por %p62, %p63
      %p65 = scmp.ne.s32.totalorder %s56, %s57
      %p66 = scmp.eq.s32.totalorder %s25, 0
      %p67 = por %p65, %p66
      %p68 = scmp.ne.s32.totalorder %s56, %s57
      %p69 = scmp.eq.s32.totalorder %s26, 1
      %p70 = por %p68, %p69
      %p72 = scmp.ne.s32.totalorder %s57, %s71
      %p73 = scmp.eq.s32.totalorder %s26, 0
      %p74 = por %p72, %p73
      %s76 = sadd.s32 %s75, 1
      %p79 = scmp.eq.s32.totalorder %s20, 1
      %p80 = scmp.ne.s32.totalorder %s75, %s77
      %p81 = scmp.eq.s32.totalorder %s20, 0
      %p82 = por %p80, %p81
      %p83 = scmp.ne.s32.totalorder %s75, %s77
      %p84 = scmp.eq.s32.totalorder %s25, 1
      %p85 = por %p83, %p84
      %p86 = scmp.ne.s32.totalorder %s77, %s78
      %p87 = scmp.eq.s32.totalorder %s25, 0
      %p88 = por %p86, %p87
      %p89 = scmp.ne.s32.totalorder %s77, %s78
      %p90 = scmp.eq.s32.totalorder %s26, 1
      %p91 = por %p89, %p90
      %p93 = scmp.ne.s32.totalorder %s78, %s92
      %p94 = scmp.eq.s32.totalorder %s26, 0
      %p95 = por %p93, %p94
      %s97 = sadd.s32 %s96, 1
      %p100 = scmp.eq.s32.totalorder %s20, 1
      %p101 = scmp.ne.s32.totalorder %s96, %s98
      %p102 = scmp.eq.s32.totalorder %s20, 0
      %p103 = por %p101, %p102
      %p104 = scmp.ne.s32.totalorder %s96, %s98
      %p105 = scmp.eq.s32.totalorder %s25, 1
      %p106 = por %p104, %p105
      %p107 = scmp.ne.s32.totalorder %s98, %s99
      %p108 = scmp.eq.s32.totalorder %s25, 0
      %p109 = por %p107, %p108
      %p110 = scmp.ne.s32.totalorder %s98, %s99
      %p111 = scmp.eq.s32.totalorder %s26, 1
      %p112 = por %p110, %p111
      %p114 = scmp.ne.s32.totalorder %s99, %s113
      %p115 = scmp.eq.s32.totalorder %s26, 0
      %p116 = por %p114, %p115
      %s118 = sadd.s32 %s117, 1
      %p121 = scmp.eq.s32.totalorder %s20, 1
      %p122 = scmp.ne.s32.totalorder %s117, %s119
      %p123 = scmp.eq.s32.totalorder %s20, 0
      %p124 = por %p122, %p123
      %p125 = scmp.ne.s32.totalorder %s117, %s119
      %p126 = scmp.eq.s32.totalorder %s25, 1
      %p127 = por %p125, %p126
      %p128 = scmp.ne.s32.totalorder %s119, %s120
      %p129 = scmp.eq.s32.totalorder %s25, 0
      %p130 = por %p128, %p129
      %p131 = scmp.ne.s32.totalorder %s119, %s120
      %p132 = scmp.eq.s32.totalorder %s26, 1
      %p133 = por %p131, %p132
      %p135 = scmp.ne.s32.totalorder %s120, %s134
      %p136 = scmp.eq.s32.totalorder %s26, 0
      %p137 = por %p135, %p136
      %s139 = sadd.s32 %s138, 1
      %p142 = scmp.eq.s32.totalorder %s20, 1
      %p143 = scmp.ne.s32.totalorder %s138, %s140
      %p144 = scmp.eq.s32.totalorder %s20, 0
      %p145 = por %p143, %p144
      %p146 = scmp.ne.s32.totalorder %s138, %s140
      %p147 = scmp.eq.s32.totalorder %s25, 1
      %p148 = por %p146, %p147
      %p149 = scmp.ne.s32.totalorder %s140, %s141
      %p150 = scmp.eq.s32.totalorder %s25, 0
      %p151 = por %p149, %p150
      %p152 = scmp.ne.s32.totalorder %s140, %s141
      %p153 = scmp.eq.s32.totalorder %s26, 1
      %p154 = por %p152, %p153
      %p156 = scmp.ne.s32.totalorder %s141, %s155
      %p157 = scmp.eq.s32.totalorder %s26, 0
      %p158 = por %p156, %p157
      %s160 = sadd.s32 %s159, 1
      %p163 = scmp.eq.s32.totalorder %s20, 1
      %p164 = scmp.ne.s32.totalorder %s159, %s161
      %p165 = scmp.eq.s32.totalorder %s20, 0
      %p166 = por %p164, %p165
      %p167 = scmp.ne.s32.totalorder %s159, %s161
      %p168 = scmp.eq.s32.totalorder %s25, 1
      %p169 = por %p167, %p168
      %p170 = scmp.ne.s32.totalorder %s161, %s162
      %p171 = scmp.eq.s32.totalorder %s25, 0
      %p172 = por %p170, %p171
      %p173 = scmp.ne.s32.totalorder %s161, %s162
      %p174 = scmp.eq.s32.totalorder %s26, 1
      %p175 = por %p173, %p174
      %p177 = scmp.ne.s32.totalorder %s162, %s176
      %p178 = scmp.eq.s32.totalorder %s26, 0
      %p179 = por %p177, %p178
      %s181 = sadd.s32 %s180, 1
      %p184 = scmp.eq.s32.totalorder %s20, 1
      %p185 = scmp.ne.s32.totalorder %s180, %s182
      %p186 = scmp.eq.s32.totalorder %s20, 0
      %p187 = por %p185, %p186
      %p188 = scmp.ne.s32.totalorder %s180, %s182
      %p189 = scmp.eq.s32.totalorder %s25, 1
      %p190 = por %p188, %p189
      %p191 = scmp.ne.s32.totalorder %s182, %s183
      %p192 = scmp.eq.s32.totalorder %s25, 0
      %p193 = por %p191, %p192
      %p194 = scmp.ne.s32.totalorder %s182, %s183
      %p195 = scmp.eq.s32.totalorder %s26, 1
      %p196 = por %p194, %p195
      %p198 = scmp.ne.s32.totalorder %s183, %s197
      %p199 = scmp.eq.s32.totalorder %s26, 0
      %p200 = por %p198, %p199
      %s202 = sadd.s32 %s201, 1
      %p205 = scmp.eq.s32.totalorder %s20, 1
      %p206 = scmp.ne.s32.totalorder %s201, %s203
      %p207 = scmp.eq.s32.totalorder %s20, 0
      %p208 = por %p206, %p207
      %p209 = scmp.ne.s32.totalorder %s201, %s203
      %p210 = scmp.eq.s32.totalorder %s25, 1
      %p211 = por %p209, %p210
      %p212 = scmp.ne.s32.totalorder %s203, %s204
      %p213 = scmp.eq.s32.totalorder %s25, 0
      %p214 = por %p212, %p213
      %p215 = scmp.ne.s32.totalorder %s203, %s204
      %p216 = scmp.eq.s32.totalorder %s26, 1
      %p217 = por %p215, %p216
      %p219 = scmp.ne.s32.totalorder %s204, %s218
      %p220 = scmp.eq.s32.totalorder %s26, 0
      %p221 = por %p219, %p220
      %s222 = ssub.s32 %s20, %s27
      %p223 = scmp.eq.s32.totalorder %s222, 0
      %s225 = sadd.s32 %s224, 1
      %s226 = scalar_select %p223, %s224, %s225
      %p229 = pneg %p223
      %p230 = scmp.eq.s32.totalorder %s20, 1
      %p231 = por %p229, %p230
      %p232 = scmp.ne.s32.totalorder %s224, %s227
      %p233 = scmp.eq.s32.totalorder %s20, 0
      %p234 = por %p232, %p233
      %p235 = scmp.ne.s32.totalorder %s224, %s227
      %p236 = scmp.eq.s32.totalorder %s25, 1
      %p237 = por %p235, %p236
      %p238 = scmp.ne.s32.totalorder %s227, %s228
      %p239 = scmp.eq.s32.totalorder %s25, 0
      %p240 = por %p238, %p239
      %p241 = scmp.ne.s32.totalorder %s227, %s228
      %p242 = scmp.eq.s32.totalorder %s26, 1
      %p243 = por %p241, %p242
      %p245 = scmp.ne.s32.totalorder %s228, %s244
      %p246 = scmp.eq.s32.totalorder %s26, 0
      %p247 = por %p245, %p246
      %p248 = scmp.le.s32.totalorder 1, %s20
      %p249 = scmp.lt.s32.totalorder %s20, 3
      %p250 = pnand %p248, %p249
      %p251 = pneg %p250
      // Predicated region
      $region9: #{gating_pallas.1} parent=5 // pred_check
        _
      $region10: #{gating_pallas.1} parent=5 // pred_check_branch
        %253 = sbr.rel (%p250) target = $region12
      $region11: #{gating_pallas.1} parent=5 // pred_region
        %s254 = ssub.s32 %s20, 1
        // Predicated region
        $region13: #{gating_pallas.1} parent=11 // pred_check
          %p255 = pneg %p67
        $region14: #{gating_pallas.1} parent=11 // pred_check_branch
          %257 = sbr.rel (%p255) target = $region16
        $region15: #{gating_pallas.1} parent=11 // pred_region
          %259 = vsyncadd [#allocation4], 0
          %s260 = sshll.u32 %s1, 4
          %s261 = int_to_ptr.hbm [resolvable:$true] %s260
          %s262 = sshll.u32 [#allocation3], 4
          %s263 = int_to_ptr.vmem [resolvable:$true] %s262
          %268 = dma.hbm_to_vmem [thread:$0]  %s261, 13824, %s263, [#allocation4], 128, 128, 8
        $region16: #{gating_pallas.1} parent=11 // pred_fallthru
          _
        // Predicated region
        $region17: #{gating_pallas.1} parent=11 // pred_check
          %p269 = pneg %p88
        $region18: #{gating_pallas.1} parent=11 // pred_check_branch
          %271 = sbr.rel (%p269) target = $region20
        $region19: #{gating_pallas.1} parent=11 // pred_region
          _
        $region20: #{gating_pallas.1} parent=11 // pred_fallthru
          _
        // Predicated region
        $region21: #{gating_pallas.1} parent=11 // pred_check
          %p272 = pneg %p109
        $region22: #{gating_pallas.1} parent=11 // pred_check_branch
          %274 = sbr.rel (%p272) target = $region24
        $region23: #{gating_pallas.1} parent=11 // pred_region
          %276 = vsyncadd [#allocation7], 0
          %s277 = sshll.u32 %s3, 4
          %s278 = int_to_ptr.hbm [resolvable:$true] %s277
          %s279 = sshll.u32 [#allocation6], 4
          %s280 = int_to_ptr.vmem [resolvable:$true] %s279
          %285 = dma.hbm_to_vmem [thread:$0]  %s278, 13824, %s280, [#allocation7], 128, 128, 8
        $region24: #{gating_pallas.1} parent=11 // pred_fallthru
          _
        // Predicated region
        $region25: #{gating_pallas.1} parent=11 // pred_check
          %p286 = pneg %p130
        $region26: #{gating_pallas.1} parent=11 // pred_check_branch
          %288 = sbr.rel (%p286) target = $region28
        $region27: #{gating_pallas.1} parent=11 // pred_region
          _
        $region28: #{gating_pallas.1} parent=11 // pred_fallthru
          _
        // Predicated region
        $region29: #{gating_pallas.1} parent=11 // pred_check
          %p289 = pneg %p151
        $region30: #{gating_pallas.1} parent=11 // pred_check_branch
          %291 = sbr.rel (%p289) target = $region32
        $region31: #{gating_pallas.1} parent=11 // pred_region
          _
        $region32: #{gating_pallas.1} parent=11 // pred_fallthru
          _
        // Predicated region
        $region33: #{gating_pallas.1} parent=11 // pred_check
          %p292 = pneg %p172
        $region34: #{gating_pallas.1} parent=11 // pred_check_branch
          %294 = sbr.rel (%p292) target = $region36
        $region35: #{gating_pallas.1} parent=11 // pred_region
          _
        $region36: #{gating_pallas.1} parent=11 // pred_fallthru
          _
        // Predicated region
        $region37: #{gating_pallas.1} parent=11 // pred_check
          %p295 = pneg %p193
        $region38: #{gating_pallas.1} parent=11 // pred_check_branch
          %297 = sbr.rel (%p295) target = $region40
        $region39: #{gating_pallas.1} parent=11 // pred_region
          _
        $region40: #{gating_pallas.1} parent=11 // pred_fallthru
          _
        // Predicated region
        $region41: #{gating_pallas.1} parent=11 // pred_check
          %p298 = pneg %p214
        $region42: #{gating_pallas.1} parent=11 // pred_check_branch
          %300 = sbr.rel (%p298) target = $region44
        $region43: #{gating_pallas.1} parent=11 // pred_region
          %302 = vsyncadd [#allocation7], 0
          %s303 = sshll.u32 %s8, 4
          %s304 = int_to_ptr.hbm [resolvable:$true] %s303
          %s305 = sshll.u32 [#allocation8], 4
          %s306 = int_to_ptr.vmem [resolvable:$true] %s305
          %311 = dma.hbm_to_vmem [thread:$0]  %s304, 12288, %s306, [#allocation7], 128, 128, 8
        $region44: #{gating_pallas.1} parent=11 // pred_fallthru
          _
      $region12: #{gating_pallas.1} parent=5 // pred_fallthru
        _
      %p312 = scmp.lt.s32.totalorder %s20, 2
      // Predicated region
      $region45: #{gating_pallas.1} parent=5 // pred_check
        %p313 = pneg %p312
      $region46: #{gating_pallas.1} parent=5 // pred_check_branch
        %315 = sbr.rel (%p313) target = $region48
      $region47: #{gating_pallas.1} parent=5 // pred_region
        // Predicated region
        $region49: #{gating_pallas.1} parent=47 // pred_check
          %p316 = pneg %p40
        $region50: #{gating_pallas.1} parent=47 // pred_check_branch
          %318 = sbr.rel (%p316) target = $region52
        $region51: #{gating_pallas.1} parent=47 // pred_region
          %p319 = scmp.lt.s32.totalorder %s20, 1
          %s320 = scalar_select %p319, %s20, 1
          %s321 = smul.addr %s320, 8
          %s322 = smul.addr %s321, 8
          %s323 = scalar_lea.vmem %s0, %s322
        $region52: #{gating_pallas.1} parent=47 // pred_fallthru
          _
      $region48: #{gating_pallas.1} parent=5 // pred_fallthru
        _
      %p324 = scmp.le.s32.totalorder 1, %s20
      %p325 = scmp.lt.s32.totalorder %s20, 3
      %p326 = pnand %p324, %p325
      %p327 = pneg %p326
      // Predicated region
      $region53: #{gating_pallas.1} parent=5 // pred_check
        _
      $region54: #{gating_pallas.1} parent=5 // pred_check_branch
        %329 = sbr.rel (%p326) target = $region56
      $region55: #{gating_pallas.1} parent=5 // pred_region
        %s330 = ssub.s32 %s20, 1
        // Predicated region
        $region57: #{gating_pallas.1} parent=55 // pred_check
          %p331 = pneg %p67
        $region58: #{gating_pallas.1} parent=55 // pred_check_branch
          %333 = sbr.rel (%p331) target = $region60
        $region59: #{gating_pallas.1} parent=55 // pred_region
          %335 = dma.done [#allocation4], 13824
        $region60: #{gating_pallas.1} parent=55 // pred_fallthru
          _
        // Predicated region
        $region61: #{gating_pallas.1} parent=55 // pred_check
          %p336 = pneg %p109
        $region62: #{gating_pallas.1} parent=55 // pred_check_branch
          %338 = sbr.rel (%p336) target = $region64
        $region63: #{gating_pallas.1} parent=55 // pred_region
          %340 = dma.done [#allocation7], 13824
        $region64: #{gating_pallas.1} parent=55 // pred_fallthru
          _
        // Predicated region
        $region65: #{gating_pallas.1} parent=55 // pred_check
          %p341 = pneg %p214
        $region66: #{gating_pallas.1} parent=55 // pred_check_branch
          %343 = sbr.rel (%p341) target = $region68
        $region67: #{gating_pallas.1} parent=55 // pred_region
          %345 = dma.done [#allocation7], 12288
        $region68: #{gating_pallas.1} parent=55 // pred_fallthru
          _
        %p346 = scmp.lt.s32.totalorder %s25, 1
        %s347 = scalar_select %p346, %s25, 1
        %s348 = smul.addr %s347, 8
        %s349 = smul.addr %s348, 8
        %s350 = scalar_lea.vmem %s0, %s349
        %p351 = pneg %p46
        %p352 = pneg %p43
        %p353 = pneg %p67
        %p354 = pneg %p64
        %p355 = pneg %p88
        %p356 = pneg %p85
        %p357 = pneg %p109
        %p358 = pneg %p106
        %p359 = pneg %p130
        %p360 = pneg %p127
        %p361 = pneg %p151
        %p362 = pneg %p148
        %p363 = pneg %p172
        %p364 = pneg %p169
        %p365 = pneg %p193
        %p366 = pneg %p190
        %p367 = pneg %p214
        %p368 = pneg %p211
        %p369 = pneg %p240
        %p370 = pneg %p237
        %s371 = sand.u32 %s227, 1
        %s372 = scalar_lea.sflag [#allocation5], %s371
        %s373 = sand.u32 %s227, 1
        %s374 = smul.addr %s373, 4
        %s375 = scalar_lea.vmem [#allocation9], %s374
        %p376 = scmp.lt.s32.totalorder %s25, 1
        %s377 = scalar_select %p376, %s25, 1
        %s378 = smul.addr %s377, 8
        %s379 = smul.addr %s378, 8
        %s380 = scalar_lea.vmem %s0, %s379
        %381 = vst [vmem:[#allocation2] sm:$0xff] 0.0
        %382 = vst [vmem:[#allocation2 + $0x20] sm:$0xff] 0.0
        %383 = vst [vmem:[#allocation2 + $0x40] sm:$0xff] 0.0
        %384 = vst [vmem:[#allocation2 + $0x60] sm:$0xff] 0.0
        %385 = vst [vmem:[#allocation2 + $0x18] sm:$0xff] 0.0
        %386 = vst [vmem:[#allocation2 + $0x38] sm:$0xff] 0.0
        %387 = vst [vmem:[#allocation2 + $0x58] sm:$0xff] 0.0
        %388 = vst [vmem:[#allocation2 + $0x78] sm:$0xff] 0.0
        %v389 = vld [vmem:[%s380] sm:$0xff]
        %v390 = vld [vmem:[%s380 + $0x8] sm:$0xff]
        %v391 = vld [vmem:[%s380 + $0x10] sm:$0xff]
        %v392 = vld [vmem:[%s380 + $0x18] sm:$0xff]
        %v393 = vld [vmem:[%s380 + $0x20] sm:$0xff]
        %v394 = vld [vmem:[%s380 + $0x28] sm:$0xff]
        %v395 = vld [vmem:[%s380 + $0x30] sm:$0xff]
        %v396 = vld [vmem:[%s380 + $0x38] sm:$0xff]
        %397 = vst [vmem:[#allocation2 + $0x8] sm:$0xff] %v389
        %398 = vst [vmem:[#allocation2 + $0x10] sm:$0xff] %v390
        %399 = vst [vmem:[#allocation2 + $0x28] sm:$0xff] %v391
        %400 = vst [vmem:[#allocation2 + $0x30] sm:$0xff] %v392
        %401 = vst [vmem:[#allocation2 + $0x48] sm:$0xff] %v393
        %402 = vst [vmem:[#allocation2 + $0x50] sm:$0xff] %v394
        %403 = vst [vmem:[#allocation2 + $0x68] sm:$0xff] %v395
        %404 = vst [vmem:[#allocation2 + $0x70] sm:$0xff] %v396
        %v405 = vld [vmem:[#allocation2] sm:$0xff]
        %v406 = vld [vmem:[#allocation2 + $0x8] sm:$0xff]
        %v407 = vld [vmem:[#allocation2 + $0x10] sm:$0xff]
        %v408 = vld [vmem:[#allocation2 + $0x20] sm:$0xff]
        %v409 = vld [vmem:[#allocation2 + $0x28] sm:$0xff]
        %v410 = vld [vmem:[#allocation2 + $0x30] sm:$0xff]
        %v411 = vld [vmem:[#allocation2 + $0x40] sm:$0xff]
        %v412 = vld [vmem:[#allocation2 + $0x48] sm:$0xff]
        %v413 = vld [vmem:[#allocation2 + $0x50] sm:$0xff]
        %v414 = vld [vmem:[#allocation2 + $0x60] sm:$0xff]
        %v415 = vld [vmem:[#allocation2 + $0x68] sm:$0xff]
        %v416 = vld [vmem:[#allocation2 + $0x70] sm:$0xff]
        %v417 = vld [vmem:[%s7] ss:$8 sm:$0x3]
        %v419 = vperm.slane %v417, 0
        %v420 = vperm.slane %v417, 1
        %421 = vrot.lane.b32.xlu0 %v419, 55
        %v422 = vpop.permute.xlu0 %421
        %423 = vrot.lane.b32.xlu0 %v420, 55
        %v424 = vpop.permute.xlu0 %423
        %vm425 = vcmask 449536
        %v426 = vsel %vm425, %v422, %v424
        %v430 = vmul.f32 %v405, %v422
        %v431 = vmul.f32 %v406, %v426
        %v432 = vmul.f32 %v407, %v424
        %v433 = vmul.f32 %v408, %v422
        %v434 = vmul.f32 %v409, %v426
        %v435 = vmul.f32 %v410, %v424
        %v436 = vmul.f32 %v411, %v422
        %v437 = vmul.f32 %v412, %v426
        %v438 = vmul.f32 %v413, %v424
        %v439 = vmul.f32 %v414, %v422
        %v440 = vmul.f32 %v415, %v426
        %v441 = vmul.f32 %v416, %v424
        %v442 = vld [vmem:[#allocation3] sm:$0xff]
        %v443 = vld [vmem:[#allocation3 + $0x8] sm:$0xff]
        %v444 = vld [vmem:[#allocation3 + $0x10] sm:$0xff]
        %v445 = vld [vmem:[#allocation3 + $0x18] sm:$0xff]
        %s446 = scalar_lea.vmem %s7, 1
        %v447 = vld [vmem:[%s446] ss:$8 sm:$0x3]
        %v449 = vperm.slane %v447, 0
        %v450 = vperm.slane %v447, 1
        %451 = vrot.lane.b32.xlu0 %v449, 56
        %v452 = vpop.permute.xlu0 %451
        %453 = vrot.lane.b32.xlu0 %v450, 56
        %v454 = vpop.permute.xlu0 %453
        %vm455 = vcmask 457728
        %v456 = vsel %vm455, %v452, %v454
        %v460 = vmul.f32 %v405, %v452
        %v461 = vmul.f32 %v406, %v456
        %v462 = vmul.f32 %v407, %v454
        %v463 = vmul.f32 %v408, %v452
        %v464 = vmul.f32 %v409, %v456
        %v465 = vmul.f32 %v410, %v454
        %v466 = vmul.f32 %v411, %v452
        %v467 = vmul.f32 %v412, %v456
        %v468 = vmul.f32 %v413, %v454
        %v469 = vmul.f32 %v414, %v452
        %v470 = vmul.f32 %v415, %v456
        %v471 = vmul.f32 %v416, %v454
        %s472 = scalar_lea.vmem [#allocation3], 32
        %v473 = vld [vmem:[%s472] sm:$0xff]
        %v474 = vld [vmem:[%s472 + $0x8] sm:$0xff]
        %v475 = vld [vmem:[%s472 + $0x10] sm:$0xff]
        %v476 = vld [vmem:[%s472 + $0x18] sm:$0xff]
        %489 = vrot.lane.b32.xlu0 %v460, 72
        %v490 = vpop.permute.xlu0 %489
        %491 = vrot.lane.b32.xlu0 %v461, 72
        %v492 = vpop.permute.xlu0 %491
        %493 = vrot.lane.b32.xlu0 %v462, 72
        %v494 = vpop.permute.xlu0 %493
        %495 = vrot.lane.b32.xlu0 %v463, 72
        %v496 = vpop.permute.xlu0 %495
        %497 = vrot.lane.b32.xlu0 %v464, 72
        %v498 = vpop.permute.xlu0 %497
        %499 = vrot.lane.b32.xlu0 %v465, 72
        %v500 = vpop.permute.xlu0 %499
        %501 = vrot.lane.b32.xlu0 %v466, 72
        %v502 = vpop.permute.xlu0 %501
        %503 = vrot.lane.b32.xlu0 %v467, 72
        %v504 = vpop.permute.xlu0 %503
        %505 = vrot.lane.b32.xlu0 %v468, 72
        %v506 = vpop.permute.xlu0 %505
        %507 = vrot.lane.b32.xlu0 %v469, 72
        %v508 = vpop.permute.xlu0 %507
        %509 = vrot.lane.b32.xlu0 %v470, 72
        %v510 = vpop.permute.xlu0 %509
        %511 = vrot.lane.b32.xlu0 %v471, 72
        %v512 = vpop.permute.xlu0 %511
        %vm513 = vcmask 588800
        %v514 = vsel %vm513, %v490, %v492
        %v515 = vsel %vm513, %v492, %v494
        %v516 = vsel %vm513, %v496, %v498
        %v517 = vsel %vm513, %v498, %v500
        %v518 = vsel %vm513, %v502, %v504
        %v519 = vsel %vm513, %v504, %v506
        %v520 = vsel %vm513, %v508, %v510
        %v521 = vsel %vm513, %v510, %v512
        %vm530 = vcmask 261120
        %v532 = vsel %vm530, %v473, 0
        %v535 = vsel %vm530, %v474, 0
        %v538 = vsel %vm530, %v475, 0
        %v541 = vsel %vm530, %v476, 0
        %543 = vmatpush.msra.mxu0 0.0
        %544 = vmatpush.msra.mxu0 0.0
        %545 = vmatpush.msra.mxu0 0.0
        %546 = vmatpush.msra.mxu0 0.0
        %547 = vmatpush.msra.mxu0 0.0
        %548 = vmatpush.msra.mxu0 0.0
        %549 = vmatpush.msra.mxu0 0.0
        %550 = vmatpush.msra.mxu0 0.0
        %551 = vmatpush.msra.mxu0 0.0
        %552 = vmatpush.msra.mxu0 0.0
        %553 = vmatpush.msra.mxu0 0.0
        %554 = vmatpush.msra.mxu0 0.0
        %555 = vmatpush.msra.mxu0 %v520
        %556 = vmatpush.msra.mxu0 %v518
        %557 = vmatpush.msra.mxu0 %v516
        %558 = vmatpush.msra.mxu0 %v514
        %559 = vmatmul.f32.gmra.mxu0 %v532
        %v560 = vpop.f32.mrf.mxu0
        %v561 = vadd.f32 0.0, %v560
        %562 = vmatmul.f32.gmra.mxu0 %v535
        %v563 = vpop.f32.mrf.mxu0
        %v564 = vadd.f32 0.0, %v563
        %565 = vmatmul.f32.gmra.mxu0 %v538
        %v566 = vpop.f32.mrf.mxu0
        %v567 = vadd.f32 0.0, %v566
        %568 = vmatmul.f32.gmra.mxu0 %v541
        %v569 = vpop.f32.mrf.mxu0
        %v570 = vadd.f32 0.0, %v569
        %571 = vdwg.mxu0
        %572 = vmatpush.msra.mxu0 0.0
        %573 = vmatpush.msra.mxu0 0.0
        %574 = vmatpush.msra.mxu0 0.0
        %575 = vmatpush.msra.mxu0 0.0
        %576 = vmatpush.msra.mxu0 0.0
        %577 = vmatpush.msra.mxu0 0.0
        %578 = vmatpush.msra.mxu0 0.0
        %579 = vmatpush.msra.mxu0 0.0
        %580 = vmatpush.msra.mxu0 0.0
        %581 = vmatpush.msra.mxu0 0.0
        %582 = vmatpush.msra.mxu0 0.0
        %583 = vmatpush.msra.mxu0 0.0
        %584 = vmatpush.msra.mxu0 %v521
        %585 = vmatpush.msra.mxu0 %v519
        %586 = vmatpush.msra.mxu0 %v517
        %587 = vmatpush.msra.mxu0 %v515
        %588 = vmatmul.f32.gmra.mxu0 %v532
        %v589 = vpop.f32.mrf.mxu0
        %v590 = vadd.f32 0.0, %v589
        %591 = vmatmul.f32.gmra.mxu0 %v535
        %v592 = vpop.f32.mrf.mxu0
        %v593 = vadd.f32 0.0, %v592
        %594 = vmatmul.f32.gmra.mxu0 %v538
        %v595 = vpop.f32.mrf.mxu0
        %v596 = vadd.f32 0.0, %v595
        %597 = vmatmul.f32.gmra.mxu0 %v541
        %v598 = vpop.f32.mrf.mxu0
        %v599 = vadd.f32 0.0, %v598
        %600 = vdwg.mxu0
        %613 = vrot.lane.b32.xlu0 %v430, 73
        %v614 = vpop.permute.xlu0 %613
        %615 = vrot.lane.b32.xlu0 %v431, 73
        %v616 = vpop.permute.xlu0 %615
        %617 = vrot.lane.b32.xlu0 %v432, 73
        %v618 = vpop.permute.xlu0 %617
        %619 = vrot.lane.b32.xlu0 %v433, 73
        %v620 = vpop.permute.xlu0 %619
        %621 = vrot.lane.b32.xlu0 %v434, 73
        %v622 = vpop.permute.xlu0 %621
        %623 = vrot.lane.b32.xlu0 %v435, 73
        %v624 = vpop.permute.xlu0 %623
        %625 = vrot.lane.b32.xlu0 %v436, 73
        %v626 = vpop.permute.xlu0 %625
        %627 = vrot.lane.b32.xlu0 %v437, 73
        %v628 = vpop.permute.xlu0 %627
        %629 = vrot.lane.b32.xlu0 %v438, 73
        %v630 = vpop.permute.xlu0 %629
        %631 = vrot.lane.b32.xlu0 %v439, 73
        %v632 = vpop.permute.xlu0 %631
        %633 = vrot.lane.b32.xlu0 %v440, 73
        %v634 = vpop.permute.xlu0 %633
        %635 = vrot.lane.b32.xlu0 %v441, 73
        %v636 = vpop.permute.xlu0 %635
        %vm637 = vcmask 596992
        %v638 = vsel %vm637, %v614, %v616
        %v639 = vsel %vm637, %v616, %v618
        %v640 = vsel %vm637, %v620, %v622
        %v641 = vsel %vm637, %v622, %v624
        %v642 = vsel %vm637, %v626, %v628
        %v643 = vsel %vm637, %v628, %v630
        %v644 = vsel %vm637, %v632, %v634
        %v645 = vsel %vm637, %v634, %v636
        %v655 = vsel %vm530, %v442, 0
        %v658 = vsel %vm530, %v443, 0
        %v661 = vsel %vm530, %v444, 0
        %v664 = vsel %vm530, %v445, 0
        %666 = vmatpush.msra.mxu0 0.0
        %667 = vmatpush.msra.mxu0 0.0
        %668 = vmatpush.msra.mxu0 0.0
        %669 = vmatpush.msra.mxu0 0.0
        %670 = vmatpush.msra.mxu0 0.0
        %671 = vmatpush.msra.mxu0 0.0
        %672 = vmatpush.msra.mxu0 0.0
        %673 = vmatpush.msra.mxu0 0.0
        %674 = vmatpush.msra.mxu0 0.0
        %675 = vmatpush.msra.mxu0 0.0
        %676 = vmatpush.msra.mxu0 0.0
        %677 = vmatpush.msra.mxu0 0.0
        %678 = vmatpush.msra.mxu0 %v644
        %679 = vmatpush.msra.mxu0 %v642
        %680 = vmatpush.msra.mxu0 %v640
        %681 = vmatpush.msra.mxu0 %v638
        %682 = vmatmul.f32.gmra.mxu0 %v655
        %v683 = vpop.f32.mrf.mxu0
        %v684 = vadd.f32 %v561, %v683
        %685 = vmatmul.f32.gmra.mxu0 %v658
        %v686 = vpop.f32.mrf.mxu0
        %v687 = vadd.f32 %v564, %v686
        %688 = vmatmul.f32.gmra.mxu0 %v661
        %v689 = vpop.f32.mrf.mxu0
        %v690 = vadd.f32 %v567, %v689
        %691 = vmatmul.f32.gmra.mxu0 %v664
        %v692 = vpop.f32.mrf.mxu0
        %v693 = vadd.f32 %v570, %v692
        %694 = vdwg.mxu0
        %695 = vmatpush.msra.mxu0 0.0
        %696 = vmatpush.msra.mxu0 0.0
        %697 = vmatpush.msra.mxu0 0.0
        %698 = vmatpush.msra.mxu0 0.0
        %699 = vmatpush.msra.mxu0 0.0
        %700 = vmatpush.msra.mxu0 0.0
        %701 = vmatpush.msra.mxu0 0.0
        %702 = vmatpush.msra.mxu0 0.0
        %703 = vmatpush.msra.mxu0 0.0
        %704 = vmatpush.msra.mxu0 0.0
        %705 = vmatpush.msra.mxu0 0.0
        %706 = vmatpush.msra.mxu0 0.0
        %707 = vmatpush.msra.mxu0 %v645
        %708 = vmatpush.msra.mxu0 %v643
        %709 = vmatpush.msra.mxu0 %v641
        %710 = vmatpush.msra.mxu0 %v639
        %711 = vmatmul.f32.gmra.mxu0 %v655
        %v712 = vpop.f32.mrf.mxu0
        %v713 = vadd.f32 %v590, %v712
        %714 = vmatmul.f32.gmra.mxu0 %v658
        %v715 = vpop.f32.mrf.mxu0
        %v716 = vadd.f32 %v593, %v715
        %717 = vmatmul.f32.gmra.mxu0 %v661
        %v718 = vpop.f32.mrf.mxu0
        %v719 = vadd.f32 %v596, %v718
        %720 = vmatmul.f32.gmra.mxu0 %v664
        %v721 = vpop.f32.mrf.mxu0
        %v722 = vadd.f32 %v599, %v721
        %723 = vdwg.mxu0
        %s724 = scalar_lea.vmem %s7, 2
        %v725 = vld [vmem:[%s724] ss:$8 sm:$0x3]
        %v727 = vperm.slane %v725, 0
        %v728 = vperm.slane %v725, 1
        %729 = vrot.lane.b32.xlu0 %v727, 57
        %v730 = vpop.permute.xlu0 %729
        %731 = vrot.lane.b32.xlu0 %v728, 57
        %v732 = vpop.permute.xlu0 %731
        %vm733 = vcmask 465920
        %v734 = vsel %vm733, %v730, %v732
        %v738 = vmul.f32 %v405, %v730
        %v739 = vmul.f32 %v406, %v734
        %v740 = vmul.f32 %v407, %v732
        %v741 = vmul.f32 %v408, %v730
        %v742 = vmul.f32 %v409, %v734
        %v743 = vmul.f32 %v410, %v732
        %v744 = vmul.f32 %v411, %v730
        %v745 = vmul.f32 %v412, %v734
        %v746 = vmul.f32 %v413, %v732
        %v747 = vmul.f32 %v414, %v730
        %v748 = vmul.f32 %v415, %v734
        %v749 = vmul.f32 %v416, %v732
        %s750 = scalar_lea.vmem [#allocation3], 64
        %v751 = vld [vmem:[%s750] sm:$0xff]
        %v752 = vld [vmem:[%s750 + $0x8] sm:$0xff]
        %v753 = vld [vmem:[%s750 + $0x10] sm:$0xff]
        %v754 = vld [vmem:[%s750 + $0x18] sm:$0xff]
        %767 = vrot.lane.b32.xlu0 %v738, 71
        %v768 = vpop.permute.xlu0 %767
        %769 = vrot.lane.b32.xlu0 %v739, 71
        %v770 = vpop.permute.xlu0 %769
        %771 = vrot.lane.b32.xlu0 %v740, 71
        %v772 = vpop.permute.xlu0 %771
        %773 = vrot.lane.b32.xlu0 %v741, 71
        %v774 = vpop.permute.xlu0 %773
        %775 = vrot.lane.b32.xlu0 %v742, 71
        %v776 = vpop.permute.xlu0 %775
        %777 = vrot.lane.b32.xlu0 %v743, 71
        %v778 = vpop.permute.xlu0 %777
        %779 = vrot.lane.b32.xlu0 %v744, 71
        %v780 = vpop.permute.xlu0 %779
        %781 = vrot.lane.b32.xlu0 %v745, 71
        %v782 = vpop.permute.xlu0 %781
        %783 = vrot.lane.b32.xlu0 %v746, 71
        %v784 = vpop.permute.xlu0 %783
        %785 = vrot.lane.b32.xlu0 %v747, 71
        %v786 = vpop.permute.xlu0 %785
        %787 = vrot.lane.b32.xlu0 %v748, 71
        %v788 = vpop.permute.xlu0 %787
        %789 = vrot.lane.b32.xlu0 %v749, 71
        %v790 = vpop.permute.xlu0 %789
        %vm791 = vcmask 580608
        %v792 = vsel %vm791, %v768, %v770
        %v793 = vsel %vm791, %v770, %v772
        %v794 = vsel %vm791, %v774, %v776
        %v795 = vsel %vm791, %v776, %v778
        %v796 = vsel %vm791, %v780, %v782
        %v797 = vsel %vm791, %v782, %v784
        %v798 = vsel %vm791, %v786, %v788
        %v799 = vsel %vm791, %v788, %v790
        %v809 = vsel %vm530, %v751, 0
        %v812 = vsel %vm530, %v752, 0
        %v815 = vsel %vm530, %v753, 0
        %v818 = vsel %vm530, %v754, 0
        %820 = vmatpush.msra.mxu0 0.0
        %821 = vmatpush.msra.mxu0 0.0
        %822 = vmatpush.msra.mxu0 0.0
        %823 = vmatpush.msra.mxu0 0.0
        %824 = vmatpush.msra.mxu0 0.0
        %825 = vmatpush.msra.mxu0 0.0
        %826 = vmatpush.msra.mxu0 0.0
        %827 = vmatpush.msra.mxu0 0.0
        %828 = vmatpush.msra.mxu0 0.0
        %829 = vmatpush.msra.mxu0 0.0
        %830 = vmatpush.msra.mxu0 0.0
        %831 = vmatpush.msra.mxu0 0.0
        %832 = vmatpush.msra.mxu0 %v798
        %833 = vmatpush.msra.mxu0 %v796
        %834 = vmatpush.msra.mxu0 %v794
        %835 = vmatpush.msra.mxu0 %v792
        %836 = vmatmul.f32.gmra.mxu0 %v809
        %v837 = vpop.f32.mrf.mxu0
        %v838 = vadd.f32 0.0, %v837
        %839 = vmatmul.f32.gmra.mxu0 %v812
        %v840 = vpop.f32.mrf.mxu0
        %v841 = vadd.f32 0.0, %v840
        %842 = vmatmul.f32.gmra.mxu0 %v815
        %v843 = vpop.f32.mrf.mxu0
        %v844 = vadd.f32 0.0, %v843
        %845 = vmatmul.f32.gmra.mxu0 %v818
        %v846 = vpop.f32.mrf.mxu0
        %v847 = vadd.f32 0.0, %v846
        %848 = vdwg.mxu0
        %849 = vmatpush.msra.mxu0 0.0
        %850 = vmatpush.msra.mxu0 0.0
        %851 = vmatpush.msra.mxu0 0.0
        %852 = vmatpush.msra.mxu0 0.0
        %853 = vmatpush.msra.mxu0 0.0
        %854 = vmatpush.msra.mxu0 0.0
        %855 = vmatpush.msra.mxu0 0.0
        %856 = vmatpush.msra.mxu0 0.0
        %857 = vmatpush.msra.mxu0 0.0
        %858 = vmatpush.msra.mxu0 0.0
        %859 = vmatpush.msra.mxu0 0.0
        %860 = vmatpush.msra.mxu0 0.0
        %861 = vmatpush.msra.mxu0 %v799
        %862 = vmatpush.msra.mxu0 %v797
        %863 = vmatpush.msra.mxu0 %v795
        %864 = vmatpush.msra.mxu0 %v793
        %865 = vmatmul.f32.gmra.mxu0 %v809
        %v866 = vpop.f32.mrf.mxu0
        %v867 = vadd.f32 0.0, %v866
        %868 = vmatmul.f32.gmra.mxu0 %v812
        %v869 = vpop.f32.mrf.mxu0
        %v870 = vadd.f32 0.0, %v869
        %871 = vmatmul.f32.gmra.mxu0 %v815
        %v872 = vpop.f32.mrf.mxu0
        %v873 = vadd.f32 0.0, %v872
        %874 = vmatmul.f32.gmra.mxu0 %v818
        %v875 = vpop.f32.mrf.mxu0
        %v876 = vadd.f32 0.0, %v875
        %877 = vdwg.mxu0
        %v878 = vadd.f32 %v684, %v838
        %v879 = vadd.f32 %v713, %v867
        %v880 = vadd.f32 %v687, %v841
        %v881 = vadd.f32 %v716, %v870
        %v882 = vadd.f32 %v690, %v844
        %v883 = vadd.f32 %v719, %v873
        %v884 = vadd.f32 %v693, %v847
        %v885 = vadd.f32 %v722, %v876
        %s886 = scalar_lea.vmem %s7, 3
        %v887 = vld [vmem:[%s886] ss:$8 sm:$0x3]
        %v889 = vperm.slane %v887, 0
        %v890 = vperm.slane %v887, 1
        %891 = vrot.lane.b32.xlu0 %v889, 63
        %v892 = vpop.permute.xlu0 %891
        %893 = vrot.lane.b32.xlu0 %v890, 63
        %v894 = vpop.permute.xlu0 %893
        %vm895 = vcmask 515072
        %v896 = vsel %vm895, %v892, %v894
        %v900 = vmul.f32 %v405, %v892
        %v901 = vmul.f32 %v406, %v896
        %v902 = vmul.f32 %v407, %v894
        %v903 = vmul.f32 %v408, %v892
        %v904 = vmul.f32 %v409, %v896
        %v905 = vmul.f32 %v410, %v894
        %v906 = vmul.f32 %v411, %v892
        %v907 = vmul.f32 %v412, %v896
        %v908 = vmul.f32 %v413, %v894
        %v909 = vmul.f32 %v414, %v892
        %v910 = vmul.f32 %v415, %v896
        %v911 = vmul.f32 %v416, %v894
        %s912 = scalar_lea.vmem [#allocation3], 96
        %v913 = vld [vmem:[%s912] sm:$0xff]
        %v914 = vld [vmem:[%s912 + $0x8] sm:$0xff]
        %v915 = vld [vmem:[%s912 + $0x10] sm:$0xff]
        %v916 = vld [vmem:[%s912 + $0x18] sm:$0xff]
        %929 = vrot.lane.b32.xlu0 %v900, 65
        %v930 = vpop.permute.xlu0 %929
        %931 = vrot.lane.b32.xlu0 %v901, 65
        %v932 = vpop.permute.xlu0 %931
        %933 = vrot.lane.b32.xlu0 %v902, 65
        %v934 = vpop.permute.xlu0 %933
        %935 = vrot.lane.b32.xlu0 %v903, 65
        %v936 = vpop.permute.xlu0 %935
        %937 = vrot.lane.b32.xlu0 %v904, 65
        %v938 = vpop.permute.xlu0 %937
        %939 = vrot.lane.b32.xlu0 %v905, 65
        %v940 = vpop.permute.xlu0 %939
        %941 = vrot.lane.b32.xlu0 %v906, 65
        %v942 = vpop.permute.xlu0 %941
        %943 = vrot.lane.b32.xlu0 %v907, 65
        %v944 = vpop.permute.xlu0 %943
        %945 = vrot.lane.b32.xlu0 %v908, 65
        %v946 = vpop.permute.xlu0 %945
        %947 = vrot.lane.b32.xlu0 %v909, 65
        %v948 = vpop.permute.xlu0 %947
        %949 = vrot.lane.b32.xlu0 %v910, 65
        %v950 = vpop.permute.xlu0 %949
        %951 = vrot.lane.b32.xlu0 %v911, 65
        %v952 = vpop.permute.xlu0 %951
        %vm953 = vcmask 531456
        %v954 = vsel %vm953, %v930, %v932
        %v955 = vsel %vm953, %v932, %v934
        %v956 = vsel %vm953, %v936, %v938
        %v957 = vsel %vm953, %v938, %v940
        %v958 = vsel %vm953, %v942, %v944
        %v959 = vsel %vm953, %v944, %v946
        %v960 = vsel %vm953, %v948, %v950
        %v961 = vsel %vm953, %v950, %v952
        %v971 = vsel %vm530, %v913, 0
        %v974 = vsel %vm530, %v914, 0
        %v977 = vsel %vm530, %v915, 0
        %v980 = vsel %vm530, %v916, 0
        %982 = vmatpush.msra.mxu0 0.0
        %983 = vmatpush.msra.mxu0 0.0
        %984 = vmatpush.msra.mxu0 0.0
        %985 = vmatpush.msra.mxu0 0.0
        %986 = vmatpush.msra.mxu0 0.0
        %987 = vmatpush.msra.mxu0 0.0
        %988 = vmatpush.msra.mxu0 0.0
        %989 = vmatpush.msra.mxu0 0.0
        %990 = vmatpush.msra.mxu0 0.0
        %991 = vmatpush.msra.mxu0 0.0
        %992 = vmatpush.msra.mxu0 0.0
        %993 = vmatpush.msra.mxu0 0.0
        %994 = vmatpush.msra.mxu0 %v960
        %995 = vmatpush.msra.mxu0 %v958
        %996 = vmatpush.msra.mxu0 %v956
        %997 = vmatpush.msra.mxu0 %v954
        %998 = vmatmul.f32.gmra.mxu0 %v971
        %v999 = vpop.f32.mrf.mxu0
        %v1000 = vadd.f32 0.0, %v999
        %1001 = vmatmul.f32.gmra.mxu0 %v974
        %v1002 = vpop.f32.mrf.mxu0
        %v1003 = vadd.f32 0.0, %v1002
        %1004 = vmatmul.f32.gmra.mxu0 %v977
        %v1005 = vpop.f32.mrf.mxu0
        %v1006 = vadd.f32 0.0, %v1005
        %1007 = vmatmul.f32.gmra.mxu0 %v980
        %v1008 = vpop.f32.mrf.mxu0
        %v1009 = vadd.f32 0.0, %v1008
        %1010 = vdwg.mxu0
        %1011 = vmatpush.msra.mxu0 0.0
        %1012 = vmatpush.msra.mxu0 0.0
        %1013 = vmatpush.msra.mxu0 0.0
        %1014 = vmatpush.msra.mxu0 0.0
        %1015 = vmatpush.msra.mxu0 0.0
        %1016 = vmatpush.msra.mxu0 0.0
        %1017 = vmatpush.msra.mxu0 0.0
        %1018 = vmatpush.msra.mxu0 0.0
        %1019 = vmatpush.msra.mxu0 0.0
        %1020 = vmatpush.msra.mxu0 0.0
        %1021 = vmatpush.msra.mxu0 0.0
        %1022 = vmatpush.msra.mxu0 0.0
        %1023 = vmatpush.msra.mxu0 %v961
        %1024 = vmatpush.msra.mxu0 %v959
        %1025 = vmatpush.msra.mxu0 %v957
        %1026 = vmatpush.msra.mxu0 %v955
        %1027 = vmatmul.f32.gmra.mxu0 %v971
        %v1028 = vpop.f32.mrf.mxu0
        %v1029 = vadd.f32 0.0, %v1028
        %1030 = vmatmul.f32.gmra.mxu0 %v974
        %v1031 = vpop.f32.mrf.mxu0
        %v1032 = vadd.f32 0.0, %v1031
        %1033 = vmatmul.f32.gmra.mxu0 %v977
        %v1034 = vpop.f32.mrf.mxu0
        %v1035 = vadd.f32 0.0, %v1034
        %1036 = vmatmul.f32.gmra.mxu0 %v980
        %v1037 = vpop.f32.mrf.mxu0
        %v1038 = vadd.f32 0.0, %v1037
        %1039 = vdwg.mxu0
        %v1040 = vadd.f32 %v878, %v1000
        %v1041 = vadd.f32 %v879, %v1029
        %v1042 = vadd.f32 %v880, %v1003
        %v1043 = vadd.f32 %v881, %v1032
        %v1044 = vadd.f32 %v882, %v1006
        %v1045 = vadd.f32 %v883, %v1035
        %v1046 = vadd.f32 %v884, %v1009
        %v1047 = vadd.f32 %v885, %v1038
        %s1048 = scalar_lea.vmem [#allocation3], 128
        %v1049 = vld [vmem:[%s1048] sm:$0xff]
        %v1050 = vld [vmem:[%s1048 + $0x8] sm:$0xff]
        %v1051 = vld [vmem:[%s1048 + $0x10] sm:$0xff]
        %v1052 = vld [vmem:[%s1048 + $0x18] sm:$0xff]
        %1065 = vrot.lane.b32.xlu0 %v405, 64
        %v1066 = vpop.permute.xlu0 %1065
        %1067 = vrot.lane.b32.xlu0 %v406, 64
        %v1068 = vpop.permute.xlu0 %1067
        %1069 = vrot.lane.b32.xlu0 %v407, 64
        %v1070 = vpop.permute.xlu0 %1069
        %1071 = vrot.lane.b32.xlu0 %v408, 64
        %v1072 = vpop.permute.xlu0 %1071
        %1073 = vrot.lane.b32.xlu0 %v409, 64
        %v1074 = vpop.permute.xlu0 %1073
        %1075 = vrot.lane.b32.xlu0 %v410, 64
        %v1076 = vpop.permute.xlu0 %1075
        %1077 = vrot.lane.b32.xlu0 %v411, 64
        %v1078 = vpop.permute.xlu0 %1077
        %1079 = vrot.lane.b32.xlu0 %v412, 64
        %v1080 = vpop.permute.xlu0 %1079
        %1081 = vrot.lane.b32.xlu0 %v413, 64
        %v1082 = vpop.permute.xlu0 %1081
        %1083 = vrot.lane.b32.xlu0 %v414, 64
        %v1084 = vpop.permute.xlu0 %1083
        %1085 = vrot.lane.b32.xlu0 %v415, 64
        %v1086 = vpop.permute.xlu0 %1085
        %1087 = vrot.lane.b32.xlu0 %v416, 64
        %v1088 = vpop.permute.xlu0 %1087
        %vm1089 = vcmask 523264
        %v1090 = vsel %vm1089, %v1066, %v1068
        %v1091 = vsel %vm1089, %v1068, %v1070
        %v1092 = vsel %vm1089, %v1072, %v1074
        %v1093 = vsel %vm1089, %v1074, %v1076
        %v1094 = vsel %vm1089, %v1078, %v1080
        %v1095 = vsel %vm1089, %v1080, %v1082
        %v1096 = vsel %vm1089, %v1084, %v1086
        %v1097 = vsel %vm1089, %v1086, %v1088
        %v1107 = vsel %vm530, %v1049, 0
        %v1110 = vsel %vm530, %v1050, 0
        %v1113 = vsel %vm530, %v1051, 0
        %v1116 = vsel %vm530, %v1052, 0
        %1118 = vmatpush.msra.mxu0 0.0
        %1119 = vmatpush.msra.mxu0 0.0
        %1120 = vmatpush.msra.mxu0 0.0
        %1121 = vmatpush.msra.mxu0 0.0
        %1122 = vmatpush.msra.mxu0 0.0
        %1123 = vmatpush.msra.mxu0 0.0
        %1124 = vmatpush.msra.mxu0 0.0
        %1125 = vmatpush.msra.mxu0 0.0
        %1126 = vmatpush.msra.mxu0 0.0
        %1127 = vmatpush.msra.mxu0 0.0
        %1128 = vmatpush.msra.mxu0 0.0
        %1129 = vmatpush.msra.mxu0 0.0
        %1130 = vmatpush.msra.mxu0 %v1096
        %1131 = vmatpush.msra.mxu0 %v1094
        %1132 = vmatpush.msra.mxu0 %v1092
        %1133 = vmatpush.msra.mxu0 %v1090
        %1134 = vmatmul.f32.gmra.mxu0 %v1107
        %v1135 = vpop.f32.mrf.mxu0
        %v1136 = vadd.f32 0.0, %v1135
        %1137 = vmatmul.f32.gmra.mxu0 %v1110
        %v1138 = vpop.f32.mrf.mxu0
        %v1139 = vadd.f32 0.0, %v1138
        %1140 = vmatmul.f32.gmra.mxu0 %v1113
        %v1141 = vpop.f32.mrf.mxu0
        %v1142 = vadd.f32 0.0, %v1141
        %1143 = vmatmul.f32.gmra.mxu0 %v1116
        %v1144 = vpop.f32.mrf.mxu0
        %v1145 = vadd.f32 0.0, %v1144
        %1146 = vdwg.mxu0
        %1147 = vmatpush.msra.mxu0 0.0
        %1148 = vmatpush.msra.mxu0 0.0
        %1149 = vmatpush.msra.mxu0 0.0
        %1150 = vmatpush.msra.mxu0 0.0
        %1151 = vmatpush.msra.mxu0 0.0
        %1152 = vmatpush.msra.mxu0 0.0
        %1153 = vmatpush.msra.mxu0 0.0
        %1154 = vmatpush.msra.mxu0 0.0
        %1155 = vmatpush.msra.mxu0 0.0
        %1156 = vmatpush.msra.mxu0 0.0
        %1157 = vmatpush.msra.mxu0 0.0
        %1158 = vmatpush.msra.mxu0 0.0
        %1159 = vmatpush.msra.mxu0 %v1097
        %1160 = vmatpush.msra.mxu0 %v1095
        %1161 = vmatpush.msra.mxu0 %v1093
        %1162 = vmatpush.msra.mxu0 %v1091
        %1163 = vmatmul.f32.gmra.mxu0 %v1107
        %v1164 = vpop.f32.mrf.mxu0
        %v1165 = vadd.f32 0.0, %v1164
        %1166 = vmatmul.f32.gmra.mxu0 %v1110
        %v1167 = vpop.f32.mrf.mxu0
        %v1168 = vadd.f32 0.0, %v1167
        %1169 = vmatmul.f32.gmra.mxu0 %v1113
        %v1170 = vpop.f32.mrf.mxu0
        %v1171 = vadd.f32 0.0, %v1170
        %1172 = vmatmul.f32.gmra.mxu0 %v1116
        %v1173 = vpop.f32.mrf.mxu0
        %v1174 = vadd.f32 0.0, %v1173
        %1175 = vdwg.mxu0
        %v1176 = vadd.f32 %v1040, %v1136
        %v1177 = vadd.f32 %v1041, %v1165
        %v1178 = vadd.f32 %v1042, %v1139
        %v1179 = vadd.f32 %v1043, %v1168
        %v1180 = vadd.f32 %v1044, %v1142
        %v1181 = vadd.f32 %v1045, %v1171
        %v1182 = vadd.f32 %v1046, %v1145
        %v1183 = vadd.f32 %v1047, %v1174
        %s1184 = scalar_lea.vmem %s7, 5
        %v1185 = vld [vmem:[%s1184] ss:$8 sm:$0x3]
        %v1187 = vperm.slane %v1185, 0
        %v1188 = vperm.slane %v1185, 1
        %1189 = vrot.lane.b32.xlu0 %v1187, 65
        %v1190 = vpop.permute.xlu0 %1189
        %1191 = vrot.lane.b32.xlu0 %v1188, 65
        %v1192 = vpop.permute.xlu0 %1191
        %v1193 = vsel %vm953, %v1190, %v1192
        %v1197 = vmul.f32 %v405, %v1190
        %v1198 = vmul.f32 %v406, %v1193
        %v1199 = vmul.f32 %v407, %v1192
        %v1200 = vmul.f32 %v408, %v1190
        %v1201 = vmul.f32 %v409, %v1193
        %v1202 = vmul.f32 %v410, %v1192
        %v1203 = vmul.f32 %v411, %v1190
        %v1204 = vmul.f32 %v412, %v1193
        %v1205 = vmul.f32 %v413, %v1192
        %v1206 = vmul.f32 %v414, %v1190
        %v1207 = vmul.f32 %v415, %v1193
        %v1208 = vmul.f32 %v416, %v1192
        %s1209 = scalar_lea.vmem [#allocation3], 160
        %v1210 = vld [vmem:[%s1209] sm:$0xff]
        %v1211 = vld [vmem:[%s1209 + $0x8] sm:$0xff]
        %v1212 = vld [vmem:[%s1209 + $0x10] sm:$0xff]
        %v1213 = vld [vmem:[%s1209 + $0x18] sm:$0xff]
        %1226 = vrot.lane.b32.xlu0 %v1197, 63
        %v1227 = vpop.permute.xlu0 %1226
        %1228 = vrot.lane.b32.xlu0 %v1198, 63
        %v1229 = vpop.permute.xlu0 %1228
        %1230 = vrot.lane.b32.xlu0 %v1199, 63
        %v1231 = vpop.permute.xlu0 %1230
        %1232 = vrot.lane.b32.xlu0 %v1200, 63
        %v1233 = vpop.permute.xlu0 %1232
        %1234 = vrot.lane.b32.xlu0 %v1201, 63
        %v1235 = vpop.permute.xlu0 %1234
        %1236 = vrot.lane.b32.xlu0 %v1202, 63
        %v1237 = vpop.permute.xlu0 %1236
        %1238 = vrot.lane.b32.xlu0 %v1203, 63
        %v1239 = vpop.permute.xlu0 %1238
        %1240 = vrot.lane.b32.xlu0 %v1204, 63
        %v1241 = vpop.permute.xlu0 %1240
        %1242 = vrot.lane.b32.xlu0 %v1205, 63
        %v1243 = vpop.permute.xlu0 %1242
        %1244 = vrot.lane.b32.xlu0 %v1206, 63
        %v1245 = vpop.permute.xlu0 %1244
        %1246 = vrot.lane.b32.xlu0 %v1207, 63
        %v1247 = vpop.permute.xlu0 %1246
        %1248 = vrot.lane.b32.xlu0 %v1208, 63
        %v1249 = vpop.permute.xlu0 %1248
        %v1250 = vsel %vm895, %v1227, %v1229
        %v1251 = vsel %vm895, %v1229, %v1231
        %v1252 = vsel %vm895, %v1233, %v1235
        %v1253 = vsel %vm895, %v1235, %v1237
        %v1254 = vsel %vm895, %v1239, %v1241
        %v1255 = vsel %vm895, %v1241, %v1243
        %v1256 = vsel %vm895, %v1245, %v1247
        %v1257 = vsel %vm895, %v1247, %v1249
        %v1267 = vsel %vm530, %v1210, 0
        %v1270 = vsel %vm530, %v1211, 0
        %v1273 = vsel %vm530, %v1212, 0
        %v1276 = vsel %vm530, %v1213, 0
        %1278 = vmatpush.msra.mxu0 0.0
        %1279 = vmatpush.msra.mxu0 0.0
        %1280 = vmatpush.msra.mxu0 0.0
        %1281 = vmatpush.msra.mxu0 0.0
        %1282 = vmatpush.msra.mxu0 0.0
        %1283 = vmatpush.msra.mxu0 0.0
        %1284 = vmatpush.msra.mxu0 0.0
        %1285 = vmatpush.msra.mxu0 0.0
        %1286 = vmatpush.msra.mxu0 0.0
        %1287 = vmatpush.msra.mxu0 0.0
        %1288 = vmatpush.msra.mxu0 0.0
        %1289 = vmatpush.msra.mxu0 0.0
        %1290 = vmatpush.msra.mxu0 %v1256
        %1291 = vmatpush.msra.mxu0 %v1254
        %1292 = vmatpush.msra.mxu0 %v1252
        %1293 = vmatpush.msra.mxu0 %v1250
        %1294 = vmatmul.f32.gmra.mxu0 %v1267
        %v1295 = vpop.f32.mrf.mxu0
        %v1296 = vadd.f32 0.0, %v1295
        %1297 = vmatmul.f32.gmra.mxu0 %v1270
        %v1298 = vpop.f32.mrf.mxu0
        %v1299 = vadd.f32 0.0, %v1298
        %1300 = vmatmul.f32.gmra.mxu0 %v1273
        %v1301 = vpop.f32.mrf.mxu0
        %v1302 = vadd.f32 0.0, %v1301
        %1303 = vmatmul.f32.gmra.mxu0 %v1276
        %v1304 = vpop.f32.mrf.mxu0
        %v1305 = vadd.f32 0.0, %v1304
        %1306 = vdwg.mxu0
        %1307 = vmatpush.msra.mxu0 0.0
        %1308 = vmatpush.msra.mxu0 0.0
        %1309 = vmatpush.msra.mxu0 0.0
        %1310 = vmatpush.msra.mxu0 0.0
        %1311 = vmatpush.msra.mxu0 0.0
        %1312 = vmatpush.msra.mxu0 0.0
        %1313 = vmatpush.msra.mxu0 0.0
        %1314 = vmatpush.msra.mxu0 0.0
        %1315 = vmatpush.msra.mxu0 0.0
        %1316 = vmatpush.msra.mxu0 0.0
        %1317 = vmatpush.msra.mxu0 0.0
        %1318 = vmatpush.msra.mxu0 0.0
        %1319 = vmatpush.msra.mxu0 %v1257
        %1320 = vmatpush.msra.mxu0 %v1255
        %1321 = vmatpush.msra.mxu0 %v1253
        %1322 = vmatpush.msra.mxu0 %v1251
        %1323 = vmatmul.f32.gmra.mxu0 %v1267
        %v1324 = vpop.f32.mrf.mxu0
        %v1325 = vadd.f32 0.0, %v1324
        %1326 = vmatmul.f32.gmra.mxu0 %v1270
        %v1327 = vpop.f32.mrf.mxu0
        %v1328 = vadd.f32 0.0, %v1327
        %1329 = vmatmul.f32.gmra.mxu0 %v1273
        %v1330 = vpop.f32.mrf.mxu0
        %v1331 = vadd.f32 0.0, %v1330
        %1332 = vmatmul.f32.gmra.mxu0 %v1276
        %v1333 = vpop.f32.mrf.mxu0
        %v1334 = vadd.f32 0.0, %v1333
        %1335 = vdwg.mxu0
        %v1336 = vadd.f32 %v1176, %v1296
        %v1337 = vadd.f32 %v1177, %v1325
        %v1338 = vadd.f32 %v1178, %v1299
        %v1339 = vadd.f32 %v1179, %v1328
        %v1340 = vadd.f32 %v1180, %v1302
        %v1341 = vadd.f32 %v1181, %v1331
        %v1342 = vadd.f32 %v1182, %v1305
        %v1343 = vadd.f32 %v1183, %v1334
        %s1344 = scalar_lea.vmem %s7, 6
        %v1345 = vld [vmem:[%s1344] ss:$8 sm:$0x3]
        %v1347 = vperm.slane %v1345, 0
        %v1348 = vperm.slane %v1345, 1
        %1349 = vrot.lane.b32.xlu0 %v1347, 71
        %v1350 = vpop.permute.xlu0 %1349
        %1351 = vrot.lane.b32.xlu0 %v1348, 71
        %v1352 = vpop.permute.xlu0 %1351
        %v1353 = vsel %vm791, %v1350, %v1352
        %v1357 = vmul.f32 %v405, %v1350
        %v1358 = vmul.f32 %v406, %v1353
        %v1359 = vmul.f32 %v407, %v1352
        %v1360 = vmul.f32 %v408, %v1350
        %v1361 = vmul.f32 %v409, %v1353
        %v1362 = vmul.f32 %v410, %v1352
        %v1363 = vmul.f32 %v411, %v1350
        %v1364 = vmul.f32 %v412, %v1353
        %v1365 = vmul.f32 %v413, %v1352
        %v1366 = vmul.f32 %v414, %v1350
        %v1367 = vmul.f32 %v415, %v1353
        %v1368 = vmul.f32 %v416, %v1352
        %s1369 = scalar_lea.vmem [#allocation3], 192
        %v1370 = vld [vmem:[%s1369] sm:$0xff]
        %v1371 = vld [vmem:[%s1369 + $0x8] sm:$0xff]
        %v1372 = vld [vmem:[%s1369 + $0x10] sm:$0xff]
        %v1373 = vld [vmem:[%s1369 + $0x18] sm:$0xff]
        %1386 = vrot.lane.b32.xlu0 %v1357, 57
        %v1387 = vpop.permute.xlu0 %1386
        %1388 = vrot.lane.b32.xlu0 %v1358, 57
        %v1389 = vpop.permute.xlu0 %1388
        %1390 = vrot.lane.b32.xlu0 %v1359, 57
        %v1391 = vpop.permute.xlu0 %1390
        %1392 = vrot.lane.b32.xlu0 %v1360, 57
        %v1393 = vpop.permute.xlu0 %1392
        %1394 = vrot.lane.b32.xlu0 %v1361, 57
        %v1395 = vpop.permute.xlu0 %1394
        %1396 = vrot.lane.b32.xlu0 %v1362, 57
        %v1397 = vpop.permute.xlu0 %1396
        %1398 = vrot.lane.b32.xlu0 %v1363, 57
        %v1399 = vpop.permute.xlu0 %1398
        %1400 = vrot.lane.b32.xlu0 %v1364, 57
        %v1401 = vpop.permute.xlu0 %1400
        %1402 = vrot.lane.b32.xlu0 %v1365, 57
        %v1403 = vpop.permute.xlu0 %1402
        %1404 = vrot.lane.b32.xlu0 %v1366, 57
        %v1405 = vpop.permute.xlu0 %1404
        %1406 = vrot.lane.b32.xlu0 %v1367, 57
        %v1407 = vpop.permute.xlu0 %1406
        %1408 = vrot.lane.b32.xlu0 %v1368, 57
        %v1409 = vpop.permute.xlu0 %1408
        %v1410 = vsel %vm733, %v1387, %v1389
        %v1411 = vsel %vm733, %v1389, %v1391
        %v1412 = vsel %vm733, %v1393, %v1395
        %v1413 = vsel %vm733, %v1395, %v1397
        %v1414 = vsel %vm733, %v1399, %v1401
        %v1415 = vsel %vm733, %v1401, %v1403
        %v1416 = vsel %vm733, %v1405, %v1407
        %v1417 = vsel %vm733, %v1407, %v1409
        %v1427 = vsel %vm530, %v1370, 0
        %v1430 = vsel %vm530, %v1371, 0
        %v1433 = vsel %vm530, %v1372, 0
        %v1436 = vsel %vm530, %v1373, 0
        %1438 = vmatpush.msra.mxu0 0.0
        %1439 = vmatpush.msra.mxu0 0.0
        %1440 = vmatpush.msra.mxu0 0.0
        %1441 = vmatpush.msra.mxu0 0.0
        %1442 = vmatpush.msra.mxu0 0.0
        %1443 = vmatpush.msra.mxu0 0.0
        %1444 = vmatpush.msra.mxu0 0.0
        %1445 = vmatpush.msra.mxu0 0.0
        %1446 = vmatpush.msra.mxu0 0.0
        %1447 = vmatpush.msra.mxu0 0.0
        %1448 = vmatpush.msra.mxu0 0.0
        %1449 = vmatpush.msra.mxu0 0.0
        %1450 = vmatpush.msra.mxu0 %v1416
        %1451 = vmatpush.msra.mxu0 %v1414
        %1452 = vmatpush.msra.mxu0 %v1412
        %1453 = vmatpush.msra.mxu0 %v1410
        %1454 = vmatmul.f32.gmra.mxu0 %v1427
        %v1455 = vpop.f32.mrf.mxu0
        %v1456 = vadd.f32 0.0, %v1455
        %1457 = vmatmul.f32.gmra.mxu0 %v1430
        %v1458 = vpop.f32.mrf.mxu0
        %v1459 = vadd.f32 0.0, %v1458
        %1460 = vmatmul.f32.gmra.mxu0 %v1433
        %v1461 = vpop.f32.mrf.mxu0
        %v1462 = vadd.f32 0.0, %v1461
        %1463 = vmatmul.f32.gmra.mxu0 %v1436
        %v1464 = vpop.f32.mrf.mxu0
        %v1465 = vadd.f32 0.0, %v1464
        %1466 = vdwg.mxu0
        %1467 = vmatpush.msra.mxu0 0.0
        %1468 = vmatpush.msra.mxu0 0.0
        %1469 = vmatpush.msra.mxu0 0.0
        %1470 = vmatpush.msra.mxu0 0.0
        %1471 = vmatpush.msra.mxu0 0.0
        %1472 = vmatpush.msra.mxu0 0.0
        %1473 = vmatpush.msra.mxu0 0.0
        %1474 = vmatpush.msra.mxu0 0.0
        %1475 = vmatpush.msra.mxu0 0.0
        %1476 = vmatpush.msra.mxu0 0.0
        %1477 = vmatpush.msra.mxu0 0.0
        %1478 = vmatpush.msra.mxu0 0.0
        %1479 = vmatpush.msra.mxu0 %v1417
        %1480 = vmatpush.msra.mxu0 %v1415
        %1481 = vmatpush.msra.mxu0 %v1413
        %1482 = vmatpush.msra.mxu0 %v1411
        %1483 = vmatmul.f32.gmra.mxu0 %v1427
        %v1484 = vpop.f32.mrf.mxu0
        %v1485 = vadd.f32 0.0, %v1484
        %1486 = vmatmul.f32.gmra.mxu0 %v1430
        %v1487 = vpop.f32.mrf.mxu0
        %v1488 = vadd.f32 0.0, %v1487
        %1489 = vmatmul.f32.gmra.mxu0 %v1433
        %v1490 = vpop.f32.mrf.mxu0
        %v1491 = vadd.f32 0.0, %v1490
        %1492 = vmatmul.f32.gmra.mxu0 %v1436
        %v1493 = vpop.f32.mrf.mxu0
        %v1494 = vadd.f32 0.0, %v1493
        %1495 = vdwg.mxu0
        %v1496 = vadd.f32 %v1336, %v1456
        %v1497 = vadd.f32 %v1337, %v1485
        %v1498 = vadd.f32 %v1338, %v1459
        %v1499 = vadd.f32 %v1339, %v1488
        %v1500 = vadd.f32 %v1340, %v1462
        %v1501 = vadd.f32 %v1341, %v1491
        %v1502 = vadd.f32 %v1342, %v1465
        %v1503 = vadd.f32 %v1343, %v1494
        %s1504 = scalar_lea.vmem %s7, 7
        %v1505 = vld [vmem:[%s1504] ss:$8 sm:$0x3]
        %v1507 = vperm.slane %v1505, 0
        %v1508 = vperm.slane %v1505, 1
        %1509 = vrot.lane.b32.xlu0 %v1507, 72
        %v1510 = vpop.permute.xlu0 %1509
        %1511 = vrot.lane.b32.xlu0 %v1508, 72
        %v1512 = vpop.permute.xlu0 %1511
        %v1513 = vsel %vm513, %v1510, %v1512
        %v1517 = vmul.f32 %v405, %v1510
        %v1518 = vmul.f32 %v406, %v1513
        %v1519 = vmul.f32 %v407, %v1512
        %v1520 = vmul.f32 %v408, %v1510
        %v1521 = vmul.f32 %v409, %v1513
        %v1522 = vmul.f32 %v410, %v1512
        %v1523 = vmul.f32 %v411, %v1510
        %v1524 = vmul.f32 %v412, %v1513
        %v1525 = vmul.f32 %v413, %v1512
        %v1526 = vmul.f32 %v414, %v1510
        %v1527 = vmul.f32 %v415, %v1513
        %v1528 = vmul.f32 %v416, %v1512
        %s1529 = scalar_lea.vmem [#allocation3], 224
        %v1530 = vld [vmem:[%s1529] sm:$0xff]
        %v1531 = vld [vmem:[%s1529 + $0x8] sm:$0xff]
        %v1532 = vld [vmem:[%s1529 + $0x10] sm:$0xff]
        %v1533 = vld [vmem:[%s1529 + $0x18] sm:$0xff]
        %1546 = vrot.lane.b32.xlu0 %v1517, 56
        %v1547 = vpop.permute.xlu0 %1546
        %1548 = vrot.lane.b32.xlu0 %v1518, 56
        %v1549 = vpop.permute.xlu0 %1548
        %1550 = vrot.lane.b32.xlu0 %v1519, 56
        %v1551 = vpop.permute.xlu0 %1550
        %1552 = vrot.lane.b32.xlu0 %v1520, 56
        %v1553 = vpop.permute.xlu0 %1552
        %1554 = vrot.lane.b32.xlu0 %v1521, 56
        %v1555 = vpop.permute.xlu0 %1554
        %1556 = vrot.lane.b32.xlu0 %v1522, 56
        %v1557 = vpop.permute.xlu0 %1556
        %1558 = vrot.lane.b32.xlu0 %v1523, 56
        %v1559 = vpop.permute.xlu0 %1558
        %1560 = vrot.lane.b32.xlu0 %v1524, 56
        %v1561 = vpop.permute.xlu0 %1560
        %1562 = vrot.lane.b32.xlu0 %v1525, 56
        %v1563 = vpop.permute.xlu0 %1562
        %1564 = vrot.lane.b32.xlu0 %v1526, 56
        %v1565 = vpop.permute.xlu0 %1564
        %1566 = vrot.lane.b32.xlu0 %v1527, 56
        %v1567 = vpop.permute.xlu0 %1566
        %1568 = vrot.lane.b32.xlu0 %v1528, 56
        %v1569 = vpop.permute.xlu0 %1568
        %v1570 = vsel %vm455, %v1547, %v1549
        %v1571 = vsel %vm455, %v1549, %v1551
        %v1572 = vsel %vm455, %v1553, %v1555
        %v1573 = vsel %vm455, %v1555, %v1557
        %v1574 = vsel %vm455, %v1559, %v1561
        %v1575 = vsel %vm455, %v1561, %v1563
        %v1576 = vsel %vm455, %v1565, %v1567
        %v1577 = vsel %vm455, %v1567, %v1569
        %v1587 = vsel %vm530, %v1530, 0
        %v1590 = vsel %vm530, %v1531, 0
        %v1593 = vsel %vm530, %v1532, 0
        %v1596 = vsel %vm530, %v1533, 0
        %1598 = vmatpush.msra.mxu0 0.0
        %1599 = vmatpush.msra.mxu0 0.0
        %1600 = vmatpush.msra.mxu0 0.0
        %1601 = vmatpush.msra.mxu0 0.0
        %1602 = vmatpush.msra.mxu0 0.0
        %1603 = vmatpush.msra.mxu0 0.0
        %1604 = vmatpush.msra.mxu0 0.0
        %1605 = vmatpush.msra.mxu0 0.0
        %1606 = vmatpush.msra.mxu0 0.0
        %1607 = vmatpush.msra.mxu0 0.0
        %1608 = vmatpush.msra.mxu0 0.0
        %1609 = vmatpush.msra.mxu0 0.0
        %1610 = vmatpush.msra.mxu0 %v1576
        %1611 = vmatpush.msra.mxu0 %v1574
        %1612 = vmatpush.msra.mxu0 %v1572
        %1613 = vmatpush.msra.mxu0 %v1570
        %1614 = vmatmul.f32.gmra.mxu0 %v1587
        %v1615 = vpop.f32.mrf.mxu0
        %v1616 = vadd.f32 0.0, %v1615
        %1617 = vmatmul.f32.gmra.mxu0 %v1590
        %v1618 = vpop.f32.mrf.mxu0
        %v1619 = vadd.f32 0.0, %v1618
        %1620 = vmatmul.f32.gmra.mxu0 %v1593
        %v1621 = vpop.f32.mrf.mxu0
        %v1622 = vadd.f32 0.0, %v1621
        %1623 = vmatmul.f32.gmra.mxu0 %v1596
        %v1624 = vpop.f32.mrf.mxu0
        %v1625 = vadd.f32 0.0, %v1624
        %1626 = vdwg.mxu0
        %1627 = vmatpush.msra.mxu0 0.0
        %1628 = vmatpush.msra.mxu0 0.0
        %1629 = vmatpush.msra.mxu0 0.0
        %1630 = vmatpush.msra.mxu0 0.0
        %1631 = vmatpush.msra.mxu0 0.0
        %1632 = vmatpush.msra.mxu0 0.0
        %1633 = vmatpush.msra.mxu0 0.0
        %1634 = vmatpush.msra.mxu0 0.0
        %1635 = vmatpush.msra.mxu0 0.0
        %1636 = vmatpush.msra.mxu0 0.0
        %1637 = vmatpush.msra.mxu0 0.0
        %1638 = vmatpush.msra.mxu0 0.0
        %1639 = vmatpush.msra.mxu0 %v1577
        %1640 = vmatpush.msra.mxu0 %v1575
        %1641 = vmatpush.msra.mxu0 %v1573
        %1642 = vmatpush.msra.mxu0 %v1571
        %1643 = vmatmul.f32.gmra.mxu0 %v1587
        %v1644 = vpop.f32.mrf.mxu0
        %v1645 = vadd.f32 0.0, %v1644
        %1646 = vmatmul.f32.gmra.mxu0 %v1590
        %v1647 = vpop.f32.mrf.mxu0
        %v1648 = vadd.f32 0.0, %v1647
        %1649 = vmatmul.f32.gmra.mxu0 %v1593
        %v1650 = vpop.f32.mrf.mxu0
        %v1651 = vadd.f32 0.0, %v1650
        %1652 = vmatmul.f32.gmra.mxu0 %v1596
        %v1653 = vpop.f32.mrf.mxu0
        %v1654 = vadd.f32 0.0, %v1653
        %1655 = vdwg.mxu0
        %v1656 = vadd.f32 %v1496, %v1616
        %v1657 = vadd.f32 %v1497, %v1645
        %v1658 = vadd.f32 %v1498, %v1619
        %v1659 = vadd.f32 %v1499, %v1648
        %v1660 = vadd.f32 %v1500, %v1622
        %v1661 = vadd.f32 %v1501, %v1651
        %v1662 = vadd.f32 %v1502, %v1625
        %v1663 = vadd.f32 %v1503, %v1654
        %s1664 = scalar_lea.vmem %s7, 16
        %v1665 = vld [vmem:[%s1664] ss:$8 sm:$0x3]
        %v1667 = vperm.slane %v1665, 0
        %v1668 = vperm.slane %v1665, 1
        %1669 = vrot.lane.b32.xlu0 %v1667, 73
        %v1670 = vpop.permute.xlu0 %1669
        %1671 = vrot.lane.b32.xlu0 %v1668, 73
        %v1672 = vpop.permute.xlu0 %1671
        %v1673 = vsel %vm637, %v1670, %v1672
        %v1677 = vmul.f32 %v405, %v1670
        %v1678 = vmul.f32 %v406, %v1673
        %v1679 = vmul.f32 %v407, %v1672
        %v1680 = vmul.f32 %v408, %v1670
        %v1681 = vmul.f32 %v409, %v1673
        %v1682 = vmul.f32 %v410, %v1672
        %v1683 = vmul.f32 %v411, %v1670
        %v1684 = vmul.f32 %v412, %v1673
        %v1685 = vmul.f32 %v413, %v1672
        %v1686 = vmul.f32 %v414, %v1670
        %v1687 = vmul.f32 %v415, %v1673
        %v1688 = vmul.f32 %v416, %v1672
        %s1689 = scalar_lea.vmem [#allocation3], 256
        %v1690 = vld [vmem:[%s1689] sm:$0xff]
        %v1691 = vld [vmem:[%s1689 + $0x8] sm:$0xff]
        %v1692 = vld [vmem:[%s1689 + $0x10] sm:$0xff]
        %v1693 = vld [vmem:[%s1689 + $0x18] sm:$0xff]
        %1706 = vrot.lane.b32.xlu0 %v1677, 55
        %v1707 = vpop.permute.xlu0 %1706
        %1708 = vrot.lane.b32.xlu0 %v1678, 55
        %v1709 = vpop.permute.xlu0 %1708
        %1710 = vrot.lane.b32.xlu0 %v1679, 55
        %v1711 = vpop.permute.xlu0 %1710
        %1712 = vrot.lane.b32.xlu0 %v1680, 55
        %v1713 = vpop.permute.xlu0 %1712
        %1714 = vrot.lane.b32.xlu0 %v1681, 55
        %v1715 = vpop.permute.xlu0 %1714
        %1716 = vrot.lane.b32.xlu0 %v1682, 55
        %v1717 = vpop.permute.xlu0 %1716
        %1718 = vrot.lane.b32.xlu0 %v1683, 55
        %v1719 = vpop.permute.xlu0 %1718
        %1720 = vrot.lane.b32.xlu0 %v1684, 55
        %v1721 = vpop.permute.xlu0 %1720
        %1722 = vrot.lane.b32.xlu0 %v1685, 55
        %v1723 = vpop.permute.xlu0 %1722
        %1724 = vrot.lane.b32.xlu0 %v1686, 55
        %v1725 = vpop.permute.xlu0 %1724
        %1726 = vrot.lane.b32.xlu0 %v1687, 55
        %v1727 = vpop.permute.xlu0 %1726
        %1728 = vrot.lane.b32.xlu0 %v1688, 55
        %v1729 = vpop.permute.xlu0 %1728
        %v1730 = vsel %vm425, %v1707, %v1709
        %v1731 = vsel %vm425, %v1709, %v1711
        %v1732 = vsel %vm425, %v1713, %v1715
        %v1733 = vsel %vm425, %v1715, %v1717
        %v1734 = vsel %vm425, %v1719, %v1721
        %v1735 = vsel %vm425, %v1721, %v1723
        %v1736 = vsel %vm425, %v1725, %v1727
        %v1737 = vsel %vm425, %v1727, %v1729
        %v1747 = vsel %vm530, %v1690, 0
        %v1750 = vsel %vm530, %v1691, 0
        %v1753 = vsel %vm530, %v1692, 0
        %v1756 = vsel %vm530, %v1693, 0
        %1758 = vmatpush.msra.mxu0 0.0
        %1759 = vmatpush.msra.mxu0 0.0
        %1760 = vmatpush.msra.mxu0 0.0
        %1761 = vmatpush.msra.mxu0 0.0
        %1762 = vmatpush.msra.mxu0 0.0
        %1763 = vmatpush.msra.mxu0 0.0
        %1764 = vmatpush.msra.mxu0 0.0
        %1765 = vmatpush.msra.mxu0 0.0
        %1766 = vmatpush.msra.mxu0 0.0
        %1767 = vmatpush.msra.mxu0 0.0
        %1768 = vmatpush.msra.mxu0 0.0
        %1769 = vmatpush.msra.mxu0 0.0
        %1770 = vmatpush.msra.mxu0 %v1736
        %1771 = vmatpush.msra.mxu0 %v1734
        %1772 = vmatpush.msra.mxu0 %v1732
        %1773 = vmatpush.msra.mxu0 %v1730
        %1774 = vmatmul.f32.gmra.mxu0 %v1747
        %v1775 = vpop.f32.mrf.mxu0
        %v1776 = vadd.f32 0.0, %v1775
        %1777 = vmatmul.f32.gmra.mxu0 %v1750
        %v1778 = vpop.f32.mrf.mxu0
        %v1779 = vadd.f32 0.0, %v1778
        %1780 = vmatmul.f32.gmra.mxu0 %v1753
        %v1781 = vpop.f32.mrf.mxu0
        %v1782 = vadd.f32 0.0, %v1781
        %1783 = vmatmul.f32.gmra.mxu0 %v1756
        %v1784 = vpop.f32.mrf.mxu0
        %v1785 = vadd.f32 0.0, %v1784
        %1786 = vdwg.mxu0
        %1787 = vmatpush.msra.mxu0 0.0
        %1788 = vmatpush.msra.mxu0 0.0
        %1789 = vmatpush.msra.mxu0 0.0
        %1790 = vmatpush.msra.mxu0 0.0
        %1791 = vmatpush.msra.mxu0 0.0
        %1792 = vmatpush.msra.mxu0 0.0
        %1793 = vmatpush.msra.mxu0 0.0
        %1794 = vmatpush.msra.mxu0 0.0
        %1795 = vmatpush.msra.mxu0 0.0
        %1796 = vmatpush.msra.mxu0 0.0
        %1797 = vmatpush.msra.mxu0 0.0
        %1798 = vmatpush.msra.mxu0 0.0
        %1799 = vmatpush.msra.mxu0 %v1737
        %1800 = vmatpush.msra.mxu0 %v1735
        %1801 = vmatpush.msra.mxu0 %v1733
        %1802 = vmatpush.msra.mxu0 %v1731
        %1803 = vmatmul.f32.gmra.mxu0 %v1747
        %v1804 = vpop.f32.mrf.mxu0
        %v1805 = vadd.f32 0.0, %v1804
        %1806 = vmatmul.f32.gmra.mxu0 %v1750
        %v1807 = vpop.f32.mrf.mxu0
        %v1808 = vadd.f32 0.0, %v1807
        %1809 = vmatmul.f32.gmra.mxu0 %v1753
        %v1810 = vpop.f32.mrf.mxu0
        %v1811 = vadd.f32 0.0, %v1810
        %1812 = vmatmul.f32.gmra.mxu0 %v1756
        %v1813 = vpop.f32.mrf.mxu0
        %v1814 = vadd.f32 0.0, %v1813
        %1815 = vdwg.mxu0
        %v1816 = vadd.f32 %v1656, %v1776
        %v1817 = vadd.f32 %v1657, %v1805
        %v1818 = vadd.f32 %v1658, %v1779
        %v1819 = vadd.f32 %v1659, %v1808
        %v1820 = vadd.f32 %v1660, %v1782
        %v1821 = vadd.f32 %v1661, %v1811
        %v1822 = vadd.f32 %v1662, %v1785
        %v1823 = vadd.f32 %v1663, %v1814
        %s1824 = scalar_lea.vmem %s7, 17
        %v1825 = vld [vmem:[%s1824] ss:$8 sm:$0x3]
        %v1827 = vperm.slane %v1825, 0
        %v1828 = vperm.slane %v1825, 1
        %1829 = vrot.lane.b32.xlu0 %v1827, 119
        %v1830 = vpop.permute.xlu0 %1829
        %1831 = vrot.lane.b32.xlu0 %v1828, 119
        %v1832 = vpop.permute.xlu0 %1831
        %vm1833 = vcmask 973824
        %v1834 = vsel %vm1833, %v1830, %v1832
        %v1838 = vmul.f32 %v405, %v1830
        %v1839 = vmul.f32 %v406, %v1834
        %v1840 = vmul.f32 %v407, %v1832
        %v1841 = vmul.f32 %v408, %v1830
        %v1842 = vmul.f32 %v409, %v1834
        %v1843 = vmul.f32 %v410, %v1832
        %v1844 = vmul.f32 %v411, %v1830
        %v1845 = vmul.f32 %v412, %v1834
        %v1846 = vmul.f32 %v413, %v1832
        %v1847 = vmul.f32 %v414, %v1830
        %v1848 = vmul.f32 %v415, %v1834
        %v1849 = vmul.f32 %v416, %v1832
        %s1850 = scalar_lea.vmem [#allocation3], 288
        %v1851 = vld [vmem:[%s1850] sm:$0xff]
        %v1852 = vld [vmem:[%s1850 + $0x8] sm:$0xff]
        %v1853 = vld [vmem:[%s1850 + $0x10] sm:$0xff]
        %v1854 = vld [vmem:[%s1850 + $0x18] sm:$0xff]
        %1867 = vrot.lane.b32.xlu0 %v1838, 9
        %v1868 = vpop.permute.xlu0 %1867
        %1869 = vrot.lane.b32.xlu0 %v1839, 9
        %v1870 = vpop.permute.xlu0 %1869
        %1871 = vrot.lane.b32.xlu0 %v1840, 9
        %v1872 = vpop.permute.xlu0 %1871
        %1873 = vrot.lane.b32.xlu0 %v1841, 9
        %v1874 = vpop.permute.xlu0 %1873
        %1875 = vrot.lane.b32.xlu0 %v1842, 9
        %v1876 = vpop.permute.xlu0 %1875
        %1877 = vrot.lane.b32.xlu0 %v1843, 9
        %v1878 = vpop.permute.xlu0 %1877
        %1879 = vrot.lane.b32.xlu0 %v1844, 9
        %v1880 = vpop.permute.xlu0 %1879
        %1881 = vrot.lane.b32.xlu0 %v1845, 9
        %v1882 = vpop.permute.xlu0 %1881
        %1883 = vrot.lane.b32.xlu0 %v1846, 9
        %v1884 = vpop.permute.xlu0 %1883
        %1885 = vrot.lane.b32.xlu0 %v1847, 9
        %v1886 = vpop.permute.xlu0 %1885
        %1887 = vrot.lane.b32.xlu0 %v1848, 9
        %v1888 = vpop.permute.xlu0 %1887
        %1889 = vrot.lane.b32.xlu0 %v1849, 9
        %v1890 = vpop.permute.xlu0 %1889
        %vm1891 = vcmask 72704
        %v1892 = vsel %vm1891, %v1868, %v1870
        %v1893 = vsel %vm1891, %v1870, %v1872
        %v1894 = vsel %vm1891, %v1874, %v1876
        %v1895 = vsel %vm1891, %v1876, %v1878
        %v1896 = vsel %vm1891, %v1880, %v1882
        %v1897 = vsel %vm1891, %v1882, %v1884
        %v1898 = vsel %vm1891, %v1886, %v1888
        %v1899 = vsel %vm1891, %v1888, %v1890
        %v1909 = vsel %vm530, %v1851, 0
        %v1912 = vsel %vm530, %v1852, 0
        %v1915 = vsel %vm530, %v1853, 0
        %v1918 = vsel %vm530, %v1854, 0
        %1920 = vmatpush.msra.mxu0 0.0
        %1921 = vmatpush.msra.mxu0 0.0
        %1922 = vmatpush.msra.mxu0 0.0
        %1923 = vmatpush.msra.mxu0 0.0
        %1924 = vmatpush.msra.mxu0 0.0
        %1925 = vmatpush.msra.mxu0 0.0
        %1926 = vmatpush.msra.mxu0 0.0
        %1927 = vmatpush.msra.mxu0 0.0
        %1928 = vmatpush.msra.mxu0 0.0
        %1929 = vmatpush.msra.mxu0 0.0
        %1930 = vmatpush.msra.mxu0 0.0
        %1931 = vmatpush.msra.mxu0 0.0
        %1932 = vmatpush.msra.mxu0 %v1898
        %1933 = vmatpush.msra.mxu0 %v1896
        %1934 = vmatpush.msra.mxu0 %v1894
        %1935 = vmatpush.msra.mxu0 %v1892
        %1936 = vmatmul.f32.gmra.mxu0 %v1909
        %v1937 = vpop.f32.mrf.mxu0
        %v1938 = vadd.f32 0.0, %v1937
        %1939 = vmatmul.f32.gmra.mxu0 %v1912
        %v1940 = vpop.f32.mrf.mxu0
        %v1941 = vadd.f32 0.0, %v1940
        %1942 = vmatmul.f32.gmra.mxu0 %v1915
        %v1943 = vpop.f32.mrf.mxu0
        %v1944 = vadd.f32 0.0, %v1943
        %1945 = vmatmul.f32.gmra.mxu0 %v1918
        %v1946 = vpop.f32.mrf.mxu0
        %v1947 = vadd.f32 0.0, %v1946
        %1948 = vdwg.mxu0
        %1949 = vmatpush.msra.mxu0 0.0
        %1950 = vmatpush.msra.mxu0 0.0
        %1951 = vmatpush.msra.mxu0 0.0
        %1952 = vmatpush.msra.mxu0 0.0
        %1953 = vmatpush.msra.mxu0 0.0
        %1954 = vmatpush.msra.mxu0 0.0
        %1955 = vmatpush.msra.mxu0 0.0
        %1956 = vmatpush.msra.mxu0 0.0
        %1957 = vmatpush.msra.mxu0 0.0
        %1958 = vmatpush.msra.mxu0 0.0
        %1959 = vmatpush.msra.mxu0 0.0
        %1960 = vmatpush.msra.mxu0 0.0
        %1961 = vmatpush.msra.mxu0 %v1899
        %1962 = vmatpush.msra.mxu0 %v1897
        %1963 = vmatpush.msra.mxu0 %v1895
        %1964 = vmatpush.msra.mxu0 %v1893
        %1965 = vmatmul.f32.gmra.mxu0 %v1909
        %v1966 = vpop.f32.mrf.mxu0
        %v1967 = vadd.f32 0.0, %v1966
        %1968 = vmatmul.f32.gmra.mxu0 %v1912
        %v1969 = vpop.f32.mrf.mxu0
        %v1970 = vadd.f32 0.0, %v1969
        %1971 = vmatmul.f32.gmra.mxu0 %v1915
        %v1972 = vpop.f32.mrf.mxu0
        %v1973 = vadd.f32 0.0, %v1972
        %1974 = vmatmul.f32.gmra.mxu0 %v1918
        %v1975 = vpop.f32.mrf.mxu0
        %v1976 = vadd.f32 0.0, %v1975
        %1977 = vdwg.mxu0
        %v1978 = vadd.f32 %v1816, %v1938
        %v1979 = vadd.f32 %v1817, %v1967
        %v1980 = vadd.f32 %v1818, %v1941
        %v1981 = vadd.f32 %v1819, %v1970
        %v1982 = vadd.f32 %v1820, %v1944
        %v1983 = vadd.f32 %v1821, %v1973
        %v1984 = vadd.f32 %v1822, %v1947
        %v1985 = vadd.f32 %v1823, %v1976
        %s1986 = scalar_lea.vmem %s7, 18
        %v1987 = vld [vmem:[%s1986] ss:$8 sm:$0x3]
        %v1989 = vperm.slane %v1987, 0
        %v1990 = vperm.slane %v1987, 1
        %1991 = vrot.lane.b32.xlu0 %v1989, 120
        %v1992 = vpop.permute.xlu0 %1991
        %1993 = vrot.lane.b32.xlu0 %v1990, 120
        %v1994 = vpop.permute.xlu0 %1993
        %vm1995 = vcmask 982016
        %v1996 = vsel %vm1995, %v1992, %v1994
        %v2000 = vmul.f32 %v405, %v1992
        %v2001 = vmul.f32 %v406, %v1996
        %v2002 = vmul.f32 %v407, %v1994
        %v2003 = vmul.f32 %v408, %v1992
        %v2004 = vmul.f32 %v409, %v1996
        %v2005 = vmul.f32 %v410, %v1994
        %v2006 = vmul.f32 %v411, %v1992
        %v2007 = vmul.f32 %v412, %v1996
        %v2008 = vmul.f32 %v413, %v1994
        %v2009 = vmul.f32 %v414, %v1992
        %v2010 = vmul.f32 %v415, %v1996
        %v2011 = vmul.f32 %v416, %v1994
        %s2012 = scalar_lea.vmem [#allocation3], 320
        %v2013 = vld [vmem:[%s2012] sm:$0xff]
        %v2014 = vld [vmem:[%s2012 + $0x8] sm:$0xff]
        %v2015 = vld [vmem:[%s2012 + $0x10] sm:$0xff]
        %v2016 = vld [vmem:[%s2012 + $0x18] sm:$0xff]
        %2029 = vrot.lane.b32.xlu0 %v2000, 8
        %v2030 = vpop.permute.xlu0 %2029
        %2031 = vrot.lane.b32.xlu0 %v2001, 8
        %v2032 = vpop.permute.xlu0 %2031
        %2033 = vrot.lane.b32.xlu0 %v2002, 8
        %v2034 = vpop.permute.xlu0 %2033
        %2035 = vrot.lane.b32.xlu0 %v2003, 8
        %v2036 = vpop.permute.xlu0 %2035
        %2037 = vrot.lane.b32.xlu0 %v2004, 8
        %v2038 = vpop.permute.xlu0 %2037
        %2039 = vrot.lane.b32.xlu0 %v2005, 8
        %v2040 = vpop.permute.xlu0 %2039
        %2041 = vrot.lane.b32.xlu0 %v2006, 8
        %v2042 = vpop.permute.xlu0 %2041
        %2043 = vrot.lane.b32.xlu0 %v2007, 8
        %v2044 = vpop.permute.xlu0 %2043
        %2045 = vrot.lane.b32.xlu0 %v2008, 8
        %v2046 = vpop.permute.xlu0 %2045
        %2047 = vrot.lane.b32.xlu0 %v2009, 8
        %v2048 = vpop.permute.xlu0 %2047
        %2049 = vrot.lane.b32.xlu0 %v2010, 8
        %v2050 = vpop.permute.xlu0 %2049
        %2051 = vrot.lane.b32.xlu0 %v2011, 8
        %v2052 = vpop.permute.xlu0 %2051
        %vm2053 = vcmask 64512
        %v2054 = vsel %vm2053, %v2030, %v2032
        %v2055 = vsel %vm2053, %v2032, %v2034
        %v2056 = vsel %vm2053, %v2036, %v2038
        %v2057 = vsel %vm2053, %v2038, %v2040
        %v2058 = vsel %vm2053, %v2042, %v2044
        %v2059 = vsel %vm2053, %v2044, %v2046
        %v2060 = vsel %vm2053, %v2048, %v2050
        %v2061 = vsel %vm2053, %v2050, %v2052
        %v2071 = vsel %vm530, %v2013, 0
        %v2074 = vsel %vm530, %v2014, 0
        %v2077 = vsel %vm530, %v2015, 0
        %v2080 = vsel %vm530, %v2016, 0
        %2082 = vmatpush.msra.mxu0 0.0
        %2083 = vmatpush.msra.mxu0 0.0
        %2084 = vmatpush.msra.mxu0 0.0
        %2085 = vmatpush.msra.mxu0 0.0
        %2086 = vmatpush.msra.mxu0 0.0
        %2087 = vmatpush.msra.mxu0 0.0
        %2088 = vmatpush.msra.mxu0 0.0
        %2089 = vmatpush.msra.mxu0 0.0
        %2090 = vmatpush.msra.mxu0 0.0
        %2091 = vmatpush.msra.mxu0 0.0
        %2092 = vmatpush.msra.mxu0 0.0
        %2093 = vmatpush.msra.mxu0 0.0
        %2094 = vmatpush.msra.mxu0 %v2060
        %2095 = vmatpush.msra.mxu0 %v2058
        %2096 = vmatpush.msra.mxu0 %v2056
        %2097 = vmatpush.msra.mxu0 %v2054
        %2098 = vmatmul.f32.gmra.mxu0 %v2071
        %v2099 = vpop.f32.mrf.mxu0
        %v2100 = vadd.f32 0.0, %v2099
        %2101 = vmatmul.f32.gmra.mxu0 %v2074
        %v2102 = vpop.f32.mrf.mxu0
        %v2103 = vadd.f32 0.0, %v2102
        %2104 = vmatmul.f32.gmra.mxu0 %v2077
        %v2105 = vpop.f32.mrf.mxu0
        %v2106 = vadd.f32 0.0, %v2105
        %2107 = vmatmul.f32.gmra.mxu0 %v2080
        %v2108 = vpop.f32.mrf.mxu0
        %v2109 = vadd.f32 0.0, %v2108
        %2110 = vdwg.mxu0
        %2111 = vmatpush.msra.mxu0 0.0
        %2112 = vmatpush.msra.mxu0 0.0
        %2113 = vmatpush.msra.mxu0 0.0
        %2114 = vmatpush.msra.mxu0 0.0
        %2115 = vmatpush.msra.mxu0 0.0
        %2116 = vmatpush.msra.mxu0 0.0
        %2117 = vmatpush.msra.mxu0 0.0
        %2118 = vmatpush.msra.mxu0 0.0
        %2119 = vmatpush.msra.mxu0 0.0
        %2120 = vmatpush.msra.mxu0 0.0
        %2121 = vmatpush.msra.mxu0 0.0
        %2122 = vmatpush.msra.mxu0 0.0
        %2123 = vmatpush.msra.mxu0 %v2061
        %2124 = vmatpush.msra.mxu0 %v2059
        %2125 = vmatpush.msra.mxu0 %v2057
        %2126 = vmatpush.msra.mxu0 %v2055
        %2127 = vmatmul.f32.gmra.mxu0 %v2071
        %v2128 = vpop.f32.mrf.mxu0
        %v2129 = vadd.f32 0.0, %v2128
        %2130 = vmatmul.f32.gmra.mxu0 %v2074
        %v2131 = vpop.f32.mrf.mxu0
        %v2132 = vadd.f32 0.0, %v2131
        %2133 = vmatmul.f32.gmra.mxu0 %v2077
        %v2134 = vpop.f32.mrf.mxu0
        %v2135 = vadd.f32 0.0, %v2134
        %2136 = vmatmul.f32.gmra.mxu0 %v2080
        %v2137 = vpop.f32.mrf.mxu0
        %v2138 = vadd.f32 0.0, %v2137
        %2139 = vdwg.mxu0
        %v2140 = vadd.f32 %v1978, %v2100
        %v2141 = vadd.f32 %v1979, %v2129
        %v2142 = vadd.f32 %v1980, %v2103
        %v2143 = vadd.f32 %v1981, %v2132
        %v2144 = vadd.f32 %v1982, %v2106
        %v2145 = vadd.f32 %v1983, %v2135
        %v2146 = vadd.f32 %v1984, %v2109
        %v2147 = vadd.f32 %v1985, %v2138
        %s2148 = scalar_lea.vmem %s7, 19
        %v2149 = vld [vmem:[%s2148] ss:$8 sm:$0x3]
        %v2151 = vperm.slane %v2149, 0
        %v2152 = vperm.slane %v2149, 1
        %2153 = vrot.lane.b32.xlu0 %v2151, 121
        %v2154 = vpop.permute.xlu0 %2153
        %2155 = vrot.lane.b32.xlu0 %v2152, 121
        %v2156 = vpop.permute.xlu0 %2155
        %vm2157 = vcmask 990208
        %v2158 = vsel %vm2157, %v2154, %v2156
        %v2162 = vmul.f32 %v405, %v2154
        %v2163 = vmul.f32 %v406, %v2158
        %v2164 = vmul.f32 %v407, %v2156
        %v2165 = vmul.f32 %v408, %v2154
        %v2166 = vmul.f32 %v409, %v2158
        %v2167 = vmul.f32 %v410, %v2156
        %v2168 = vmul.f32 %v411, %v2154
        %v2169 = vmul.f32 %v412, %v2158
        %v2170 = vmul.f32 %v413, %v2156
        %v2171 = vmul.f32 %v414, %v2154
        %v2172 = vmul.f32 %v415, %v2158
        %v2173 = vmul.f32 %v416, %v2156
        %s2174 = scalar_lea.vmem [#allocation3], 352
        %v2175 = vld [vmem:[%s2174] sm:$0xff]
        %v2176 = vld [vmem:[%s2174 + $0x8] sm:$0xff]
        %v2177 = vld [vmem:[%s2174 + $0x10] sm:$0xff]
        %v2178 = vld [vmem:[%s2174 + $0x18] sm:$0xff]
        %2191 = vrot.lane.b32.xlu0 %v2162, 7
        %v2192 = vpop.permute.xlu0 %2191
        %2193 = vrot.lane.b32.xlu0 %v2163, 7
        %v2194 = vpop.permute.xlu0 %2193
        %2195 = vrot.lane.b32.xlu0 %v2164, 7
        %v2196 = vpop.permute.xlu0 %2195
        %2197 = vrot.lane.b32.xlu0 %v2165, 7
        %v2198 = vpop.permute.xlu0 %2197
        %2199 = vrot.lane.b32.xlu0 %v2166, 7
        %v2200 = vpop.permute.xlu0 %2199
        %2201 = vrot.lane.b32.xlu0 %v2167, 7
        %v2202 = vpop.permute.xlu0 %2201
        %2203 = vrot.lane.b32.xlu0 %v2168, 7
        %v2204 = vpop.permute.xlu0 %2203
        %2205 = vrot.lane.b32.xlu0 %v2169, 7
        %v2206 = vpop.permute.xlu0 %2205
        %2207 = vrot.lane.b32.xlu0 %v2170, 7
        %v2208 = vpop.permute.xlu0 %2207
        %2209 = vrot.lane.b32.xlu0 %v2171, 7
        %v2210 = vpop.permute.xlu0 %2209
        %2211 = vrot.lane.b32.xlu0 %v2172, 7
        %v2212 = vpop.permute.xlu0 %2211
        %2213 = vrot.lane.b32.xlu0 %v2173, 7
        %v2214 = vpop.permute.xlu0 %2213
        %vm2215 = vcmask 56320
        %v2216 = vsel %vm2215, %v2192, %v2194
        %v2217 = vsel %vm2215, %v2194, %v2196
        %v2218 = vsel %vm2215, %v2198, %v2200
        %v2219 = vsel %vm2215, %v2200, %v2202
        %v2220 = vsel %vm2215, %v2204, %v2206
        %v2221 = vsel %vm2215, %v2206, %v2208
        %v2222 = vsel %vm2215, %v2210, %v2212
        %v2223 = vsel %vm2215, %v2212, %v2214
        %v2233 = vsel %vm530, %v2175, 0
        %v2236 = vsel %vm530, %v2176, 0
        %v2239 = vsel %vm530, %v2177, 0
        %v2242 = vsel %vm530, %v2178, 0
        %2244 = vmatpush.msra.mxu0 0.0
        %2245 = vmatpush.msra.mxu0 0.0
        %2246 = vmatpush.msra.mxu0 0.0
        %2247 = vmatpush.msra.mxu0 0.0
        %2248 = vmatpush.msra.mxu0 0.0
        %2249 = vmatpush.msra.mxu0 0.0
        %2250 = vmatpush.msra.mxu0 0.0
        %2251 = vmatpush.msra.mxu0 0.0
        %2252 = vmatpush.msra.mxu0 0.0
        %2253 = vmatpush.msra.mxu0 0.0
        %2254 = vmatpush.msra.mxu0 0.0
        %2255 = vmatpush.msra.mxu0 0.0
        %2256 = vmatpush.msra.mxu0 %v2222
        %2257 = vmatpush.msra.mxu0 %v2220
        %2258 = vmatpush.msra.mxu0 %v2218
        %2259 = vmatpush.msra.mxu0 %v2216
        %2260 = vmatmul.f32.gmra.mxu0 %v2233
        %v2261 = vpop.f32.mrf.mxu0
        %v2262 = vadd.f32 0.0, %v2261
        %2263 = vmatmul.f32.gmra.mxu0 %v2236
        %v2264 = vpop.f32.mrf.mxu0
        %v2265 = vadd.f32 0.0, %v2264
        %2266 = vmatmul.f32.gmra.mxu0 %v2239
        %v2267 = vpop.f32.mrf.mxu0
        %v2268 = vadd.f32 0.0, %v2267
        %2269 = vmatmul.f32.gmra.mxu0 %v2242
        %v2270 = vpop.f32.mrf.mxu0
        %v2271 = vadd.f32 0.0, %v2270
        %2272 = vdwg.mxu0
        %2273 = vmatpush.msra.mxu0 0.0
        %2274 = vmatpush.msra.mxu0 0.0
        %2275 = vmatpush.msra.mxu0 0.0
        %2276 = vmatpush.msra.mxu0 0.0
        %2277 = vmatpush.msra.mxu0 0.0
        %2278 = vmatpush.msra.mxu0 0.0
        %2279 = vmatpush.msra.mxu0 0.0
        %2280 = vmatpush.msra.mxu0 0.0
        %2281 = vmatpush.msra.mxu0 0.0
        %2282 = vmatpush.msra.mxu0 0.0
        %2283 = vmatpush.msra.mxu0 0.0
        %2284 = vmatpush.msra.mxu0 0.0
        %2285 = vmatpush.msra.mxu0 %v2223
        %2286 = vmatpush.msra.mxu0 %v2221
        %2287 = vmatpush.msra.mxu0 %v2219
        %2288 = vmatpush.msra.mxu0 %v2217
        %2289 = vmatmul.f32.gmra.mxu0 %v2233
        %v2290 = vpop.f32.mrf.mxu0
        %v2291 = vadd.f32 0.0, %v2290
        %2292 = vmatmul.f32.gmra.mxu0 %v2236
        %v2293 = vpop.f32.mrf.mxu0
        %v2294 = vadd.f32 0.0, %v2293
        %2295 = vmatmul.f32.gmra.mxu0 %v2239
        %v2296 = vpop.f32.mrf.mxu0
        %v2297 = vadd.f32 0.0, %v2296
        %2298 = vmatmul.f32.gmra.mxu0 %v2242
        %v2299 = vpop.f32.mrf.mxu0
        %v2300 = vadd.f32 0.0, %v2299
        %2301 = vdwg.mxu0
        %v2302 = vadd.f32 %v2140, %v2262
        %v2303 = vadd.f32 %v2141, %v2291
        %v2304 = vadd.f32 %v2142, %v2265
        %v2305 = vadd.f32 %v2143, %v2294
        %v2306 = vadd.f32 %v2144, %v2268
        %v2307 = vadd.f32 %v2145, %v2297
        %v2308 = vadd.f32 %v2146, %v2271
        %v2309 = vadd.f32 %v2147, %v2300
        %s2310 = scalar_lea.vmem %s7, 20
        %v2311 = vld [vmem:[%s2310] ss:$8 sm:$0x3]
        %v2313 = vperm.slane %v2311, 0
        %v2314 = vperm.slane %v2311, 1
        %2315 = vrot.lane.b32.xlu0 %v2313, 127
        %v2316 = vpop.permute.xlu0 %2315
        %2317 = vrot.lane.b32.xlu0 %v2314, 127
        %v2318 = vpop.permute.xlu0 %2317
        %vm2319 = vcmask 1039360
        %v2320 = vsel %vm2319, %v2316, %v2318
        %v2324 = vmul.f32 %v405, %v2316
        %v2325 = vmul.f32 %v406, %v2320
        %v2326 = vmul.f32 %v407, %v2318
        %v2327 = vmul.f32 %v408, %v2316
        %v2328 = vmul.f32 %v409, %v2320
        %v2329 = vmul.f32 %v410, %v2318
        %v2330 = vmul.f32 %v411, %v2316
        %v2331 = vmul.f32 %v412, %v2320
        %v2332 = vmul.f32 %v413, %v2318
        %v2333 = vmul.f32 %v414, %v2316
        %v2334 = vmul.f32 %v415, %v2320
        %v2335 = vmul.f32 %v416, %v2318
        %s2336 = scalar_lea.vmem [#allocation3], 384
        %v2337 = vld [vmem:[%s2336] sm:$0xff]
        %v2338 = vld [vmem:[%s2336 + $0x8] sm:$0xff]
        %v2339 = vld [vmem:[%s2336 + $0x10] sm:$0xff]
        %v2340 = vld [vmem:[%s2336 + $0x18] sm:$0xff]
        %2353 = vrot.lane.b32.xlu0 %v2324, 1
        %v2354 = vpop.permute.xlu0 %2353
        %2355 = vrot.lane.b32.xlu0 %v2325, 1
        %v2356 = vpop.permute.xlu0 %2355
        %2357 = vrot.lane.b32.xlu0 %v2326, 1
        %v2358 = vpop.permute.xlu0 %2357
        %2359 = vrot.lane.b32.xlu0 %v2327, 1
        %v2360 = vpop.permute.xlu0 %2359
        %2361 = vrot.lane.b32.xlu0 %v2328, 1
        %v2362 = vpop.permute.xlu0 %2361
        %2363 = vrot.lane.b32.xlu0 %v2329, 1
        %v2364 = vpop.permute.xlu0 %2363
        %2365 = vrot.lane.b32.xlu0 %v2330, 1
        %v2366 = vpop.permute.xlu0 %2365
        %2367 = vrot.lane.b32.xlu0 %v2331, 1
        %v2368 = vpop.permute.xlu0 %2367
        %2369 = vrot.lane.b32.xlu0 %v2332, 1
        %v2370 = vpop.permute.xlu0 %2369
        %2371 = vrot.lane.b32.xlu0 %v2333, 1
        %v2372 = vpop.permute.xlu0 %2371
        %2373 = vrot.lane.b32.xlu0 %v2334, 1
        %v2374 = vpop.permute.xlu0 %2373
        %2375 = vrot.lane.b32.xlu0 %v2335, 1
        %v2376 = vpop.permute.xlu0 %2375
        %vm2377 = vcmask 7168
        %v2378 = vsel %vm2377, %v2354, %v2356
        %v2379 = vsel %vm2377, %v2356, %v2358
        %v2380 = vsel %vm2377, %v2360, %v2362
        %v2381 = vsel %vm2377, %v2362, %v2364
        %v2382 = vsel %vm2377, %v2366, %v2368
        %v2383 = vsel %vm2377, %v2368, %v2370
        %v2384 = vsel %vm2377, %v2372, %v2374
        %v2385 = vsel %vm2377, %v2374, %v2376
        %v2395 = vsel %vm530, %v2337, 0
        %v2398 = vsel %vm530, %v2338, 0
        %v2401 = vsel %vm530, %v2339, 0
        %v2404 = vsel %vm530, %v2340, 0
        %2406 = vmatpush.msra.mxu0 0.0
        %2407 = vmatpush.msra.mxu0 0.0
        %2408 = vmatpush.msra.mxu0 0.0
        %2409 = vmatpush.msra.mxu0 0.0
        %2410 = vmatpush.msra.mxu0 0.0
        %2411 = vmatpush.msra.mxu0 0.0
        %2412 = vmatpush.msra.mxu0 0.0
        %2413 = vmatpush.msra.mxu0 0.0
        %2414 = vmatpush.msra.mxu0 0.0
        %2415 = vmatpush.msra.mxu0 0.0
        %2416 = vmatpush.msra.mxu0 0.0
        %2417 = vmatpush.msra.mxu0 0.0
        %2418 = vmatpush.msra.mxu0 %v2384
        %2419 = vmatpush.msra.mxu0 %v2382
        %2420 = vmatpush.msra.mxu0 %v2380
        %2421 = vmatpush.msra.mxu0 %v2378
        %2422 = vmatmul.f32.gmra.mxu0 %v2395
        %v2423 = vpop.f32.mrf.mxu0
        %v2424 = vadd.f32 0.0, %v2423
        %2425 = vmatmul.f32.gmra.mxu0 %v2398
        %v2426 = vpop.f32.mrf.mxu0
        %v2427 = vadd.f32 0.0, %v2426
        %2428 = vmatmul.f32.gmra.mxu0 %v2401
        %v2429 = vpop.f32.mrf.mxu0
        %v2430 = vadd.f32 0.0, %v2429
        %2431 = vmatmul.f32.gmra.mxu0 %v2404
        %v2432 = vpop.f32.mrf.mxu0
        %v2433 = vadd.f32 0.0, %v2432
        %2434 = vdwg.mxu0
        %2435 = vmatpush.msra.mxu0 0.0
        %2436 = vmatpush.msra.mxu0 0.0
        %2437 = vmatpush.msra.mxu0 0.0
        %2438 = vmatpush.msra.mxu0 0.0
        %2439 = vmatpush.msra.mxu0 0.0
        %2440 = vmatpush.msra.mxu0 0.0
        %2441 = vmatpush.msra.mxu0 0.0
        %2442 = vmatpush.msra.mxu0 0.0
        %2443 = vmatpush.msra.mxu0 0.0
        %2444 = vmatpush.msra.mxu0 0.0
        %2445 = vmatpush.msra.mxu0 0.0
        %2446 = vmatpush.msra.mxu0 0.0
        %2447 = vmatpush.msra.mxu0 %v2385
        %2448 = vmatpush.msra.mxu0 %v2383
        %2449 = vmatpush.msra.mxu0 %v2381
        %2450 = vmatpush.msra.mxu0 %v2379
        %2451 = vmatmul.f32.gmra.mxu0 %v2395
        %v2452 = vpop.f32.mrf.mxu0
        %v2453 = vadd.f32 0.0, %v2452
        %2454 = vmatmul.f32.gmra.mxu0 %v2398
        %v2455 = vpop.f32.mrf.mxu0
        %v2456 = vadd.f32 0.0, %v2455
        %2457 = vmatmul.f32.gmra.mxu0 %v2401
        %v2458 = vpop.f32.mrf.mxu0
        %v2459 = vadd.f32 0.0, %v2458
        %2460 = vmatmul.f32.gmra.mxu0 %v2404
        %v2461 = vpop.f32.mrf.mxu0
        %v2462 = vadd.f32 0.0, %v2461
        %2463 = vdwg.mxu0
        %v2464 = vadd.f32 %v2302, %v2424
        %v2465 = vadd.f32 %v2303, %v2453
        %v2466 = vadd.f32 %v2304, %v2427
        %v2467 = vadd.f32 %v2305, %v2456
        %v2468 = vadd.f32 %v2306, %v2430
        %v2469 = vadd.f32 %v2307, %v2459
        %v2470 = vadd.f32 %v2308, %v2433
        %v2471 = vadd.f32 %v2309, %v2462
        %s2472 = scalar_lea.vmem [#allocation3], 416
        %v2473 = vld [vmem:[%s2472] sm:$0xff]
        %v2474 = vld [vmem:[%s2472 + $0x8] sm:$0xff]
        %v2475 = vld [vmem:[%s2472 + $0x10] sm:$0xff]
        %v2476 = vld [vmem:[%s2472 + $0x18] sm:$0xff]
        %v2478 = vsel %vm530, %v2473, 0
        %v2481 = vsel %vm530, %v2474, 0
        %v2484 = vsel %vm530, %v2475, 0
        %v2487 = vsel %vm530, %v2476, 0
        %2489 = vmatpush.msra.mxu0 0.0
        %2490 = vmatpush.msra.mxu0 0.0
        %2491 = vmatpush.msra.mxu0 0.0
        %2492 = vmatpush.msra.mxu0 0.0
        %2493 = vmatpush.msra.mxu0 0.0
        %2494 = vmatpush.msra.mxu0 0.0
        %2495 = vmatpush.msra.mxu0 0.0
        %2496 = vmatpush.msra.mxu0 0.0
        %2497 = vmatpush.msra.mxu0 0.0
        %2498 = vmatpush.msra.mxu0 0.0
        %2499 = vmatpush.msra.mxu0 0.0
        %2500 = vmatpush.msra.mxu0 0.0
        %2501 = vmatpush.msra.mxu0 %v415
        %2502 = vmatpush.msra.mxu0 %v412
        %2503 = vmatpush.msra.mxu0 %v409
        %2504 = vmatpush.msra.mxu0 %v406
        %2505 = vmatmul.f32.gmra.mxu0 %v2478
        %v2506 = vpop.f32.mrf.mxu0
        %v2507 = vadd.f32 0.0, %v2506
        %2508 = vmatmul.f32.gmra.mxu0 %v2481
        %v2509 = vpop.f32.mrf.mxu0
        %v2510 = vadd.f32 0.0, %v2509
        %2511 = vmatmul.f32.gmra.mxu0 %v2484
        %v2512 = vpop.f32.mrf.mxu0
        %v2513 = vadd.f32 0.0, %v2512
        %2514 = vmatmul.f32.gmra.mxu0 %v2487
        %v2515 = vpop.f32.mrf.mxu0
        %v2516 = vadd.f32 0.0, %v2515
        %2517 = vdwg.mxu0
        %2518 = vmatpush.msra.mxu0 0.0
        %2519 = vmatpush.msra.mxu0 0.0
        %2520 = vmatpush.msra.mxu0 0.0
        %2521 = vmatpush.msra.mxu0 0.0
        %2522 = vmatpush.msra.mxu0 0.0
        %2523 = vmatpush.msra.mxu0 0.0
        %2524 = vmatpush.msra.mxu0 0.0
        %2525 = vmatpush.msra.mxu0 0.0
        %2526 = vmatpush.msra.mxu0 0.0
        %2527 = vmatpush.msra.mxu0 0.0
        %2528 = vmatpush.msra.mxu0 0.0
        %2529 = vmatpush.msra.mxu0 0.0
        %2530 = vmatpush.msra.mxu0 %v416
        %2531 = vmatpush.msra.mxu0 %v413
        %2532 = vmatpush.msra.mxu0 %v410
        %2533 = vmatpush.msra.mxu0 %v407
        %2534 = vmatmul.f32.gmra.mxu0 %v2478
        %v2535 = vpop.f32.mrf.mxu0
        %v2536 = vadd.f32 0.0, %v2535
        %2537 = vmatmul.f32.gmra.mxu0 %v2481
        %v2538 = vpop.f32.mrf.mxu0
        %v2539 = vadd.f32 0.0, %v2538
        %2540 = vmatmul.f32.gmra.mxu0 %v2484
        %v2541 = vpop.f32.mrf.mxu0
        %v2542 = vadd.f32 0.0, %v2541
        %2543 = vmatmul.f32.gmra.mxu0 %v2487
        %v2544 = vpop.f32.mrf.mxu0
        %v2545 = vadd.f32 0.0, %v2544
        %2546 = vdwg.mxu0
        %v2547 = vadd.f32 %v2464, %v2507
        %v2548 = vadd.f32 %v2465, %v2536
        %v2549 = vadd.f32 %v2466, %v2510
        %v2550 = vadd.f32 %v2467, %v2539
        %v2551 = vadd.f32 %v2468, %v2513
        %v2552 = vadd.f32 %v2469, %v2542
        %v2553 = vadd.f32 %v2470, %v2516
        %v2554 = vadd.f32 %v2471, %v2545
        %v2555 = vld [vmem:[#allocation2 + $0x8] sm:$0xff]
        %v2556 = vld [vmem:[#allocation2 + $0x10] sm:$0xff]
        %v2557 = vld [vmem:[#allocation2 + $0x18] sm:$0xff]
        %v2558 = vld [vmem:[#allocation2 + $0x28] sm:$0xff]
        %v2559 = vld [vmem:[#allocation2 + $0x30] sm:$0xff]
        %v2560 = vld [vmem:[#allocation2 + $0x38] sm:$0xff]
        %v2561 = vld [vmem:[#allocation2 + $0x48] sm:$0xff]
        %v2562 = vld [vmem:[#allocation2 + $0x50] sm:$0xff]
        %v2563 = vld [vmem:[#allocation2 + $0x58] sm:$0xff]
        %v2564 = vld [vmem:[#allocation2 + $0x68] sm:$0xff]
        %v2565 = vld [vmem:[#allocation2 + $0x70] sm:$0xff]
        %v2566 = vld [vmem:[#allocation2 + $0x78] sm:$0xff]
        %s2567 = scalar_lea.vmem %s7, 22
        %v2568 = vld [vmem:[%s2567] ss:$8 sm:$0x3]
        %v2570 = vperm.slane %v2568, 0
        %v2571 = vperm.slane %v2568, 1
        %2572 = vrot.lane.b32.xlu0 %v2570, 1
        %v2573 = vpop.permute.xlu0 %2572
        %2574 = vrot.lane.b32.xlu0 %v2571, 1
        %v2575 = vpop.permute.xlu0 %2574
        %v2576 = vsel %vm2377, %v2573, %v2575
        %v2580 = vmul.f32 %v2555, %v2573
        %v2581 = vmul.f32 %v2556, %v2576
        %v2582 = vmul.f32 %v2557, %v2575
        %v2583 = vmul.f32 %v2558, %v2573
        %v2584 = vmul.f32 %v2559, %v2576
        %v2585 = vmul.f32 %v2560, %v2575
        %v2586 = vmul.f32 %v2561, %v2573
        %v2587 = vmul.f32 %v2562, %v2576
        %v2588 = vmul.f32 %v2563, %v2575
        %v2589 = vmul.f32 %v2564, %v2573
        %v2590 = vmul.f32 %v2565, %v2576
        %v2591 = vmul.f32 %v2566, %v2575
        %s2592 = scalar_lea.vmem [#allocation3], 448
        %v2593 = vld [vmem:[%s2592] sm:$0xff]
        %v2594 = vld [vmem:[%s2592 + $0x8] sm:$0xff]
        %v2595 = vld [vmem:[%s2592 + $0x10] sm:$0xff]
        %v2596 = vld [vmem:[%s2592 + $0x18] sm:$0xff]
        %2609 = vrot.lane.b32.xlu0 %v2580, 127
        %v2610 = vpop.permute.xlu0 %2609
        %2611 = vrot.lane.b32.xlu0 %v2581, 127
        %v2612 = vpop.permute.xlu0 %2611
        %2613 = vrot.lane.b32.xlu0 %v2582, 127
        %v2614 = vpop.permute.xlu0 %2613
        %2615 = vrot.lane.b32.xlu0 %v2583, 127
        %v2616 = vpop.permute.xlu0 %2615
        %2617 = vrot.lane.b32.xlu0 %v2584, 127
        %v2618 = vpop.permute.xlu0 %2617
        %2619 = vrot.lane.b32.xlu0 %v2585, 127
        %v2620 = vpop.permute.xlu0 %2619
        %2621 = vrot.lane.b32.xlu0 %v2586, 127
        %v2622 = vpop.permute.xlu0 %2621
        %2623 = vrot.lane.b32.xlu0 %v2587, 127
        %v2624 = vpop.permute.xlu0 %2623
        %2625 = vrot.lane.b32.xlu0 %v2588, 127
        %v2626 = vpop.permute.xlu0 %2625
        %2627 = vrot.lane.b32.xlu0 %v2589, 127
        %v2628 = vpop.permute.xlu0 %2627
        %2629 = vrot.lane.b32.xlu0 %v2590, 127
        %v2630 = vpop.permute.xlu0 %2629
        %2631 = vrot.lane.b32.xlu0 %v2591, 127
        %v2632 = vpop.permute.xlu0 %2631
        %v2633 = vsel %vm2319, %v2610, %v2612
        %v2634 = vsel %vm2319, %v2612, %v2614
        %v2635 = vsel %vm2319, %v2616, %v2618
        %v2636 = vsel %vm2319, %v2618, %v2620
        %v2637 = vsel %vm2319, %v2622, %v2624
        %v2638 = vsel %vm2319, %v2624, %v2626
        %v2639 = vsel %vm2319, %v2628, %v2630
        %v2640 = vsel %vm2319, %v2630, %v2632
        %v2650 = vsel %vm530, %v2593, 0
        %v2653 = vsel %vm530, %v2594, 0
        %v2656 = vsel %vm530, %v2595, 0
        %v2659 = vsel %vm530, %v2596, 0
        %2661 = vmatpush.msra.mxu0 0.0
        %2662 = vmatpush.msra.mxu0 0.0
        %2663 = vmatpush.msra.mxu0 0.0
        %2664 = vmatpush.msra.mxu0 0.0
        %2665 = vmatpush.msra.mxu0 0.0
        %2666 = vmatpush.msra.mxu0 0.0
        %2667 = vmatpush.msra.mxu0 0.0
        %2668 = vmatpush.msra.mxu0 0.0
        %2669 = vmatpush.msra.mxu0 0.0
        %2670 = vmatpush.msra.mxu0 0.0
        %2671 = vmatpush.msra.mxu0 0.0
        %2672 = vmatpush.msra.mxu0 0.0
        %2673 = vmatpush.msra.mxu0 %v2639
        %2674 = vmatpush.msra.mxu0 %v2637
        %2675 = vmatpush.msra.mxu0 %v2635
        %2676 = vmatpush.msra.mxu0 %v2633
        %2677 = vmatmul.f32.gmra.mxu0 %v2650
        %v2678 = vpop.f32.mrf.mxu0
        %v2679 = vadd.f32 0.0, %v2678
        %2680 = vmatmul.f32.gmra.mxu0 %v2653
        %v2681 = vpop.f32.mrf.mxu0
        %v2682 = vadd.f32 0.0, %v2681
        %2683 = vmatmul.f32.gmra.mxu0 %v2656
        %v2684 = vpop.f32.mrf.mxu0
        %v2685 = vadd.f32 0.0, %v2684
        %2686 = vmatmul.f32.gmra.mxu0 %v2659
        %v2687 = vpop.f32.mrf.mxu0
        %v2688 = vadd.f32 0.0, %v2687
        %2689 = vdwg.mxu0
        %2690 = vmatpush.msra.mxu0 0.0
        %2691 = vmatpush.msra.mxu0 0.0
        %2692 = vmatpush.msra.mxu0 0.0
        %2693 = vmatpush.msra.mxu0 0.0
        %2694 = vmatpush.msra.mxu0 0.0
        %2695 = vmatpush.msra.mxu0 0.0
        %2696 = vmatpush.msra.mxu0 0.0
        %2697 = vmatpush.msra.mxu0 0.0
        %2698 = vmatpush.msra.mxu0 0.0
        %2699 = vmatpush.msra.mxu0 0.0
        %2700 = vmatpush.msra.mxu0 0.0
        %2701 = vmatpush.msra.mxu0 0.0
        %2702 = vmatpush.msra.mxu0 %v2640
        %2703 = vmatpush.msra.mxu0 %v2638
        %2704 = vmatpush.msra.mxu0 %v2636
        %2705 = vmatpush.msra.mxu0 %v2634
        %2706 = vmatmul.f32.gmra.mxu0 %v2650
        %v2707 = vpop.f32.mrf.mxu0
        %v2708 = vadd.f32 0.0, %v2707
        %2709 = vmatmul.f32.gmra.mxu0 %v2653
        %v2710 = vpop.f32.mrf.mxu0
        %v2711 = vadd.f32 0.0, %v2710
        %2712 = vmatmul.f32.gmra.mxu0 %v2656
        %v2713 = vpop.f32.mrf.mxu0
        %v2714 = vadd.f32 0.0, %v2713
        %2715 = vmatmul.f32.gmra.mxu0 %v2659
        %v2716 = vpop.f32.mrf.mxu0
        %v2717 = vadd.f32 0.0, %v2716
        %2718 = vdwg.mxu0
        %v2719 = vadd.f32 %v2547, %v2679
        %v2720 = vadd.f32 %v2548, %v2708
        %v2721 = vadd.f32 %v2549, %v2682
        %v2722 = vadd.f32 %v2550, %v2711
        %v2723 = vadd.f32 %v2551, %v2685
        %v2724 = vadd.f32 %v2552, %v2714
        %v2725 = vadd.f32 %v2553, %v2688
        %v2726 = vadd.f32 %v2554, %v2717
        %s2727 = scalar_lea.vmem %s7, 23
        %v2728 = vld [vmem:[%s2727] ss:$8 sm:$0x3]
        %v2730 = vperm.slane %v2728, 0
        %v2731 = vperm.slane %v2728, 1
        %2732 = vrot.lane.b32.xlu0 %v2730, 7
        %v2733 = vpop.permute.xlu0 %2732
        %2734 = vrot.lane.b32.xlu0 %v2731, 7
        %v2735 = vpop.permute.xlu0 %2734
        %v2736 = vsel %vm2215, %v2733, %v2735
        %v2740 = vmul.f32 %v2555, %v2733
        %v2741 = vmul.f32 %v2556, %v2736
        %v2742 = vmul.f32 %v2557, %v2735
        %v2743 = vmul.f32 %v2558, %v2733
        %v2744 = vmul.f32 %v2559, %v2736
        %v2745 = vmul.f32 %v2560, %v2735
        %v2746 = vmul.f32 %v2561, %v2733
        %v2747 = vmul.f32 %v2562, %v2736
        %v2748 = vmul.f32 %v2563, %v2735
        %v2749 = vmul.f32 %v2564, %v2733
        %v2750 = vmul.f32 %v2565, %v2736
        %v2751 = vmul.f32 %v2566, %v2735
        %s2752 = scalar_lea.vmem [#allocation3], 480
        %v2753 = vld [vmem:[%s2752] sm:$0xff]
        %v2754 = vld [vmem:[%s2752 + $0x8] sm:$0xff]
        %v2755 = vld [vmem:[%s2752 + $0x10] sm:$0xff]
        %v2756 = vld [vmem:[%s2752 + $0x18] sm:$0xff]
        %2769 = vrot.lane.b32.xlu0 %v2740, 121
        %v2770 = vpop.permute.xlu0 %2769
        %2771 = vrot.lane.b32.xlu0 %v2741, 121
        %v2772 = vpop.permute.xlu0 %2771
        %2773 = vrot.lane.b32.xlu0 %v2742, 121
        %v2774 = vpop.permute.xlu0 %2773
        %2775 = vrot.lane.b32.xlu0 %v2743, 121
        %v2776 = vpop.permute.xlu0 %2775
        %2777 = vrot.lane.b32.xlu0 %v2744, 121
        %v2778 = vpop.permute.xlu0 %2777
        %2779 = vrot.lane.b32.xlu0 %v2745, 121
        %v2780 = vpop.permute.xlu0 %2779
        %2781 = vrot.lane.b32.xlu0 %v2746, 121
        %v2782 = vpop.permute.xlu0 %2781
        %2783 = vrot.lane.b32.xlu0 %v2747, 121
        %v2784 = vpop.permute.xlu0 %2783
        %2785 = vrot.lane.b32.xlu0 %v2748, 121
        %v2786 = vpop.permute.xlu0 %2785
        %2787 = vrot.lane.b32.xlu0 %v2749, 121
        %v2788 = vpop.permute.xlu0 %2787
        %2789 = vrot.lane.b32.xlu0 %v2750, 121
        %v2790 = vpop.permute.xlu0 %2789
        %2791 = vrot.lane.b32.xlu0 %v2751, 121
        %v2792 = vpop.permute.xlu0 %2791
        %v2793 = vsel %vm2157, %v2770, %v2772
        %v2794 = vsel %vm2157, %v2772, %v2774
        %v2795 = vsel %vm2157, %v2776, %v2778
        %v2796 = vsel %vm2157, %v2778, %v2780
        %v2797 = vsel %vm2157, %v2782, %v2784
        %v2798 = vsel %vm2157, %v2784, %v2786
        %v2799 = vsel %vm2157, %v2788, %v2790
        %v2800 = vsel %vm2157, %v2790, %v2792
        %v2810 = vsel %vm530, %v2753, 0
        %v2813 = vsel %vm530, %v2754, 0
        %v2816 = vsel %vm530, %v2755, 0
        %v2819 = vsel %vm530, %v2756, 0
        %2821 = vmatpush.msra.mxu0 0.0
        %2822 = vmatpush.msra.mxu0 0.0
        %2823 = vmatpush.msra.mxu0 0.0
        %2824 = vmatpush.msra.mxu0 0.0
        %2825 = vmatpush.msra.mxu0 0.0
        %2826 = vmatpush.msra.mxu0 0.0
        %2827 = vmatpush.msra.mxu0 0.0
        %2828 = vmatpush.msra.mxu0 0.0
        %2829 = vmatpush.msra.mxu0 0.0
        %2830 = vmatpush.msra.mxu0 0.0
        %2831 = vmatpush.msra.mxu0 0.0
        %2832 = vmatpush.msra.mxu0 0.0
        %2833 = vmatpush.msra.mxu0 %v2799
        %2834 = vmatpush.msra.mxu0 %v2797
        %2835 = vmatpush.msra.mxu0 %v2795
        %2836 = vmatpush.msra.mxu0 %v2793
        %2837 = vmatmul.f32.gmra.mxu0 %v2810
        %v2838 = vpop.f32.mrf.mxu0
        %v2839 = vadd.f32 0.0, %v2838
        %2840 = vmatmul.f32.gmra.mxu0 %v2813
        %v2841 = vpop.f32.mrf.mxu0
        %v2842 = vadd.f32 0.0, %v2841
        %2843 = vmatmul.f32.gmra.mxu0 %v2816
        %v2844 = vpop.f32.mrf.mxu0
        %v2845 = vadd.f32 0.0, %v2844
        %2846 = vmatmul.f32.gmra.mxu0 %v2819
        %v2847 = vpop.f32.mrf.mxu0
        %v2848 = vadd.f32 0.0, %v2847
        %2849 = vdwg.mxu0
        %2850 = vmatpush.msra.mxu0 0.0
        %2851 = vmatpush.msra.mxu0 0.0
        %2852 = vmatpush.msra.mxu0 0.0
        %2853 = vmatpush.msra.mxu0 0.0
        %2854 = vmatpush.msra.mxu0 0.0
        %2855 = vmatpush.msra.mxu0 0.0
        %2856 = vmatpush.msra.mxu0 0.0
        %2857 = vmatpush.msra.mxu0 0.0
        %2858 = vmatpush.msra.mxu0 0.0
        %2859 = vmatpush.msra.mxu0 0.0
        %2860 = vmatpush.msra.mxu0 0.0
        %2861 = vmatpush.msra.mxu0 0.0
        %2862 = vmatpush.msra.mxu0 %v2800
        %2863 = vmatpush.msra.mxu0 %v2798
        %2864 = vmatpush.msra.mxu0 %v2796
        %2865 = vmatpush.msra.mxu0 %v2794
        %2866 = vmatmul.f32.gmra.mxu0 %v2810
        %v2867 = vpop.f32.mrf.mxu0
        %v2868 = vadd.f32 0.0, %v2867
        %2869 = vmatmul.f32.gmra.mxu0 %v2813
        %v2870 = vpop.f32.mrf.mxu0
        %v2871 = vadd.f32 0.0, %v2870
        %2872 = vmatmul.f32.gmra.mxu0 %v2816
        %v2873 = vpop.f32.mrf.mxu0
        %v2874 = vadd.f32 0.0, %v2873
        %2875 = vmatmul.f32.gmra.mxu0 %v2819
        %v2876 = vpop.f32.mrf.mxu0
        %v2877 = vadd.f32 0.0, %v2876
        %2878 = vdwg.mxu0
        %v2879 = vadd.f32 %v2719, %v2839
        %v2880 = vadd.f32 %v2720, %v2868
        %v2881 = vadd.f32 %v2721, %v2842
        %v2882 = vadd.f32 %v2722, %v2871
        %v2883 = vadd.f32 %v2723, %v2845
        %v2884 = vadd.f32 %v2724, %v2874
        %v2885 = vadd.f32 %v2725, %v2848
        %v2886 = vadd.f32 %v2726, %v2877
        %s2887 = scalar_lea.vmem %s7, 32
        %v2888 = vld [vmem:[%s2887] ss:$8 sm:$0x3]
        %v2890 = vperm.slane %v2888, 0
        %v2891 = vperm.slane %v2888, 1
        %2892 = vrot.lane.b32.xlu0 %v2890, 8
        %v2893 = vpop.permute.xlu0 %2892
        %2894 = vrot.lane.b32.xlu0 %v2891, 8
        %v2895 = vpop.permute.xlu0 %2894
        %v2896 = vsel %vm2053, %v2893, %v2895
        %v2900 = vmul.f32 %v2555, %v2893
        %v2901 = vmul.f32 %v2556, %v2896
        %v2902 = vmul.f32 %v2557, %v2895
        %v2903 = vmul.f32 %v2558, %v2893
        %v2904 = vmul.f32 %v2559, %v2896
        %v2905 = vmul.f32 %v2560, %v2895
        %v2906 = vmul.f32 %v2561, %v2893
        %v2907 = vmul.f32 %v2562, %v2896
        %v2908 = vmul.f32 %v2563, %v2895
        %v2909 = vmul.f32 %v2564, %v2893
        %v2910 = vmul.f32 %v2565, %v2896
        %v2911 = vmul.f32 %v2566, %v2895
        %s2912 = scalar_lea.vmem [#allocation3], 512
        %v2913 = vld [vmem:[%s2912] sm:$0xff]
        %v2914 = vld [vmem:[%s2912 + $0x8] sm:$0xff]
        %v2915 = vld [vmem:[%s2912 + $0x10] sm:$0xff]
        %v2916 = vld [vmem:[%s2912 + $0x18] sm:$0xff]
        %2929 = vrot.lane.b32.xlu0 %v2900, 120
        %v2930 = vpop.permute.xlu0 %2929
        %2931 = vrot.lane.b32.xlu0 %v2901, 120
        %v2932 = vpop.permute.xlu0 %2931
        %2933 = vrot.lane.b32.xlu0 %v2902, 120
        %v2934 = vpop.permute.xlu0 %2933
        %2935 = vrot.lane.b32.xlu0 %v2903, 120
        %v2936 = vpop.permute.xlu0 %2935
        %2937 = vrot.lane.b32.xlu0 %v2904, 120
        %v2938 = vpop.permute.xlu0 %2937
        %2939 = vrot.lane.b32.xlu0 %v2905, 120
        %v2940 = vpop.permute.xlu0 %2939
        %2941 = vrot.lane.b32.xlu0 %v2906, 120
        %v2942 = vpop.permute.xlu0 %2941
        %2943 = vrot.lane.b32.xlu0 %v2907, 120
        %v2944 = vpop.permute.xlu0 %2943
        %2945 = vrot.lane.b32.xlu0 %v2908, 120
        %v2946 = vpop.permute.xlu0 %2945
        %2947 = vrot.lane.b32.xlu0 %v2909, 120
        %v2948 = vpop.permute.xlu0 %2947
        %2949 = vrot.lane.b32.xlu0 %v2910, 120
        %v2950 = vpop.permute.xlu0 %2949
        %2951 = vrot.lane.b32.xlu0 %v2911, 120
        %v2952 = vpop.permute.xlu0 %2951
        %v2953 = vsel %vm1995, %v2930, %v2932
        %v2954 = vsel %vm1995, %v2932, %v2934
        %v2955 = vsel %vm1995, %v2936, %v2938
        %v2956 = vsel %vm1995, %v2938, %v2940
        %v2957 = vsel %vm1995, %v2942, %v2944
        %v2958 = vsel %vm1995, %v2944, %v2946
        %v2959 = vsel %vm1995, %v2948, %v2950
        %v2960 = vsel %vm1995, %v2950, %v2952
        %v2970 = vsel %vm530, %v2913, 0
        %v2973 = vsel %vm530, %v2914, 0
        %v2976 = vsel %vm530, %v2915, 0
        %v2979 = vsel %vm530, %v2916, 0
        %2981 = vmatpush.msra.mxu0 0.0
        %2982 = vmatpush.msra.mxu0 0.0
        %2983 = vmatpush.msra.mxu0 0.0
        %2984 = vmatpush.msra.mxu0 0.0
        %2985 = vmatpush.msra.mxu0 0.0
        %2986 = vmatpush.msra.mxu0 0.0
        %2987 = vmatpush.msra.mxu0 0.0
        %2988 = vmatpush.msra.mxu0 0.0
        %2989 = vmatpush.msra.mxu0 0.0
        %2990 = vmatpush.msra.mxu0 0.0
        %2991 = vmatpush.msra.mxu0 0.0
        %2992 = vmatpush.msra.mxu0 0.0
        %2993 = vmatpush.msra.mxu0 %v2959
        %2994 = vmatpush.msra.mxu0 %v2957
        %2995 = vmatpush.msra.mxu0 %v2955
        %2996 = vmatpush.msra.mxu0 %v2953
        %2997 = vmatmul.f32.gmra.mxu0 %v2970
        %v2998 = vpop.f32.mrf.mxu0
        %v2999 = vadd.f32 0.0, %v2998
        %3000 = vmatmul.f32.gmra.mxu0 %v2973
        %v3001 = vpop.f32.mrf.mxu0
        %v3002 = vadd.f32 0.0, %v3001
        %3003 = vmatmul.f32.gmra.mxu0 %v2976
        %v3004 = vpop.f32.mrf.mxu0
        %v3005 = vadd.f32 0.0, %v3004
        %3006 = vmatmul.f32.gmra.mxu0 %v2979
        %v3007 = vpop.f32.mrf.mxu0
        %v3008 = vadd.f32 0.0, %v3007
        %3009 = vdwg.mxu0
        %3010 = vmatpush.msra.mxu0 0.0
        %3011 = vmatpush.msra.mxu0 0.0
        %3012 = vmatpush.msra.mxu0 0.0
        %3013 = vmatpush.msra.mxu0 0.0
        %3014 = vmatpush.msra.mxu0 0.0
        %3015 = vmatpush.msra.mxu0 0.0
        %3016 = vmatpush.msra.mxu0 0.0
        %3017 = vmatpush.msra.mxu0 0.0
        %3018 = vmatpush.msra.mxu0 0.0
        %3019 = vmatpush.msra.mxu0 0.0
        %3020 = vmatpush.msra.mxu0 0.0
        %3021 = vmatpush.msra.mxu0 0.0
        %3022 = vmatpush.msra.mxu0 %v2960
        %3023 = vmatpush.msra.mxu0 %v2958
        %3024 = vmatpush.msra.mxu0 %v2956
        %3025 = vmatpush.msra.mxu0 %v2954
        %3026 = vmatmul.f32.gmra.mxu0 %v2970
        %v3027 = vpop.f32.mrf.mxu0
        %v3028 = vadd.f32 0.0, %v3027
        %3029 = vmatmul.f32.gmra.mxu0 %v2973
        %v3030 = vpop.f32.mrf.mxu0
        %v3031 = vadd.f32 0.0, %v3030
        %3032 = vmatmul.f32.gmra.mxu0 %v2976
        %v3033 = vpop.f32.mrf.mxu0
        %v3034 = vadd.f32 0.0, %v3033
        %3035 = vmatmul.f32.gmra.mxu0 %v2979
        %v3036 = vpop.f32.mrf.mxu0
        %v3037 = vadd.f32 0.0, %v3036
        %3038 = vdwg.mxu0
        %v3039 = vadd.f32 %v2879, %v2999
        %v3040 = vadd.f32 %v2880, %v3028
        %v3041 = vadd.f32 %v2881, %v3002
        %v3042 = vadd.f32 %v2882, %v3031
        %v3043 = vadd.f32 %v2883, %v3005
        %v3044 = vadd.f32 %v2884, %v3034
        %v3045 = vadd.f32 %v2885, %v3008
        %v3046 = vadd.f32 %v2886, %v3037
        %s3047 = scalar_lea.vmem %s7, 33
        %v3048 = vld [vmem:[%s3047] ss:$8 sm:$0x3]
        %v3050 = vperm.slane %v3048, 0
        %v3051 = vperm.slane %v3048, 1
        %3052 = vrot.lane.b32.xlu0 %v3050, 9
        %v3053 = vpop.permute.xlu0 %3052
        %3054 = vrot.lane.b32.xlu0 %v3051, 9
        %v3055 = vpop.permute.xlu0 %3054
        %v3056 = vsel %vm1891, %v3053, %v3055
        %v3060 = vmul.f32 %v2555, %v3053
        %v3061 = vmul.f32 %v2556, %v3056
        %v3062 = vmul.f32 %v2557, %v3055
        %v3063 = vmul.f32 %v2558, %v3053
        %v3064 = vmul.f32 %v2559, %v3056
        %v3065 = vmul.f32 %v2560, %v3055
        %v3066 = vmul.f32 %v2561, %v3053
        %v3067 = vmul.f32 %v2562, %v3056
        %v3068 = vmul.f32 %v2563, %v3055
        %v3069 = vmul.f32 %v2564, %v3053
        %v3070 = vmul.f32 %v2565, %v3056
        %v3071 = vmul.f32 %v2566, %v3055
        %s3072 = scalar_lea.vmem [#allocation3], 544
        %v3073 = vld [vmem:[%s3072] sm:$0xff]
        %v3074 = vld [vmem:[%s3072 + $0x8] sm:$0xff]
        %v3075 = vld [vmem:[%s3072 + $0x10] sm:$0xff]
        %v3076 = vld [vmem:[%s3072 + $0x18] sm:$0xff]
        %3089 = vrot.lane.b32.xlu0 %v3060, 119
        %v3090 = vpop.permute.xlu0 %3089
        %3091 = vrot.lane.b32.xlu0 %v3061, 119
        %v3092 = vpop.permute.xlu0 %3091
        %3093 = vrot.lane.b32.xlu0 %v3062, 119
        %v3094 = vpop.permute.xlu0 %3093
        %3095 = vrot.lane.b32.xlu0 %v3063, 119
        %v3096 = vpop.permute.xlu0 %3095
        %3097 = vrot.lane.b32.xlu0 %v3064, 119
        %v3098 = vpop.permute.xlu0 %3097
        %3099 = vrot.lane.b32.xlu0 %v3065, 119
        %v3100 = vpop.permute.xlu0 %3099
        %3101 = vrot.lane.b32.xlu0 %v3066, 119
        %v3102 = vpop.permute.xlu0 %3101
        %3103 = vrot.lane.b32.xlu0 %v3067, 119
        %v3104 = vpop.permute.xlu0 %3103
        %3105 = vrot.lane.b32.xlu0 %v3068, 119
        %v3106 = vpop.permute.xlu0 %3105
        %3107 = vrot.lane.b32.xlu0 %v3069, 119
        %v3108 = vpop.permute.xlu0 %3107
        %3109 = vrot.lane.b32.xlu0 %v3070, 119
        %v3110 = vpop.permute.xlu0 %3109
        %3111 = vrot.lane.b32.xlu0 %v3071, 119
        %v3112 = vpop.permute.xlu0 %3111
        %v3113 = vsel %vm1833, %v3090, %v3092
        %v3114 = vsel %vm1833, %v3092, %v3094
        %v3115 = vsel %vm1833, %v3096, %v3098
        %v3116 = vsel %vm1833, %v3098, %v3100
        %v3117 = vsel %vm1833, %v3102, %v3104
        %v3118 = vsel %vm1833, %v3104, %v3106
        %v3119 = vsel %vm1833, %v3108, %v3110
        %v3120 = vsel %vm1833, %v3110, %v3112
        %v3130 = vsel %vm530, %v3073, 0
        %v3133 = vsel %vm530, %v3074, 0
        %v3136 = vsel %vm530, %v3075, 0
        %v3139 = vsel %vm530, %v3076, 0
        %3141 = vmatpush.msra.mxu0 0.0
        %3142 = vmatpush.msra.mxu0 0.0
        %3143 = vmatpush.msra.mxu0 0.0
        %3144 = vmatpush.msra.mxu0 0.0
        %3145 = vmatpush.msra.mxu0 0.0
        %3146 = vmatpush.msra.mxu0 0.0
        %3147 = vmatpush.msra.mxu0 0.0
        %3148 = vmatpush.msra.mxu0 0.0
        %3149 = vmatpush.msra.mxu0 0.0
        %3150 = vmatpush.msra.mxu0 0.0
        %3151 = vmatpush.msra.mxu0 0.0
        %3152 = vmatpush.msra.mxu0 0.0
        %3153 = vmatpush.msra.mxu0 %v3119
        %3154 = vmatpush.msra.mxu0 %v3117
        %3155 = vmatpush.msra.mxu0 %v3115
        %3156 = vmatpush.msra.mxu0 %v3113
        %3157 = vmatmul.f32.gmra.mxu0 %v3130
        %v3158 = vpop.f32.mrf.mxu0
        %v3159 = vadd.f32 0.0, %v3158
        %3160 = vmatmul.f32.gmra.mxu0 %v3133
        %v3161 = vpop.f32.mrf.mxu0
        %v3162 = vadd.f32 0.0, %v3161
        %3163 = vmatmul.f32.gmra.mxu0 %v3136
        %v3164 = vpop.f32.mrf.mxu0
        %v3165 = vadd.f32 0.0, %v3164
        %3166 = vmatmul.f32.gmra.mxu0 %v3139
        %v3167 = vpop.f32.mrf.mxu0
        %v3168 = vadd.f32 0.0, %v3167
        %3169 = vdwg.mxu0
        %3170 = vmatpush.msra.mxu0 0.0
        %3171 = vmatpush.msra.mxu0 0.0
        %3172 = vmatpush.msra.mxu0 0.0
        %3173 = vmatpush.msra.mxu0 0.0
        %3174 = vmatpush.msra.mxu0 0.0
        %3175 = vmatpush.msra.mxu0 0.0
        %3176 = vmatpush.msra.mxu0 0.0
        %3177 = vmatpush.msra.mxu0 0.0
        %3178 = vmatpush.msra.mxu0 0.0
        %3179 = vmatpush.msra.mxu0 0.0
        %3180 = vmatpush.msra.mxu0 0.0
        %3181 = vmatpush.msra.mxu0 0.0
        %3182 = vmatpush.msra.mxu0 %v3120
        %3183 = vmatpush.msra.mxu0 %v3118
        %3184 = vmatpush.msra.mxu0 %v3116
        %3185 = vmatpush.msra.mxu0 %v3114
        %3186 = vmatmul.f32.gmra.mxu0 %v3130
        %v3187 = vpop.f32.mrf.mxu0
        %v3188 = vadd.f32 0.0, %v3187
        %3189 = vmatmul.f32.gmra.mxu0 %v3133
        %v3190 = vpop.f32.mrf.mxu0
        %v3191 = vadd.f32 0.0, %v3190
        %3192 = vmatmul.f32.gmra.mxu0 %v3136
        %v3193 = vpop.f32.mrf.mxu0
        %v3194 = vadd.f32 0.0, %v3193
        %3195 = vmatmul.f32.gmra.mxu0 %v3139
        %v3196 = vpop.f32.mrf.mxu0
        %v3197 = vadd.f32 0.0, %v3196
        %3198 = vdwg.mxu0
        %v3199 = vadd.f32 %v3039, %v3159
        %v3200 = vadd.f32 %v3040, %v3188
        %v3201 = vadd.f32 %v3041, %v3162
        %v3202 = vadd.f32 %v3042, %v3191
        %v3203 = vadd.f32 %v3043, %v3165
        %v3204 = vadd.f32 %v3044, %v3194
        %v3205 = vadd.f32 %v3045, %v3168
        %v3206 = vadd.f32 %v3046, %v3197
        %s3207 = scalar_lea.vmem %s7, 34
        %v3208 = vld [vmem:[%s3207] ss:$8 sm:$0x3]
        %v3210 = vperm.slane %v3208, 0
        %v3211 = vperm.slane %v3208, 1
        %3212 = vrot.lane.b32.xlu0 %v3210, 55
        %v3213 = vpop.permute.xlu0 %3212
        %3214 = vrot.lane.b32.xlu0 %v3211, 55
        %v3215 = vpop.permute.xlu0 %3214
        %v3216 = vsel %vm425, %v3213, %v3215
        %v3220 = vmul.f32 %v2555, %v3213
        %v3221 = vmul.f32 %v2556, %v3216
        %v3222 = vmul.f32 %v2557, %v3215
        %v3223 = vmul.f32 %v2558, %v3213
        %v3224 = vmul.f32 %v2559, %v3216
        %v3225 = vmul.f32 %v2560, %v3215
        %v3226 = vmul.f32 %v2561, %v3213
        %v3227 = vmul.f32 %v2562, %v3216
        %v3228 = vmul.f32 %v2563, %v3215
        %v3229 = vmul.f32 %v2564, %v3213
        %v3230 = vmul.f32 %v2565, %v3216
        %v3231 = vmul.f32 %v2566, %v3215
        %s3232 = scalar_lea.vmem [#allocation3], 576
        %v3233 = vld [vmem:[%s3232] sm:$0xff]
        %v3234 = vld [vmem:[%s3232 + $0x8] sm:$0xff]
        %v3235 = vld [vmem:[%s3232 + $0x10] sm:$0xff]
        %v3236 = vld [vmem:[%s3232 + $0x18] sm:$0xff]
        %3249 = vrot.lane.b32.xlu0 %v3220, 73
        %v3250 = vpop.permute.xlu0 %3249
        %3251 = vrot.lane.b32.xlu0 %v3221, 73
        %v3252 = vpop.permute.xlu0 %3251
        %3253 = vrot.lane.b32.xlu0 %v3222, 73
        %v3254 = vpop.permute.xlu0 %3253
        %3255 = vrot.lane.b32.xlu0 %v3223, 73
        %v3256 = vpop.permute.xlu0 %3255
        %3257 = vrot.lane.b32.xlu0 %v3224, 73
        %v3258 = vpop.permute.xlu0 %3257
        %3259 = vrot.lane.b32.xlu0 %v3225, 73
        %v3260 = vpop.permute.xlu0 %3259
        %3261 = vrot.lane.b32.xlu0 %v3226, 73
        %v3262 = vpop.permute.xlu0 %3261
        %3263 = vrot.lane.b32.xlu0 %v3227, 73
        %v3264 = vpop.permute.xlu0 %3263
        %3265 = vrot.lane.b32.xlu0 %v3228, 73
        %v3266 = vpop.permute.xlu0 %3265
        %3267 = vrot.lane.b32.xlu0 %v3229, 73
        %v3268 = vpop.permute.xlu0 %3267
        %3269 = vrot.lane.b32.xlu0 %v3230, 73
        %v3270 = vpop.permute.xlu0 %3269
        %3271 = vrot.lane.b32.xlu0 %v3231, 73
        %v3272 = vpop.permute.xlu0 %3271
        %v3273 = vsel %vm637, %v3250, %v3252
        %v3274 = vsel %vm637, %v3252, %v3254
        %v3275 = vsel %vm637, %v3256, %v3258
        %v3276 = vsel %vm637, %v3258, %v3260
        %v3277 = vsel %vm637, %v3262, %v3264
        %v3278 = vsel %vm637, %v3264, %v3266
        %v3279 = vsel %vm637, %v3268, %v3270
        %v3280 = vsel %vm637, %v3270, %v3272
        %v3290 = vsel %vm530, %v3233, 0
        %v3293 = vsel %vm530, %v3234, 0
        %v3296 = vsel %vm530, %v3235, 0
        %v3299 = vsel %vm530, %v3236, 0
        %3301 = vmatpush.msra.mxu0 0.0
        %3302 = vmatpush.msra.mxu0 0.0
        %3303 = vmatpush.msra.mxu0 0.0
        %3304 = vmatpush.msra.mxu0 0.0
        %3305 = vmatpush.msra.mxu0 0.0
        %3306 = vmatpush.msra.mxu0 0.0
        %3307 = vmatpush.msra.mxu0 0.0
        %3308 = vmatpush.msra.mxu0 0.0
        %3309 = vmatpush.msra.mxu0 0.0
        %3310 = vmatpush.msra.mxu0 0.0
        %3311 = vmatpush.msra.mxu0 0.0
        %3312 = vmatpush.msra.mxu0 0.0
        %3313 = vmatpush.msra.mxu0 %v3279
        %3314 = vmatpush.msra.mxu0 %v3277
        %3315 = vmatpush.msra.mxu0 %v3275
        %3316 = vmatpush.msra.mxu0 %v3273
        %3317 = vmatmul.f32.gmra.mxu0 %v3290
        %v3318 = vpop.f32.mrf.mxu0
        %v3319 = vadd.f32 0.0, %v3318
        %3320 = vmatmul.f32.gmra.mxu0 %v3293
        %v3321 = vpop.f32.mrf.mxu0
        %v3322 = vadd.f32 0.0, %v3321
        %3323 = vmatmul.f32.gmra.mxu0 %v3296
        %v3324 = vpop.f32.mrf.mxu0
        %v3325 = vadd.f32 0.0, %v3324
        %3326 = vmatmul.f32.gmra.mxu0 %v3299
        %v3327 = vpop.f32.mrf.mxu0
        %v3328 = vadd.f32 0.0, %v3327
        %3329 = vdwg.mxu0
        %3330 = vmatpush.msra.mxu0 0.0
        %3331 = vmatpush.msra.mxu0 0.0
        %3332 = vmatpush.msra.mxu0 0.0
        %3333 = vmatpush.msra.mxu0 0.0
        %3334 = vmatpush.msra.mxu0 0.0
        %3335 = vmatpush.msra.mxu0 0.0
        %3336 = vmatpush.msra.mxu0 0.0
        %3337 = vmatpush.msra.mxu0 0.0
        %3338 = vmatpush.msra.mxu0 0.0
        %3339 = vmatpush.msra.mxu0 0.0
        %3340 = vmatpush.msra.mxu0 0.0
        %3341 = vmatpush.msra.mxu0 0.0
        %3342 = vmatpush.msra.mxu0 %v3280
        %3343 = vmatpush.msra.mxu0 %v3278
        %3344 = vmatpush.msra.mxu0 %v3276
        %3345 = vmatpush.msra.mxu0 %v3274
        %3346 = vmatmul.f32.gmra.mxu0 %v3290
        %v3347 = vpop.f32.mrf.mxu0
        %v3348 = vadd.f32 0.0, %v3347
        %3349 = vmatmul.f32.gmra.mxu0 %v3293
        %v3350 = vpop.f32.mrf.mxu0
        %v3351 = vadd.f32 0.0, %v3350
        %3352 = vmatmul.f32.gmra.mxu0 %v3296
        %v3353 = vpop.f32.mrf.mxu0
        %v3354 = vadd.f32 0.0, %v3353
        %3355 = vmatmul.f32.gmra.mxu0 %v3299
        %v3356 = vpop.f32.mrf.mxu0
        %v3357 = vadd.f32 0.0, %v3356
        %3358 = vdwg.mxu0
        %v3359 = vadd.f32 %v3199, %v3319
        %v3360 = vadd.f32 %v3200, %v3348
        %v3361 = vadd.f32 %v3201, %v3322
        %v3362 = vadd.f32 %v3202, %v3351
        %v3363 = vadd.f32 %v3203, %v3325
        %v3364 = vadd.f32 %v3204, %v3354
        %v3365 = vadd.f32 %v3205, %v3328
        %v3366 = vadd.f32 %v3206, %v3357
        %s3367 = scalar_lea.vmem %s7, 35
        %v3368 = vld [vmem:[%s3367] ss:$8 sm:$0x3]
        %v3370 = vperm.slane %v3368, 0
        %v3371 = vperm.slane %v3368, 1
        %3372 = vrot.lane.b32.xlu0 %v3370, 56
        %v3373 = vpop.permute.xlu0 %3372
        %3374 = vrot.lane.b32.xlu0 %v3371, 56
        %v3375 = vpop.permute.xlu0 %3374
        %v3376 = vsel %vm455, %v3373, %v3375
        %v3380 = vmul.f32 %v2555, %v3373
        %v3381 = vmul.f32 %v2556, %v3376
        %v3382 = vmul.f32 %v2557, %v3375
        %v3383 = vmul.f32 %v2558, %v3373
        %v3384 = vmul.f32 %v2559, %v3376
        %v3385 = vmul.f32 %v2560, %v3375
        %v3386 = vmul.f32 %v2561, %v3373
        %v3387 = vmul.f32 %v2562, %v3376
        %v3388 = vmul.f32 %v2563, %v3375
        %v3389 = vmul.f32 %v2564, %v3373
        %v3390 = vmul.f32 %v2565, %v3376
        %v3391 = vmul.f32 %v2566, %v3375
        %s3392 = scalar_lea.vmem [#allocation3], 608
        %v3393 = vld [vmem:[%s3392] sm:$0xff]
        %v3394 = vld [vmem:[%s3392 + $0x8] sm:$0xff]
        %v3395 = vld [vmem:[%s3392 + $0x10] sm:$0xff]
        %v3396 = vld [vmem:[%s3392 + $0x18] sm:$0xff]
        %3409 = vrot.lane.b32.xlu0 %v3380, 72
        %v3410 = vpop.permute.xlu0 %3409
        %3411 = vrot.lane.b32.xlu0 %v3381, 72
        %v3412 = vpop.permute.xlu0 %3411
        %3413 = vrot.lane.b32.xlu0 %v3382, 72
        %v3414 = vpop.permute.xlu0 %3413
        %3415 = vrot.lane.b32.xlu0 %v3383, 72
        %v3416 = vpop.permute.xlu0 %3415
        %3417 = vrot.lane.b32.xlu0 %v3384, 72
        %v3418 = vpop.permute.xlu0 %3417
        %3419 = vrot.lane.b32.xlu0 %v3385, 72
        %v3420 = vpop.permute.xlu0 %3419
        %3421 = vrot.lane.b32.xlu0 %v3386, 72
        %v3422 = vpop.permute.xlu0 %3421
        %3423 = vrot.lane.b32.xlu0 %v3387, 72
        %v3424 = vpop.permute.xlu0 %3423
        %3425 = vrot.lane.b32.xlu0 %v3388, 72
        %v3426 = vpop.permute.xlu0 %3425
        %3427 = vrot.lane.b32.xlu0 %v3389, 72
        %v3428 = vpop.permute.xlu0 %3427
        %3429 = vrot.lane.b32.xlu0 %v3390, 72
        %v3430 = vpop.permute.xlu0 %3429
        %3431 = vrot.lane.b32.xlu0 %v3391, 72
        %v3432 = vpop.permute.xlu0 %3431
        %v3433 = vsel %vm513, %v3410, %v3412
        %v3434 = vsel %vm513, %v3412, %v3414
        %v3435 = vsel %vm513, %v3416, %v3418
        %v3436 = vsel %vm513, %v3418, %v3420
        %v3437 = vsel %vm513, %v3422, %v3424
        %v3438 = vsel %vm513, %v3424, %v3426
        %v3439 = vsel %vm513, %v3428, %v3430
        %v3440 = vsel %vm513, %v3430, %v3432
        %v3450 = vsel %vm530, %v3393, 0
        %v3453 = vsel %vm530, %v3394, 0
        %v3456 = vsel %vm530, %v3395, 0
        %v3459 = vsel %vm530, %v3396, 0
        %3461 = vmatpush.msra.mxu0 0.0
        %3462 = vmatpush.msra.mxu0 0.0
        %3463 = vmatpush.msra.mxu0 0.0
        %3464 = vmatpush.msra.mxu0 0.0
        %3465 = vmatpush.msra.mxu0 0.0
        %3466 = vmatpush.msra.mxu0 0.0
        %3467 = vmatpush.msra.mxu0 0.0
        %3468 = vmatpush.msra.mxu0 0.0
        %3469 = vmatpush.msra.mxu0 0.0
        %3470 = vmatpush.msra.mxu0 0.0
        %3471 = vmatpush.msra.mxu0 0.0
        %3472 = vmatpush.msra.mxu0 0.0
        %3473 = vmatpush.msra.mxu0 %v3439
        %3474 = vmatpush.msra.mxu0 %v3437
        %3475 = vmatpush.msra.mxu0 %v3435
        %3476 = vmatpush.msra.mxu0 %v3433
        %3477 = vmatmul.f32.gmra.mxu0 %v3450
        %v3478 = vpop.f32.mrf.mxu0
        %v3479 = vadd.f32 0.0, %v3478
        %3480 = vmatmul.f32.gmra.mxu0 %v3453
        %v3481 = vpop.f32.mrf.mxu0
        %v3482 = vadd.f32 0.0, %v3481
        %3483 = vmatmul.f32.gmra.mxu0 %v3456
        %v3484 = vpop.f32.mrf.mxu0
        %v3485 = vadd.f32 0.0, %v3484
        %3486 = vmatmul.f32.gmra.mxu0 %v3459
        %v3487 = vpop.f32.mrf.mxu0
        %v3488 = vadd.f32 0.0, %v3487
        %3489 = vdwg.mxu0
        %3490 = vmatpush.msra.mxu0 0.0
        %3491 = vmatpush.msra.mxu0 0.0
        %3492 = vmatpush.msra.mxu0 0.0
        %3493 = vmatpush.msra.mxu0 0.0
        %3494 = vmatpush.msra.mxu0 0.0
        %3495 = vmatpush.msra.mxu0 0.0
        %3496 = vmatpush.msra.mxu0 0.0
        %3497 = vmatpush.msra.mxu0 0.0
        %3498 = vmatpush.msra.mxu0 0.0
        %3499 = vmatpush.msra.mxu0 0.0
        %3500 = vmatpush.msra.mxu0 0.0
        %3501 = vmatpush.msra.mxu0 0.0
        %3502 = vmatpush.msra.mxu0 %v3440
        %3503 = vmatpush.msra.mxu0 %v3438
        %3504 = vmatpush.msra.mxu0 %v3436
        %3505 = vmatpush.msra.mxu0 %v3434
        %3506 = vmatmul.f32.gmra.mxu0 %v3450
        %v3507 = vpop.f32.mrf.mxu0
        %v3508 = vadd.f32 0.0, %v3507
        %3509 = vmatmul.f32.gmra.mxu0 %v3453
        %v3510 = vpop.f32.mrf.mxu0
        %v3511 = vadd.f32 0.0, %v3510
        %3512 = vmatmul.f32.gmra.mxu0 %v3456
        %v3513 = vpop.f32.mrf.mxu0
        %v3514 = vadd.f32 0.0, %v3513
        %3515 = vmatmul.f32.gmra.mxu0 %v3459
        %v3516 = vpop.f32.mrf.mxu0
        %v3517 = vadd.f32 0.0, %v3516
        %3518 = vdwg.mxu0
        %v3519 = vadd.f32 %v3359, %v3479
        %v3520 = vadd.f32 %v3360, %v3508
        %v3521 = vadd.f32 %v3361, %v3482
        %v3522 = vadd.f32 %v3362, %v3511
        %v3523 = vadd.f32 %v3363, %v3485
        %v3524 = vadd.f32 %v3364, %v3514
        %v3525 = vadd.f32 %v3365, %v3488
        %v3526 = vadd.f32 %v3366, %v3517
        %s3527 = scalar_lea.vmem %s7, 36
        %v3528 = vld [vmem:[%s3527] ss:$8 sm:$0x3]
        %v3530 = vperm.slane %v3528, 0
        %v3531 = vperm.slane %v3528, 1
        %3532 = vrot.lane.b32.xlu0 %v3530, 57
        %v3533 = vpop.permute.xlu0 %3532
        %3534 = vrot.lane.b32.xlu0 %v3531, 57
        %v3535 = vpop.permute.xlu0 %3534
        %v3536 = vsel %vm733, %v3533, %v3535
        %v3540 = vmul.f32 %v2555, %v3533
        %v3541 = vmul.f32 %v2556, %v3536
        %v3542 = vmul.f32 %v2557, %v3535
        %v3543 = vmul.f32 %v2558, %v3533
        %v3544 = vmul.f32 %v2559, %v3536
        %v3545 = vmul.f32 %v2560, %v3535
        %v3546 = vmul.f32 %v2561, %v3533
        %v3547 = vmul.f32 %v2562, %v3536
        %v3548 = vmul.f32 %v2563, %v3535
        %v3549 = vmul.f32 %v2564, %v3533
        %v3550 = vmul.f32 %v2565, %v3536
        %v3551 = vmul.f32 %v2566, %v3535
        %s3552 = scalar_lea.vmem [#allocation3], 640
        %v3553 = vld [vmem:[%s3552] sm:$0xff]
        %v3554 = vld [vmem:[%s3552 + $0x8] sm:$0xff]
        %v3555 = vld [vmem:[%s3552 + $0x10] sm:$0xff]
        %v3556 = vld [vmem:[%s3552 + $0x18] sm:$0xff]
        %3569 = vrot.lane.b32.xlu0 %v3540, 71
        %v3570 = vpop.permute.xlu0 %3569
        %3571 = vrot.lane.b32.xlu0 %v3541, 71
        %v3572 = vpop.permute.xlu0 %3571
        %3573 = vrot.lane.b32.xlu0 %v3542, 71
        %v3574 = vpop.permute.xlu0 %3573
        %3575 = vrot.lane.b32.xlu0 %v3543, 71
        %v3576 = vpop.permute.xlu0 %3575
        %3577 = vrot.lane.b32.xlu0 %v3544, 71
        %v3578 = vpop.permute.xlu0 %3577
        %3579 = vrot.lane.b32.xlu0 %v3545, 71
        %v3580 = vpop.permute.xlu0 %3579
        %3581 = vrot.lane.b32.xlu0 %v3546, 71
        %v3582 = vpop.permute.xlu0 %3581
        %3583 = vrot.lane.b32.xlu0 %v3547, 71
        %v3584 = vpop.permute.xlu0 %3583
        %3585 = vrot.lane.b32.xlu0 %v3548, 71
        %v3586 = vpop.permute.xlu0 %3585
        %3587 = vrot.lane.b32.xlu0 %v3549, 71
        %v3588 = vpop.permute.xlu0 %3587
        %3589 = vrot.lane.b32.xlu0 %v3550, 71
        %v3590 = vpop.permute.xlu0 %3589
        %3591 = vrot.lane.b32.xlu0 %v3551, 71
        %v3592 = vpop.permute.xlu0 %3591
        %v3593 = vsel %vm791, %v3570, %v3572
        %v3594 = vsel %vm791, %v3572, %v3574
        %v3595 = vsel %vm791, %v3576, %v3578
        %v3596 = vsel %vm791, %v3578, %v3580
        %v3597 = vsel %vm791, %v3582, %v3584
        %v3598 = vsel %vm791, %v3584, %v3586
        %v3599 = vsel %vm791, %v3588, %v3590
        %v3600 = vsel %vm791, %v3590, %v3592
        %v3610 = vsel %vm530, %v3553, 0
        %v3613 = vsel %vm530, %v3554, 0
        %v3616 = vsel %vm530, %v3555, 0
        %v3619 = vsel %vm530, %v3556, 0
        %3621 = vmatpush.msra.mxu0 0.0
        %3622 = vmatpush.msra.mxu0 0.0
        %3623 = vmatpush.msra.mxu0 0.0
        %3624 = vmatpush.msra.mxu0 0.0
        %3625 = vmatpush.msra.mxu0 0.0
        %3626 = vmatpush.msra.mxu0 0.0
        %3627 = vmatpush.msra.mxu0 0.0
        %3628 = vmatpush.msra.mxu0 0.0
        %3629 = vmatpush.msra.mxu0 0.0
        %3630 = vmatpush.msra.mxu0 0.0
        %3631 = vmatpush.msra.mxu0 0.0
        %3632 = vmatpush.msra.mxu0 0.0
        %3633 = vmatpush.msra.mxu0 %v3599
        %3634 = vmatpush.msra.mxu0 %v3597
        %3635 = vmatpush.msra.mxu0 %v3595
        %3636 = vmatpush.msra.mxu0 %v3593
        %3637 = vmatmul.f32.gmra.mxu0 %v3610
        %v3638 = vpop.f32.mrf.mxu0
        %v3639 = vadd.f32 0.0, %v3638
        %3640 = vmatmul.f32.gmra.mxu0 %v3613
        %v3641 = vpop.f32.mrf.mxu0
        %v3642 = vadd.f32 0.0, %v3641
        %3643 = vmatmul.f32.gmra.mxu0 %v3616
        %v3644 = vpop.f32.mrf.mxu0
        %v3645 = vadd.f32 0.0, %v3644
        %3646 = vmatmul.f32.gmra.mxu0 %v3619
        %v3647 = vpop.f32.mrf.mxu0
        %v3648 = vadd.f32 0.0, %v3647
        %3649 = vdwg.mxu0
        %3650 = vmatpush.msra.mxu0 0.0
        %3651 = vmatpush.msra.mxu0 0.0
        %3652 = vmatpush.msra.mxu0 0.0
        %3653 = vmatpush.msra.mxu0 0.0
        %3654 = vmatpush.msra.mxu0 0.0
        %3655 = vmatpush.msra.mxu0 0.0
        %3656 = vmatpush.msra.mxu0 0.0
        %3657 = vmatpush.msra.mxu0 0.0
        %3658 = vmatpush.msra.mxu0 0.0
        %3659 = vmatpush.msra.mxu0 0.0
        %3660 = vmatpush.msra.mxu0 0.0
        %3661 = vmatpush.msra.mxu0 0.0
        %3662 = vmatpush.msra.mxu0 %v3600
        %3663 = vmatpush.msra.mxu0 %v3598
        %3664 = vmatpush.msra.mxu0 %v3596
        %3665 = vmatpush.msra.mxu0 %v3594
        %3666 = vmatmul.f32.gmra.mxu0 %v3610
        %v3667 = vpop.f32.mrf.mxu0
        %v3668 = vadd.f32 0.0, %v3667
        %3669 = vmatmul.f32.gmra.mxu0 %v3613
        %v3670 = vpop.f32.mrf.mxu0
        %v3671 = vadd.f32 0.0, %v3670
        %3672 = vmatmul.f32.gmra.mxu0 %v3616
        %v3673 = vpop.f32.mrf.mxu0
        %v3674 = vadd.f32 0.0, %v3673
        %3675 = vmatmul.f32.gmra.mxu0 %v3619
        %v3676 = vpop.f32.mrf.mxu0
        %v3677 = vadd.f32 0.0, %v3676
        %3678 = vdwg.mxu0
        %v3679 = vadd.f32 %v3519, %v3639
        %v3680 = vadd.f32 %v3520, %v3668
        %v3681 = vadd.f32 %v3521, %v3642
        %v3682 = vadd.f32 %v3522, %v3671
        %v3683 = vadd.f32 %v3523, %v3645
        %v3684 = vadd.f32 %v3524, %v3674
        %v3685 = vadd.f32 %v3525, %v3648
        %v3686 = vadd.f32 %v3526, %v3677
        %s3687 = scalar_lea.vmem %s7, 37
        %v3688 = vld [vmem:[%s3687] ss:$8 sm:$0x3]
        %v3690 = vperm.slane %v3688, 0
        %v3691 = vperm.slane %v3688, 1
        %3692 = vrot.lane.b32.xlu0 %v3690, 63
        %v3693 = vpop.permute.xlu0 %3692
        %3694 = vrot.lane.b32.xlu0 %v3691, 63
        %v3695 = vpop.permute.xlu0 %3694
        %v3696 = vsel %vm895, %v3693, %v3695
        %v3700 = vmul.f32 %v2555, %v3693
        %v3701 = vmul.f32 %v2556, %v3696
        %v3702 = vmul.f32 %v2557, %v3695
        %v3703 = vmul.f32 %v2558, %v3693
        %v3704 = vmul.f32 %v2559, %v3696
        %v3705 = vmul.f32 %v2560, %v3695
        %v3706 = vmul.f32 %v2561, %v3693
        %v3707 = vmul.f32 %v2562, %v3696
        %v3708 = vmul.f32 %v2563, %v3695
        %v3709 = vmul.f32 %v2564, %v3693
        %v3710 = vmul.f32 %v2565, %v3696
        %v3711 = vmul.f32 %v2566, %v3695
        %s3712 = scalar_lea.vmem [#allocation3], 672
        %v3713 = vld [vmem:[%s3712] sm:$0xff]
        %v3714 = vld [vmem:[%s3712 + $0x8] sm:$0xff]
        %v3715 = vld [vmem:[%s3712 + $0x10] sm:$0xff]
        %v3716 = vld [vmem:[%s3712 + $0x18] sm:$0xff]
        %3729 = vrot.lane.b32.xlu0 %v3700, 65
        %v3730 = vpop.permute.xlu0 %3729
        %3731 = vrot.lane.b32.xlu0 %v3701, 65
        %v3732 = vpop.permute.xlu0 %3731
        %3733 = vrot.lane.b32.xlu0 %v3702, 65
        %v3734 = vpop.permute.xlu0 %3733
        %3735 = vrot.lane.b32.xlu0 %v3703, 65
        %v3736 = vpop.permute.xlu0 %3735
        %3737 = vrot.lane.b32.xlu0 %v3704, 65
        %v3738 = vpop.permute.xlu0 %3737
        %3739 = vrot.lane.b32.xlu0 %v3705, 65
        %v3740 = vpop.permute.xlu0 %3739
        %3741 = vrot.lane.b32.xlu0 %v3706, 65
        %v3742 = vpop.permute.xlu0 %3741
        %3743 = vrot.lane.b32.xlu0 %v3707, 65
        %v3744 = vpop.permute.xlu0 %3743
        %3745 = vrot.lane.b32.xlu0 %v3708, 65
        %v3746 = vpop.permute.xlu0 %3745
        %3747 = vrot.lane.b32.xlu0 %v3709, 65
        %v3748 = vpop.permute.xlu0 %3747
        %3749 = vrot.lane.b32.xlu0 %v3710, 65
        %v3750 = vpop.permute.xlu0 %3749
        %3751 = vrot.lane.b32.xlu0 %v3711, 65
        %v3752 = vpop.permute.xlu0 %3751
        %v3753 = vsel %vm953, %v3730, %v3732
        %v3754 = vsel %vm953, %v3732, %v3734
        %v3755 = vsel %vm953, %v3736, %v3738
        %v3756 = vsel %vm953, %v3738, %v3740
        %v3757 = vsel %vm953, %v3742, %v3744
        %v3758 = vsel %vm953, %v3744, %v3746
        %v3759 = vsel %vm953, %v3748, %v3750
        %v3760 = vsel %vm953, %v3750, %v3752
        %v3770 = vsel %vm530, %v3713, 0
        %v3773 = vsel %vm530, %v3714, 0
        %v3776 = vsel %vm530, %v3715, 0
        %v3779 = vsel %vm530, %v3716, 0
        %3781 = vmatpush.msra.mxu0 0.0
        %3782 = vmatpush.msra.mxu0 0.0
        %3783 = vmatpush.msra.mxu0 0.0
        %3784 = vmatpush.msra.mxu0 0.0
        %3785 = vmatpush.msra.mxu0 0.0
        %3786 = vmatpush.msra.mxu0 0.0
        %3787 = vmatpush.msra.mxu0 0.0
        %3788 = vmatpush.msra.mxu0 0.0
        %3789 = vmatpush.msra.mxu0 0.0
        %3790 = vmatpush.msra.mxu0 0.0
        %3791 = vmatpush.msra.mxu0 0.0
        %3792 = vmatpush.msra.mxu0 0.0
        %3793 = vmatpush.msra.mxu0 %v3759
        %3794 = vmatpush.msra.mxu0 %v3757
        %3795 = vmatpush.msra.mxu0 %v3755
        %3796 = vmatpush.msra.mxu0 %v3753
        %3797 = vmatmul.f32.gmra.mxu0 %v3770
        %v3798 = vpop.f32.mrf.mxu0
        %v3799 = vadd.f32 0.0, %v3798
        %3800 = vmatmul.f32.gmra.mxu0 %v3773
        %v3801 = vpop.f32.mrf.mxu0
        %v3802 = vadd.f32 0.0, %v3801
        %3803 = vmatmul.f32.gmra.mxu0 %v3776
        %v3804 = vpop.f32.mrf.mxu0
        %v3805 = vadd.f32 0.0, %v3804
        %3806 = vmatmul.f32.gmra.mxu0 %v3779
        %v3807 = vpop.f32.mrf.mxu0
        %v3808 = vadd.f32 0.0, %v3807
        %3809 = vdwg.mxu0
        %3810 = vmatpush.msra.mxu0 0.0
        %3811 = vmatpush.msra.mxu0 0.0
        %3812 = vmatpush.msra.mxu0 0.0
        %3813 = vmatpush.msra.mxu0 0.0
        %3814 = vmatpush.msra.mxu0 0.0
        %3815 = vmatpush.msra.mxu0 0.0
        %3816 = vmatpush.msra.mxu0 0.0
        %3817 = vmatpush.msra.mxu0 0.0
        %3818 = vmatpush.msra.mxu0 0.0
        %3819 = vmatpush.msra.mxu0 0.0
        %3820 = vmatpush.msra.mxu0 0.0
        %3821 = vmatpush.msra.mxu0 0.0
        %3822 = vmatpush.msra.mxu0 %v3760
        %3823 = vmatpush.msra.mxu0 %v3758
        %3824 = vmatpush.msra.mxu0 %v3756
        %3825 = vmatpush.msra.mxu0 %v3754
        %3826 = vmatmul.f32.gmra.mxu0 %v3770
        %v3827 = vpop.f32.mrf.mxu0
        %v3828 = vadd.f32 0.0, %v3827
        %3829 = vmatmul.f32.gmra.mxu0 %v3773
        %v3830 = vpop.f32.mrf.mxu0
        %v3831 = vadd.f32 0.0, %v3830
        %3832 = vmatmul.f32.gmra.mxu0 %v3776
        %v3833 = vpop.f32.mrf.mxu0
        %v3834 = vadd.f32 0.0, %v3833
        %3835 = vmatmul.f32.gmra.mxu0 %v3779
        %v3836 = vpop.f32.mrf.mxu0
        %v3837 = vadd.f32 0.0, %v3836
        %3838 = vdwg.mxu0
        %v3839 = vadd.f32 %v3679, %v3799
        %v3840 = vadd.f32 %v3680, %v3828
        %v3841 = vadd.f32 %v3681, %v3802
        %v3842 = vadd.f32 %v3682, %v3831
        %v3843 = vadd.f32 %v3683, %v3805
        %v3844 = vadd.f32 %v3684, %v3834
        %v3845 = vadd.f32 %v3685, %v3808
        %v3846 = vadd.f32 %v3686, %v3837
        %s3847 = scalar_lea.vmem [#allocation3], 704
        %v3848 = vld [vmem:[%s3847] sm:$0xff]
        %v3849 = vld [vmem:[%s3847 + $0x8] sm:$0xff]
        %v3850 = vld [vmem:[%s3847 + $0x10] sm:$0xff]
        %v3851 = vld [vmem:[%s3847 + $0x18] sm:$0xff]
        %3864 = vrot.lane.b32.xlu0 %v2555, 64
        %v3865 = vpop.permute.xlu0 %3864
        %3866 = vrot.lane.b32.xlu0 %v2556, 64
        %v3867 = vpop.permute.xlu0 %3866
        %3868 = vrot.lane.b32.xlu0 %v2557, 64
        %v3869 = vpop.permute.xlu0 %3868
        %3870 = vrot.lane.b32.xlu0 %v2558, 64
        %v3871 = vpop.permute.xlu0 %3870
        %3872 = vrot.lane.b32.xlu0 %v2559, 64
        %v3873 = vpop.permute.xlu0 %3872
        %3874 = vrot.lane.b32.xlu0 %v2560, 64
        %v3875 = vpop.permute.xlu0 %3874
        %3876 = vrot.lane.b32.xlu0 %v2561, 64
        %v3877 = vpop.permute.xlu0 %3876
        %3878 = vrot.lane.b32.xlu0 %v2562, 64
        %v3879 = vpop.permute.xlu0 %3878
        %3880 = vrot.lane.b32.xlu0 %v2563, 64
        %v3881 = vpop.permute.xlu0 %3880
        %3882 = vrot.lane.b32.xlu0 %v2564, 64
        %v3883 = vpop.permute.xlu0 %3882
        %3884 = vrot.lane.b32.xlu0 %v2565, 64
        %v3885 = vpop.permute.xlu0 %3884
        %3886 = vrot.lane.b32.xlu0 %v2566, 64
        %v3887 = vpop.permute.xlu0 %3886
        %v3888 = vsel %vm1089, %v3865, %v3867
        %v3889 = vsel %vm1089, %v3867, %v3869
        %v3890 = vsel %vm1089, %v3871, %v3873
        %v3891 = vsel %vm1089, %v3873, %v3875
        %v3892 = vsel %vm1089, %v3877, %v3879
        %v3893 = vsel %vm1089, %v3879, %v3881
        %v3894 = vsel %vm1089, %v3883, %v3885
        %v3895 = vsel %vm1089, %v3885, %v3887
        %v3905 = vsel %vm530, %v3848, 0
        %v3908 = vsel %vm530, %v3849, 0
        %v3911 = vsel %vm530, %v3850, 0
        %v3914 = vsel %vm530, %v3851, 0
        %3916 = vmatpush.msra.mxu0 0.0
        %3917 = vmatpush.msra.mxu0 0.0
        %3918 = vmatpush.msra.mxu0 0.0
        %3919 = vmatpush.msra.mxu0 0.0
        %3920 = vmatpush.msra.mxu0 0.0
        %3921 = vmatpush.msra.mxu0 0.0
        %3922 = vmatpush.msra.mxu0 0.0
        %3923 = vmatpush.msra.mxu0 0.0
        %3924 = vmatpush.msra.mxu0 0.0
        %3925 = vmatpush.msra.mxu0 0.0
        %3926 = vmatpush.msra.mxu0 0.0
        %3927 = vmatpush.msra.mxu0 0.0
        %3928 = vmatpush.msra.mxu0 %v3894
        %3929 = vmatpush.msra.mxu0 %v3892
        %3930 = vmatpush.msra.mxu0 %v3890
        %3931 = vmatpush.msra.mxu0 %v3888
        %3932 = vmatmul.f32.gmra.mxu0 %v3905
        %v3933 = vpop.f32.mrf.mxu0
        %v3934 = vadd.f32 0.0, %v3933
        %3935 = vmatmul.f32.gmra.mxu0 %v3908
        %v3936 = vpop.f32.mrf.mxu0
        %v3937 = vadd.f32 0.0, %v3936
        %3938 = vmatmul.f32.gmra.mxu0 %v3911
        %v3939 = vpop.f32.mrf.mxu0
        %v3940 = vadd.f32 0.0, %v3939
        %3941 = vmatmul.f32.gmra.mxu0 %v3914
        %v3942 = vpop.f32.mrf.mxu0
        %v3943 = vadd.f32 0.0, %v3942
        %3944 = vdwg.mxu0
        %3945 = vmatpush.msra.mxu0 0.0
        %3946 = vmatpush.msra.mxu0 0.0
        %3947 = vmatpush.msra.mxu0 0.0
        %3948 = vmatpush.msra.mxu0 0.0
        %3949 = vmatpush.msra.mxu0 0.0
        %3950 = vmatpush.msra.mxu0 0.0
        %3951 = vmatpush.msra.mxu0 0.0
        %3952 = vmatpush.msra.mxu0 0.0
        %3953 = vmatpush.msra.mxu0 0.0
        %3954 = vmatpush.msra.mxu0 0.0
        %3955 = vmatpush.msra.mxu0 0.0
        %3956 = vmatpush.msra.mxu0 0.0
        %3957 = vmatpush.msra.mxu0 %v3895
        %3958 = vmatpush.msra.mxu0 %v3893
        %3959 = vmatpush.msra.mxu0 %v3891
        %3960 = vmatpush.msra.mxu0 %v3889
        %3961 = vmatmul.f32.gmra.mxu0 %v3905
        %v3962 = vpop.f32.mrf.mxu0
        %v3963 = vadd.f32 0.0, %v3962
        %3964 = vmatmul.f32.gmra.mxu0 %v3908
        %v3965 = vpop.f32.mrf.mxu0
        %v3966 = vadd.f32 0.0, %v3965
        %3967 = vmatmul.f32.gmra.mxu0 %v3911
        %v3968 = vpop.f32.mrf.mxu0
        %v3969 = vadd.f32 0.0, %v3968
        %3970 = vmatmul.f32.gmra.mxu0 %v3914
        %v3971 = vpop.f32.mrf.mxu0
        %v3972 = vadd.f32 0.0, %v3971
        %3973 = vdwg.mxu0
        %v3974 = vadd.f32 %v3839, %v3934
        %v3975 = vadd.f32 %v3840, %v3963
        %v3976 = vadd.f32 %v3841, %v3937
        %v3977 = vadd.f32 %v3842, %v3966
        %v3978 = vadd.f32 %v3843, %v3940
        %v3979 = vadd.f32 %v3844, %v3969
        %v3980 = vadd.f32 %v3845, %v3943
        %v3981 = vadd.f32 %v3846, %v3972
        %s3982 = scalar_lea.vmem %s7, 39
        %v3983 = vld [vmem:[%s3982] ss:$8 sm:$0x3]
        %v3985 = vperm.slane %v3983, 0
        %v3986 = vperm.slane %v3983, 1
        %3987 = vrot.lane.b32.xlu0 %v3985, 65
        %v3988 = vpop.permute.xlu0 %3987
        %3989 = vrot.lane.b32.xlu0 %v3986, 65
        %v3990 = vpop.permute.xlu0 %3989
        %v3991 = vsel %vm953, %v3988, %v3990
        %v3995 = vmul.f32 %v2555, %v3988
        %v3996 = vmul.f32 %v2556, %v3991
        %v3997 = vmul.f32 %v2557, %v3990
        %v3998 = vmul.f32 %v2558, %v3988
        %v3999 = vmul.f32 %v2559, %v3991
        %v4000 = vmul.f32 %v2560, %v3990
        %v4001 = vmul.f32 %v2561, %v3988
        %v4002 = vmul.f32 %v2562, %v3991
        %v4003 = vmul.f32 %v2563, %v3990
        %v4004 = vmul.f32 %v2564, %v3988
        %v4005 = vmul.f32 %v2565, %v3991
        %v4006 = vmul.f32 %v2566, %v3990
        %s4007 = scalar_lea.vmem [#allocation3], 736
        %v4008 = vld [vmem:[%s4007] sm:$0xff]
        %v4009 = vld [vmem:[%s4007 + $0x8] sm:$0xff]
        %v4010 = vld [vmem:[%s4007 + $0x10] sm:$0xff]
        %v4011 = vld [vmem:[%s4007 + $0x18] sm:$0xff]
        %4024 = vrot.lane.b32.xlu0 %v3995, 63
        %v4025 = vpop.permute.xlu0 %4024
        %4026 = vrot.lane.b32.xlu0 %v3996, 63
        %v4027 = vpop.permute.xlu0 %4026
        %4028 = vrot.lane.b32.xlu0 %v3997, 63
        %v4029 = vpop.permute.xlu0 %4028
        %4030 = vrot.lane.b32.xlu0 %v3998, 63
        %v4031 = vpop.permute.xlu0 %4030
        %4032 = vrot.lane.b32.xlu0 %v3999, 63
        %v4033 = vpop.permute.xlu0 %4032
        %4034 = vrot.lane.b32.xlu0 %v4000, 63
        %v4035 = vpop.permute.xlu0 %4034
        %4036 = vrot.lane.b32.xlu0 %v4001, 63
        %v4037 = vpop.permute.xlu0 %4036
        %4038 = vrot.lane.b32.xlu0 %v4002, 63
        %v4039 = vpop.permute.xlu0 %4038
        %4040 = vrot.lane.b32.xlu0 %v4003, 63
        %v4041 = vpop.permute.xlu0 %4040
        %4042 = vrot.lane.b32.xlu0 %v4004, 63
        %v4043 = vpop.permute.xlu0 %4042
        %4044 = vrot.lane.b32.xlu0 %v4005, 63
        %v4045 = vpop.permute.xlu0 %4044
        %4046 = vrot.lane.b32.xlu0 %v4006, 63
        %v4047 = vpop.permute.xlu0 %4046
        %v4048 = vsel %vm895, %v4025, %v4027
        %v4049 = vsel %vm895, %v4027, %v4029
        %v4050 = vsel %vm895, %v4031, %v4033
        %v4051 = vsel %vm895, %v4033, %v4035
        %v4052 = vsel %vm895, %v4037, %v4039
        %v4053 = vsel %vm895, %v4039, %v4041
        %v4054 = vsel %vm895, %v4043, %v4045
        %v4055 = vsel %vm895, %v4045, %v4047
        %v4065 = vsel %vm530, %v4008, 0
        %v4068 = vsel %vm530, %v4009, 0
        %v4071 = vsel %vm530, %v4010, 0
        %v4074 = vsel %vm530, %v4011, 0
        %4076 = vmatpush.msra.mxu0 0.0
        %4077 = vmatpush.msra.mxu0 0.0
        %4078 = vmatpush.msra.mxu0 0.0
        %4079 = vmatpush.msra.mxu0 0.0
        %4080 = vmatpush.msra.mxu0 0.0
        %4081 = vmatpush.msra.mxu0 0.0
        %4082 = vmatpush.msra.mxu0 0.0
        %4083 = vmatpush.msra.mxu0 0.0
        %4084 = vmatpush.msra.mxu0 0.0
        %4085 = vmatpush.msra.mxu0 0.0
        %4086 = vmatpush.msra.mxu0 0.0
        %4087 = vmatpush.msra.mxu0 0.0
        %4088 = vmatpush.msra.mxu0 %v4054
        %4089 = vmatpush.msra.mxu0 %v4052
        %4090 = vmatpush.msra.mxu0 %v4050
        %4091 = vmatpush.msra.mxu0 %v4048
        %4092 = vmatmul.f32.gmra.mxu0 %v4065
        %v4093 = vpop.f32.mrf.mxu0
        %v4094 = vadd.f32 0.0, %v4093
        %4095 = vmatmul.f32.gmra.mxu0 %v4068
        %v4096 = vpop.f32.mrf.mxu0
        %v4097 = vadd.f32 0.0, %v4096
        %4098 = vmatmul.f32.gmra.mxu0 %v4071
        %v4099 = vpop.f32.mrf.mxu0
        %v4100 = vadd.f32 0.0, %v4099
        %4101 = vmatmul.f32.gmra.mxu0 %v4074
        %v4102 = vpop.f32.mrf.mxu0
        %v4103 = vadd.f32 0.0, %v4102
        %4104 = vdwg.mxu0
        %4105 = vmatpush.msra.mxu0 0.0
        %4106 = vmatpush.msra.mxu0 0.0
        %4107 = vmatpush.msra.mxu0 0.0
        %4108 = vmatpush.msra.mxu0 0.0
        %4109 = vmatpush.msra.mxu0 0.0
        %4110 = vmatpush.msra.mxu0 0.0
        %4111 = vmatpush.msra.mxu0 0.0
        %4112 = vmatpush.msra.mxu0 0.0
        %4113 = vmatpush.msra.mxu0 0.0
        %4114 = vmatpush.msra.mxu0 0.0
        %4115 = vmatpush.msra.mxu0 0.0
        %4116 = vmatpush.msra.mxu0 0.0
        %4117 = vmatpush.msra.mxu0 %v4055
        %4118 = vmatpush.msra.mxu0 %v4053
        %4119 = vmatpush.msra.mxu0 %v4051
        %4120 = vmatpush.msra.mxu0 %v4049
        %4121 = vmatmul.f32.gmra.mxu0 %v4065
        %v4122 = vpop.f32.mrf.mxu0
        %v4123 = vadd.f32 0.0, %v4122
        %4124 = vmatmul.f32.gmra.mxu0 %v4068
        %v4125 = vpop.f32.mrf.mxu0
        %v4126 = vadd.f32 0.0, %v4125
        %4127 = vmatmul.f32.gmra.mxu0 %v4071
        %v4128 = vpop.f32.mrf.mxu0
        %v4129 = vadd.f32 0.0, %v4128
        %4130 = vmatmul.f32.gmra.mxu0 %v4074
        %v4131 = vpop.f32.mrf.mxu0
        %v4132 = vadd.f32 0.0, %v4131
        %4133 = vdwg.mxu0
        %v4134 = vadd.f32 %v3974, %v4094
        %v4135 = vadd.f32 %v3975, %v4123
        %v4136 = vadd.f32 %v3976, %v4097
        %v4137 = vadd.f32 %v3977, %v4126
        %v4138 = vadd.f32 %v3978, %v4100
        %v4139 = vadd.f32 %v3979, %v4129
        %v4140 = vadd.f32 %v3980, %v4103
        %v4141 = vadd.f32 %v3981, %v4132
        %s4142 = scalar_lea.vmem %s7, 48
        %v4143 = vld [vmem:[%s4142] ss:$8 sm:$0x3]
        %v4145 = vperm.slane %v4143, 0
        %v4146 = vperm.slane %v4143, 1
        %4147 = vrot.lane.b32.xlu0 %v4145, 71
        %v4148 = vpop.permute.xlu0 %4147
        %4149 = vrot.lane.b32.xlu0 %v4146, 71
        %v4150 = vpop.permute.xlu0 %4149
        %v4151 = vsel %vm791, %v4148, %v4150
        %v4155 = vmul.f32 %v2555, %v4148
        %v4156 = vmul.f32 %v2556, %v4151
        %v4157 = vmul.f32 %v2557, %v4150
        %v4158 = vmul.f32 %v2558, %v4148
        %v4159 = vmul.f32 %v2559, %v4151
        %v4160 = vmul.f32 %v2560, %v4150
        %v4161 = vmul.f32 %v2561, %v4148
        %v4162 = vmul.f32 %v2562, %v4151
        %v4163 = vmul.f32 %v2563, %v4150
        %v4164 = vmul.f32 %v2564, %v4148
        %v4165 = vmul.f32 %v2565, %v4151
        %v4166 = vmul.f32 %v2566, %v4150
        %s4167 = scalar_lea.vmem [#allocation3], 768
        %v4168 = vld [vmem:[%s4167] sm:$0xff]
        %v4169 = vld [vmem:[%s4167 + $0x8] sm:$0xff]
        %v4170 = vld [vmem:[%s4167 + $0x10] sm:$0xff]
        %v4171 = vld [vmem:[%s4167 + $0x18] sm:$0xff]
        %4184 = vrot.lane.b32.xlu0 %v4155, 57
        %v4185 = vpop.permute.xlu0 %4184
        %4186 = vrot.lane.b32.xlu0 %v4156, 57
        %v4187 = vpop.permute.xlu0 %4186
        %4188 = vrot.lane.b32.xlu0 %v4157, 57
        %v4189 = vpop.permute.xlu0 %4188
        %4190 = vrot.lane.b32.xlu0 %v4158, 57
        %v4191 = vpop.permute.xlu0 %4190
        %4192 = vrot.lane.b32.xlu0 %v4159, 57
        %v4193 = vpop.permute.xlu0 %4192
        %4194 = vrot.lane.b32.xlu0 %v4160, 57
        %v4195 = vpop.permute.xlu0 %4194
        %4196 = vrot.lane.b32.xlu0 %v4161, 57
        %v4197 = vpop.permute.xlu0 %4196
        %4198 = vrot.lane.b32.xlu0 %v4162, 57
        %v4199 = vpop.permute.xlu0 %4198
        %4200 = vrot.lane.b32.xlu0 %v4163, 57
        %v4201 = vpop.permute.xlu0 %4200
        %4202 = vrot.lane.b32.xlu0 %v4164, 57
        %v4203 = vpop.permute.xlu0 %4202
        %4204 = vrot.lane.b32.xlu0 %v4165, 57
        %v4205 = vpop.permute.xlu0 %4204
        %4206 = vrot.lane.b32.xlu0 %v4166, 57
        %v4207 = vpop.permute.xlu0 %4206
        %v4208 = vsel %vm733, %v4185, %v4187
        %v4209 = vsel %vm733, %v4187, %v4189
        %v4210 = vsel %vm733, %v4191, %v4193
        %v4211 = vsel %vm733, %v4193, %v4195
        %v4212 = vsel %vm733, %v4197, %v4199
        %v4213 = vsel %vm733, %v4199, %v4201
        %v4214 = vsel %vm733, %v4203, %v4205
        %v4215 = vsel %vm733, %v4205, %v4207
        %v4225 = vsel %vm530, %v4168, 0
        %v4228 = vsel %vm530, %v4169, 0
        %v4231 = vsel %vm530, %v4170, 0
        %v4234 = vsel %vm530, %v4171, 0
        %4236 = vmatpush.msra.mxu0 0.0
        %4237 = vmatpush.msra.mxu0 0.0
        %4238 = vmatpush.msra.mxu0 0.0
        %4239 = vmatpush.msra.mxu0 0.0
        %4240 = vmatpush.msra.mxu0 0.0
        %4241 = vmatpush.msra.mxu0 0.0
        %4242 = vmatpush.msra.mxu0 0.0
        %4243 = vmatpush.msra.mxu0 0.0
        %4244 = vmatpush.msra.mxu0 0.0
        %4245 = vmatpush.msra.mxu0 0.0
        %4246 = vmatpush.msra.mxu0 0.0
        %4247 = vmatpush.msra.mxu0 0.0
        %4248 = vmatpush.msra.mxu0 %v4214
        %4249 = vmatpush.msra.mxu0 %v4212
        %4250 = vmatpush.msra.mxu0 %v4210
        %4251 = vmatpush.msra.mxu0 %v4208
        %4252 = vmatmul.f32.gmra.mxu0 %v4225
        %v4253 = vpop.f32.mrf.mxu0
        %v4254 = vadd.f32 0.0, %v4253
        %4255 = vmatmul.f32.gmra.mxu0 %v4228
        %v4256 = vpop.f32.mrf.mxu0
        %v4257 = vadd.f32 0.0, %v4256
        %4258 = vmatmul.f32.gmra.mxu0 %v4231
        %v4259 = vpop.f32.mrf.mxu0
        %v4260 = vadd.f32 0.0, %v4259
        %4261 = vmatmul.f32.gmra.mxu0 %v4234
        %v4262 = vpop.f32.mrf.mxu0
        %v4263 = vadd.f32 0.0, %v4262
        %4264 = vdwg.mxu0
        %4265 = vmatpush.msra.mxu0 0.0
        %4266 = vmatpush.msra.mxu0 0.0
        %4267 = vmatpush.msra.mxu0 0.0
        %4268 = vmatpush.msra.mxu0 0.0
        %4269 = vmatpush.msra.mxu0 0.0
        %4270 = vmatpush.msra.mxu0 0.0
        %4271 = vmatpush.msra.mxu0 0.0
        %4272 = vmatpush.msra.mxu0 0.0
        %4273 = vmatpush.msra.mxu0 0.0
        %4274 = vmatpush.msra.mxu0 0.0
        %4275 = vmatpush.msra.mxu0 0.0
        %4276 = vmatpush.msra.mxu0 0.0
        %4277 = vmatpush.msra.mxu0 %v4215
        %4278 = vmatpush.msra.mxu0 %v4213
        %4279 = vmatpush.msra.mxu0 %v4211
        %4280 = vmatpush.msra.mxu0 %v4209
        %4281 = vmatmul.f32.gmra.mxu0 %v4225
        %v4282 = vpop.f32.mrf.mxu0
        %v4283 = vadd.f32 0.0, %v4282
        %4284 = vmatmul.f32.gmra.mxu0 %v4228
        %v4285 = vpop.f32.mrf.mxu0
        %v4286 = vadd.f32 0.0, %v4285
        %4287 = vmatmul.f32.gmra.mxu0 %v4231
        %v4288 = vpop.f32.mrf.mxu0
        %v4289 = vadd.f32 0.0, %v4288
        %4290 = vmatmul.f32.gmra.mxu0 %v4234
        %v4291 = vpop.f32.mrf.mxu0
        %v4292 = vadd.f32 0.0, %v4291
        %4293 = vdwg.mxu0
        %v4294 = vadd.f32 %v4134, %v4254
        %v4295 = vadd.f32 %v4135, %v4283
        %v4296 = vadd.f32 %v4136, %v4257
        %v4297 = vadd.f32 %v4137, %v4286
        %v4298 = vadd.f32 %v4138, %v4260
        %v4299 = vadd.f32 %v4139, %v4289
        %v4300 = vadd.f32 %v4140, %v4263
        %v4301 = vadd.f32 %v4141, %v4292
        %s4302 = scalar_lea.vmem %s7, 49
        %v4303 = vld [vmem:[%s4302] ss:$8 sm:$0x3]
        %v4305 = vperm.slane %v4303, 0
        %v4306 = vperm.slane %v4303, 1
        %4307 = vrot.lane.b32.xlu0 %v4305, 72
        %v4308 = vpop.permute.xlu0 %4307
        %4309 = vrot.lane.b32.xlu0 %v4306, 72
        %v4310 = vpop.permute.xlu0 %4309
        %v4311 = vsel %vm513, %v4308, %v4310
        %v4315 = vmul.f32 %v2555, %v4308
        %v4316 = vmul.f32 %v2556, %v4311
        %v4317 = vmul.f32 %v2557, %v4310
        %v4318 = vmul.f32 %v2558, %v4308
        %v4319 = vmul.f32 %v2559, %v4311
        %v4320 = vmul.f32 %v2560, %v4310
        %v4321 = vmul.f32 %v2561, %v4308
        %v4322 = vmul.f32 %v2562, %v4311
        %v4323 = vmul.f32 %v2563, %v4310
        %v4324 = vmul.f32 %v2564, %v4308
        %v4325 = vmul.f32 %v2565, %v4311
        %v4326 = vmul.f32 %v2566, %v4310
        %s4327 = scalar_lea.vmem [#allocation3], 800
        %v4328 = vld [vmem:[%s4327] sm:$0xff]
        %v4329 = vld [vmem:[%s4327 + $0x8] sm:$0xff]
        %v4330 = vld [vmem:[%s4327 + $0x10] sm:$0xff]
        %v4331 = vld [vmem:[%s4327 + $0x18] sm:$0xff]
        %4344 = vrot.lane.b32.xlu0 %v4315, 56
        %v4345 = vpop.permute.xlu0 %4344
        %4346 = vrot.lane.b32.xlu0 %v4316, 56
        %v4347 = vpop.permute.xlu0 %4346
        %4348 = vrot.lane.b32.xlu0 %v4317, 56
        %v4349 = vpop.permute.xlu0 %4348
        %4350 = vrot.lane.b32.xlu0 %v4318, 56
        %v4351 = vpop.permute.xlu0 %4350
        %4352 = vrot.lane.b32.xlu0 %v4319, 56
        %v4353 = vpop.permute.xlu0 %4352
        %4354 = vrot.lane.b32.xlu0 %v4320, 56
        %v4355 = vpop.permute.xlu0 %4354
        %4356 = vrot.lane.b32.xlu0 %v4321, 56
        %v4357 = vpop.permute.xlu0 %4356
        %4358 = vrot.lane.b32.xlu0 %v4322, 56
        %v4359 = vpop.permute.xlu0 %4358
        %4360 = vrot.lane.b32.xlu0 %v4323, 56
        %v4361 = vpop.permute.xlu0 %4360
        %4362 = vrot.lane.b32.xlu0 %v4324, 56
        %v4363 = vpop.permute.xlu0 %4362
        %4364 = vrot.lane.b32.xlu0 %v4325, 56
        %v4365 = vpop.permute.xlu0 %4364
        %4366 = vrot.lane.b32.xlu0 %v4326, 56
        %v4367 = vpop.permute.xlu0 %4366
        %v4368 = vsel %vm455, %v4345, %v4347
        %v4369 = vsel %vm455, %v4347, %v4349
        %v4370 = vsel %vm455, %v4351, %v4353
        %v4371 = vsel %vm455, %v4353, %v4355
        %v4372 = vsel %vm455, %v4357, %v4359
        %v4373 = vsel %vm455, %v4359, %v4361
        %v4374 = vsel %vm455, %v4363, %v4365
        %v4375 = vsel %vm455, %v4365, %v4367
        %v4385 = vsel %vm530, %v4328, 0
        %v4388 = vsel %vm530, %v4329, 0
        %v4391 = vsel %vm530, %v4330, 0
        %v4394 = vsel %vm530, %v4331, 0
        %4396 = vmatpush.msra.mxu0 0.0
        %4397 = vmatpush.msra.mxu0 0.0
        %4398 = vmatpush.msra.mxu0 0.0
        %4399 = vmatpush.msra.mxu0 0.0
        %4400 = vmatpush.msra.mxu0 0.0
        %4401 = vmatpush.msra.mxu0 0.0
        %4402 = vmatpush.msra.mxu0 0.0
        %4403 = vmatpush.msra.mxu0 0.0
        %4404 = vmatpush.msra.mxu0 0.0
        %4405 = vmatpush.msra.mxu0 0.0
        %4406 = vmatpush.msra.mxu0 0.0
        %4407 = vmatpush.msra.mxu0 0.0
        %4408 = vmatpush.msra.mxu0 %v4374
        %4409 = vmatpush.msra.mxu0 %v4372
        %4410 = vmatpush.msra.mxu0 %v4370
        %4411 = vmatpush.msra.mxu0 %v4368
        %4412 = vmatmul.f32.gmra.mxu0 %v4385
        %v4413 = vpop.f32.mrf.mxu0
        %v4414 = vadd.f32 0.0, %v4413
        %4415 = vmatmul.f32.gmra.mxu0 %v4388
        %v4416 = vpop.f32.mrf.mxu0
        %v4417 = vadd.f32 0.0, %v4416
        %4418 = vmatmul.f32.gmra.mxu0 %v4391
        %v4419 = vpop.f32.mrf.mxu0
        %v4420 = vadd.f32 0.0, %v4419
        %4421 = vmatmul.f32.gmra.mxu0 %v4394
        %v4422 = vpop.f32.mrf.mxu0
        %v4423 = vadd.f32 0.0, %v4422
        %4424 = vdwg.mxu0
        %4425 = vmatpush.msra.mxu0 0.0
        %4426 = vmatpush.msra.mxu0 0.0
        %4427 = vmatpush.msra.mxu0 0.0
        %4428 = vmatpush.msra.mxu0 0.0
        %4429 = vmatpush.msra.mxu0 0.0
        %4430 = vmatpush.msra.mxu0 0.0
        %4431 = vmatpush.msra.mxu0 0.0
        %4432 = vmatpush.msra.mxu0 0.0
        %4433 = vmatpush.msra.mxu0 0.0
        %4434 = vmatpush.msra.mxu0 0.0
        %4435 = vmatpush.msra.mxu0 0.0
        %4436 = vmatpush.msra.mxu0 0.0
        %4437 = vmatpush.msra.mxu0 %v4375
        %4438 = vmatpush.msra.mxu0 %v4373
        %4439 = vmatpush.msra.mxu0 %v4371
        %4440 = vmatpush.msra.mxu0 %v4369
        %4441 = vmatmul.f32.gmra.mxu0 %v4385
        %v4442 = vpop.f32.mrf.mxu0
        %v4443 = vadd.f32 0.0, %v4442
        %4444 = vmatmul.f32.gmra.mxu0 %v4388
        %v4445 = vpop.f32.mrf.mxu0
        %v4446 = vadd.f32 0.0, %v4445
        %4447 = vmatmul.f32.gmra.mxu0 %v4391
        %v4448 = vpop.f32.mrf.mxu0
        %v4449 = vadd.f32 0.0, %v4448
        %4450 = vmatmul.f32.gmra.mxu0 %v4394
        %v4451 = vpop.f32.mrf.mxu0
        %v4452 = vadd.f32 0.0, %v4451
        %4453 = vdwg.mxu0
        %v4454 = vadd.f32 %v4294, %v4414
        %v4455 = vadd.f32 %v4295, %v4443
        %v4456 = vadd.f32 %v4296, %v4417
        %v4457 = vadd.f32 %v4297, %v4446
        %v4458 = vadd.f32 %v4298, %v4420
        %v4459 = vadd.f32 %v4299, %v4449
        %v4460 = vadd.f32 %v4300, %v4423
        %v4461 = vadd.f32 %v4301, %v4452
        %s4462 = scalar_lea.vmem %s7, 50
        %v4463 = vld [vmem:[%s4462] ss:$8 sm:$0x3]
        %v4465 = vperm.slane %v4463, 0
        %v4466 = vperm.slane %v4463, 1
        %4467 = vrot.lane.b32.xlu0 %v4465, 73
        %v4468 = vpop.permute.xlu0 %4467
        %4469 = vrot.lane.b32.xlu0 %v4466, 73
        %v4470 = vpop.permute.xlu0 %4469
        %v4471 = vsel %vm637, %v4468, %v4470
        %v4475 = vmul.f32 %v2555, %v4468
        %v4476 = vmul.f32 %v2556, %v4471
        %v4477 = vmul.f32 %v2557, %v4470
        %v4478 = vmul.f32 %v2558, %v4468
        %v4479 = vmul.f32 %v2559, %v4471
        %v4480 = vmul.f32 %v2560, %v4470
        %v4481 = vmul.f32 %v2561, %v4468
        %v4482 = vmul.f32 %v2562, %v4471
        %v4483 = vmul.f32 %v2563, %v4470
        %v4484 = vmul.f32 %v2564, %v4468
        %v4485 = vmul.f32 %v2565, %v4471
        %v4486 = vmul.f32 %v2566, %v4470
        %s4487 = scalar_lea.vmem [#allocation3], 832
        %v4488 = vld [vmem:[%s4487] sm:$0xff]
        %v4489 = vld [vmem:[%s4487 + $0x8] sm:$0xff]
        %v4490 = vld [vmem:[%s4487 + $0x10] sm:$0xff]
        %v4491 = vld [vmem:[%s4487 + $0x18] sm:$0xff]
        %4504 = vrot.lane.b32.xlu0 %v4475, 55
        %v4505 = vpop.permute.xlu0 %4504
        %4506 = vrot.lane.b32.xlu0 %v4476, 55
        %v4507 = vpop.permute.xlu0 %4506
        %4508 = vrot.lane.b32.xlu0 %v4477, 55
        %v4509 = vpop.permute.xlu0 %4508
        %4510 = vrot.lane.b32.xlu0 %v4478, 55
        %v4511 = vpop.permute.xlu0 %4510
        %4512 = vrot.lane.b32.xlu0 %v4479, 55
        %v4513 = vpop.permute.xlu0 %4512
        %4514 = vrot.lane.b32.xlu0 %v4480, 55
        %v4515 = vpop.permute.xlu0 %4514
        %4516 = vrot.lane.b32.xlu0 %v4481, 55
        %v4517 = vpop.permute.xlu0 %4516
        %4518 = vrot.lane.b32.xlu0 %v4482, 55
        %v4519 = vpop.permute.xlu0 %4518
        %4520 = vrot.lane.b32.xlu0 %v4483, 55
        %v4521 = vpop.permute.xlu0 %4520
        %4522 = vrot.lane.b32.xlu0 %v4484, 55
        %v4523 = vpop.permute.xlu0 %4522
        %4524 = vrot.lane.b32.xlu0 %v4485, 55
        %v4525 = vpop.permute.xlu0 %4524
        %4526 = vrot.lane.b32.xlu0 %v4486, 55
        %v4527 = vpop.permute.xlu0 %4526
        %v4528 = vsel %vm425, %v4505, %v4507
        %v4529 = vsel %vm425, %v4507, %v4509
        %v4530 = vsel %vm425, %v4511, %v4513
        %v4531 = vsel %vm425, %v4513, %v4515
        %v4532 = vsel %vm425, %v4517, %v4519
        %v4533 = vsel %vm425, %v4519, %v4521
        %v4534 = vsel %vm425, %v4523, %v4525
        %v4535 = vsel %vm425, %v4525, %v4527
        %v4545 = vsel %vm530, %v4488, 0
        %v4548 = vsel %vm530, %v4489, 0
        %v4551 = vsel %vm530, %v4490, 0
        %v4554 = vsel %vm530, %v4491, 0
        %4556 = vmatpush.msra.mxu0 0.0
        %4557 = vmatpush.msra.mxu0 0.0
        %4558 = vmatpush.msra.mxu0 0.0
        %4559 = vmatpush.msra.mxu0 0.0
        %4560 = vmatpush.msra.mxu0 0.0
        %4561 = vmatpush.msra.mxu0 0.0
        %4562 = vmatpush.msra.mxu0 0.0
        %4563 = vmatpush.msra.mxu0 0.0
        %4564 = vmatpush.msra.mxu0 0.0
        %4565 = vmatpush.msra.mxu0 0.0
        %4566 = vmatpush.msra.mxu0 0.0
        %4567 = vmatpush.msra.mxu0 0.0
        %4568 = vmatpush.msra.mxu0 %v4534
        %4569 = vmatpush.msra.mxu0 %v4532
        %4570 = vmatpush.msra.mxu0 %v4530
        %4571 = vmatpush.msra.mxu0 %v4528
        %4572 = vmatmul.f32.gmra.mxu0 %v4545
        %v4573 = vpop.f32.mrf.mxu0
        %v4574 = vadd.f32 0.0, %v4573
        %4575 = vmatmul.f32.gmra.mxu0 %v4548
        %v4576 = vpop.f32.mrf.mxu0
        %v4577 = vadd.f32 0.0, %v4576
        %4578 = vmatmul.f32.gmra.mxu0 %v4551
        %v4579 = vpop.f32.mrf.mxu0
        %v4580 = vadd.f32 0.0, %v4579
        %4581 = vmatmul.f32.gmra.mxu0 %v4554
        %v4582 = vpop.f32.mrf.mxu0
        %v4583 = vadd.f32 0.0, %v4582
        %4584 = vdwg.mxu0
        %4585 = vmatpush.msra.mxu0 0.0
        %4586 = vmatpush.msra.mxu0 0.0
        %4587 = vmatpush.msra.mxu0 0.0
        %4588 = vmatpush.msra.mxu0 0.0
        %4589 = vmatpush.msra.mxu0 0.0
        %4590 = vmatpush.msra.mxu0 0.0
        %4591 = vmatpush.msra.mxu0 0.0
        %4592 = vmatpush.msra.mxu0 0.0
        %4593 = vmatpush.msra.mxu0 0.0
        %4594 = vmatpush.msra.mxu0 0.0
        %4595 = vmatpush.msra.mxu0 0.0
        %4596 = vmatpush.msra.mxu0 0.0
        %4597 = vmatpush.msra.mxu0 %v4535
        %4598 = vmatpush.msra.mxu0 %v4533
        %4599 = vmatpush.msra.mxu0 %v4531
        %4600 = vmatpush.msra.mxu0 %v4529
        %4601 = vmatmul.f32.gmra.mxu0 %v4545
        %v4602 = vpop.f32.mrf.mxu0
        %v4603 = vadd.f32 0.0, %v4602
        %4604 = vmatmul.f32.gmra.mxu0 %v4548
        %v4605 = vpop.f32.mrf.mxu0
        %v4606 = vadd.f32 0.0, %v4605
        %4607 = vmatmul.f32.gmra.mxu0 %v4551
        %v4608 = vpop.f32.mrf.mxu0
        %v4609 = vadd.f32 0.0, %v4608
        %4610 = vmatmul.f32.gmra.mxu0 %v4554
        %v4611 = vpop.f32.mrf.mxu0
        %v4612 = vadd.f32 0.0, %v4611
        %4613 = vdwg.mxu0
        %v4614 = vadd.f32 %v4454, %v4574
        %v4615 = vadd.f32 %v4455, %v4603
        %v4616 = vadd.f32 %v4456, %v4577
        %v4617 = vadd.f32 %v4457, %v4606
        %v4618 = vadd.f32 %v4458, %v4580
        %v4619 = vadd.f32 %v4459, %v4609
        %v4620 = vadd.f32 %v4460, %v4583
        %v4621 = vadd.f32 %v4461, %v4612
        %v4622 = vld [vmem:[%s2] sm:$0xff]
        %v4623 = vld [vmem:[%s2 + $0x8] sm:$0xff]
        %v4624 = vld [vmem:[%s2 + $0x10] sm:$0xff]
        %v4625 = vld [vmem:[%s2 + $0x18] sm:$0xff]
        %4627 = vset.pattern.permute.xlu0 0
        %4628 = vperm.xlu0 %4627, %v4622
        %v4629 = vpop.permute.xlu0 %4628
        %4632 = vset.pattern.permute.xlu0 0
        %4633 = vperm.xlu0 %4632, %v4623
        %v4634 = vpop.permute.xlu0 %4633
        %4637 = vset.pattern.permute.xlu0 0
        %4638 = vperm.xlu0 %4637, %v4624
        %v4639 = vpop.permute.xlu0 %4638
        %4642 = vset.pattern.permute.xlu0 0
        %4643 = vperm.xlu0 %4642, %v4625
        %v4644 = vpop.permute.xlu0 %4643
        %v4646 = vadd.f32 %v4614, %v4629
        %v4647 = vadd.f32 %v4615, %v4629
        %v4648 = vadd.f32 %v4616, %v4634
        %v4649 = vadd.f32 %v4617, %v4634
        %v4650 = vadd.f32 %v4618, %v4639
        %v4651 = vadd.f32 %v4619, %v4639
        %v4652 = vadd.f32 %v4620, %v4644
        %v4653 = vadd.f32 %v4621, %v4644
        %v4654 = vmax.f32 %v4646, 0.0
        %v4655 = vmax.f32 %v4647, 0.0
        %v4656 = vmax.f32 %v4648, 0.0
        %v4657 = vmax.f32 %v4649, 0.0
        %v4658 = vmax.f32 %v4650, 0.0
        %v4659 = vmax.f32 %v4651, 0.0
        %v4660 = vmax.f32 %v4652, 0.0
        %v4661 = vmax.f32 %v4653, 0.0
        %4662 = vst [vmem:[#allocation2 + $0x8] sm:$0xff] %v4654
        %4663 = vst [vmem:[#allocation2 + $0x10] sm:$0xff] %v4655
        %4664 = vst [vmem:[#allocation2 + $0x28] sm:$0xff] %v4656
        %4665 = vst [vmem:[#allocation2 + $0x30] sm:$0xff] %v4657
        %4666 = vst [vmem:[#allocation2 + $0x48] sm:$0xff] %v4658
        %4667 = vst [vmem:[#allocation2 + $0x50] sm:$0xff] %v4659
        %4668 = vst [vmem:[#allocation2 + $0x68] sm:$0xff] %v4660
        %4669 = vst [vmem:[#allocation2 + $0x70] sm:$0xff] %v4661
        %v4670 = vld [vmem:[#allocation2] sm:$0xff]
        %v4671 = vld [vmem:[#allocation2 + $0x8] sm:$0xff]
        %v4672 = vld [vmem:[#allocation2 + $0x10] sm:$0xff]
        %v4673 = vld [vmem:[#allocation2 + $0x20] sm:$0xff]
        %v4674 = vld [vmem:[#allocation2 + $0x28] sm:$0xff]
        %v4675 = vld [vmem:[#allocation2 + $0x30] sm:$0xff]
        %v4676 = vld [vmem:[#allocation2 + $0x40] sm:$0xff]
        %v4677 = vld [vmem:[#allocation2 + $0x48] sm:$0xff]
        %v4678 = vld [vmem:[#allocation2 + $0x50] sm:$0xff]
        %v4679 = vld [vmem:[#allocation2 + $0x60] sm:$0xff]
        %v4680 = vld [vmem:[#allocation2 + $0x68] sm:$0xff]
        %v4681 = vld [vmem:[#allocation2 + $0x70] sm:$0xff]
        %v4682 = vld [vmem:[%s7] ss:$8 sm:$0x3]
        %v4684 = vperm.slane %v4682, 0
        %v4685 = vperm.slane %v4682, 1
        %4686 = vrot.lane.b32.xlu0 %v4684, 55
        %v4687 = vpop.permute.xlu0 %4686
        %4688 = vrot.lane.b32.xlu0 %v4685, 55
        %v4689 = vpop.permute.xlu0 %4688
        %v4690 = vsel %vm425, %v4687, %v4689
        %v4694 = vmul.f32 %v4670, %v4687
        %v4695 = vmul.f32 %v4671, %v4690
        %v4696 = vmul.f32 %v4672, %v4689
        %v4697 = vmul.f32 %v4673, %v4687
        %v4698 = vmul.f32 %v4674, %v4690
        %v4699 = vmul.f32 %v4675, %v4689
        %v4700 = vmul.f32 %v4676, %v4687
        %v4701 = vmul.f32 %v4677, %v4690
        %v4702 = vmul.f32 %v4678, %v4689
        %v4703 = vmul.f32 %v4679, %v4687
        %v4704 = vmul.f32 %v4680, %v4690
        %v4705 = vmul.f32 %v4681, %v4689
        %v4706 = vld [vmem:[#allocation6] sm:$0xff]
        %v4707 = vld [vmem:[#allocation6 + $0x8] sm:$0xff]
        %v4708 = vld [vmem:[#allocation6 + $0x10] sm:$0xff]
        %v4709 = vld [vmem:[#allocation6 + $0x18] sm:$0xff]
        %v4710 = vld [vmem:[%s446] ss:$8 sm:$0x3]
        %v4712 = vperm.slane %v4710, 0
        %v4713 = vperm.slane %v4710, 1
        %4714 = vrot.lane.b32.xlu0 %v4712, 56
        %v4715 = vpop.permute.xlu0 %4714
        %4716 = vrot.lane.b32.xlu0 %v4713, 56
        %v4717 = vpop.permute.xlu0 %4716
        %v4718 = vsel %vm455, %v4715, %v4717
        %v4722 = vmul.f32 %v4670, %v4715
        %v4723 = vmul.f32 %v4671, %v4718
        %v4724 = vmul.f32 %v4672, %v4717
        %v4725 = vmul.f32 %v4673, %v4715
        %v4726 = vmul.f32 %v4674, %v4718
        %v4727 = vmul.f32 %v4675, %v4717
        %v4728 = vmul.f32 %v4676, %v4715
        %v4729 = vmul.f32 %v4677, %v4718
        %v4730 = vmul.f32 %v4678, %v4717
        %v4731 = vmul.f32 %v4679, %v4715
        %v4732 = vmul.f32 %v4680, %v4718
        %v4733 = vmul.f32 %v4681, %v4717
        %s4734 = scalar_lea.vmem [#allocation6], 32
        %v4735 = vld [vmem:[%s4734] sm:$0xff]
        %v4736 = vld [vmem:[%s4734 + $0x8] sm:$0xff]
        %v4737 = vld [vmem:[%s4734 + $0x10] sm:$0xff]
        %v4738 = vld [vmem:[%s4734 + $0x18] sm:$0xff]
        %4751 = vrot.lane.b32.xlu0 %v4722, 72
        %v4752 = vpop.permute.xlu0 %4751
        %4753 = vrot.lane.b32.xlu0 %v4723, 72
        %v4754 = vpop.permute.xlu0 %4753
        %4755 = vrot.lane.b32.xlu0 %v4724, 72
        %v4756 = vpop.permute.xlu0 %4755
        %4757 = vrot.lane.b32.xlu0 %v4725, 72
        %v4758 = vpop.permute.xlu0 %4757
        %4759 = vrot.lane.b32.xlu0 %v4726, 72
        %v4760 = vpop.permute.xlu0 %4759
        %4761 = vrot.lane.b32.xlu0 %v4727, 72
        %v4762 = vpop.permute.xlu0 %4761
        %4763 = vrot.lane.b32.xlu0 %v4728, 72
        %v4764 = vpop.permute.xlu0 %4763
        %4765 = vrot.lane.b32.xlu0 %v4729, 72
        %v4766 = vpop.permute.xlu0 %4765
        %4767 = vrot.lane.b32.xlu0 %v4730, 72
        %v4768 = vpop.permute.xlu0 %4767
        %4769 = vrot.lane.b32.xlu0 %v4731, 72
        %v4770 = vpop.permute.xlu0 %4769
        %4771 = vrot.lane.b32.xlu0 %v4732, 72
        %v4772 = vpop.permute.xlu0 %4771
        %4773 = vrot.lane.b32.xlu0 %v4733, 72
        %v4774 = vpop.permute.xlu0 %4773
        %v4775 = vsel %vm513, %v4752, %v4754
        %v4776 = vsel %vm513, %v4754, %v4756
        %v4777 = vsel %vm513, %v4758, %v4760
        %v4778 = vsel %vm513, %v4760, %v4762
        %v4779 = vsel %vm513, %v4764, %v4766
        %v4780 = vsel %vm513, %v4766, %v4768
        %v4781 = vsel %vm513, %v4770, %v4772
        %v4782 = vsel %vm513, %v4772, %v4774
        %v4792 = vsel %vm530, %v4735, 0
        %v4795 = vsel %vm530, %v4736, 0
        %v4798 = vsel %vm530, %v4737, 0
        %v4801 = vsel %vm530, %v4738, 0
        %4803 = vmatpush.msra.mxu0 0.0
        %4804 = vmatpush.msra.mxu0 0.0
        %4805 = vmatpush.msra.mxu0 0.0
        %4806 = vmatpush.msra.mxu0 0.0
        %4807 = vmatpush.msra.mxu0 0.0
        %4808 = vmatpush.msra.mxu0 0.0
        %4809 = vmatpush.msra.mxu0 0.0
        %4810 = vmatpush.msra.mxu0 0.0
        %4811 = vmatpush.msra.mxu0 0.0
        %4812 = vmatpush.msra.mxu0 0.0
        %4813 = vmatpush.msra.mxu0 0.0
        %4814 = vmatpush.msra.mxu0 0.0
        %4815 = vmatpush.msra.mxu0 %v4781
        %4816 = vmatpush.msra.mxu0 %v4779
        %4817 = vmatpush.msra.mxu0 %v4777
        %4818 = vmatpush.msra.mxu0 %v4775
        %4819 = vmatmul.f32.gmra.mxu0 %v4792
        %v4820 = vpop.f32.mrf.mxu0
        %v4821 = vadd.f32 0.0, %v4820
        %4822 = vmatmul.f32.gmra.mxu0 %v4795
        %v4823 = vpop.f32.mrf.mxu0
        %v4824 = vadd.f32 0.0, %v4823
        %4825 = vmatmul.f32.gmra.mxu0 %v4798
        %v4826 = vpop.f32.mrf.mxu0
        %v4827 = vadd.f32 0.0, %v4826
        %4828 = vmatmul.f32.gmra.mxu0 %v4801
        %v4829 = vpop.f32.mrf.mxu0
        %v4830 = vadd.f32 0.0, %v4829
        %4831 = vdwg.mxu0
        %4832 = vmatpush.msra.mxu0 0.0
        %4833 = vmatpush.msra.mxu0 0.0
        %4834 = vmatpush.msra.mxu0 0.0
        %4835 = vmatpush.msra.mxu0 0.0
        %4836 = vmatpush.msra.mxu0 0.0
        %4837 = vmatpush.msra.mxu0 0.0
        %4838 = vmatpush.msra.mxu0 0.0
        %4839 = vmatpush.msra.mxu0 0.0
        %4840 = vmatpush.msra.mxu0 0.0
        %4841 = vmatpush.msra.mxu0 0.0
        %4842 = vmatpush.msra.mxu0 0.0
        %4843 = vmatpush.msra.mxu0 0.0
        %4844 = vmatpush.msra.mxu0 %v4782
        %4845 = vmatpush.msra.mxu0 %v4780
        %4846 = vmatpush.msra.mxu0 %v4778
        %4847 = vmatpush.msra.mxu0 %v4776
        %4848 = vmatmul.f32.gmra.mxu0 %v4792
        %v4849 = vpop.f32.mrf.mxu0
        %v4850 = vadd.f32 0.0, %v4849
        %4851 = vmatmul.f32.gmra.mxu0 %v4795
        %v4852 = vpop.f32.mrf.mxu0
        %v4853 = vadd.f32 0.0, %v4852
        %4854 = vmatmul.f32.gmra.mxu0 %v4798
        %v4855 = vpop.f32.mrf.mxu0
        %v4856 = vadd.f32 0.0, %v4855
        %4857 = vmatmul.f32.gmra.mxu0 %v4801
        %v4858 = vpop.f32.mrf.mxu0
        %v4859 = vadd.f32 0.0, %v4858
        %4860 = vdwg.mxu0
        %4873 = vrot.lane.b32.xlu0 %v4694, 73
        %v4874 = vpop.permute.xlu0 %4873
        %4875 = vrot.lane.b32.xlu0 %v4695, 73
        %v4876 = vpop.permute.xlu0 %4875
        %4877 = vrot.lane.b32.xlu0 %v4696, 73
        %v4878 = vpop.permute.xlu0 %4877
        %4879 = vrot.lane.b32.xlu0 %v4697, 73
        %v4880 = vpop.permute.xlu0 %4879
        %4881 = vrot.lane.b32.xlu0 %v4698, 73
        %v4882 = vpop.permute.xlu0 %4881
        %4883 = vrot.lane.b32.xlu0 %v4699, 73
        %v4884 = vpop.permute.xlu0 %4883
        %4885 = vrot.lane.b32.xlu0 %v4700, 73
        %v4886 = vpop.permute.xlu0 %4885
        %4887 = vrot.lane.b32.xlu0 %v4701, 73
        %v4888 = vpop.permute.xlu0 %4887
        %4889 = vrot.lane.b32.xlu0 %v4702, 73
        %v4890 = vpop.permute.xlu0 %4889
        %4891 = vrot.lane.b32.xlu0 %v4703, 73
        %v4892 = vpop.permute.xlu0 %4891
        %4893 = vrot.lane.b32.xlu0 %v4704, 73
        %v4894 = vpop.permute.xlu0 %4893
        %4895 = vrot.lane.b32.xlu0 %v4705, 73
        %v4896 = vpop.permute.xlu0 %4895
        %v4897 = vsel %vm637, %v4874, %v4876
        %v4898 = vsel %vm637, %v4876, %v4878
        %v4899 = vsel %vm637, %v4880, %v4882
        %v4900 = vsel %vm637, %v4882, %v4884
        %v4901 = vsel %vm637, %v4886, %v4888
        %v4902 = vsel %vm637, %v4888, %v4890
        %v4903 = vsel %vm637, %v4892, %v4894
        %v4904 = vsel %vm637, %v4894, %v4896
        %v4914 = vsel %vm530, %v4706, 0
        %v4917 = vsel %vm530, %v4707, 0
        %v4920 = vsel %vm530, %v4708, 0
        %v4923 = vsel %vm530, %v4709, 0
        %4925 = vmatpush.msra.mxu0 0.0
        %4926 = vmatpush.msra.mxu0 0.0
        %4927 = vmatpush.msra.mxu0 0.0
        %4928 = vmatpush.msra.mxu0 0.0
        %4929 = vmatpush.msra.mxu0 0.0
        %4930 = vmatpush.msra.mxu0 0.0
        %4931 = vmatpush.msra.mxu0 0.0
        %4932 = vmatpush.msra.mxu0 0.0
        %4933 = vmatpush.msra.mxu0 0.0
        %4934 = vmatpush.msra.mxu0 0.0
        %4935 = vmatpush.msra.mxu0 0.0
        %4936 = vmatpush.msra.mxu0 0.0
        %4937 = vmatpush.msra.mxu0 %v4903
        %4938 = vmatpush.msra.mxu0 %v4901
        %4939 = vmatpush.msra.mxu0 %v4899
        %4940 = vmatpush.msra.mxu0 %v4897
        %4941 = vmatmul.f32.gmra.mxu0 %v4914
        %v4942 = vpop.f32.mrf.mxu0
        %v4943 = vadd.f32 %v4821, %v4942
        %4944 = vmatmul.f32.gmra.mxu0 %v4917
        %v4945 = vpop.f32.mrf.mxu0
        %v4946 = vadd.f32 %v4824, %v4945
        %4947 = vmatmul.f32.gmra.mxu0 %v4920
        %v4948 = vpop.f32.mrf.mxu0
        %v4949 = vadd.f32 %v4827, %v4948
        %4950 = vmatmul.f32.gmra.mxu0 %v4923
        %v4951 = vpop.f32.mrf.mxu0
        %v4952 = vadd.f32 %v4830, %v4951
        %4953 = vdwg.mxu0
        %4954 = vmatpush.msra.mxu0 0.0
        %4955 = vmatpush.msra.mxu0 0.0
        %4956 = vmatpush.msra.mxu0 0.0
        %4957 = vmatpush.msra.mxu0 0.0
        %4958 = vmatpush.msra.mxu0 0.0
        %4959 = vmatpush.msra.mxu0 0.0
        %4960 = vmatpush.msra.mxu0 0.0
        %4961 = vmatpush.msra.mxu0 0.0
        %4962 = vmatpush.msra.mxu0 0.0
        %4963 = vmatpush.msra.mxu0 0.0
        %4964 = vmatpush.msra.mxu0 0.0
        %4965 = vmatpush.msra.mxu0 0.0
        %4966 = vmatpush.msra.mxu0 %v4904
        %4967 = vmatpush.msra.mxu0 %v4902
        %4968 = vmatpush.msra.mxu0 %v4900
        %4969 = vmatpush.msra.mxu0 %v4898
        %4970 = vmatmul.f32.gmra.mxu0 %v4914
        %v4971 = vpop.f32.mrf.mxu0
        %v4972 = vadd.f32 %v4850, %v4971
        %4973 = vmatmul.f32.gmra.mxu0 %v4917
        %v4974 = vpop.f32.mrf.mxu0
        %v4975 = vadd.f32 %v4853, %v4974
        %4976 = vmatmul.f32.gmra.mxu0 %v4920
        %v4977 = vpop.f32.mrf.mxu0
        %v4978 = vadd.f32 %v4856, %v4977
        %4979 = vmatmul.f32.gmra.mxu0 %v4923
        %v4980 = vpop.f32.mrf.mxu0
        %v4981 = vadd.f32 %v4859, %v4980
        %4982 = vdwg.mxu0
        %v4983 = vld [vmem:[%s724] ss:$8 sm:$0x3]
        %v4985 = vperm.slane %v4983, 0
        %v4986 = vperm.slane %v4983, 1
        %4987 = vrot.lane.b32.xlu0 %v4985, 57
        %v4988 = vpop.permute.xlu0 %4987
        %4989 = vrot.lane.b32.xlu0 %v4986, 57
        %v4990 = vpop.permute.xlu0 %4989
        %v4991 = vsel %vm733, %v4988, %v4990
        %v4995 = vmul.f32 %v4670, %v4988
        %v4996 = vmul.f32 %v4671, %v4991
        %v4997 = vmul.f32 %v4672, %v4990
        %v4998 = vmul.f32 %v4673, %v4988
        %v4999 = vmul.f32 %v4674, %v4991
        %v5000 = vmul.f32 %v4675, %v4990
        %v5001 = vmul.f32 %v4676, %v4988
        %v5002 = vmul.f32 %v4677, %v4991
        %v5003 = vmul.f32 %v4678, %v4990
        %v5004 = vmul.f32 %v4679, %v4988
        %v5005 = vmul.f32 %v4680, %v4991
        %v5006 = vmul.f32 %v4681, %v4990
        %s5007 = scalar_lea.vmem [#allocation6], 64
        %v5008 = vld [vmem:[%s5007] sm:$0xff]
        %v5009 = vld [vmem:[%s5007 + $0x8] sm:$0xff]
        %v5010 = vld [vmem:[%s5007 + $0x10] sm:$0xff]
        %v5011 = vld [vmem:[%s5007 + $0x18] sm:$0xff]
        %5024 = vrot.lane.b32.xlu0 %v4995, 71
        %v5025 = vpop.permute.xlu0 %5024
        %5026 = vrot.lane.b32.xlu0 %v4996, 71
        %v5027 = vpop.permute.xlu0 %5026
        %5028 = vrot.lane.b32.xlu0 %v4997, 71
        %v5029 = vpop.permute.xlu0 %5028
        %5030 = vrot.lane.b32.xlu0 %v4998, 71
        %v5031 = vpop.permute.xlu0 %5030
        %5032 = vrot.lane.b32.xlu0 %v4999, 71
        %v5033 = vpop.permute.xlu0 %5032
        %5034 = vrot.lane.b32.xlu0 %v5000, 71
        %v5035 = vpop.permute.xlu0 %5034
        %5036 = vrot.lane.b32.xlu0 %v5001, 71
        %v5037 = vpop.permute.xlu0 %5036
        %5038 = vrot.lane.b32.xlu0 %v5002, 71
        %v5039 = vpop.permute.xlu0 %5038
        %5040 = vrot.lane.b32.xlu0 %v5003, 71
        %v5041 = vpop.permute.xlu0 %5040
        %5042 = vrot.lane.b32.xlu0 %v5004, 71
        %v5043 = vpop.permute.xlu0 %5042
        %5044 = vrot.lane.b32.xlu0 %v5005, 71
        %v5045 = vpop.permute.xlu0 %5044
        %5046 = vrot.lane.b32.xlu0 %v5006, 71
        %v5047 = vpop.permute.xlu0 %5046
        %v5048 = vsel %vm791, %v5025, %v5027
        %v5049 = vsel %vm791, %v5027, %v5029
        %v5050 = vsel %vm791, %v5031, %v5033
        %v5051 = vsel %vm791, %v5033, %v5035
        %v5052 = vsel %vm791, %v5037, %v5039
        %v5053 = vsel %vm791, %v5039, %v5041
        %v5054 = vsel %vm791, %v5043, %v5045
        %v5055 = vsel %vm791, %v5045, %v5047
        %v5065 = vsel %vm530, %v5008, 0
        %v5068 = vsel %vm530, %v5009, 0
        %v5071 = vsel %vm530, %v5010, 0
        %v5074 = vsel %vm530, %v5011, 0
        %5076 = vmatpush.msra.mxu0 0.0
        %5077 = vmatpush.msra.mxu0 0.0
        %5078 = vmatpush.msra.mxu0 0.0
        %5079 = vmatpush.msra.mxu0 0.0
        %5080 = vmatpush.msra.mxu0 0.0
        %5081 = vmatpush.msra.mxu0 0.0
        %5082 = vmatpush.msra.mxu0 0.0
        %5083 = vmatpush.msra.mxu0 0.0
        %5084 = vmatpush.msra.mxu0 0.0
        %5085 = vmatpush.msra.mxu0 0.0
        %5086 = vmatpush.msra.mxu0 0.0
        %5087 = vmatpush.msra.mxu0 0.0
        %5088 = vmatpush.msra.mxu0 %v5054
        %5089 = vmatpush.msra.mxu0 %v5052
        %5090 = vmatpush.msra.mxu0 %v5050
        %5091 = vmatpush.msra.mxu0 %v5048
        %5092 = vmatmul.f32.gmra.mxu0 %v5065
        %v5093 = vpop.f32.mrf.mxu0
        %v5094 = vadd.f32 0.0, %v5093
        %5095 = vmatmul.f32.gmra.mxu0 %v5068
        %v5096 = vpop.f32.mrf.mxu0
        %v5097 = vadd.f32 0.0, %v5096
        %5098 = vmatmul.f32.gmra.mxu0 %v5071
        %v5099 = vpop.f32.mrf.mxu0
        %v5100 = vadd.f32 0.0, %v5099
        %5101 = vmatmul.f32.gmra.mxu0 %v5074
        %v5102 = vpop.f32.mrf.mxu0
        %v5103 = vadd.f32 0.0, %v5102
        %5104 = vdwg.mxu0
        %5105 = vmatpush.msra.mxu0 0.0
        %5106 = vmatpush.msra.mxu0 0.0
        %5107 = vmatpush.msra.mxu0 0.0
        %5108 = vmatpush.msra.mxu0 0.0
        %5109 = vmatpush.msra.mxu0 0.0
        %5110 = vmatpush.msra.mxu0 0.0
        %5111 = vmatpush.msra.mxu0 0.0
        %5112 = vmatpush.msra.mxu0 0.0
        %5113 = vmatpush.msra.mxu0 0.0
        %5114 = vmatpush.msra.mxu0 0.0
        %5115 = vmatpush.msra.mxu0 0.0
        %5116 = vmatpush.msra.mxu0 0.0
        %5117 = vmatpush.msra.mxu0 %v5055
        %5118 = vmatpush.msra.mxu0 %v5053
        %5119 = vmatpush.msra.mxu0 %v5051
        %5120 = vmatpush.msra.mxu0 %v5049
        %5121 = vmatmul.f32.gmra.mxu0 %v5065
        %v5122 = vpop.f32.mrf.mxu0
        %v5123 = vadd.f32 0.0, %v5122
        %5124 = vmatmul.f32.gmra.mxu0 %v5068
        %v5125 = vpop.f32.mrf.mxu0
        %v5126 = vadd.f32 0.0, %v5125
        %5127 = vmatmul.f32.gmra.mxu0 %v5071
        %v5128 = vpop.f32.mrf.mxu0
        %v5129 = vadd.f32 0.0, %v5128
        %5130 = vmatmul.f32.gmra.mxu0 %v5074
        %v5131 = vpop.f32.mrf.mxu0
        %v5132 = vadd.f32 0.0, %v5131
        %5133 = vdwg.mxu0
        %v5134 = vadd.f32 %v4943, %v5094
        %v5135 = vadd.f32 %v4972, %v5123
        %v5136 = vadd.f32 %v4946, %v5097
        %v5137 = vadd.f32 %v4975, %v5126
        %v5138 = vadd.f32 %v4949, %v5100
        %v5139 = vadd.f32 %v4978, %v5129
        %v5140 = vadd.f32 %v4952, %v5103
        %v5141 = vadd.f32 %v4981, %v5132
        %v5142 = vld [vmem:[%s886] ss:$8 sm:$0x3]
        %v5144 = vperm.slane %v5142, 0
        %v5145 = vperm.slane %v5142, 1
        %5146 = vrot.lane.b32.xlu0 %v5144, 63
        %v5147 = vpop.permute.xlu0 %5146
        %5148 = vrot.lane.b32.xlu0 %v5145, 63
        %v5149 = vpop.permute.xlu0 %5148
        %v5150 = vsel %vm895, %v5147, %v5149
        %v5154 = vmul.f32 %v4670, %v5147
        %v5155 = vmul.f32 %v4671, %v5150
        %v5156 = vmul.f32 %v4672, %v5149
        %v5157 = vmul.f32 %v4673, %v5147
        %v5158 = vmul.f32 %v4674, %v5150
        %v5159 = vmul.f32 %v4675, %v5149
        %v5160 = vmul.f32 %v4676, %v5147
        %v5161 = vmul.f32 %v4677, %v5150
        %v5162 = vmul.f32 %v4678, %v5149
        %v5163 = vmul.f32 %v4679, %v5147
        %v5164 = vmul.f32 %v4680, %v5150
        %v5165 = vmul.f32 %v4681, %v5149
        %s5166 = scalar_lea.vmem [#allocation6], 96
        %v5167 = vld [vmem:[%s5166] sm:$0xff]
        %v5168 = vld [vmem:[%s5166 + $0x8] sm:$0xff]
        %v5169 = vld [vmem:[%s5166 + $0x10] sm:$0xff]
        %v5170 = vld [vmem:[%s5166 + $0x18] sm:$0xff]
        %5183 = vrot.lane.b32.xlu0 %v5154, 65
        %v5184 = vpop.permute.xlu0 %5183
        %5185 = vrot.lane.b32.xlu0 %v5155, 65
        %v5186 = vpop.permute.xlu0 %5185
        %5187 = vrot.lane.b32.xlu0 %v5156, 65
        %v5188 = vpop.permute.xlu0 %5187
        %5189 = vrot.lane.b32.xlu0 %v5157, 65
        %v5190 = vpop.permute.xlu0 %5189
        %5191 = vrot.lane.b32.xlu0 %v5158, 65
        %v5192 = vpop.permute.xlu0 %5191
        %5193 = vrot.lane.b32.xlu0 %v5159, 65
        %v5194 = vpop.permute.xlu0 %5193
        %5195 = vrot.lane.b32.xlu0 %v5160, 65
        %v5196 = vpop.permute.xlu0 %5195
        %5197 = vrot.lane.b32.xlu0 %v5161, 65
        %v5198 = vpop.permute.xlu0 %5197
        %5199 = vrot.lane.b32.xlu0 %v5162, 65
        %v5200 = vpop.permute.xlu0 %5199
        %5201 = vrot.lane.b32.xlu0 %v5163, 65
        %v5202 = vpop.permute.xlu0 %5201
        %5203 = vrot.lane.b32.xlu0 %v5164, 65
        %v5204 = vpop.permute.xlu0 %5203
        %5205 = vrot.lane.b32.xlu0 %v5165, 65
        %v5206 = vpop.permute.xlu0 %5205
        %v5207 = vsel %vm953, %v5184, %v5186
        %v5208 = vsel %vm953, %v5186, %v5188
        %v5209 = vsel %vm953, %v5190, %v5192
        %v5210 = vsel %vm953, %v5192, %v5194
        %v5211 = vsel %vm953, %v5196, %v5198
        %v5212 = vsel %vm953, %v5198, %v5200
        %v5213 = vsel %vm953, %v5202, %v5204
        %v5214 = vsel %vm953, %v5204, %v5206
        %v5224 = vsel %vm530, %v5167, 0
        %v5227 = vsel %vm530, %v5168, 0
        %v5230 = vsel %vm530, %v5169, 0
        %v5233 = vsel %vm530, %v5170, 0
        %5235 = vmatpush.msra.mxu0 0.0
        %5236 = vmatpush.msra.mxu0 0.0
        %5237 = vmatpush.msra.mxu0 0.0
        %5238 = vmatpush.msra.mxu0 0.0
        %5239 = vmatpush.msra.mxu0 0.0
        %5240 = vmatpush.msra.mxu0 0.0
        %5241 = vmatpush.msra.mxu0 0.0
        %5242 = vmatpush.msra.mxu0 0.0
        %5243 = vmatpush.msra.mxu0 0.0
        %5244 = vmatpush.msra.mxu0 0.0
        %5245 = vmatpush.msra.mxu0 0.0
        %5246 = vmatpush.msra.mxu0 0.0
        %5247 = vmatpush.msra.mxu0 %v5213
        %5248 = vmatpush.msra.mxu0 %v5211
        %5249 = vmatpush.msra.mxu0 %v5209
        %5250 = vmatpush.msra.mxu0 %v5207
        %5251 = vmatmul.f32.gmra.mxu0 %v5224
        %v5252 = vpop.f32.mrf.mxu0
        %v5253 = vadd.f32 0.0, %v5252
        %5254 = vmatmul.f32.gmra.mxu0 %v5227
        %v5255 = vpop.f32.mrf.mxu0
        %v5256 = vadd.f32 0.0, %v5255
        %5257 = vmatmul.f32.gmra.mxu0 %v5230
        %v5258 = vpop.f32.mrf.mxu0
        %v5259 = vadd.f32 0.0, %v5258
        %5260 = vmatmul.f32.gmra.mxu0 %v5233
        %v5261 = vpop.f32.mrf.mxu0
        %v5262 = vadd.f32 0.0, %v5261
        %5263 = vdwg.mxu0
        %5264 = vmatpush.msra.mxu0 0.0
        %5265 = vmatpush.msra.mxu0 0.0
        %5266 = vmatpush.msra.mxu0 0.0
        %5267 = vmatpush.msra.mxu0 0.0
        %5268 = vmatpush.msra.mxu0 0.0
        %5269 = vmatpush.msra.mxu0 0.0
        %5270 = vmatpush.msra.mxu0 0.0
        %5271 = vmatpush.msra.mxu0 0.0
        %5272 = vmatpush.msra.mxu0 0.0
        %5273 = vmatpush.msra.mxu0 0.0
        %5274 = vmatpush.msra.mxu0 0.0
        %5275 = vmatpush.msra.mxu0 0.0
        %5276 = vmatpush.msra.mxu0 %v5214
        %5277 = vmatpush.msra.mxu0 %v5212
        %5278 = vmatpush.msra.mxu0 %v5210
        %5279 = vmatpush.msra.mxu0 %v5208
        %5280 = vmatmul.f32.gmra.mxu0 %v5224
        %v5281 = vpop.f32.mrf.mxu0
        %v5282 = vadd.f32 0.0, %v5281
        %5283 = vmatmul.f32.gmra.mxu0 %v5227
        %v5284 = vpop.f32.mrf.mxu0
        %v5285 = vadd.f32 0.0, %v5284
        %5286 = vmatmul.f32.gmra.mxu0 %v5230
        %v5287 = vpop.f32.mrf.mxu0
        %v5288 = vadd.f32 0.0, %v5287
        %5289 = vmatmul.f32.gmra.mxu0 %v5233
        %v5290 = vpop.f32.mrf.mxu0
        %v5291 = vadd.f32 0.0, %v5290
        %5292 = vdwg.mxu0
        %v5293 = vadd.f32 %v5134, %v5253
        %v5294 = vadd.f32 %v5135, %v5282
        %v5295 = vadd.f32 %v5136, %v5256
        %v5296 = vadd.f32 %v5137, %v5285
        %v5297 = vadd.f32 %v5138, %v5259
        %v5298 = vadd.f32 %v5139, %v5288
        %v5299 = vadd.f32 %v5140, %v5262
        %v5300 = vadd.f32 %v5141, %v5291
        %s5301 = scalar_lea.vmem [#allocation6], 128
        %v5302 = vld [vmem:[%s5301] sm:$0xff]
        %v5303 = vld [vmem:[%s5301 + $0x8] sm:$0xff]
        %v5304 = vld [vmem:[%s5301 + $0x10] sm:$0xff]
        %v5305 = vld [vmem:[%s5301 + $0x18] sm:$0xff]
        %5318 = vrot.lane.b32.xlu0 %v4670, 64
        %v5319 = vpop.permute.xlu0 %5318
        %5320 = vrot.lane.b32.xlu0 %v4671, 64
        %v5321 = vpop.permute.xlu0 %5320
        %5322 = vrot.lane.b32.xlu0 %v4672, 64
        %v5323 = vpop.permute.xlu0 %5322
        %5324 = vrot.lane.b32.xlu0 %v4673, 64
        %v5325 = vpop.permute.xlu0 %5324
        %5326 = vrot.lane.b32.xlu0 %v4674, 64
        %v5327 = vpop.permute.xlu0 %5326
        %5328 = vrot.lane.b32.xlu0 %v4675, 64
        %v5329 = vpop.permute.xlu0 %5328
        %5330 = vrot.lane.b32.xlu0 %v4676, 64
        %v5331 = vpop.permute.xlu0 %5330
        %5332 = vrot.lane.b32.xlu0 %v4677, 64
        %v5333 = vpop.permute.xlu0 %5332
        %5334 = vrot.lane.b32.xlu0 %v4678, 64
        %v5335 = vpop.permute.xlu0 %5334
        %5336 = vrot.lane.b32.xlu0 %v4679, 64
        %v5337 = vpop.permute.xlu0 %5336
        %5338 = vrot.lane.b32.xlu0 %v4680, 64
        %v5339 = vpop.permute.xlu0 %5338
        %5340 = vrot.lane.b32.xlu0 %v4681, 64
        %v5341 = vpop.permute.xlu0 %5340
        %v5342 = vsel %vm1089, %v5319, %v5321
        %v5343 = vsel %vm1089, %v5321, %v5323
        %v5344 = vsel %vm1089, %v5325, %v5327
        %v5345 = vsel %vm1089, %v5327, %v5329
        %v5346 = vsel %vm1089, %v5331, %v5333
        %v5347 = vsel %vm1089, %v5333, %v5335
        %v5348 = vsel %vm1089, %v5337, %v5339
        %v5349 = vsel %vm1089, %v5339, %v5341
        %v5359 = vsel %vm530, %v5302, 0
        %v5362 = vsel %vm530, %v5303, 0
        %v5365 = vsel %vm530, %v5304, 0
        %v5368 = vsel %vm530, %v5305, 0
        %5370 = vmatpush.msra.mxu0 0.0
        %5371 = vmatpush.msra.mxu0 0.0
        %5372 = vmatpush.msra.mxu0 0.0
        %5373 = vmatpush.msra.mxu0 0.0
        %5374 = vmatpush.msra.mxu0 0.0
        %5375 = vmatpush.msra.mxu0 0.0
        %5376 = vmatpush.msra.mxu0 0.0
        %5377 = vmatpush.msra.mxu0 0.0
        %5378 = vmatpush.msra.mxu0 0.0
        %5379 = vmatpush.msra.mxu0 0.0
        %5380 = vmatpush.msra.mxu0 0.0
        %5381 = vmatpush.msra.mxu0 0.0
        %5382 = vmatpush.msra.mxu0 %v5348
        %5383 = vmatpush.msra.mxu0 %v5346
        %5384 = vmatpush.msra.mxu0 %v5344
        %5385 = vmatpush.msra.mxu0 %v5342
        %5386 = vmatmul.f32.gmra.mxu0 %v5359
        %v5387 = vpop.f32.mrf.mxu0
        %v5388 = vadd.f32 0.0, %v5387
        %5389 = vmatmul.f32.gmra.mxu0 %v5362
        %v5390 = vpop.f32.mrf.mxu0
        %v5391 = vadd.f32 0.0, %v5390
        %5392 = vmatmul.f32.gmra.mxu0 %v5365
        %v5393 = vpop.f32.mrf.mxu0
        %v5394 = vadd.f32 0.0, %v5393
        %5395 = vmatmul.f32.gmra.mxu0 %v5368
        %v5396 = vpop.f32.mrf.mxu0
        %v5397 = vadd.f32 0.0, %v5396
        %5398 = vdwg.mxu0
        %5399 = vmatpush.msra.mxu0 0.0
        %5400 = vmatpush.msra.mxu0 0.0
        %5401 = vmatpush.msra.mxu0 0.0
        %5402 = vmatpush.msra.mxu0 0.0
        %5403 = vmatpush.msra.mxu0 0.0
        %5404 = vmatpush.msra.mxu0 0.0
        %5405 = vmatpush.msra.mxu0 0.0
        %5406 = vmatpush.msra.mxu0 0.0
        %5407 = vmatpush.msra.mxu0 0.0
        %5408 = vmatpush.msra.mxu0 0.0
        %5409 = vmatpush.msra.mxu0 0.0
        %5410 = vmatpush.msra.mxu0 0.0
        %5411 = vmatpush.msra.mxu0 %v5349
        %5412 = vmatpush.msra.mxu0 %v5347
        %5413 = vmatpush.msra.mxu0 %v5345
        %5414 = vmatpush.msra.mxu0 %v5343
        %5415 = vmatmul.f32.gmra.mxu0 %v5359
        %v5416 = vpop.f32.mrf.mxu0
        %v5417 = vadd.f32 0.0, %v5416
        %5418 = vmatmul.f32.gmra.mxu0 %v5362
        %v5419 = vpop.f32.mrf.mxu0
        %v5420 = vadd.f32 0.0, %v5419
        %5421 = vmatmul.f32.gmra.mxu0 %v5365
        %v5422 = vpop.f32.mrf.mxu0
        %v5423 = vadd.f32 0.0, %v5422
        %5424 = vmatmul.f32.gmra.mxu0 %v5368
        %v5425 = vpop.f32.mrf.mxu0
        %v5426 = vadd.f32 0.0, %v5425
        %5427 = vdwg.mxu0
        %v5428 = vadd.f32 %v5293, %v5388
        %v5429 = vadd.f32 %v5294, %v5417
        %v5430 = vadd.f32 %v5295, %v5391
        %v5431 = vadd.f32 %v5296, %v5420
        %v5432 = vadd.f32 %v5297, %v5394
        %v5433 = vadd.f32 %v5298, %v5423
        %v5434 = vadd.f32 %v5299, %v5397
        %v5435 = vadd.f32 %v5300, %v5426
        %v5436 = vld [vmem:[%s1184] ss:$8 sm:$0x3]
        %v5438 = vperm.slane %v5436, 0
        %v5439 = vperm.slane %v5436, 1
        %5440 = vrot.lane.b32.xlu0 %v5438, 65
        %v5441 = vpop.permute.xlu0 %5440
        %5442 = vrot.lane.b32.xlu0 %v5439, 65
        %v5443 = vpop.permute.xlu0 %5442
        %v5444 = vsel %vm953, %v5441, %v5443
        %v5448 = vmul.f32 %v4670, %v5441
        %v5449 = vmul.f32 %v4671, %v5444
        %v5450 = vmul.f32 %v4672, %v5443
        %v5451 = vmul.f32 %v4673, %v5441
        %v5452 = vmul.f32 %v4674, %v5444
        %v5453 = vmul.f32 %v4675, %v5443
        %v5454 = vmul.f32 %v4676, %v5441
        %v5455 = vmul.f32 %v4677, %v5444
        %v5456 = vmul.f32 %v4678, %v5443
        %v5457 = vmul.f32 %v4679, %v5441
        %v5458 = vmul.f32 %v4680, %v5444
        %v5459 = vmul.f32 %v4681, %v5443
        %s5460 = scalar_lea.vmem [#allocation6], 160
        %v5461 = vld [vmem:[%s5460] sm:$0xff]
        %v5462 = vld [vmem:[%s5460 + $0x8] sm:$0xff]
        %v5463 = vld [vmem:[%s5460 + $0x10] sm:$0xff]
        %v5464 = vld [vmem:[%s5460 + $0x18] sm:$0xff]
        %5477 = vrot.lane.b32.xlu0 %v5448, 63
        %v5478 = vpop.permute.xlu0 %5477
        %5479 = vrot.lane.b32.xlu0 %v5449, 63
        %v5480 = vpop.permute.xlu0 %5479
        %5481 = vrot.lane.b32.xlu0 %v5450, 63
        %v5482 = vpop.permute.xlu0 %5481
        %5483 = vrot.lane.b32.xlu0 %v5451, 63
        %v5484 = vpop.permute.xlu0 %5483
        %5485 = vrot.lane.b32.xlu0 %v5452, 63
        %v5486 = vpop.permute.xlu0 %5485
        %5487 = vrot.lane.b32.xlu0 %v5453, 63
        %v5488 = vpop.permute.xlu0 %5487
        %5489 = vrot.lane.b32.xlu0 %v5454, 63
        %v5490 = vpop.permute.xlu0 %5489
        %5491 = vrot.lane.b32.xlu0 %v5455, 63
        %v5492 = vpop.permute.xlu0 %5491
        %5493 = vrot.lane.b32.xlu0 %v5456, 63
        %v5494 = vpop.permute.xlu0 %5493
        %5495 = vrot.lane.b32.xlu0 %v5457, 63
        %v5496 = vpop.permute.xlu0 %5495
        %5497 = vrot.lane.b32.xlu0 %v5458, 63
        %v5498 = vpop.permute.xlu0 %5497
        %5499 = vrot.lane.b32.xlu0 %v5459, 63
        %v5500 = vpop.permute.xlu0 %5499
        %v5501 = vsel %vm895, %v5478, %v5480
        %v5502 = vsel %vm895, %v5480, %v5482
        %v5503 = vsel %vm895, %v5484, %v5486
        %v5504 = vsel %vm895, %v5486, %v5488
        %v5505 = vsel %vm895, %v5490, %v5492
        %v5506 = vsel %vm895, %v5492, %v5494
        %v5507 = vsel %vm895, %v5496, %v5498
        %v5508 = vsel %vm895, %v5498, %v5500
        %v5518 = vsel %vm530, %v5461, 0
        %v5521 = vsel %vm530, %v5462, 0
        %v5524 = vsel %vm530, %v5463, 0
        %v5527 = vsel %vm530, %v5464, 0
        %5529 = vmatpush.msra.mxu0 0.0
        %5530 = vmatpush.msra.mxu0 0.0
        %5531 = vmatpush.msra.mxu0 0.0
        %5532 = vmatpush.msra.mxu0 0.0
        %5533 = vmatpush.msra.mxu0 0.0
        %5534 = vmatpush.msra.mxu0 0.0
        %5535 = vmatpush.msra.mxu0 0.0
        %5536 = vmatpush.msra.mxu0 0.0
        %5537 = vmatpush.msra.mxu0 0.0
        %5538 = vmatpush.msra.mxu0 0.0
        %5539 = vmatpush.msra.mxu0 0.0
        %5540 = vmatpush.msra.mxu0 0.0
        %5541 = vmatpush.msra.mxu0 %v5507
        %5542 = vmatpush.msra.mxu0 %v5505
        %5543 = vmatpush.msra.mxu0 %v5503
        %5544 = vmatpush.msra.mxu0 %v5501
        %5545 = vmatmul.f32.gmra.mxu0 %v5518
        %v5546 = vpop.f32.mrf.mxu0
        %v5547 = vadd.f32 0.0, %v5546
        %5548 = vmatmul.f32.gmra.mxu0 %v5521
        %v5549 = vpop.f32.mrf.mxu0
        %v5550 = vadd.f32 0.0, %v5549
        %5551 = vmatmul.f32.gmra.mxu0 %v5524
        %v5552 = vpop.f32.mrf.mxu0
        %v5553 = vadd.f32 0.0, %v5552
        %5554 = vmatmul.f32.gmra.mxu0 %v5527
        %v5555 = vpop.f32.mrf.mxu0
        %v5556 = vadd.f32 0.0, %v5555
        %5557 = vdwg.mxu0
        %5558 = vmatpush.msra.mxu0 0.0
        %5559 = vmatpush.msra.mxu0 0.0
        %5560 = vmatpush.msra.mxu0 0.0
        %5561 = vmatpush.msra.mxu0 0.0
        %5562 = vmatpush.msra.mxu0 0.0
        %5563 = vmatpush.msra.mxu0 0.0
        %5564 = vmatpush.msra.mxu0 0.0
        %5565 = vmatpush.msra.mxu0 0.0
        %5566 = vmatpush.msra.mxu0 0.0
        %5567 = vmatpush.msra.mxu0 0.0
        %5568 = vmatpush.msra.mxu0 0.0
        %5569 = vmatpush.msra.mxu0 0.0
        %5570 = vmatpush.msra.mxu0 %v5508
        %5571 = vmatpush.msra.mxu0 %v5506
        %5572 = vmatpush.msra.mxu0 %v5504
        %5573 = vmatpush.msra.mxu0 %v5502
        %5574 = vmatmul.f32.gmra.mxu0 %v5518
        %v5575 = vpop.f32.mrf.mxu0
        %v5576 = vadd.f32 0.0, %v5575
        %5577 = vmatmul.f32.gmra.mxu0 %v5521
        %v5578 = vpop.f32.mrf.mxu0
        %v5579 = vadd.f32 0.0, %v5578
        %5580 = vmatmul.f32.gmra.mxu0 %v5524
        %v5581 = vpop.f32.mrf.mxu0
        %v5582 = vadd.f32 0.0, %v5581
        %5583 = vmatmul.f32.gmra.mxu0 %v5527
        %v5584 = vpop.f32.mrf.mxu0
        %v5585 = vadd.f32 0.0, %v5584
        %5586 = vdwg.mxu0
        %v5587 = vadd.f32 %v5428, %v5547
        %v5588 = vadd.f32 %v5429, %v5576
        %v5589 = vadd.f32 %v5430, %v5550
        %v5590 = vadd.f32 %v5431, %v5579
        %v5591 = vadd.f32 %v5432, %v5553
        %v5592 = vadd.f32 %v5433, %v5582
        %v5593 = vadd.f32 %v5434, %v5556
        %v5594 = vadd.f32 %v5435, %v5585
        %v5595 = vld [vmem:[%s1344] ss:$8 sm:$0x3]
        %v5597 = vperm.slane %v5595, 0
        %v5598 = vperm.slane %v5595, 1
        %5599 = vrot.lane.b32.xlu0 %v5597, 71
        %v5600 = vpop.permute.xlu0 %5599
        %5601 = vrot.lane.b32.xlu0 %v5598, 71
        %v5602 = vpop.permute.xlu0 %5601
        %v5603 = vsel %vm791, %v5600, %v5602
        %v5607 = vmul.f32 %v4670, %v5600
        %v5608 = vmul.f32 %v4671, %v5603
        %v5609 = vmul.f32 %v4672, %v5602
        %v5610 = vmul.f32 %v4673, %v5600
        %v5611 = vmul.f32 %v4674, %v5603
        %v5612 = vmul.f32 %v4675, %v5602
        %v5613 = vmul.f32 %v4676, %v5600
        %v5614 = vmul.f32 %v4677, %v5603
        %v5615 = vmul.f32 %v4678, %v5602
        %v5616 = vmul.f32 %v4679, %v5600
        %v5617 = vmul.f32 %v4680, %v5603
        %v5618 = vmul.f32 %v4681, %v5602
        %s5619 = scalar_lea.vmem [#allocation6], 192
        %v5620 = vld [vmem:[%s5619] sm:$0xff]
        %v5621 = vld [vmem:[%s5619 + $0x8] sm:$0xff]
        %v5622 = vld [vmem:[%s5619 + $0x10] sm:$0xff]
        %v5623 = vld [vmem:[%s5619 + $0x18] sm:$0xff]
        %5636 = vrot.lane.b32.xlu0 %v5607, 57
        %v5637 = vpop.permute.xlu0 %5636
        %5638 = vrot.lane.b32.xlu0 %v5608, 57
        %v5639 = vpop.permute.xlu0 %5638
        %5640 = vrot.lane.b32.xlu0 %v5609, 57
        %v5641 = vpop.permute.xlu0 %5640
        %5642 = vrot.lane.b32.xlu0 %v5610, 57
        %v5643 = vpop.permute.xlu0 %5642
        %5644 = vrot.lane.b32.xlu0 %v5611, 57
        %v5645 = vpop.permute.xlu0 %5644
        %5646 = vrot.lane.b32.xlu0 %v5612, 57
        %v5647 = vpop.permute.xlu0 %5646
        %5648 = vrot.lane.b32.xlu0 %v5613, 57
        %v5649 = vpop.permute.xlu0 %5648
        %5650 = vrot.lane.b32.xlu0 %v5614, 57
        %v5651 = vpop.permute.xlu0 %5650
        %5652 = vrot.lane.b32.xlu0 %v5615, 57
        %v5653 = vpop.permute.xlu0 %5652
        %5654 = vrot.lane.b32.xlu0 %v5616, 57
        %v5655 = vpop.permute.xlu0 %5654
        %5656 = vrot.lane.b32.xlu0 %v5617, 57
        %v5657 = vpop.permute.xlu0 %5656
        %5658 = vrot.lane.b32.xlu0 %v5618, 57
        %v5659 = vpop.permute.xlu0 %5658
        %v5660 = vsel %vm733, %v5637, %v5639
        %v5661 = vsel %vm733, %v5639, %v5641
        %v5662 = vsel %vm733, %v5643, %v5645
        %v5663 = vsel %vm733, %v5645, %v5647
        %v5664 = vsel %vm733, %v5649, %v5651
        %v5665 = vsel %vm733, %v5651, %v5653
        %v5666 = vsel %vm733, %v5655, %v5657
        %v5667 = vsel %vm733, %v5657, %v5659
        %v5677 = vsel %vm530, %v5620, 0
        %v5680 = vsel %vm530, %v5621, 0
        %v5683 = vsel %vm530, %v5622, 0
        %v5686 = vsel %vm530, %v5623, 0
        %5688 = vmatpush.msra.mxu0 0.0
        %5689 = vmatpush.msra.mxu0 0.0
        %5690 = vmatpush.msra.mxu0 0.0
        %5691 = vmatpush.msra.mxu0 0.0
        %5692 = vmatpush.msra.mxu0 0.0
        %5693 = vmatpush.msra.mxu0 0.0
        %5694 = vmatpush.msra.mxu0 0.0
        %5695 = vmatpush.msra.mxu0 0.0
        %5696 = vmatpush.msra.mxu0 0.0
        %5697 = vmatpush.msra.mxu0 0.0
        %5698 = vmatpush.msra.mxu0 0.0
        %5699 = vmatpush.msra.mxu0 0.0
        %5700 = vmatpush.msra.mxu0 %v5666
        %5701 = vmatpush.msra.mxu0 %v5664
        %5702 = vmatpush.msra.mxu0 %v5662
        %5703 = vmatpush.msra.mxu0 %v5660
        %5704 = vmatmul.f32.gmra.mxu0 %v5677
        %v5705 = vpop.f32.mrf.mxu0
        %v5706 = vadd.f32 0.0, %v5705
        %5707 = vmatmul.f32.gmra.mxu0 %v5680
        %v5708 = vpop.f32.mrf.mxu0
        %v5709 = vadd.f32 0.0, %v5708
        %5710 = vmatmul.f32.gmra.mxu0 %v5683
        %v5711 = vpop.f32.mrf.mxu0
        %v5712 = vadd.f32 0.0, %v5711
        %5713 = vmatmul.f32.gmra.mxu0 %v5686
        %v5714 = vpop.f32.mrf.mxu0
        %v5715 = vadd.f32 0.0, %v5714
        %5716 = vdwg.mxu0
        %5717 = vmatpush.msra.mxu0 0.0
        %5718 = vmatpush.msra.mxu0 0.0
        %5719 = vmatpush.msra.mxu0 0.0
        %5720 = vmatpush.msra.mxu0 0.0
        %5721 = vmatpush.msra.mxu0 0.0
        %5722 = vmatpush.msra.mxu0 0.0
        %5723 = vmatpush.msra.mxu0 0.0
        %5724 = vmatpush.msra.mxu0 0.0
        %5725 = vmatpush.msra.mxu0 0.0
        %5726 = vmatpush.msra.mxu0 0.0
        %5727 = vmatpush.msra.mxu0 0.0
        %5728 = vmatpush.msra.mxu0 0.0
        %5729 = vmatpush.msra.mxu0 %v5667
        %5730 = vmatpush.msra.mxu0 %v5665
        %5731 = vmatpush.msra.mxu0 %v5663
        %5732 = vmatpush.msra.mxu0 %v5661
        %5733 = vmatmul.f32.gmra.mxu0 %v5677
        %v5734 = vpop.f32.mrf.mxu0
        %v5735 = vadd.f32 0.0, %v5734
        %5736 = vmatmul.f32.gmra.mxu0 %v5680
        %v5737 = vpop.f32.mrf.mxu0
        %v5738 = vadd.f32 0.0, %v5737
        %5739 = vmatmul.f32.gmra.mxu0 %v5683
        %v5740 = vpop.f32.mrf.mxu0
        %v5741 = vadd.f32 0.0, %v5740
        %5742 = vmatmul.f32.gmra.mxu0 %v5686
        %v5743 = vpop.f32.mrf.mxu0
        %v5744 = vadd.f32 0.0, %v5743
        %5745 = vdwg.mxu0
        %v5746 = vadd.f32 %v5587, %v5706
        %v5747 = vadd.f32 %v5588, %v5735
        %v5748 = vadd.f32 %v5589, %v5709
        %v5749 = vadd.f32 %v5590, %v5738
        %v5750 = vadd.f32 %v5591, %v5712
        %v5751 = vadd.f32 %v5592, %v5741
        %v5752 = vadd.f32 %v5593, %v5715
        %v5753 = vadd.f32 %v5594, %v5744
        %v5754 = vld [vmem:[%s1504] ss:$8 sm:$0x3]
        %v5756 = vperm.slane %v5754, 0
        %v5757 = vperm.slane %v5754, 1
        %5758 = vrot.lane.b32.xlu0 %v5756, 72
        %v5759 = vpop.permute.xlu0 %5758
        %5760 = vrot.lane.b32.xlu0 %v5757, 72
        %v5761 = vpop.permute.xlu0 %5760
        %v5762 = vsel %vm513, %v5759, %v5761
        %v5766 = vmul.f32 %v4670, %v5759
        %v5767 = vmul.f32 %v4671, %v5762
        %v5768 = vmul.f32 %v4672, %v5761
        %v5769 = vmul.f32 %v4673, %v5759
        %v5770 = vmul.f32 %v4674, %v5762
        %v5771 = vmul.f32 %v4675, %v5761
        %v5772 = vmul.f32 %v4676, %v5759
        %v5773 = vmul.f32 %v4677, %v5762
        %v5774 = vmul.f32 %v4678, %v5761
        %v5775 = vmul.f32 %v4679, %v5759
        %v5776 = vmul.f32 %v4680, %v5762
        %v5777 = vmul.f32 %v4681, %v5761
        %s5778 = scalar_lea.vmem [#allocation6], 224
        %v5779 = vld [vmem:[%s5778] sm:$0xff]
        %v5780 = vld [vmem:[%s5778 + $0x8] sm:$0xff]
        %v5781 = vld [vmem:[%s5778 + $0x10] sm:$0xff]
        %v5782 = vld [vmem:[%s5778 + $0x18] sm:$0xff]
        %5795 = vrot.lane.b32.xlu0 %v5766, 56
        %v5796 = vpop.permute.xlu0 %5795
        %5797 = vrot.lane.b32.xlu0 %v5767, 56
        %v5798 = vpop.permute.xlu0 %5797
        %5799 = vrot.lane.b32.xlu0 %v5768, 56
        %v5800 = vpop.permute.xlu0 %5799
        %5801 = vrot.lane.b32.xlu0 %v5769, 56
        %v5802 = vpop.permute.xlu0 %5801
        %5803 = vrot.lane.b32.xlu0 %v5770, 56
        %v5804 = vpop.permute.xlu0 %5803
        %5805 = vrot.lane.b32.xlu0 %v5771, 56
        %v5806 = vpop.permute.xlu0 %5805
        %5807 = vrot.lane.b32.xlu0 %v5772, 56
        %v5808 = vpop.permute.xlu0 %5807
        %5809 = vrot.lane.b32.xlu0 %v5773, 56
        %v5810 = vpop.permute.xlu0 %5809
        %5811 = vrot.lane.b32.xlu0 %v5774, 56
        %v5812 = vpop.permute.xlu0 %5811
        %5813 = vrot.lane.b32.xlu0 %v5775, 56
        %v5814 = vpop.permute.xlu0 %5813
        %5815 = vrot.lane.b32.xlu0 %v5776, 56
        %v5816 = vpop.permute.xlu0 %5815
        %5817 = vrot.lane.b32.xlu0 %v5777, 56
        %v5818 = vpop.permute.xlu0 %5817
        %v5819 = vsel %vm455, %v5796, %v5798
        %v5820 = vsel %vm455, %v5798, %v5800
        %v5821 = vsel %vm455, %v5802, %v5804
        %v5822 = vsel %vm455, %v5804, %v5806
        %v5823 = vsel %vm455, %v5808, %v5810
        %v5824 = vsel %vm455, %v5810, %v5812
        %v5825 = vsel %vm455, %v5814, %v5816
        %v5826 = vsel %vm455, %v5816, %v5818
        %v5836 = vsel %vm530, %v5779, 0
        %v5839 = vsel %vm530, %v5780, 0
        %v5842 = vsel %vm530, %v5781, 0
        %v5845 = vsel %vm530, %v5782, 0
        %5847 = vmatpush.msra.mxu0 0.0
        %5848 = vmatpush.msra.mxu0 0.0
        %5849 = vmatpush.msra.mxu0 0.0
        %5850 = vmatpush.msra.mxu0 0.0
        %5851 = vmatpush.msra.mxu0 0.0
        %5852 = vmatpush.msra.mxu0 0.0
        %5853 = vmatpush.msra.mxu0 0.0
        %5854 = vmatpush.msra.mxu0 0.0
        %5855 = vmatpush.msra.mxu0 0.0
        %5856 = vmatpush.msra.mxu0 0.0
        %5857 = vmatpush.msra.mxu0 0.0
        %5858 = vmatpush.msra.mxu0 0.0
        %5859 = vmatpush.msra.mxu0 %v5825
        %5860 = vmatpush.msra.mxu0 %v5823
        %5861 = vmatpush.msra.mxu0 %v5821
        %5862 = vmatpush.msra.mxu0 %v5819
        %5863 = vmatmul.f32.gmra.mxu0 %v5836
        %v5864 = vpop.f32.mrf.mxu0
        %v5865 = vadd.f32 0.0, %v5864
        %5866 = vmatmul.f32.gmra.mxu0 %v5839
        %v5867 = vpop.f32.mrf.mxu0
        %v5868 = vadd.f32 0.0, %v5867
        %5869 = vmatmul.f32.gmra.mxu0 %v5842
        %v5870 = vpop.f32.mrf.mxu0
        %v5871 = vadd.f32 0.0, %v5870
        %5872 = vmatmul.f32.gmra.mxu0 %v5845
        %v5873 = vpop.f32.mrf.mxu0
        %v5874 = vadd.f32 0.0, %v5873
        %5875 = vdwg.mxu0
        %5876 = vmatpush.msra.mxu0 0.0
        %5877 = vmatpush.msra.mxu0 0.0
        %5878 = vmatpush.msra.mxu0 0.0
        %5879 = vmatpush.msra.mxu0 0.0
        %5880 = vmatpush.msra.mxu0 0.0
        %5881 = vmatpush.msra.mxu0 0.0
        %5882 = vmatpush.msra.mxu0 0.0
        %5883 = vmatpush.msra.mxu0 0.0
        %5884 = vmatpush.msra.mxu0 0.0
        %5885 = vmatpush.msra.mxu0 0.0
        %5886 = vmatpush.msra.mxu0 0.0
        %5887 = vmatpush.msra.mxu0 0.0
        %5888 = vmatpush.msra.mxu0 %v5826
        %5889 = vmatpush.msra.mxu0 %v5824
        %5890 = vmatpush.msra.mxu0 %v5822
        %5891 = vmatpush.msra.mxu0 %v5820
        %5892 = vmatmul.f32.gmra.mxu0 %v5836
        %v5893 = vpop.f32.mrf.mxu0
        %v5894 = vadd.f32 0.0, %v5893
        %5895 = vmatmul.f32.gmra.mxu0 %v5839
        %v5896 = vpop.f32.mrf.mxu0
        %v5897 = vadd.f32 0.0, %v5896
        %5898 = vmatmul.f32.gmra.mxu0 %v5842
        %v5899 = vpop.f32.mrf.mxu0
        %v5900 = vadd.f32 0.0, %v5899
        %5901 = vmatmul.f32.gmra.mxu0 %v5845
        %v5902 = vpop.f32.mrf.mxu0
        %v5903 = vadd.f32 0.0, %v5902
        %5904 = vdwg.mxu0
        %v5905 = vadd.f32 %v5746, %v5865
        %v5906 = vadd.f32 %v5747, %v5894
        %v5907 = vadd.f32 %v5748, %v5868
        %v5908 = vadd.f32 %v5749, %v5897
        %v5909 = vadd.f32 %v5750, %v5871
        %v5910 = vadd.f32 %v5751, %v5900
        %v5911 = vadd.f32 %v5752, %v5874
        %v5912 = vadd.f32 %v5753, %v5903
        %v5913 = vld [vmem:[%s1664] ss:$8 sm:$0x3]
        %v5915 = vperm.slane %v5913, 0
        %v5916 = vperm.slane %v5913, 1
        %5917 = vrot.lane.b32.xlu0 %v5915, 73
        %v5918 = vpop.permute.xlu0 %5917
        %5919 = vrot.lane.b32.xlu0 %v5916, 73
        %v5920 = vpop.permute.xlu0 %5919
        %v5921 = vsel %vm637, %v5918, %v5920
        %v5925 = vmul.f32 %v4670, %v5918
        %v5926 = vmul.f32 %v4671, %v5921
        %v5927 = vmul.f32 %v4672, %v5920
        %v5928 = vmul.f32 %v4673, %v5918
        %v5929 = vmul.f32 %v4674, %v5921
        %v5930 = vmul.f32 %v4675, %v5920
        %v5931 = vmul.f32 %v4676, %v5918
        %v5932 = vmul.f32 %v4677, %v5921
        %v5933 = vmul.f32 %v4678, %v5920
        %v5934 = vmul.f32 %v4679, %v5918
        %v5935 = vmul.f32 %v4680, %v5921
        %v5936 = vmul.f32 %v4681, %v5920
        %s5937 = scalar_lea.vmem [#allocation6], 256
        %v5938 = vld [vmem:[%s5937] sm:$0xff]
        %v5939 = vld [vmem:[%s5937 + $0x8] sm:$0xff]
        %v5940 = vld [vmem:[%s5937 + $0x10] sm:$0xff]
        %v5941 = vld [vmem:[%s5937 + $0x18] sm:$0xff]
        %5954 = vrot.lane.b32.xlu0 %v5925, 55
        %v5955 = vpop.permute.xlu0 %5954
        %5956 = vrot.lane.b32.xlu0 %v5926, 55
        %v5957 = vpop.permute.xlu0 %5956
        %5958 = vrot.lane.b32.xlu0 %v5927, 55
        %v5959 = vpop.permute.xlu0 %5958
        %5960 = vrot.lane.b32.xlu0 %v5928, 55
        %v5961 = vpop.permute.xlu0 %5960
        %5962 = vrot.lane.b32.xlu0 %v5929, 55
        %v5963 = vpop.permute.xlu0 %5962
        %5964 = vrot.lane.b32.xlu0 %v5930, 55
        %v5965 = vpop.permute.xlu0 %5964
        %5966 = vrot.lane.b32.xlu0 %v5931, 55
        %v5967 = vpop.permute.xlu0 %5966
        %5968 = vrot.lane.b32.xlu0 %v5932, 55
        %v5969 = vpop.permute.xlu0 %5968
        %5970 = vrot.lane.b32.xlu0 %v5933, 55
        %v5971 = vpop.permute.xlu0 %5970
        %5972 = vrot.lane.b32.xlu0 %v5934, 55
        %v5973 = vpop.permute.xlu0 %5972
        %5974 = vrot.lane.b32.xlu0 %v5935, 55
        %v5975 = vpop.permute.xlu0 %5974
        %5976 = vrot.lane.b32.xlu0 %v5936, 55
        %v5977 = vpop.permute.xlu0 %5976
        %v5978 = vsel %vm425, %v5955, %v5957
        %v5979 = vsel %vm425, %v5957, %v5959
        %v5980 = vsel %vm425, %v5961, %v5963
        %v5981 = vsel %vm425, %v5963, %v5965
        %v5982 = vsel %vm425, %v5967, %v5969
        %v5983 = vsel %vm425, %v5969, %v5971
        %v5984 = vsel %vm425, %v5973, %v5975
        %v5985 = vsel %vm425, %v5975, %v5977
        %v5995 = vsel %vm530, %v5938, 0
        %v5998 = vsel %vm530, %v5939, 0
        %v6001 = vsel %vm530, %v5940, 0
        %v6004 = vsel %vm530, %v5941, 0
        %6006 = vmatpush.msra.mxu0 0.0
        %6007 = vmatpush.msra.mxu0 0.0
        %6008 = vmatpush.msra.mxu0 0.0
        %6009 = vmatpush.msra.mxu0 0.0
        %6010 = vmatpush.msra.mxu0 0.0
        %6011 = vmatpush.msra.mxu0 0.0
        %6012 = vmatpush.msra.mxu0 0.0
        %6013 = vmatpush.msra.mxu0 0.0
        %6014 = vmatpush.msra.mxu0 0.0
        %6015 = vmatpush.msra.mxu0 0.0
        %6016 = vmatpush.msra.mxu0 0.0
        %6017 = vmatpush.msra.mxu0 0.0
        %6018 = vmatpush.msra.mxu0 %v5984
        %6019 = vmatpush.msra.mxu0 %v5982
        %6020 = vmatpush.msra.mxu0 %v5980
        %6021 = vmatpush.msra.mxu0 %v5978
        %6022 = vmatmul.f32.gmra.mxu0 %v5995
        %v6023 = vpop.f32.mrf.mxu0
        %v6024 = vadd.f32 0.0, %v6023
        %6025 = vmatmul.f32.gmra.mxu0 %v5998
        %v6026 = vpop.f32.mrf.mxu0
        %v6027 = vadd.f32 0.0, %v6026
        %6028 = vmatmul.f32.gmra.mxu0 %v6001
        %v6029 = vpop.f32.mrf.mxu0
        %v6030 = vadd.f32 0.0, %v6029
        %6031 = vmatmul.f32.gmra.mxu0 %v6004
        %v6032 = vpop.f32.mrf.mxu0
        %v6033 = vadd.f32 0.0, %v6032
        %6034 = vdwg.mxu0
        %6035 = vmatpush.msra.mxu0 0.0
        %6036 = vmatpush.msra.mxu0 0.0
        %6037 = vmatpush.msra.mxu0 0.0
        %6038 = vmatpush.msra.mxu0 0.0
        %6039 = vmatpush.msra.mxu0 0.0
        %6040 = vmatpush.msra.mxu0 0.0
        %6041 = vmatpush.msra.mxu0 0.0
        %6042 = vmatpush.msra.mxu0 0.0
        %6043 = vmatpush.msra.mxu0 0.0
        %6044 = vmatpush.msra.mxu0 0.0
        %6045 = vmatpush.msra.mxu0 0.0
        %6046 = vmatpush.msra.mxu0 0.0
        %6047 = vmatpush.msra.mxu0 %v5985
        %6048 = vmatpush.msra.mxu0 %v5983
        %6049 = vmatpush.msra.mxu0 %v5981
        %6050 = vmatpush.msra.mxu0 %v5979
        %6051 = vmatmul.f32.gmra.mxu0 %v5995
        %v6052 = vpop.f32.mrf.mxu0
        %v6053 = vadd.f32 0.0, %v6052
        %6054 = vmatmul.f32.gmra.mxu0 %v5998
        %v6055 = vpop.f32.mrf.mxu0
        %v6056 = vadd.f32 0.0, %v6055
        %6057 = vmatmul.f32.gmra.mxu0 %v6001
        %v6058 = vpop.f32.mrf.mxu0
        %v6059 = vadd.f32 0.0, %v6058
        %6060 = vmatmul.f32.gmra.mxu0 %v6004
        %v6061 = vpop.f32.mrf.mxu0
        %v6062 = vadd.f32 0.0, %v6061
        %6063 = vdwg.mxu0
        %v6064 = vadd.f32 %v5905, %v6024
        %v6065 = vadd.f32 %v5906, %v6053
        %v6066 = vadd.f32 %v5907, %v6027
        %v6067 = vadd.f32 %v5908, %v6056
        %v6068 = vadd.f32 %v5909, %v6030
        %v6069 = vadd.f32 %v5910, %v6059
        %v6070 = vadd.f32 %v5911, %v6033
        %v6071 = vadd.f32 %v5912, %v6062
        %v6072 = vld [vmem:[%s1824] ss:$8 sm:$0x3]
        %v6074 = vperm.slane %v6072, 0
        %v6075 = vperm.slane %v6072, 1
        %6076 = vrot.lane.b32.xlu0 %v6074, 119
        %v6077 = vpop.permute.xlu0 %6076
        %6078 = vrot.lane.b32.xlu0 %v6075, 119
        %v6079 = vpop.permute.xlu0 %6078
        %v6080 = vsel %vm1833, %v6077, %v6079
        %v6084 = vmul.f32 %v4670, %v6077
        %v6085 = vmul.f32 %v4671, %v6080
        %v6086 = vmul.f32 %v4672, %v6079
        %v6087 = vmul.f32 %v4673, %v6077
        %v6088 = vmul.f32 %v4674, %v6080
        %v6089 = vmul.f32 %v4675, %v6079
        %v6090 = vmul.f32 %v4676, %v6077
        %v6091 = vmul.f32 %v4677, %v6080
        %v6092 = vmul.f32 %v4678, %v6079
        %v6093 = vmul.f32 %v4679, %v6077
        %v6094 = vmul.f32 %v4680, %v6080
        %v6095 = vmul.f32 %v4681, %v6079
        %s6096 = scalar_lea.vmem [#allocation6], 288
        %v6097 = vld [vmem:[%s6096] sm:$0xff]
        %v6098 = vld [vmem:[%s6096 + $0x8] sm:$0xff]
        %v6099 = vld [vmem:[%s6096 + $0x10] sm:$0xff]
        %v6100 = vld [vmem:[%s6096 + $0x18] sm:$0xff]
        %6113 = vrot.lane.b32.xlu0 %v6084, 9
        %v6114 = vpop.permute.xlu0 %6113
        %6115 = vrot.lane.b32.xlu0 %v6085, 9
        %v6116 = vpop.permute.xlu0 %6115
        %6117 = vrot.lane.b32.xlu0 %v6086, 9
        %v6118 = vpop.permute.xlu0 %6117
        %6119 = vrot.lane.b32.xlu0 %v6087, 9
        %v6120 = vpop.permute.xlu0 %6119
        %6121 = vrot.lane.b32.xlu0 %v6088, 9
        %v6122 = vpop.permute.xlu0 %6121
        %6123 = vrot.lane.b32.xlu0 %v6089, 9
        %v6124 = vpop.permute.xlu0 %6123
        %6125 = vrot.lane.b32.xlu0 %v6090, 9
        %v6126 = vpop.permute.xlu0 %6125
        %6127 = vrot.lane.b32.xlu0 %v6091, 9
        %v6128 = vpop.permute.xlu0 %6127
        %6129 = vrot.lane.b32.xlu0 %v6092, 9
        %v6130 = vpop.permute.xlu0 %6129
        %6131 = vrot.lane.b32.xlu0 %v6093, 9
        %v6132 = vpop.permute.xlu0 %6131
        %6133 = vrot.lane.b32.xlu0 %v6094, 9
        %v6134 = vpop.permute.xlu0 %6133
        %6135 = vrot.lane.b32.xlu0 %v6095, 9
        %v6136 = vpop.permute.xlu0 %6135
        %v6137 = vsel %vm1891, %v6114, %v6116
        %v6138 = vsel %vm1891, %v6116, %v6118
        %v6139 = vsel %vm1891, %v6120, %v6122
        %v6140 = vsel %vm1891, %v6122, %v6124
        %v6141 = vsel %vm1891, %v6126, %v6128
        %v6142 = vsel %vm1891, %v6128, %v6130
        %v6143 = vsel %vm1891, %v6132, %v6134
        %v6144 = vsel %vm1891, %v6134, %v6136
        %v6154 = vsel %vm530, %v6097, 0
        %v6157 = vsel %vm530, %v6098, 0
        %v6160 = vsel %vm530, %v6099, 0
        %v6163 = vsel %vm530, %v6100, 0
        %6165 = vmatpush.msra.mxu0 0.0
        %6166 = vmatpush.msra.mxu0 0.0
        %6167 = vmatpush.msra.mxu0 0.0
        %6168 = vmatpush.msra.mxu0 0.0
        %6169 = vmatpush.msra.mxu0 0.0
        %6170 = vmatpush.msra.mxu0 0.0
        %6171 = vmatpush.msra.mxu0 0.0
        %6172 = vmatpush.msra.mxu0 0.0
        %6173 = vmatpush.msra.mxu0 0.0
        %6174 = vmatpush.msra.mxu0 0.0
        %6175 = vmatpush.msra.mxu0 0.0
        %6176 = vmatpush.msra.mxu0 0.0
        %6177 = vmatpush.msra.mxu0 %v6143
        %6178 = vmatpush.msra.mxu0 %v6141
        %6179 = vmatpush.msra.mxu0 %v6139
        %6180 = vmatpush.msra.mxu0 %v6137
        %6181 = vmatmul.f32.gmra.mxu0 %v6154
        %v6182 = vpop.f32.mrf.mxu0
        %v6183 = vadd.f32 0.0, %v6182
        %6184 = vmatmul.f32.gmra.mxu0 %v6157
        %v6185 = vpop.f32.mrf.mxu0
        %v6186 = vadd.f32 0.0, %v6185
        %6187 = vmatmul.f32.gmra.mxu0 %v6160
        %v6188 = vpop.f32.mrf.mxu0
        %v6189 = vadd.f32 0.0, %v6188
        %6190 = vmatmul.f32.gmra.mxu0 %v6163
        %v6191 = vpop.f32.mrf.mxu0
        %v6192 = vadd.f32 0.0, %v6191
        %6193 = vdwg.mxu0
        %6194 = vmatpush.msra.mxu0 0.0
        %6195 = vmatpush.msra.mxu0 0.0
        %6196 = vmatpush.msra.mxu0 0.0
        %6197 = vmatpush.msra.mxu0 0.0
        %6198 = vmatpush.msra.mxu0 0.0
        %6199 = vmatpush.msra.mxu0 0.0
        %6200 = vmatpush.msra.mxu0 0.0
        %6201 = vmatpush.msra.mxu0 0.0
        %6202 = vmatpush.msra.mxu0 0.0
        %6203 = vmatpush.msra.mxu0 0.0
        %6204 = vmatpush.msra.mxu0 0.0
        %6205 = vmatpush.msra.mxu0 0.0
        %6206 = vmatpush.msra.mxu0 %v6144
        %6207 = vmatpush.msra.mxu0 %v6142
        %6208 = vmatpush.msra.mxu0 %v6140
        %6209 = vmatpush.msra.mxu0 %v6138
        %6210 = vmatmul.f32.gmra.mxu0 %v6154
        %v6211 = vpop.f32.mrf.mxu0
        %v6212 = vadd.f32 0.0, %v6211
        %6213 = vmatmul.f32.gmra.mxu0 %v6157
        %v6214 = vpop.f32.mrf.mxu0
        %v6215 = vadd.f32 0.0, %v6214
        %6216 = vmatmul.f32.gmra.mxu0 %v6160
        %v6217 = vpop.f32.mrf.mxu0
        %v6218 = vadd.f32 0.0, %v6217
        %6219 = vmatmul.f32.gmra.mxu0 %v6163
        %v6220 = vpop.f32.mrf.mxu0
        %v6221 = vadd.f32 0.0, %v6220
        %6222 = vdwg.mxu0
        %v6223 = vadd.f32 %v6064, %v6183
        %v6224 = vadd.f32 %v6065, %v6212
        %v6225 = vadd.f32 %v6066, %v6186
        %v6226 = vadd.f32 %v6067, %v6215
        %v6227 = vadd.f32 %v6068, %v6189
        %v6228 = vadd.f32 %v6069, %v6218
        %v6229 = vadd.f32 %v6070, %v6192
        %v6230 = vadd.f32 %v6071, %v6221
        %v6231 = vld [vmem:[%s1986] ss:$8 sm:$0x3]
        %v6233 = vperm.slane %v6231, 0
        %v6234 = vperm.slane %v6231, 1
        %6235 = vrot.lane.b32.xlu0 %v6233, 120
        %v6236 = vpop.permute.xlu0 %6235
        %6237 = vrot.lane.b32.xlu0 %v6234, 120
        %v6238 = vpop.permute.xlu0 %6237
        %v6239 = vsel %vm1995, %v6236, %v6238
        %v6243 = vmul.f32 %v4670, %v6236
        %v6244 = vmul.f32 %v4671, %v6239
        %v6245 = vmul.f32 %v4672, %v6238
        %v6246 = vmul.f32 %v4673, %v6236
        %v6247 = vmul.f32 %v4674, %v6239
        %v6248 = vmul.f32 %v4675, %v6238
        %v6249 = vmul.f32 %v4676, %v6236
        %v6250 = vmul.f32 %v4677, %v6239
        %v6251 = vmul.f32 %v4678, %v6238
        %v6252 = vmul.f32 %v4679, %v6236
        %v6253 = vmul.f32 %v4680, %v6239
        %v6254 = vmul.f32 %v4681, %v6238
        %s6255 = scalar_lea.vmem [#allocation6], 320
        %v6256 = vld [vmem:[%s6255] sm:$0xff]
        %v6257 = vld [vmem:[%s6255 + $0x8] sm:$0xff]
        %v6258 = vld [vmem:[%s6255 + $0x10] sm:$0xff]
        %v6259 = vld [vmem:[%s6255 + $0x18] sm:$0xff]
        %6272 = vrot.lane.b32.xlu0 %v6243, 8
        %v6273 = vpop.permute.xlu0 %6272
        %6274 = vrot.lane.b32.xlu0 %v6244, 8
        %v6275 = vpop.permute.xlu0 %6274
        %6276 = vrot.lane.b32.xlu0 %v6245, 8
        %v6277 = vpop.permute.xlu0 %6276
        %6278 = vrot.lane.b32.xlu0 %v6246, 8
        %v6279 = vpop.permute.xlu0 %6278
        %6280 = vrot.lane.b32.xlu0 %v6247, 8
        %v6281 = vpop.permute.xlu0 %6280
        %6282 = vrot.lane.b32.xlu0 %v6248, 8
        %v6283 = vpop.permute.xlu0 %6282
        %6284 = vrot.lane.b32.xlu0 %v6249, 8
        %v6285 = vpop.permute.xlu0 %6284
        %6286 = vrot.lane.b32.xlu0 %v6250, 8
        %v6287 = vpop.permute.xlu0 %6286
        %6288 = vrot.lane.b32.xlu0 %v6251, 8
        %v6289 = vpop.permute.xlu0 %6288
        %6290 = vrot.lane.b32.xlu0 %v6252, 8
        %v6291 = vpop.permute.xlu0 %6290
        %6292 = vrot.lane.b32.xlu0 %v6253, 8
        %v6293 = vpop.permute.xlu0 %6292
        %6294 = vrot.lane.b32.xlu0 %v6254, 8
        %v6295 = vpop.permute.xlu0 %6294
        %v6296 = vsel %vm2053, %v6273, %v6275
        %v6297 = vsel %vm2053, %v6275, %v6277
        %v6298 = vsel %vm2053, %v6279, %v6281
        %v6299 = vsel %vm2053, %v6281, %v6283
        %v6300 = vsel %vm2053, %v6285, %v6287
        %v6301 = vsel %vm2053, %v6287, %v6289
        %v6302 = vsel %vm2053, %v6291, %v6293
        %v6303 = vsel %vm2053, %v6293, %v6295
        %v6313 = vsel %vm530, %v6256, 0
        %v6316 = vsel %vm530, %v6257, 0
        %v6319 = vsel %vm530, %v6258, 0
        %v6322 = vsel %vm530, %v6259, 0
        %6324 = vmatpush.msra.mxu0 0.0
        %6325 = vmatpush.msra.mxu0 0.0
        %6326 = vmatpush.msra.mxu0 0.0
        %6327 = vmatpush.msra.mxu0 0.0
        %6328 = vmatpush.msra.mxu0 0.0
        %6329 = vmatpush.msra.mxu0 0.0
        %6330 = vmatpush.msra.mxu0 0.0
        %6331 = vmatpush.msra.mxu0 0.0
        %6332 = vmatpush.msra.mxu0 0.0
        %6333 = vmatpush.msra.mxu0 0.0
        %6334 = vmatpush.msra.mxu0 0.0
        %6335 = vmatpush.msra.mxu0 0.0
        %6336 = vmatpush.msra.mxu0 %v6302
        %6337 = vmatpush.msra.mxu0 %v6300
        %6338 = vmatpush.msra.mxu0 %v6298
        %6339 = vmatpush.msra.mxu0 %v6296
        %6340 = vmatmul.f32.gmra.mxu0 %v6313
        %v6341 = vpop.f32.mrf.mxu0
        %v6342 = vadd.f32 0.0, %v6341
        %6343 = vmatmul.f32.gmra.mxu0 %v6316
        %v6344 = vpop.f32.mrf.mxu0
        %v6345 = vadd.f32 0.0, %v6344
        %6346 = vmatmul.f32.gmra.mxu0 %v6319
        %v6347 = vpop.f32.mrf.mxu0
        %v6348 = vadd.f32 0.0, %v6347
        %6349 = vmatmul.f32.gmra.mxu0 %v6322
        %v6350 = vpop.f32.mrf.mxu0
        %v6351 = vadd.f32 0.0, %v6350
        %6352 = vdwg.mxu0
        %6353 = vmatpush.msra.mxu0 0.0
        %6354 = vmatpush.msra.mxu0 0.0
        %6355 = vmatpush.msra.mxu0 0.0
        %6356 = vmatpush.msra.mxu0 0.0
        %6357 = vmatpush.msra.mxu0 0.0
        %6358 = vmatpush.msra.mxu0 0.0
        %6359 = vmatpush.msra.mxu0 0.0
        %6360 = vmatpush.msra.mxu0 0.0
        %6361 = vmatpush.msra.mxu0 0.0
        %6362 = vmatpush.msra.mxu0 0.0
        %6363 = vmatpush.msra.mxu0 0.0
        %6364 = vmatpush.msra.mxu0 0.0
        %6365 = vmatpush.msra.mxu0 %v6303
        %6366 = vmatpush.msra.mxu0 %v6301
        %6367 = vmatpush.msra.mxu0 %v6299
        %6368 = vmatpush.msra.mxu0 %v6297
        %6369 = vmatmul.f32.gmra.mxu0 %v6313
        %v6370 = vpop.f32.mrf.mxu0
        %v6371 = vadd.f32 0.0, %v6370
        %6372 = vmatmul.f32.gmra.mxu0 %v6316
        %v6373 = vpop.f32.mrf.mxu0
        %v6374 = vadd.f32 0.0, %v6373
        %6375 = vmatmul.f32.gmra.mxu0 %v6319
        %v6376 = vpop.f32.mrf.mxu0
        %v6377 = vadd.f32 0.0, %v6376
        %6378 = vmatmul.f32.gmra.mxu0 %v6322
        %v6379 = vpop.f32.mrf.mxu0
        %v6380 = vadd.f32 0.0, %v6379
        %6381 = vdwg.mxu0
        %v6382 = vadd.f32 %v6223, %v6342
        %v6383 = vadd.f32 %v6224, %v6371
        %v6384 = vadd.f32 %v6225, %v6345
        %v6385 = vadd.f32 %v6226, %v6374
        %v6386 = vadd.f32 %v6227, %v6348
        %v6387 = vadd.f32 %v6228, %v6377
        %v6388 = vadd.f32 %v6229, %v6351
        %v6389 = vadd.f32 %v6230, %v6380
        %v6390 = vld [vmem:[%s2148] ss:$8 sm:$0x3]
        %v6392 = vperm.slane %v6390, 0
        %v6393 = vperm.slane %v6390, 1
        %6394 = vrot.lane.b32.xlu0 %v6392, 121
        %v6395 = vpop.permute.xlu0 %6394
        %6396 = vrot.lane.b32.xlu0 %v6393, 121
        %v6397 = vpop.permute.xlu0 %6396
        %v6398 = vsel %vm2157, %v6395, %v6397
        %v6402 = vmul.f32 %v4670, %v6395
        %v6403 = vmul.f32 %v4671, %v6398
        %v6404 = vmul.f32 %v4672, %v6397
        %v6405 = vmul.f32 %v4673, %v6395
        %v6406 = vmul.f32 %v4674, %v6398
        %v6407 = vmul.f32 %v4675, %v6397
        %v6408 = vmul.f32 %v4676, %v6395
        %v6409 = vmul.f32 %v4677, %v6398
        %v6410 = vmul.f32 %v4678, %v6397
        %v6411 = vmul.f32 %v4679, %v6395
        %v6412 = vmul.f32 %v4680, %v6398
        %v6413 = vmul.f32 %v4681, %v6397
        %s6414 = scalar_lea.vmem [#allocation6], 352
        %v6415 = vld [vmem:[%s6414] sm:$0xff]
        %v6416 = vld [vmem:[%s6414 + $0x8] sm:$0xff]
        %v6417 = vld [vmem:[%s6414 + $0x10] sm:$0xff]
        %v6418 = vld [vmem:[%s6414 + $0x18] sm:$0xff]
        %6431 = vrot.lane.b32.xlu0 %v6402, 7
        %v6432 = vpop.permute.xlu0 %6431
        %6433 = vrot.lane.b32.xlu0 %v6403, 7
        %v6434 = vpop.permute.xlu0 %6433
        %6435 = vrot.lane.b32.xlu0 %v6404, 7
        %v6436 = vpop.permute.xlu0 %6435
        %6437 = vrot.lane.b32.xlu0 %v6405, 7
        %v6438 = vpop.permute.xlu0 %6437
        %6439 = vrot.lane.b32.xlu0 %v6406, 7
        %v6440 = vpop.permute.xlu0 %6439
        %6441 = vrot.lane.b32.xlu0 %v6407, 7
        %v6442 = vpop.permute.xlu0 %6441
        %6443 = vrot.lane.b32.xlu0 %v6408, 7
        %v6444 = vpop.permute.xlu0 %6443
        %6445 = vrot.lane.b32.xlu0 %v6409, 7
        %v6446 = vpop.permute.xlu0 %6445
        %6447 = vrot.lane.b32.xlu0 %v6410, 7
        %v6448 = vpop.permute.xlu0 %6447
        %6449 = vrot.lane.b32.xlu0 %v6411, 7
        %v6450 = vpop.permute.xlu0 %6449
        %6451 = vrot.lane.b32.xlu0 %v6412, 7
        %v6452 = vpop.permute.xlu0 %6451
        %6453 = vrot.lane.b32.xlu0 %v6413, 7
        %v6454 = vpop.permute.xlu0 %6453
        %v6455 = vsel %vm2215, %v6432, %v6434
        %v6456 = vsel %vm2215, %v6434, %v6436
        %v6457 = vsel %vm2215, %v6438, %v6440
        %v6458 = vsel %vm2215, %v6440, %v6442
        %v6459 = vsel %vm2215, %v6444, %v6446
        %v6460 = vsel %vm2215, %v6446, %v6448
        %v6461 = vsel %vm2215, %v6450, %v6452
        %v6462 = vsel %vm2215, %v6452, %v6454
        %v6472 = vsel %vm530, %v6415, 0
        %v6475 = vsel %vm530, %v6416, 0
        %v6478 = vsel %vm530, %v6417, 0
        %v6481 = vsel %vm530, %v6418, 0
        %6483 = vmatpush.msra.mxu0 0.0
        %6484 = vmatpush.msra.mxu0 0.0
        %6485 = vmatpush.msra.mxu0 0.0
        %6486 = vmatpush.msra.mxu0 0.0
        %6487 = vmatpush.msra.mxu0 0.0
        %6488 = vmatpush.msra.mxu0 0.0
        %6489 = vmatpush.msra.mxu0 0.0
        %6490 = vmatpush.msra.mxu0 0.0
        %6491 = vmatpush.msra.mxu0 0.0
        %6492 = vmatpush.msra.mxu0 0.0
        %6493 = vmatpush.msra.mxu0 0.0
        %6494 = vmatpush.msra.mxu0 0.0
        %6495 = vmatpush.msra.mxu0 %v6461
        %6496 = vmatpush.msra.mxu0 %v6459
        %6497 = vmatpush.msra.mxu0 %v6457
        %6498 = vmatpush.msra.mxu0 %v6455
        %6499 = vmatmul.f32.gmra.mxu0 %v6472
        %v6500 = vpop.f32.mrf.mxu0
        %v6501 = vadd.f32 0.0, %v6500
        %6502 = vmatmul.f32.gmra.mxu0 %v6475
        %v6503 = vpop.f32.mrf.mxu0
        %v6504 = vadd.f32 0.0, %v6503
        %6505 = vmatmul.f32.gmra.mxu0 %v6478
        %v6506 = vpop.f32.mrf.mxu0
        %v6507 = vadd.f32 0.0, %v6506
        %6508 = vmatmul.f32.gmra.mxu0 %v6481
        %v6509 = vpop.f32.mrf.mxu0
        %v6510 = vadd.f32 0.0, %v6509
        %6511 = vdwg.mxu0
        %6512 = vmatpush.msra.mxu0 0.0
        %6513 = vmatpush.msra.mxu0 0.0
        %6514 = vmatpush.msra.mxu0 0.0
        %6515 = vmatpush.msra.mxu0 0.0
        %6516 = vmatpush.msra.mxu0 0.0
        %6517 = vmatpush.msra.mxu0 0.0
        %6518 = vmatpush.msra.mxu0 0.0
        %6519 = vmatpush.msra.mxu0 0.0
        %6520 = vmatpush.msra.mxu0 0.0
        %6521 = vmatpush.msra.mxu0 0.0
        %6522 = vmatpush.msra.mxu0 0.0
        %6523 = vmatpush.msra.mxu0 0.0
        %6524 = vmatpush.msra.mxu0 %v6462
        %6525 = vmatpush.msra.mxu0 %v6460
        %6526 = vmatpush.msra.mxu0 %v6458
        %6527 = vmatpush.msra.mxu0 %v6456
        %6528 = vmatmul.f32.gmra.mxu0 %v6472
        %v6529 = vpop.f32.mrf.mxu0
        %v6530 = vadd.f32 0.0, %v6529
        %6531 = vmatmul.f32.gmra.mxu0 %v6475
        %v6532 = vpop.f32.mrf.mxu0
        %v6533 = vadd.f32 0.0, %v6532
        %6534 = vmatmul.f32.gmra.mxu0 %v6478
        %v6535 = vpop.f32.mrf.mxu0
        %v6536 = vadd.f32 0.0, %v6535
        %6537 = vmatmul.f32.gmra.mxu0 %v6481
        %v6538 = vpop.f32.mrf.mxu0
        %v6539 = vadd.f32 0.0, %v6538
        %6540 = vdwg.mxu0
        %v6541 = vadd.f32 %v6382, %v6501
        %v6542 = vadd.f32 %v6383, %v6530
        %v6543 = vadd.f32 %v6384, %v6504
        %v6544 = vadd.f32 %v6385, %v6533
        %v6545 = vadd.f32 %v6386, %v6507
        %v6546 = vadd.f32 %v6387, %v6536
        %v6547 = vadd.f32 %v6388, %v6510
        %v6548 = vadd.f32 %v6389, %v6539
        %v6549 = vld [vmem:[%s2310] ss:$8 sm:$0x3]
        %v6551 = vperm.slane %v6549, 0
        %v6552 = vperm.slane %v6549, 1
        %6553 = vrot.lane.b32.xlu0 %v6551, 127
        %v6554 = vpop.permute.xlu0 %6553
        %6555 = vrot.lane.b32.xlu0 %v6552, 127
        %v6556 = vpop.permute.xlu0 %6555
        %v6557 = vsel %vm2319, %v6554, %v6556
        %v6561 = vmul.f32 %v4670, %v6554
        %v6562 = vmul.f32 %v4671, %v6557
        %v6563 = vmul.f32 %v4672, %v6556
        %v6564 = vmul.f32 %v4673, %v6554
        %v6565 = vmul.f32 %v4674, %v6557
        %v6566 = vmul.f32 %v4675, %v6556
        %v6567 = vmul.f32 %v4676, %v6554
        %v6568 = vmul.f32 %v4677, %v6557
        %v6569 = vmul.f32 %v4678, %v6556
        %v6570 = vmul.f32 %v4679, %v6554
        %v6571 = vmul.f32 %v4680, %v6557
        %v6572 = vmul.f32 %v4681, %v6556
        %s6573 = scalar_lea.vmem [#allocation6], 384
        %v6574 = vld [vmem:[%s6573] sm:$0xff]
        %v6575 = vld [vmem:[%s6573 + $0x8] sm:$0xff]
        %v6576 = vld [vmem:[%s6573 + $0x10] sm:$0xff]
        %v6577 = vld [vmem:[%s6573 + $0x18] sm:$0xff]
        %6590 = vrot.lane.b32.xlu0 %v6561, 1
        %v6591 = vpop.permute.xlu0 %6590
        %6592 = vrot.lane.b32.xlu0 %v6562, 1
        %v6593 = vpop.permute.xlu0 %6592
        %6594 = vrot.lane.b32.xlu0 %v6563, 1
        %v6595 = vpop.permute.xlu0 %6594
        %6596 = vrot.lane.b32.xlu0 %v6564, 1
        %v6597 = vpop.permute.xlu0 %6596
        %6598 = vrot.lane.b32.xlu0 %v6565, 1
        %v6599 = vpop.permute.xlu0 %6598
        %6600 = vrot.lane.b32.xlu0 %v6566, 1
        %v6601 = vpop.permute.xlu0 %6600
        %6602 = vrot.lane.b32.xlu0 %v6567, 1
        %v6603 = vpop.permute.xlu0 %6602
        %6604 = vrot.lane.b32.xlu0 %v6568, 1
        %v6605 = vpop.permute.xlu0 %6604
        %6606 = vrot.lane.b32.xlu0 %v6569, 1
        %v6607 = vpop.permute.xlu0 %6606
        %6608 = vrot.lane.b32.xlu0 %v6570, 1
        %v6609 = vpop.permute.xlu0 %6608
        %6610 = vrot.lane.b32.xlu0 %v6571, 1
        %v6611 = vpop.permute.xlu0 %6610
        %6612 = vrot.lane.b32.xlu0 %v6572, 1
        %v6613 = vpop.permute.xlu0 %6612
        %v6614 = vsel %vm2377, %v6591, %v6593
        %v6615 = vsel %vm2377, %v6593, %v6595
        %v6616 = vsel %vm2377, %v6597, %v6599
        %v6617 = vsel %vm2377, %v6599, %v6601
        %v6618 = vsel %vm2377, %v6603, %v6605
        %v6619 = vsel %vm2377, %v6605, %v6607
        %v6620 = vsel %vm2377, %v6609, %v6611
        %v6621 = vsel %vm2377, %v6611, %v6613
        %v6631 = vsel %vm530, %v6574, 0
        %v6634 = vsel %vm530, %v6575, 0
        %v6637 = vsel %vm530, %v6576, 0
        %v6640 = vsel %vm530, %v6577, 0
        %6642 = vmatpush.msra.mxu0 0.0
        %6643 = vmatpush.msra.mxu0 0.0
        %6644 = vmatpush.msra.mxu0 0.0
        %6645 = vmatpush.msra.mxu0 0.0
        %6646 = vmatpush.msra.mxu0 0.0
        %6647 = vmatpush.msra.mxu0 0.0
        %6648 = vmatpush.msra.mxu0 0.0
        %6649 = vmatpush.msra.mxu0 0.0
        %6650 = vmatpush.msra.mxu0 0.0
        %6651 = vmatpush.msra.mxu0 0.0
        %6652 = vmatpush.msra.mxu0 0.0
        %6653 = vmatpush.msra.mxu0 0.0
        %6654 = vmatpush.msra.mxu0 %v6620
        %6655 = vmatpush.msra.mxu0 %v6618
        %6656 = vmatpush.msra.mxu0 %v6616
        %6657 = vmatpush.msra.mxu0 %v6614
        %6658 = vmatmul.f32.gmra.mxu0 %v6631
        %v6659 = vpop.f32.mrf.mxu0
        %v6660 = vadd.f32 0.0, %v6659
        %6661 = vmatmul.f32.gmra.mxu0 %v6634
        %v6662 = vpop.f32.mrf.mxu0
        %v6663 = vadd.f32 0.0, %v6662
        %6664 = vmatmul.f32.gmra.mxu0 %v6637
        %v6665 = vpop.f32.mrf.mxu0
        %v6666 = vadd.f32 0.0, %v6665
        %6667 = vmatmul.f32.gmra.mxu0 %v6640
        %v6668 = vpop.f32.mrf.mxu0
        %v6669 = vadd.f32 0.0, %v6668
        %6670 = vdwg.mxu0
        %6671 = vmatpush.msra.mxu0 0.0
        %6672 = vmatpush.msra.mxu0 0.0
        %6673 = vmatpush.msra.mxu0 0.0
        %6674 = vmatpush.msra.mxu0 0.0
        %6675 = vmatpush.msra.mxu0 0.0
        %6676 = vmatpush.msra.mxu0 0.0
        %6677 = vmatpush.msra.mxu0 0.0
        %6678 = vmatpush.msra.mxu0 0.0
        %6679 = vmatpush.msra.mxu0 0.0
        %6680 = vmatpush.msra.mxu0 0.0
        %6681 = vmatpush.msra.mxu0 0.0
        %6682 = vmatpush.msra.mxu0 0.0
        %6683 = vmatpush.msra.mxu0 %v6621
        %6684 = vmatpush.msra.mxu0 %v6619
        %6685 = vmatpush.msra.mxu0 %v6617
        %6686 = vmatpush.msra.mxu0 %v6615
        %6687 = vmatmul.f32.gmra.mxu0 %v6631
        %v6688 = vpop.f32.mrf.mxu0
        %v6689 = vadd.f32 0.0, %v6688
        %6690 = vmatmul.f32.gmra.mxu0 %v6634
        %v6691 = vpop.f32.mrf.mxu0
        %v6692 = vadd.f32 0.0, %v6691
        %6693 = vmatmul.f32.gmra.mxu0 %v6637
        %v6694 = vpop.f32.mrf.mxu0
        %v6695 = vadd.f32 0.0, %v6694
        %6696 = vmatmul.f32.gmra.mxu0 %v6640
        %v6697 = vpop.f32.mrf.mxu0
        %v6698 = vadd.f32 0.0, %v6697
        %6699 = vdwg.mxu0
        %v6700 = vadd.f32 %v6541, %v6660
        %v6701 = vadd.f32 %v6542, %v6689
        %v6702 = vadd.f32 %v6543, %v6663
        %v6703 = vadd.f32 %v6544, %v6692
        %v6704 = vadd.f32 %v6545, %v6666
        %v6705 = vadd.f32 %v6546, %v6695
        %v6706 = vadd.f32 %v6547, %v6669
        %v6707 = vadd.f32 %v6548, %v6698
        %s6708 = scalar_lea.vmem [#allocation6], 416
        %v6709 = vld [vmem:[%s6708] sm:$0xff]
        %v6710 = vld [vmem:[%s6708 + $0x8] sm:$0xff]
        %v6711 = vld [vmem:[%s6708 + $0x10] sm:$0xff]
        %v6712 = vld [vmem:[%s6708 + $0x18] sm:$0xff]
        %v6714 = vsel %vm530, %v6709, 0
        %v6717 = vsel %vm530, %v6710, 0
        %v6720 = vsel %vm530, %v6711, 0
        %v6723 = vsel %vm530, %v6712, 0
        %6725 = vmatpush.msra.mxu0 0.0
        %6726 = vmatpush.msra.mxu0 0.0
        %6727 = vmatpush.msra.mxu0 0.0
        %6728 = vmatpush.msra.mxu0 0.0
        %6729 = vmatpush.msra.mxu0 0.0
        %6730 = vmatpush.msra.mxu0 0.0
        %6731 = vmatpush.msra.mxu0 0.0
        %6732 = vmatpush.msra.mxu0 0.0
        %6733 = vmatpush.msra.mxu0 0.0
        %6734 = vmatpush.msra.mxu0 0.0
        %6735 = vmatpush.msra.mxu0 0.0
        %6736 = vmatpush.msra.mxu0 0.0
        %6737 = vmatpush.msra.mxu0 %v4680
        %6738 = vmatpush.msra.mxu0 %v4677
        %6739 = vmatpush.msra.mxu0 %v4674
        %6740 = vmatpush.msra.mxu0 %v4671
        %6741 = vmatmul.f32.gmra.mxu0 %v6714
        %v6742 = vpop.f32.mrf.mxu0
        %v6743 = vadd.f32 0.0, %v6742
        %6744 = vmatmul.f32.gmra.mxu0 %v6717
        %v6745 = vpop.f32.mrf.mxu0
        %v6746 = vadd.f32 0.0, %v6745
        %6747 = vmatmul.f32.gmra.mxu0 %v6720
        %v6748 = vpop.f32.mrf.mxu0
        %v6749 = vadd.f32 0.0, %v6748
        %6750 = vmatmul.f32.gmra.mxu0 %v6723
        %v6751 = vpop.f32.mrf.mxu0
        %v6752 = vadd.f32 0.0, %v6751
        %6753 = vdwg.mxu0
        %6754 = vmatpush.msra.mxu0 0.0
        %6755 = vmatpush.msra.mxu0 0.0
        %6756 = vmatpush.msra.mxu0 0.0
        %6757 = vmatpush.msra.mxu0 0.0
        %6758 = vmatpush.msra.mxu0 0.0
        %6759 = vmatpush.msra.mxu0 0.0
        %6760 = vmatpush.msra.mxu0 0.0
        %6761 = vmatpush.msra.mxu0 0.0
        %6762 = vmatpush.msra.mxu0 0.0
        %6763 = vmatpush.msra.mxu0 0.0
        %6764 = vmatpush.msra.mxu0 0.0
        %6765 = vmatpush.msra.mxu0 0.0
        %6766 = vmatpush.msra.mxu0 %v4681
        %6767 = vmatpush.msra.mxu0 %v4678
        %6768 = vmatpush.msra.mxu0 %v4675
        %6769 = vmatpush.msra.mxu0 %v4672
        %6770 = vmatmul.f32.gmra.mxu0 %v6714
        %v6771 = vpop.f32.mrf.mxu0
        %v6772 = vadd.f32 0.0, %v6771
        %6773 = vmatmul.f32.gmra.mxu0 %v6717
        %v6774 = vpop.f32.mrf.mxu0
        %v6775 = vadd.f32 0.0, %v6774
        %6776 = vmatmul.f32.gmra.mxu0 %v6720
        %v6777 = vpop.f32.mrf.mxu0
        %v6778 = vadd.f32 0.0, %v6777
        %6779 = vmatmul.f32.gmra.mxu0 %v6723
        %v6780 = vpop.f32.mrf.mxu0
        %v6781 = vadd.f32 0.0, %v6780
        %6782 = vdwg.mxu0
        %v6783 = vadd.f32 %v6700, %v6743
        %v6784 = vadd.f32 %v6701, %v6772
        %v6785 = vadd.f32 %v6702, %v6746
        %v6786 = vadd.f32 %v6703, %v6775
        %v6787 = vadd.f32 %v6704, %v6749
        %v6788 = vadd.f32 %v6705, %v6778
        %v6789 = vadd.f32 %v6706, %v6752
        %v6790 = vadd.f32 %v6707, %v6781
        %v6791 = vld [vmem:[#allocation2 + $0x8] sm:$0xff]
        %v6792 = vld [vmem:[#allocation2 + $0x10] sm:$0xff]
        %v6793 = vld [vmem:[#allocation2 + $0x18] sm:$0xff]
        %v6794 = vld [vmem:[#allocation2 + $0x28] sm:$0xff]
        %v6795 = vld [vmem:[#allocation2 + $0x30] sm:$0xff]
        %v6796 = vld [vmem:[#allocation2 + $0x38] sm:$0xff]
        %v6797 = vld [vmem:[#allocation2 + $0x48] sm:$0xff]
        %v6798 = vld [vmem:[#allocation2 + $0x50] sm:$0xff]
        %v6799 = vld [vmem:[#allocation2 + $0x58] sm:$0xff]
        %v6800 = vld [vmem:[#allocation2 + $0x68] sm:$0xff]
        %v6801 = vld [vmem:[#allocation2 + $0x70] sm:$0xff]
        %v6802 = vld [vmem:[#allocation2 + $0x78] sm:$0xff]
        %v6803 = vld [vmem:[%s2567] ss:$8 sm:$0x3]
        %v6805 = vperm.slane %v6803, 0
        %v6806 = vperm.slane %v6803, 1
        %6807 = vrot.lane.b32.xlu0 %v6805, 1
        %v6808 = vpop.permute.xlu0 %6807
        %6809 = vrot.lane.b32.xlu0 %v6806, 1
        %v6810 = vpop.permute.xlu0 %6809
        %v6811 = vsel %vm2377, %v6808, %v6810
        %v6815 = vmul.f32 %v6791, %v6808
        %v6816 = vmul.f32 %v6792, %v6811
        %v6817 = vmul.f32 %v6793, %v6810
        %v6818 = vmul.f32 %v6794, %v6808
        %v6819 = vmul.f32 %v6795, %v6811
        %v6820 = vmul.f32 %v6796, %v6810
        %v6821 = vmul.f32 %v6797, %v6808
        %v6822 = vmul.f32 %v6798, %v6811
        %v6823 = vmul.f32 %v6799, %v6810
        %v6824 = vmul.f32 %v6800, %v6808
        %v6825 = vmul.f32 %v6801, %v6811
        %v6826 = vmul.f32 %v6802, %v6810
        %s6827 = scalar_lea.vmem [#allocation6], 448
        %v6828 = vld [vmem:[%s6827] sm:$0xff]
        %v6829 = vld [vmem:[%s6827 + $0x8] sm:$0xff]
        %v6830 = vld [vmem:[%s6827 + $0x10] sm:$0xff]
        %v6831 = vld [vmem:[%s6827 + $0x18] sm:$0xff]
        %6844 = vrot.lane.b32.xlu0 %v6815, 127
        %v6845 = vpop.permute.xlu0 %6844
        %6846 = vrot.lane.b32.xlu0 %v6816, 127
        %v6847 = vpop.permute.xlu0 %6846
        %6848 = vrot.lane.b32.xlu0 %v6817, 127
        %v6849 = vpop.permute.xlu0 %6848
        %6850 = vrot.lane.b32.xlu0 %v6818, 127
        %v6851 = vpop.permute.xlu0 %6850
        %6852 = vrot.lane.b32.xlu0 %v6819, 127
        %v6853 = vpop.permute.xlu0 %6852
        %6854 = vrot.lane.b32.xlu0 %v6820, 127
        %v6855 = vpop.permute.xlu0 %6854
        %6856 = vrot.lane.b32.xlu0 %v6821, 127
        %v6857 = vpop.permute.xlu0 %6856
        %6858 = vrot.lane.b32.xlu0 %v6822, 127
        %v6859 = vpop.permute.xlu0 %6858
        %6860 = vrot.lane.b32.xlu0 %v6823, 127
        %v6861 = vpop.permute.xlu0 %6860
        %6862 = vrot.lane.b32.xlu0 %v6824, 127
        %v6863 = vpop.permute.xlu0 %6862
        %6864 = vrot.lane.b32.xlu0 %v6825, 127
        %v6865 = vpop.permute.xlu0 %6864
        %6866 = vrot.lane.b32.xlu0 %v6826, 127
        %v6867 = vpop.permute.xlu0 %6866
        %v6868 = vsel %vm2319, %v6845, %v6847
        %v6869 = vsel %vm2319, %v6847, %v6849
        %v6870 = vsel %vm2319, %v6851, %v6853
        %v6871 = vsel %vm2319, %v6853, %v6855
        %v6872 = vsel %vm2319, %v6857, %v6859
        %v6873 = vsel %vm2319, %v6859, %v6861
        %v6874 = vsel %vm2319, %v6863, %v6865
        %v6875 = vsel %vm2319, %v6865, %v6867
        %v6885 = vsel %vm530, %v6828, 0
        %v6888 = vsel %vm530, %v6829, 0
        %v6891 = vsel %vm530, %v6830, 0
        %v6894 = vsel %vm530, %v6831, 0
        %6896 = vmatpush.msra.mxu0 0.0
        %6897 = vmatpush.msra.mxu0 0.0
        %6898 = vmatpush.msra.mxu0 0.0
        %6899 = vmatpush.msra.mxu0 0.0
        %6900 = vmatpush.msra.mxu0 0.0
        %6901 = vmatpush.msra.mxu0 0.0
        %6902 = vmatpush.msra.mxu0 0.0
        %6903 = vmatpush.msra.mxu0 0.0
        %6904 = vmatpush.msra.mxu0 0.0
        %6905 = vmatpush.msra.mxu0 0.0
        %6906 = vmatpush.msra.mxu0 0.0
        %6907 = vmatpush.msra.mxu0 0.0
        %6908 = vmatpush.msra.mxu0 %v6874
        %6909 = vmatpush.msra.mxu0 %v6872
        %6910 = vmatpush.msra.mxu0 %v6870
        %6911 = vmatpush.msra.mxu0 %v6868
        %6912 = vmatmul.f32.gmra.mxu0 %v6885
        %v6913 = vpop.f32.mrf.mxu0
        %v6914 = vadd.f32 0.0, %v6913
        %6915 = vmatmul.f32.gmra.mxu0 %v6888
        %v6916 = vpop.f32.mrf.mxu0
        %v6917 = vadd.f32 0.0, %v6916
        %6918 = vmatmul.f32.gmra.mxu0 %v6891
        %v6919 = vpop.f32.mrf.mxu0
        %v6920 = vadd.f32 0.0, %v6919
        %6921 = vmatmul.f32.gmra.mxu0 %v6894
        %v6922 = vpop.f32.mrf.mxu0
        %v6923 = vadd.f32 0.0, %v6922
        %6924 = vdwg.mxu0
        %6925 = vmatpush.msra.mxu0 0.0
        %6926 = vmatpush.msra.mxu0 0.0
        %6927 = vmatpush.msra.mxu0 0.0
        %6928 = vmatpush.msra.mxu0 0.0
        %6929 = vmatpush.msra.mxu0 0.0
        %6930 = vmatpush.msra.mxu0 0.0
        %6931 = vmatpush.msra.mxu0 0.0
        %6932 = vmatpush.msra.mxu0 0.0
        %6933 = vmatpush.msra.mxu0 0.0
        %6934 = vmatpush.msra.mxu0 0.0
        %6935 = vmatpush.msra.mxu0 0.0
        %6936 = vmatpush.msra.mxu0 0.0
        %6937 = vmatpush.msra.mxu0 %v6875
        %6938 = vmatpush.msra.mxu0 %v6873
        %6939 = vmatpush.msra.mxu0 %v6871
        %6940 = vmatpush.msra.mxu0 %v6869
        %6941 = vmatmul.f32.gmra.mxu0 %v6885
        %v6942 = vpop.f32.mrf.mxu0
        %v6943 = vadd.f32 0.0, %v6942
        %6944 = vmatmul.f32.gmra.mxu0 %v6888
        %v6945 = vpop.f32.mrf.mxu0
        %v6946 = vadd.f32 0.0, %v6945
        %6947 = vmatmul.f32.gmra.mxu0 %v6891
        %v6948 = vpop.f32.mrf.mxu0
        %v6949 = vadd.f32 0.0, %v6948
        %6950 = vmatmul.f32.gmra.mxu0 %v6894
        %v6951 = vpop.f32.mrf.mxu0
        %v6952 = vadd.f32 0.0, %v6951
        %6953 = vdwg.mxu0
        %v6954 = vadd.f32 %v6783, %v6914
        %v6955 = vadd.f32 %v6784, %v6943
        %v6956 = vadd.f32 %v6785, %v6917
        %v6957 = vadd.f32 %v6786, %v6946
        %v6958 = vadd.f32 %v6787, %v6920
        %v6959 = vadd.f32 %v6788, %v6949
        %v6960 = vadd.f32 %v6789, %v6923
        %v6961 = vadd.f32 %v6790, %v6952
        %v6962 = vld [vmem:[%s2727] ss:$8 sm:$0x3]
        %v6964 = vperm.slane %v6962, 0
        %v6965 = vperm.slane %v6962, 1
        %6966 = vrot.lane.b32.xlu0 %v6964, 7
        %v6967 = vpop.permute.xlu0 %6966
        %6968 = vrot.lane.b32.xlu0 %v6965, 7
        %v6969 = vpop.permute.xlu0 %6968
        %v6970 = vsel %vm2215, %v6967, %v6969
        %v6974 = vmul.f32 %v6791, %v6967
        %v6975 = vmul.f32 %v6792, %v6970
        %v6976 = vmul.f32 %v6793, %v6969
        %v6977 = vmul.f32 %v6794, %v6967
        %v6978 = vmul.f32 %v6795, %v6970
        %v6979 = vmul.f32 %v6796, %v6969
        %v6980 = vmul.f32 %v6797, %v6967
        %v6981 = vmul.f32 %v6798, %v6970
        %v6982 = vmul.f32 %v6799, %v6969
        %v6983 = vmul.f32 %v6800, %v6967
        %v6984 = vmul.f32 %v6801, %v6970
        %v6985 = vmul.f32 %v6802, %v6969
        %s6986 = scalar_lea.vmem [#allocation6], 480
        %v6987 = vld [vmem:[%s6986] sm:$0xff]
        %v6988 = vld [vmem:[%s6986 + $0x8] sm:$0xff]
        %v6989 = vld [vmem:[%s6986 + $0x10] sm:$0xff]
        %v6990 = vld [vmem:[%s6986 + $0x18] sm:$0xff]
        %7003 = vrot.lane.b32.xlu0 %v6974, 121
        %v7004 = vpop.permute.xlu0 %7003
        %7005 = vrot.lane.b32.xlu0 %v6975, 121
        %v7006 = vpop.permute.xlu0 %7005
        %7007 = vrot.lane.b32.xlu0 %v6976, 121
        %v7008 = vpop.permute.xlu0 %7007
        %7009 = vrot.lane.b32.xlu0 %v6977, 121
        %v7010 = vpop.permute.xlu0 %7009
        %7011 = vrot.lane.b32.xlu0 %v6978, 121
        %v7012 = vpop.permute.xlu0 %7011
        %7013 = vrot.lane.b32.xlu0 %v6979, 121
        %v7014 = vpop.permute.xlu0 %7013
        %7015 = vrot.lane.b32.xlu0 %v6980, 121
        %v7016 = vpop.permute.xlu0 %7015
        %7017 = vrot.lane.b32.xlu0 %v6981, 121
        %v7018 = vpop.permute.xlu0 %7017
        %7019 = vrot.lane.b32.xlu0 %v6982, 121
        %v7020 = vpop.permute.xlu0 %7019
        %7021 = vrot.lane.b32.xlu0 %v6983, 121
        %v7022 = vpop.permute.xlu0 %7021
        %7023 = vrot.lane.b32.xlu0 %v6984, 121
        %v7024 = vpop.permute.xlu0 %7023
        %7025 = vrot.lane.b32.xlu0 %v6985, 121
        %v7026 = vpop.permute.xlu0 %7025
        %v7027 = vsel %vm2157, %v7004, %v7006
        %v7028 = vsel %vm2157, %v7006, %v7008
        %v7029 = vsel %vm2157, %v7010, %v7012
        %v7030 = vsel %vm2157, %v7012, %v7014
        %v7031 = vsel %vm2157, %v7016, %v7018
        %v7032 = vsel %vm2157, %v7018, %v7020
        %v7033 = vsel %vm2157, %v7022, %v7024
        %v7034 = vsel %vm2157, %v7024, %v7026
        %v7044 = vsel %vm530, %v6987, 0
        %v7047 = vsel %vm530, %v6988, 0
        %v7050 = vsel %vm530, %v6989, 0
        %v7053 = vsel %vm530, %v6990, 0
        %7055 = vmatpush.msra.mxu0 0.0
        %7056 = vmatpush.msra.mxu0 0.0
        %7057 = vmatpush.msra.mxu0 0.0
        %7058 = vmatpush.msra.mxu0 0.0
        %7059 = vmatpush.msra.mxu0 0.0
        %7060 = vmatpush.msra.mxu0 0.0
        %7061 = vmatpush.msra.mxu0 0.0
        %7062 = vmatpush.msra.mxu0 0.0
        %7063 = vmatpush.msra.mxu0 0.0
        %7064 = vmatpush.msra.mxu0 0.0
        %7065 = vmatpush.msra.mxu0 0.0
        %7066 = vmatpush.msra.mxu0 0.0
        %7067 = vmatpush.msra.mxu0 %v7033
        %7068 = vmatpush.msra.mxu0 %v7031
        %7069 = vmatpush.msra.mxu0 %v7029
        %7070 = vmatpush.msra.mxu0 %v7027
        %7071 = vmatmul.f32.gmra.mxu0 %v7044
        %v7072 = vpop.f32.mrf.mxu0
        %v7073 = vadd.f32 0.0, %v7072
        %7074 = vmatmul.f32.gmra.mxu0 %v7047
        %v7075 = vpop.f32.mrf.mxu0
        %v7076 = vadd.f32 0.0, %v7075
        %7077 = vmatmul.f32.gmra.mxu0 %v7050
        %v7078 = vpop.f32.mrf.mxu0
        %v7079 = vadd.f32 0.0, %v7078
        %7080 = vmatmul.f32.gmra.mxu0 %v7053
        %v7081 = vpop.f32.mrf.mxu0
        %v7082 = vadd.f32 0.0, %v7081
        %7083 = vdwg.mxu0
        %7084 = vmatpush.msra.mxu0 0.0
        %7085 = vmatpush.msra.mxu0 0.0
        %7086 = vmatpush.msra.mxu0 0.0
        %7087 = vmatpush.msra.mxu0 0.0
        %7088 = vmatpush.msra.mxu0 0.0
        %7089 = vmatpush.msra.mxu0 0.0
        %7090 = vmatpush.msra.mxu0 0.0
        %7091 = vmatpush.msra.mxu0 0.0
        %7092 = vmatpush.msra.mxu0 0.0
        %7093 = vmatpush.msra.mxu0 0.0
        %7094 = vmatpush.msra.mxu0 0.0
        %7095 = vmatpush.msra.mxu0 0.0
        %7096 = vmatpush.msra.mxu0 %v7034
        %7097 = vmatpush.msra.mxu0 %v7032
        %7098 = vmatpush.msra.mxu0 %v7030
        %7099 = vmatpush.msra.mxu0 %v7028
        %7100 = vmatmul.f32.gmra.mxu0 %v7044
        %v7101 = vpop.f32.mrf.mxu0
        %v7102 = vadd.f32 0.0, %v7101
        %7103 = vmatmul.f32.gmra.mxu0 %v7047
        %v7104 = vpop.f32.mrf.mxu0
        %v7105 = vadd.f32 0.0, %v7104
        %7106 = vmatmul.f32.gmra.mxu0 %v7050
        %v7107 = vpop.f32.mrf.mxu0
        %v7108 = vadd.f32 0.0, %v7107
        %7109 = vmatmul.f32.gmra.mxu0 %v7053
        %v7110 = vpop.f32.mrf.mxu0
        %v7111 = vadd.f32 0.0, %v7110
        %7112 = vdwg.mxu0
        %v7113 = vadd.f32 %v6954, %v7073
        %v7114 = vadd.f32 %v6955, %v7102
        %v7115 = vadd.f32 %v6956, %v7076
        %v7116 = vadd.f32 %v6957, %v7105
        %v7117 = vadd.f32 %v6958, %v7079
        %v7118 = vadd.f32 %v6959, %v7108
        %v7119 = vadd.f32 %v6960, %v7082
        %v7120 = vadd.f32 %v6961, %v7111
        %v7121 = vld [vmem:[%s2887] ss:$8 sm:$0x3]
        %v7123 = vperm.slane %v7121, 0
        %v7124 = vperm.slane %v7121, 1
        %7125 = vrot.lane.b32.xlu0 %v7123, 8
        %v7126 = vpop.permute.xlu0 %7125
        %7127 = vrot.lane.b32.xlu0 %v7124, 8
        %v7128 = vpop.permute.xlu0 %7127
        %v7129 = vsel %vm2053, %v7126, %v7128
        %v7133 = vmul.f32 %v6791, %v7126
        %v7134 = vmul.f32 %v6792, %v7129
        %v7135 = vmul.f32 %v6793, %v7128
        %v7136 = vmul.f32 %v6794, %v7126
        %v7137 = vmul.f32 %v6795, %v7129
        %v7138 = vmul.f32 %v6796, %v7128
        %v7139 = vmul.f32 %v6797, %v7126
        %v7140 = vmul.f32 %v6798, %v7129
        %v7141 = vmul.f32 %v6799, %v7128
        %v7142 = vmul.f32 %v6800, %v7126
        %v7143 = vmul.f32 %v6801, %v7129
        %v7144 = vmul.f32 %v6802, %v7128
        %s7145 = scalar_lea.vmem [#allocation6], 512
        %v7146 = vld [vmem:[%s7145] sm:$0xff]
        %v7147 = vld [vmem:[%s7145 + $0x8] sm:$0xff]
        %v7148 = vld [vmem:[%s7145 + $0x10] sm:$0xff]
        %v7149 = vld [vmem:[%s7145 + $0x18] sm:$0xff]
        %7162 = vrot.lane.b32.xlu0 %v7133, 120
        %v7163 = vpop.permute.xlu0 %7162
        %7164 = vrot.lane.b32.xlu0 %v7134, 120
        %v7165 = vpop.permute.xlu0 %7164
        %7166 = vrot.lane.b32.xlu0 %v7135, 120
        %v7167 = vpop.permute.xlu0 %7166
        %7168 = vrot.lane.b32.xlu0 %v7136, 120
        %v7169 = vpop.permute.xlu0 %7168
        %7170 = vrot.lane.b32.xlu0 %v7137, 120
        %v7171 = vpop.permute.xlu0 %7170
        %7172 = vrot.lane.b32.xlu0 %v7138, 120
        %v7173 = vpop.permute.xlu0 %7172
        %7174 = vrot.lane.b32.xlu0 %v7139, 120
        %v7175 = vpop.permute.xlu0 %7174
        %7176 = vrot.lane.b32.xlu0 %v7140, 120
        %v7177 = vpop.permute.xlu0 %7176
        %7178 = vrot.lane.b32.xlu0 %v7141, 120
        %v7179 = vpop.permute.xlu0 %7178
        %7180 = vrot.lane.b32.xlu0 %v7142, 120
        %v7181 = vpop.permute.xlu0 %7180
        %7182 = vrot.lane.b32.xlu0 %v7143, 120
        %v7183 = vpop.permute.xlu0 %7182
        %7184 = vrot.lane.b32.xlu0 %v7144, 120
        %v7185 = vpop.permute.xlu0 %7184
        %v7186 = vsel %vm1995, %v7163, %v7165
        %v7187 = vsel %vm1995, %v7165, %v7167
        %v7188 = vsel %vm1995, %v7169, %v7171
        %v7189 = vsel %vm1995, %v7171, %v7173
        %v7190 = vsel %vm1995, %v7175, %v7177
        %v7191 = vsel %vm1995, %v7177, %v7179
        %v7192 = vsel %vm1995, %v7181, %v7183
        %v7193 = vsel %vm1995, %v7183, %v7185
        %v7203 = vsel %vm530, %v7146, 0
        %v7206 = vsel %vm530, %v7147, 0
        %v7209 = vsel %vm530, %v7148, 0
        %v7212 = vsel %vm530, %v7149, 0
        %7214 = vmatpush.msra.mxu0 0.0
        %7215 = vmatpush.msra.mxu0 0.0
        %7216 = vmatpush.msra.mxu0 0.0
        %7217 = vmatpush.msra.mxu0 0.0
        %7218 = vmatpush.msra.mxu0 0.0
        %7219 = vmatpush.msra.mxu0 0.0
        %7220 = vmatpush.msra.mxu0 0.0
        %7221 = vmatpush.msra.mxu0 0.0
        %7222 = vmatpush.msra.mxu0 0.0
        %7223 = vmatpush.msra.mxu0 0.0
        %7224 = vmatpush.msra.mxu0 0.0
        %7225 = vmatpush.msra.mxu0 0.0
        %7226 = vmatpush.msra.mxu0 %v7192
        %7227 = vmatpush.msra.mxu0 %v7190
        %7228 = vmatpush.msra.mxu0 %v7188
        %7229 = vmatpush.msra.mxu0 %v7186
        %7230 = vmatmul.f32.gmra.mxu0 %v7203
        %v7231 = vpop.f32.mrf.mxu0
        %v7232 = vadd.f32 0.0, %v7231
        %7233 = vmatmul.f32.gmra.mxu0 %v7206
        %v7234 = vpop.f32.mrf.mxu0
        %v7235 = vadd.f32 0.0, %v7234
        %7236 = vmatmul.f32.gmra.mxu0 %v7209
        %v7237 = vpop.f32.mrf.mxu0
        %v7238 = vadd.f32 0.0, %v7237
        %7239 = vmatmul.f32.gmra.mxu0 %v7212
        %v7240 = vpop.f32.mrf.mxu0
        %v7241 = vadd.f32 0.0, %v7240
        %7242 = vdwg.mxu0
        %7243 = vmatpush.msra.mxu0 0.0
        %7244 = vmatpush.msra.mxu0 0.0
        %7245 = vmatpush.msra.mxu0 0.0
        %7246 = vmatpush.msra.mxu0 0.0
        %7247 = vmatpush.msra.mxu0 0.0
        %7248 = vmatpush.msra.mxu0 0.0
        %7249 = vmatpush.msra.mxu0 0.0
        %7250 = vmatpush.msra.mxu0 0.0
        %7251 = vmatpush.msra.mxu0 0.0
        %7252 = vmatpush.msra.mxu0 0.0
        %7253 = vmatpush.msra.mxu0 0.0
        %7254 = vmatpush.msra.mxu0 0.0
        %7255 = vmatpush.msra.mxu0 %v7193
        %7256 = vmatpush.msra.mxu0 %v7191
        %7257 = vmatpush.msra.mxu0 %v7189
        %7258 = vmatpush.msra.mxu0 %v7187
        %7259 = vmatmul.f32.gmra.mxu0 %v7203
        %v7260 = vpop.f32.mrf.mxu0
        %v7261 = vadd.f32 0.0, %v7260
        %7262 = vmatmul.f32.gmra.mxu0 %v7206
        %v7263 = vpop.f32.mrf.mxu0
        %v7264 = vadd.f32 0.0, %v7263
        %7265 = vmatmul.f32.gmra.mxu0 %v7209
        %v7266 = vpop.f32.mrf.mxu0
        %v7267 = vadd.f32 0.0, %v7266
        %7268 = vmatmul.f32.gmra.mxu0 %v7212
        %v7269 = vpop.f32.mrf.mxu0
        %v7270 = vadd.f32 0.0, %v7269
        %7271 = vdwg.mxu0
        %v7272 = vadd.f32 %v7113, %v7232
        %v7273 = vadd.f32 %v7114, %v7261
        %v7274 = vadd.f32 %v7115, %v7235
        %v7275 = vadd.f32 %v7116, %v7264
        %v7276 = vadd.f32 %v7117, %v7238
        %v7277 = vadd.f32 %v7118, %v7267
        %v7278 = vadd.f32 %v7119, %v7241
        %v7279 = vadd.f32 %v7120, %v7270
        %v7280 = vld [vmem:[%s3047] ss:$8 sm:$0x3]
        %v7282 = vperm.slane %v7280, 0
        %v7283 = vperm.slane %v7280, 1
        %7284 = vrot.lane.b32.xlu0 %v7282, 9
        %v7285 = vpop.permute.xlu0 %7284
        %7286 = vrot.lane.b32.xlu0 %v7283, 9
        %v7287 = vpop.permute.xlu0 %7286
        %v7288 = vsel %vm1891, %v7285, %v7287
        %v7292 = vmul.f32 %v6791, %v7285
        %v7293 = vmul.f32 %v6792, %v7288
        %v7294 = vmul.f32 %v6793, %v7287
        %v7295 = vmul.f32 %v6794, %v7285
        %v7296 = vmul.f32 %v6795, %v7288
        %v7297 = vmul.f32 %v6796, %v7287
        %v7298 = vmul.f32 %v6797, %v7285
        %v7299 = vmul.f32 %v6798, %v7288
        %v7300 = vmul.f32 %v6799, %v7287
        %v7301 = vmul.f32 %v6800, %v7285
        %v7302 = vmul.f32 %v6801, %v7288
        %v7303 = vmul.f32 %v6802, %v7287
        %s7304 = scalar_lea.vmem [#allocation6], 544
        %v7305 = vld [vmem:[%s7304] sm:$0xff]
        %v7306 = vld [vmem:[%s7304 + $0x8] sm:$0xff]
        %v7307 = vld [vmem:[%s7304 + $0x10] sm:$0xff]
        %v7308 = vld [vmem:[%s7304 + $0x18] sm:$0xff]
        %7321 = vrot.lane.b32.xlu0 %v7292, 119
        %v7322 = vpop.permute.xlu0 %7321
        %7323 = vrot.lane.b32.xlu0 %v7293, 119
        %v7324 = vpop.permute.xlu0 %7323
        %7325 = vrot.lane.b32.xlu0 %v7294, 119
        %v7326 = vpop.permute.xlu0 %7325
        %7327 = vrot.lane.b32.xlu0 %v7295, 119
        %v7328 = vpop.permute.xlu0 %7327
        %7329 = vrot.lane.b32.xlu0 %v7296, 119
        %v7330 = vpop.permute.xlu0 %7329
        %7331 = vrot.lane.b32.xlu0 %v7297, 119
        %v7332 = vpop.permute.xlu0 %7331
        %7333 = vrot.lane.b32.xlu0 %v7298, 119
        %v7334 = vpop.permute.xlu0 %7333
        %7335 = vrot.lane.b32.xlu0 %v7299, 119
        %v7336 = vpop.permute.xlu0 %7335
        %7337 = vrot.lane.b32.xlu0 %v7300, 119
        %v7338 = vpop.permute.xlu0 %7337
        %7339 = vrot.lane.b32.xlu0 %v7301, 119
        %v7340 = vpop.permute.xlu0 %7339
        %7341 = vrot.lane.b32.xlu0 %v7302, 119
        %v7342 = vpop.permute.xlu0 %7341
        %7343 = vrot.lane.b32.xlu0 %v7303, 119
        %v7344 = vpop.permute.xlu0 %7343
        %v7345 = vsel %vm1833, %v7322, %v7324
        %v7346 = vsel %vm1833, %v7324, %v7326
        %v7347 = vsel %vm1833, %v7328, %v7330
        %v7348 = vsel %vm1833, %v7330, %v7332
        %v7349 = vsel %vm1833, %v7334, %v7336
        %v7350 = vsel %vm1833, %v7336, %v7338
        %v7351 = vsel %vm1833, %v7340, %v7342
        %v7352 = vsel %vm1833, %v7342, %v7344
        %v7362 = vsel %vm530, %v7305, 0
        %v7365 = vsel %vm530, %v7306, 0
        %v7368 = vsel %vm530, %v7307, 0
        %v7371 = vsel %vm530, %v7308, 0
        %7373 = vmatpush.msra.mxu0 0.0
        %7374 = vmatpush.msra.mxu0 0.0
        %7375 = vmatpush.msra.mxu0 0.0
        %7376 = vmatpush.msra.mxu0 0.0
        %7377 = vmatpush.msra.mxu0 0.0
        %7378 = vmatpush.msra.mxu0 0.0
        %7379 = vmatpush.msra.mxu0 0.0
        %7380 = vmatpush.msra.mxu0 0.0
        %7381 = vmatpush.msra.mxu0 0.0
        %7382 = vmatpush.msra.mxu0 0.0
        %7383 = vmatpush.msra.mxu0 0.0
        %7384 = vmatpush.msra.mxu0 0.0
        %7385 = vmatpush.msra.mxu0 %v7351
        %7386 = vmatpush.msra.mxu0 %v7349
        %7387 = vmatpush.msra.mxu0 %v7347
        %7388 = vmatpush.msra.mxu0 %v7345
        %7389 = vmatmul.f32.gmra.mxu0 %v7362
        %v7390 = vpop.f32.mrf.mxu0
        %v7391 = vadd.f32 0.0, %v7390
        %7392 = vmatmul.f32.gmra.mxu0 %v7365
        %v7393 = vpop.f32.mrf.mxu0
        %v7394 = vadd.f32 0.0, %v7393
        %7395 = vmatmul.f32.gmra.mxu0 %v7368
        %v7396 = vpop.f32.mrf.mxu0
        %v7397 = vadd.f32 0.0, %v7396
        %7398 = vmatmul.f32.gmra.mxu0 %v7371
        %v7399 = vpop.f32.mrf.mxu0
        %v7400 = vadd.f32 0.0, %v7399
        %7401 = vdwg.mxu0
        %7402 = vmatpush.msra.mxu0 0.0
        %7403 = vmatpush.msra.mxu0 0.0
        %7404 = vmatpush.msra.mxu0 0.0
        %7405 = vmatpush.msra.mxu0 0.0
        %7406 = vmatpush.msra.mxu0 0.0
        %7407 = vmatpush.msra.mxu0 0.0
        %7408 = vmatpush.msra.mxu0 0.0
        %7409 = vmatpush.msra.mxu0 0.0
        %7410 = vmatpush.msra.mxu0 0.0
        %7411 = vmatpush.msra.mxu0 0.0
        %7412 = vmatpush.msra.mxu0 0.0
        %7413 = vmatpush.msra.mxu0 0.0
        %7414 = vmatpush.msra.mxu0 %v7352
        %7415 = vmatpush.msra.mxu0 %v7350
        %7416 = vmatpush.msra.mxu0 %v7348
        %7417 = vmatpush.msra.mxu0 %v7346
        %7418 = vmatmul.f32.gmra.mxu0 %v7362
        %v7419 = vpop.f32.mrf.mxu0
        %v7420 = vadd.f32 0.0, %v7419
        %7421 = vmatmul.f32.gmra.mxu0 %v7365
        %v7422 = vpop.f32.mrf.mxu0
        %v7423 = vadd.f32 0.0, %v7422
        %7424 = vmatmul.f32.gmra.mxu0 %v7368
        %v7425 = vpop.f32.mrf.mxu0
        %v7426 = vadd.f32 0.0, %v7425
        %7427 = vmatmul.f32.gmra.mxu0 %v7371
        %v7428 = vpop.f32.mrf.mxu0
        %v7429 = vadd.f32 0.0, %v7428
        %7430 = vdwg.mxu0
        %v7431 = vadd.f32 %v7272, %v7391
        %v7432 = vadd.f32 %v7273, %v7420
        %v7433 = vadd.f32 %v7274, %v7394
        %v7434 = vadd.f32 %v7275, %v7423
        %v7435 = vadd.f32 %v7276, %v7397
        %v7436 = vadd.f32 %v7277, %v7426
        %v7437 = vadd.f32 %v7278, %v7400
        %v7438 = vadd.f32 %v7279, %v7429
        %v7439 = vld [vmem:[%s3207] ss:$8 sm:$0x3]
        %v7441 = vperm.slane %v7439, 0
        %v7442 = vperm.slane %v7439, 1
        %7443 = vrot.lane.b32.xlu0 %v7441, 55
        %v7444 = vpop.permute.xlu0 %7443
        %7445 = vrot.lane.b32.xlu0 %v7442, 55
        %v7446 = vpop.permute.xlu0 %7445
        %v7447 = vsel %vm425, %v7444, %v7446
        %v7451 = vmul.f32 %v6791, %v7444
        %v7452 = vmul.f32 %v6792, %v7447
        %v7453 = vmul.f32 %v6793, %v7446
        %v7454 = vmul.f32 %v6794, %v7444
        %v7455 = vmul.f32 %v6795, %v7447
        %v7456 = vmul.f32 %v6796, %v7446
        %v7457 = vmul.f32 %v6797, %v7444
        %v7458 = vmul.f32 %v6798, %v7447
        %v7459 = vmul.f32 %v6799, %v7446
        %v7460 = vmul.f32 %v6800, %v7444
        %v7461 = vmul.f32 %v6801, %v7447
        %v7462 = vmul.f32 %v6802, %v7446
        %s7463 = scalar_lea.vmem [#allocation6], 576
        %v7464 = vld [vmem:[%s7463] sm:$0xff]
        %v7465 = vld [vmem:[%s7463 + $0x8] sm:$0xff]
        %v7466 = vld [vmem:[%s7463 + $0x10] sm:$0xff]
        %v7467 = vld [vmem:[%s7463 + $0x18] sm:$0xff]
        %7480 = vrot.lane.b32.xlu0 %v7451, 73
        %v7481 = vpop.permute.xlu0 %7480
        %7482 = vrot.lane.b32.xlu0 %v7452, 73
        %v7483 = vpop.permute.xlu0 %7482
        %7484 = vrot.lane.b32.xlu0 %v7453, 73
        %v7485 = vpop.permute.xlu0 %7484
        %7486 = vrot.lane.b32.xlu0 %v7454, 73
        %v7487 = vpop.permute.xlu0 %7486
        %7488 = vrot.lane.b32.xlu0 %v7455, 73
        %v7489 = vpop.permute.xlu0 %7488
        %7490 = vrot.lane.b32.xlu0 %v7456, 73
        %v7491 = vpop.permute.xlu0 %7490
        %7492 = vrot.lane.b32.xlu0 %v7457, 73
        %v7493 = vpop.permute.xlu0 %7492
        %7494 = vrot.lane.b32.xlu0 %v7458, 73
        %v7495 = vpop.permute.xlu0 %7494
        %7496 = vrot.lane.b32.xlu0 %v7459, 73
        %v7497 = vpop.permute.xlu0 %7496
        %7498 = vrot.lane.b32.xlu0 %v7460, 73
        %v7499 = vpop.permute.xlu0 %7498
        %7500 = vrot.lane.b32.xlu0 %v7461, 73
        %v7501 = vpop.permute.xlu0 %7500
        %7502 = vrot.lane.b32.xlu0 %v7462, 73
        %v7503 = vpop.permute.xlu0 %7502
        %v7504 = vsel %vm637, %v7481, %v7483
        %v7505 = vsel %vm637, %v7483, %v7485
        %v7506 = vsel %vm637, %v7487, %v7489
        %v7507 = vsel %vm637, %v7489, %v7491
        %v7508 = vsel %vm637, %v7493, %v7495
        %v7509 = vsel %vm637, %v7495, %v7497
        %v7510 = vsel %vm637, %v7499, %v7501
        %v7511 = vsel %vm637, %v7501, %v7503
        %v7521 = vsel %vm530, %v7464, 0
        %v7524 = vsel %vm530, %v7465, 0
        %v7527 = vsel %vm530, %v7466, 0
        %v7530 = vsel %vm530, %v7467, 0
        %7532 = vmatpush.msra.mxu0 0.0
        %7533 = vmatpush.msra.mxu0 0.0
        %7534 = vmatpush.msra.mxu0 0.0
        %7535 = vmatpush.msra.mxu0 0.0
        %7536 = vmatpush.msra.mxu0 0.0
        %7537 = vmatpush.msra.mxu0 0.0
        %7538 = vmatpush.msra.mxu0 0.0
        %7539 = vmatpush.msra.mxu0 0.0
        %7540 = vmatpush.msra.mxu0 0.0
        %7541 = vmatpush.msra.mxu0 0.0
        %7542 = vmatpush.msra.mxu0 0.0
        %7543 = vmatpush.msra.mxu0 0.0
        %7544 = vmatpush.msra.mxu0 %v7510
        %7545 = vmatpush.msra.mxu0 %v7508
        %7546 = vmatpush.msra.mxu0 %v7506
        %7547 = vmatpush.msra.mxu0 %v7504
        %7548 = vmatmul.f32.gmra.mxu0 %v7521
        %v7549 = vpop.f32.mrf.mxu0
        %v7550 = vadd.f32 0.0, %v7549
        %7551 = vmatmul.f32.gmra.mxu0 %v7524
        %v7552 = vpop.f32.mrf.mxu0
        %v7553 = vadd.f32 0.0, %v7552
        %7554 = vmatmul.f32.gmra.mxu0 %v7527
        %v7555 = vpop.f32.mrf.mxu0
        %v7556 = vadd.f32 0.0, %v7555
        %7557 = vmatmul.f32.gmra.mxu0 %v7530
        %v7558 = vpop.f32.mrf.mxu0
        %v7559 = vadd.f32 0.0, %v7558
        %7560 = vdwg.mxu0
        %7561 = vmatpush.msra.mxu0 0.0
        %7562 = vmatpush.msra.mxu0 0.0
        %7563 = vmatpush.msra.mxu0 0.0
        %7564 = vmatpush.msra.mxu0 0.0
        %7565 = vmatpush.msra.mxu0 0.0
        %7566 = vmatpush.msra.mxu0 0.0
        %7567 = vmatpush.msra.mxu0 0.0
        %7568 = vmatpush.msra.mxu0 0.0
        %7569 = vmatpush.msra.mxu0 0.0
        %7570 = vmatpush.msra.mxu0 0.0
        %7571 = vmatpush.msra.mxu0 0.0
        %7572 = vmatpush.msra.mxu0 0.0
        %7573 = vmatpush.msra.mxu0 %v7511
        %7574 = vmatpush.msra.mxu0 %v7509
        %7575 = vmatpush.msra.mxu0 %v7507
        %7576 = vmatpush.msra.mxu0 %v7505
        %7577 = vmatmul.f32.gmra.mxu0 %v7521
        %v7578 = vpop.f32.mrf.mxu0
        %v7579 = vadd.f32 0.0, %v7578
        %7580 = vmatmul.f32.gmra.mxu0 %v7524
        %v7581 = vpop.f32.mrf.mxu0
        %v7582 = vadd.f32 0.0, %v7581
        %7583 = vmatmul.f32.gmra.mxu0 %v7527
        %v7584 = vpop.f32.mrf.mxu0
        %v7585 = vadd.f32 0.0, %v7584
        %7586 = vmatmul.f32.gmra.mxu0 %v7530
        %v7587 = vpop.f32.mrf.mxu0
        %v7588 = vadd.f32 0.0, %v7587
        %7589 = vdwg.mxu0
        %v7590 = vadd.f32 %v7431, %v7550
        %v7591 = vadd.f32 %v7432, %v7579
        %v7592 = vadd.f32 %v7433, %v7553
        %v7593 = vadd.f32 %v7434, %v7582
        %v7594 = vadd.f32 %v7435, %v7556
        %v7595 = vadd.f32 %v7436, %v7585
        %v7596 = vadd.f32 %v7437, %v7559
        %v7597 = vadd.f32 %v7438, %v7588
        %v7598 = vld [vmem:[%s3367] ss:$8 sm:$0x3]
        %v7600 = vperm.slane %v7598, 0
        %v7601 = vperm.slane %v7598, 1
        %7602 = vrot.lane.b32.xlu0 %v7600, 56
        %v7603 = vpop.permute.xlu0 %7602
        %7604 = vrot.lane.b32.xlu0 %v7601, 56
        %v7605 = vpop.permute.xlu0 %7604
        %v7606 = vsel %vm455, %v7603, %v7605
        %v7610 = vmul.f32 %v6791, %v7603
        %v7611 = vmul.f32 %v6792, %v7606
        %v7612 = vmul.f32 %v6793, %v7605
        %v7613 = vmul.f32 %v6794, %v7603
        %v7614 = vmul.f32 %v6795, %v7606
        %v7615 = vmul.f32 %v6796, %v7605
        %v7616 = vmul.f32 %v6797, %v7603
        %v7617 = vmul.f32 %v6798, %v7606
        %v7618 = vmul.f32 %v6799, %v7605
        %v7619 = vmul.f32 %v6800, %v7603
        %v7620 = vmul.f32 %v6801, %v7606
        %v7621 = vmul.f32 %v6802, %v7605
        %s7622 = scalar_lea.vmem [#allocation6], 608
        %v7623 = vld [vmem:[%s7622] sm:$0xff]
        %v7624 = vld [vmem:[%s7622 + $0x8] sm:$0xff]
        %v7625 = vld [vmem:[%s7622 + $0x10] sm:$0xff]
        %v7626 = vld [vmem:[%s7622 + $0x18] sm:$0xff]
        %7639 = vrot.lane.b32.xlu0 %v7610, 72
        %v7640 = vpop.permute.xlu0 %7639
        %7641 = vrot.lane.b32.xlu0 %v7611, 72
        %v7642 = vpop.permute.xlu0 %7641
        %7643 = vrot.lane.b32.xlu0 %v7612, 72
        %v7644 = vpop.permute.xlu0 %7643
        %7645 = vrot.lane.b32.xlu0 %v7613, 72
        %v7646 = vpop.permute.xlu0 %7645
        %7647 = vrot.lane.b32.xlu0 %v7614, 72
        %v7648 = vpop.permute.xlu0 %7647
        %7649 = vrot.lane.b32.xlu0 %v7615, 72
        %v7650 = vpop.permute.xlu0 %7649
        %7651 = vrot.lane.b32.xlu0 %v7616, 72
        %v7652 = vpop.permute.xlu0 %7651
        %7653 = vrot.lane.b32.xlu0 %v7617, 72
        %v7654 = vpop.permute.xlu0 %7653
        %7655 = vrot.lane.b32.xlu0 %v7618, 72
        %v7656 = vpop.permute.xlu0 %7655
        %7657 = vrot.lane.b32.xlu0 %v7619, 72
        %v7658 = vpop.permute.xlu0 %7657
        %7659 = vrot.lane.b32.xlu0 %v7620, 72
        %v7660 = vpop.permute.xlu0 %7659
        %7661 = vrot.lane.b32.xlu0 %v7621, 72
        %v7662 = vpop.permute.xlu0 %7661
        %v7663 = vsel %vm513, %v7640, %v7642
        %v7664 = vsel %vm513, %v7642, %v7644
        %v7665 = vsel %vm513, %v7646, %v7648
        %v7666 = vsel %vm513, %v7648, %v7650
        %v7667 = vsel %vm513, %v7652, %v7654
        %v7668 = vsel %vm513, %v7654, %v7656
        %v7669 = vsel %vm513, %v7658, %v7660
        %v7670 = vsel %vm513, %v7660, %v7662
        %v7680 = vsel %vm530, %v7623, 0
        %v7683 = vsel %vm530, %v7624, 0
        %v7686 = vsel %vm530, %v7625, 0
        %v7689 = vsel %vm530, %v7626, 0
        %7691 = vmatpush.msra.mxu0 0.0
        %7692 = vmatpush.msra.mxu0 0.0
        %7693 = vmatpush.msra.mxu0 0.0
        %7694 = vmatpush.msra.mxu0 0.0
        %7695 = vmatpush.msra.mxu0 0.0
        %7696 = vmatpush.msra.mxu0 0.0
        %7697 = vmatpush.msra.mxu0 0.0
        %7698 = vmatpush.msra.mxu0 0.0
        %7699 = vmatpush.msra.mxu0 0.0
        %7700 = vmatpush.msra.mxu0 0.0
        %7701 = vmatpush.msra.mxu0 0.0
        %7702 = vmatpush.msra.mxu0 0.0
        %7703 = vmatpush.msra.mxu0 %v7669
        %7704 = vmatpush.msra.mxu0 %v7667
        %7705 = vmatpush.msra.mxu0 %v7665
        %7706 = vmatpush.msra.mxu0 %v7663
        %7707 = vmatmul.f32.gmra.mxu0 %v7680
        %v7708 = vpop.f32.mrf.mxu0
        %v7709 = vadd.f32 0.0, %v7708
        %7710 = vmatmul.f32.gmra.mxu0 %v7683
        %v7711 = vpop.f32.mrf.mxu0
        %v7712 = vadd.f32 0.0, %v7711
        %7713 = vmatmul.f32.gmra.mxu0 %v7686
        %v7714 = vpop.f32.mrf.mxu0
        %v7715 = vadd.f32 0.0, %v7714
        %7716 = vmatmul.f32.gmra.mxu0 %v7689
        %v7717 = vpop.f32.mrf.mxu0
        %v7718 = vadd.f32 0.0, %v7717
        %7719 = vdwg.mxu0
        %7720 = vmatpush.msra.mxu0 0.0
        %7721 = vmatpush.msra.mxu0 0.0
        %7722 = vmatpush.msra.mxu0 0.0
        %7723 = vmatpush.msra.mxu0 0.0
        %7724 = vmatpush.msra.mxu0 0.0
        %7725 = vmatpush.msra.mxu0 0.0
        %7726 = vmatpush.msra.mxu0 0.0
        %7727 = vmatpush.msra.mxu0 0.0
        %7728 = vmatpush.msra.mxu0 0.0
        %7729 = vmatpush.msra.mxu0 0.0
        %7730 = vmatpush.msra.mxu0 0.0
        %7731 = vmatpush.msra.mxu0 0.0
        %7732 = vmatpush.msra.mxu0 %v7670
        %7733 = vmatpush.msra.mxu0 %v7668
        %7734 = vmatpush.msra.mxu0 %v7666
        %7735 = vmatpush.msra.mxu0 %v7664
        %7736 = vmatmul.f32.gmra.mxu0 %v7680
        %v7737 = vpop.f32.mrf.mxu0
        %v7738 = vadd.f32 0.0, %v7737
        %7739 = vmatmul.f32.gmra.mxu0 %v7683
        %v7740 = vpop.f32.mrf.mxu0
        %v7741 = vadd.f32 0.0, %v7740
        %7742 = vmatmul.f32.gmra.mxu0 %v7686
        %v7743 = vpop.f32.mrf.mxu0
        %v7744 = vadd.f32 0.0, %v7743
        %7745 = vmatmul.f32.gmra.mxu0 %v7689
        %v7746 = vpop.f32.mrf.mxu0
        %v7747 = vadd.f32 0.0, %v7746
        %7748 = vdwg.mxu0
        %v7749 = vadd.f32 %v7590, %v7709
        %v7750 = vadd.f32 %v7591, %v7738
        %v7751 = vadd.f32 %v7592, %v7712
        %v7752 = vadd.f32 %v7593, %v7741
        %v7753 = vadd.f32 %v7594, %v7715
        %v7754 = vadd.f32 %v7595, %v7744
        %v7755 = vadd.f32 %v7596, %v7718
        %v7756 = vadd.f32 %v7597, %v7747
        %v7757 = vld [vmem:[%s3527] ss:$8 sm:$0x3]
        %v7759 = vperm.slane %v7757, 0
        %v7760 = vperm.slane %v7757, 1
        %7761 = vrot.lane.b32.xlu0 %v7759, 57
        %v7762 = vpop.permute.xlu0 %7761
        %7763 = vrot.lane.b32.xlu0 %v7760, 57
        %v7764 = vpop.permute.xlu0 %7763
        %v7765 = vsel %vm733, %v7762, %v7764
        %v7769 = vmul.f32 %v6791, %v7762
        %v7770 = vmul.f32 %v6792, %v7765
        %v7771 = vmul.f32 %v6793, %v7764
        %v7772 = vmul.f32 %v6794, %v7762
        %v7773 = vmul.f32 %v6795, %v7765
        %v7774 = vmul.f32 %v6796, %v7764
        %v7775 = vmul.f32 %v6797, %v7762
        %v7776 = vmul.f32 %v6798, %v7765
        %v7777 = vmul.f32 %v6799, %v7764
        %v7778 = vmul.f32 %v6800, %v7762
        %v7779 = vmul.f32 %v6801, %v7765
        %v7780 = vmul.f32 %v6802, %v7764
        %s7781 = scalar_lea.vmem [#allocation6], 640
        %v7782 = vld [vmem:[%s7781] sm:$0xff]
        %v7783 = vld [vmem:[%s7781 + $0x8] sm:$0xff]
        %v7784 = vld [vmem:[%s7781 + $0x10] sm:$0xff]
        %v7785 = vld [vmem:[%s7781 + $0x18] sm:$0xff]
        %7798 = vrot.lane.b32.xlu0 %v7769, 71
        %v7799 = vpop.permute.xlu0 %7798
        %7800 = vrot.lane.b32.xlu0 %v7770, 71
        %v7801 = vpop.permute.xlu0 %7800
        %7802 = vrot.lane.b32.xlu0 %v7771, 71
        %v7803 = vpop.permute.xlu0 %7802
        %7804 = vrot.lane.b32.xlu0 %v7772, 71
        %v7805 = vpop.permute.xlu0 %7804
        %7806 = vrot.lane.b32.xlu0 %v7773, 71
        %v7807 = vpop.permute.xlu0 %7806
        %7808 = vrot.lane.b32.xlu0 %v7774, 71
        %v7809 = vpop.permute.xlu0 %7808
        %7810 = vrot.lane.b32.xlu0 %v7775, 71
        %v7811 = vpop.permute.xlu0 %7810
        %7812 = vrot.lane.b32.xlu0 %v7776, 71
        %v7813 = vpop.permute.xlu0 %7812
        %7814 = vrot.lane.b32.xlu0 %v7777, 71
        %v7815 = vpop.permute.xlu0 %7814
        %7816 = vrot.lane.b32.xlu0 %v7778, 71
        %v7817 = vpop.permute.xlu0 %7816
        %7818 = vrot.lane.b32.xlu0 %v7779, 71
        %v7819 = vpop.permute.xlu0 %7818
        %7820 = vrot.lane.b32.xlu0 %v7780, 71
        %v7821 = vpop.permute.xlu0 %7820
        %v7822 = vsel %vm791, %v7799, %v7801
        %v7823 = vsel %vm791, %v7801, %v7803
        %v7824 = vsel %vm791, %v7805, %v7807
        %v7825 = vsel %vm791, %v7807, %v7809
        %v7826 = vsel %vm791, %v7811, %v7813
        %v7827 = vsel %vm791, %v7813, %v7815
        %v7828 = vsel %vm791, %v7817, %v7819
        %v7829 = vsel %vm791, %v7819, %v7821
        %v7839 = vsel %vm530, %v7782, 0
        %v7842 = vsel %vm530, %v7783, 0
        %v7845 = vsel %vm530, %v7784, 0
        %v7848 = vsel %vm530, %v7785, 0
        %7850 = vmatpush.msra.mxu0 0.0
        %7851 = vmatpush.msra.mxu0 0.0
        %7852 = vmatpush.msra.mxu0 0.0
        %7853 = vmatpush.msra.mxu0 0.0
        %7854 = vmatpush.msra.mxu0 0.0
        %7855 = vmatpush.msra.mxu0 0.0
        %7856 = vmatpush.msra.mxu0 0.0
        %7857 = vmatpush.msra.mxu0 0.0
        %7858 = vmatpush.msra.mxu0 0.0
        %7859 = vmatpush.msra.mxu0 0.0
        %7860 = vmatpush.msra.mxu0 0.0
        %7861 = vmatpush.msra.mxu0 0.0
        %7862 = vmatpush.msra.mxu0 %v7828
        %7863 = vmatpush.msra.mxu0 %v7826
        %7864 = vmatpush.msra.mxu0 %v7824
        %7865 = vmatpush.msra.mxu0 %v7822
        %7866 = vmatmul.f32.gmra.mxu0 %v7839
        %v7867 = vpop.f32.mrf.mxu0
        %v7868 = vadd.f32 0.0, %v7867
        %7869 = vmatmul.f32.gmra.mxu0 %v7842
        %v7870 = vpop.f32.mrf.mxu0
        %v7871 = vadd.f32 0.0, %v7870
        %7872 = vmatmul.f32.gmra.mxu0 %v7845
        %v7873 = vpop.f32.mrf.mxu0
        %v7874 = vadd.f32 0.0, %v7873
        %7875 = vmatmul.f32.gmra.mxu0 %v7848
        %v7876 = vpop.f32.mrf.mxu0
        %v7877 = vadd.f32 0.0, %v7876
        %7878 = vdwg.mxu0
        %7879 = vmatpush.msra.mxu0 0.0
        %7880 = vmatpush.msra.mxu0 0.0
        %7881 = vmatpush.msra.mxu0 0.0
        %7882 = vmatpush.msra.mxu0 0.0
        %7883 = vmatpush.msra.mxu0 0.0
        %7884 = vmatpush.msra.mxu0 0.0
        %7885 = vmatpush.msra.mxu0 0.0
        %7886 = vmatpush.msra.mxu0 0.0
        %7887 = vmatpush.msra.mxu0 0.0
        %7888 = vmatpush.msra.mxu0 0.0
        %7889 = vmatpush.msra.mxu0 0.0
        %7890 = vmatpush.msra.mxu0 0.0
        %7891 = vmatpush.msra.mxu0 %v7829
        %7892 = vmatpush.msra.mxu0 %v7827
        %7893 = vmatpush.msra.mxu0 %v7825
        %7894 = vmatpush.msra.mxu0 %v7823
        %7895 = vmatmul.f32.gmra.mxu0 %v7839
        %v7896 = vpop.f32.mrf.mxu0
        %v7897 = vadd.f32 0.0, %v7896
        %7898 = vmatmul.f32.gmra.mxu0 %v7842
        %v7899 = vpop.f32.mrf.mxu0
        %v7900 = vadd.f32 0.0, %v7899
        %7901 = vmatmul.f32.gmra.mxu0 %v7845
        %v7902 = vpop.f32.mrf.mxu0
        %v7903 = vadd.f32 0.0, %v7902
        %7904 = vmatmul.f32.gmra.mxu0 %v7848
        %v7905 = vpop.f32.mrf.mxu0
        %v7906 = vadd.f32 0.0, %v7905
        %7907 = vdwg.mxu0
        %v7908 = vadd.f32 %v7749, %v7868
        %v7909 = vadd.f32 %v7750, %v7897
        %v7910 = vadd.f32 %v7751, %v7871
        %v7911 = vadd.f32 %v7752, %v7900
        %v7912 = vadd.f32 %v7753, %v7874
        %v7913 = vadd.f32 %v7754, %v7903
        %v7914 = vadd.f32 %v7755, %v7877
        %v7915 = vadd.f32 %v7756, %v7906
        %v7916 = vld [vmem:[%s3687] ss:$8 sm:$0x3]
        %v7918 = vperm.slane %v7916, 0
        %v7919 = vperm.slane %v7916, 1
        %7920 = vrot.lane.b32.xlu0 %v7918, 63
        %v7921 = vpop.permute.xlu0 %7920
        %7922 = vrot.lane.b32.xlu0 %v7919, 63
        %v7923 = vpop.permute.xlu0 %7922
        %v7924 = vsel %vm895, %v7921, %v7923
        %v7928 = vmul.f32 %v6791, %v7921
        %v7929 = vmul.f32 %v6792, %v7924
        %v7930 = vmul.f32 %v6793, %v7923
        %v7931 = vmul.f32 %v6794, %v7921
        %v7932 = vmul.f32 %v6795, %v7924
        %v7933 = vmul.f32 %v6796, %v7923
        %v7934 = vmul.f32 %v6797, %v7921
        %v7935 = vmul.f32 %v6798, %v7924
        %v7936 = vmul.f32 %v6799, %v7923
        %v7937 = vmul.f32 %v6800, %v7921
        %v7938 = vmul.f32 %v6801, %v7924
        %v7939 = vmul.f32 %v6802, %v7923
        %s7940 = scalar_lea.vmem [#allocation6], 672
        %v7941 = vld [vmem:[%s7940] sm:$0xff]
        %v7942 = vld [vmem:[%s7940 + $0x8] sm:$0xff]
        %v7943 = vld [vmem:[%s7940 + $0x10] sm:$0xff]
        %v7944 = vld [vmem:[%s7940 + $0x18] sm:$0xff]
        %7957 = vrot.lane.b32.xlu0 %v7928, 65
        %v7958 = vpop.permute.xlu0 %7957
        %7959 = vrot.lane.b32.xlu0 %v7929, 65
        %v7960 = vpop.permute.xlu0 %7959
        %7961 = vrot.lane.b32.xlu0 %v7930, 65
        %v7962 = vpop.permute.xlu0 %7961
        %7963 = vrot.lane.b32.xlu0 %v7931, 65
        %v7964 = vpop.permute.xlu0 %7963
        %7965 = vrot.lane.b32.xlu0 %v7932, 65
        %v7966 = vpop.permute.xlu0 %7965
        %7967 = vrot.lane.b32.xlu0 %v7933, 65
        %v7968 = vpop.permute.xlu0 %7967
        %7969 = vrot.lane.b32.xlu0 %v7934, 65
        %v7970 = vpop.permute.xlu0 %7969
        %7971 = vrot.lane.b32.xlu0 %v7935, 65
        %v7972 = vpop.permute.xlu0 %7971
        %7973 = vrot.lane.b32.xlu0 %v7936, 65
        %v7974 = vpop.permute.xlu0 %7973
        %7975 = vrot.lane.b32.xlu0 %v7937, 65
        %v7976 = vpop.permute.xlu0 %7975
        %7977 = vrot.lane.b32.xlu0 %v7938, 65
        %v7978 = vpop.permute.xlu0 %7977
        %7979 = vrot.lane.b32.xlu0 %v7939, 65
        %v7980 = vpop.permute.xlu0 %7979
        %v7981 = vsel %vm953, %v7958, %v7960
        %v7982 = vsel %vm953, %v7960, %v7962
        %v7983 = vsel %vm953, %v7964, %v7966
        %v7984 = vsel %vm953, %v7966, %v7968
        %v7985 = vsel %vm953, %v7970, %v7972
        %v7986 = vsel %vm953, %v7972, %v7974
        %v7987 = vsel %vm953, %v7976, %v7978
        %v7988 = vsel %vm953, %v7978, %v7980
        %v7998 = vsel %vm530, %v7941, 0
        %v8001 = vsel %vm530, %v7942, 0
        %v8004 = vsel %vm530, %v7943, 0
        %v8007 = vsel %vm530, %v7944, 0
        %8009 = vmatpush.msra.mxu0 0.0
        %8010 = vmatpush.msra.mxu0 0.0
        %8011 = vmatpush.msra.mxu0 0.0
        %8012 = vmatpush.msra.mxu0 0.0
        %8013 = vmatpush.msra.mxu0 0.0
        %8014 = vmatpush.msra.mxu0 0.0
        %8015 = vmatpush.msra.mxu0 0.0
        %8016 = vmatpush.msra.mxu0 0.0
        %8017 = vmatpush.msra.mxu0 0.0
        %8018 = vmatpush.msra.mxu0 0.0
        %8019 = vmatpush.msra.mxu0 0.0
        %8020 = vmatpush.msra.mxu0 0.0
        %8021 = vmatpush.msra.mxu0 %v7987
        %8022 = vmatpush.msra.mxu0 %v7985
        %8023 = vmatpush.msra.mxu0 %v7983
        %8024 = vmatpush.msra.mxu0 %v7981
        %8025 = vmatmul.f32.gmra.mxu0 %v7998
        %v8026 = vpop.f32.mrf.mxu0
        %v8027 = vadd.f32 0.0, %v8026
        %8028 = vmatmul.f32.gmra.mxu0 %v8001
        %v8029 = vpop.f32.mrf.mxu0
        %v8030 = vadd.f32 0.0, %v8029
        %8031 = vmatmul.f32.gmra.mxu0 %v8004
        %v8032 = vpop.f32.mrf.mxu0
        %v8033 = vadd.f32 0.0, %v8032
        %8034 = vmatmul.f32.gmra.mxu0 %v8007
        %v8035 = vpop.f32.mrf.mxu0
        %v8036 = vadd.f32 0.0, %v8035
        %8037 = vdwg.mxu0
        %8038 = vmatpush.msra.mxu0 0.0
        %8039 = vmatpush.msra.mxu0 0.0
        %8040 = vmatpush.msra.mxu0 0.0
        %8041 = vmatpush.msra.mxu0 0.0
        %8042 = vmatpush.msra.mxu0 0.0
        %8043 = vmatpush.msra.mxu0 0.0
        %8044 = vmatpush.msra.mxu0 0.0
        %8045 = vmatpush.msra.mxu0 0.0
        %8046 = vmatpush.msra.mxu0 0.0
        %8047 = vmatpush.msra.mxu0 0.0
        %8048 = vmatpush.msra.mxu0 0.0
        %8049 = vmatpush.msra.mxu0 0.0
        %8050 = vmatpush.msra.mxu0 %v7988
        %8051 = vmatpush.msra.mxu0 %v7986
        %8052 = vmatpush.msra.mxu0 %v7984
        %8053 = vmatpush.msra.mxu0 %v7982
        %8054 = vmatmul.f32.gmra.mxu0 %v7998
        %v8055 = vpop.f32.mrf.mxu0
        %v8056 = vadd.f32 0.0, %v8055
        %8057 = vmatmul.f32.gmra.mxu0 %v8001
        %v8058 = vpop.f32.mrf.mxu0
        %v8059 = vadd.f32 0.0, %v8058
        %8060 = vmatmul.f32.gmra.mxu0 %v8004
        %v8061 = vpop.f32.mrf.mxu0
        %v8062 = vadd.f32 0.0, %v8061
        %8063 = vmatmul.f32.gmra.mxu0 %v8007
        %v8064 = vpop.f32.mrf.mxu0
        %v8065 = vadd.f32 0.0, %v8064
        %8066 = vdwg.mxu0
        %v8067 = vadd.f32 %v7908, %v8027
        %v8068 = vadd.f32 %v7909, %v8056
        %v8069 = vadd.f32 %v7910, %v8030
        %v8070 = vadd.f32 %v7911, %v8059
        %v8071 = vadd.f32 %v7912, %v8033
        %v8072 = vadd.f32 %v7913, %v8062
        %v8073 = vadd.f32 %v7914, %v8036
        %v8074 = vadd.f32 %v7915, %v8065
        %s8075 = scalar_lea.vmem [#allocation6], 704
        %v8076 = vld [vmem:[%s8075] sm:$0xff]
        %v8077 = vld [vmem:[%s8075 + $0x8] sm:$0xff]
        %v8078 = vld [vmem:[%s8075 + $0x10] sm:$0xff]
        %v8079 = vld [vmem:[%s8075 + $0x18] sm:$0xff]
        %8092 = vrot.lane.b32.xlu0 %v6791, 64
        %v8093 = vpop.permute.xlu0 %8092
        %8094 = vrot.lane.b32.xlu0 %v6792, 64
        %v8095 = vpop.permute.xlu0 %8094
        %8096 = vrot.lane.b32.xlu0 %v6793, 64
        %v8097 = vpop.permute.xlu0 %8096
        %8098 = vrot.lane.b32.xlu0 %v6794, 64
        %v8099 = vpop.permute.xlu0 %8098
        %8100 = vrot.lane.b32.xlu0 %v6795, 64
        %v8101 = vpop.permute.xlu0 %8100
        %8102 = vrot.lane.b32.xlu0 %v6796, 64
        %v8103 = vpop.permute.xlu0 %8102
        %8104 = vrot.lane.b32.xlu0 %v6797, 64
        %v8105 = vpop.permute.xlu0 %8104
        %8106 = vrot.lane.b32.xlu0 %v6798, 64
        %v8107 = vpop.permute.xlu0 %8106
        %8108 = vrot.lane.b32.xlu0 %v6799, 64
        %v8109 = vpop.permute.xlu0 %8108
        %8110 = vrot.lane.b32.xlu0 %v6800, 64
        %v8111 = vpop.permute.xlu0 %8110
        %8112 = vrot.lane.b32.xlu0 %v6801, 64
        %v8113 = vpop.permute.xlu0 %8112
        %8114 = vrot.lane.b32.xlu0 %v6802, 64
        %v8115 = vpop.permute.xlu0 %8114
        %v8116 = vsel %vm1089, %v8093, %v8095
        %v8117 = vsel %vm1089, %v8095, %v8097
        %v8118 = vsel %vm1089, %v8099, %v8101
        %v8119 = vsel %vm1089, %v8101, %v8103
        %v8120 = vsel %vm1089, %v8105, %v8107
        %v8121 = vsel %vm1089, %v8107, %v8109
        %v8122 = vsel %vm1089, %v8111, %v8113
        %v8123 = vsel %vm1089, %v8113, %v8115
        %v8133 = vsel %vm530, %v8076, 0
        %v8136 = vsel %vm530, %v8077, 0
        %v8139 = vsel %vm530, %v8078, 0
        %v8142 = vsel %vm530, %v8079, 0
        %8144 = vmatpush.msra.mxu0 0.0
        %8145 = vmatpush.msra.mxu0 0.0
        %8146 = vmatpush.msra.mxu0 0.0
        %8147 = vmatpush.msra.mxu0 0.0
        %8148 = vmatpush.msra.mxu0 0.0
        %8149 = vmatpush.msra.mxu0 0.0
        %8150 = vmatpush.msra.mxu0 0.0
        %8151 = vmatpush.msra.mxu0 0.0
        %8152 = vmatpush.msra.mxu0 0.0
        %8153 = vmatpush.msra.mxu0 0.0
        %8154 = vmatpush.msra.mxu0 0.0
        %8155 = vmatpush.msra.mxu0 0.0
        %8156 = vmatpush.msra.mxu0 %v8122
        %8157 = vmatpush.msra.mxu0 %v8120
        %8158 = vmatpush.msra.mxu0 %v8118
        %8159 = vmatpush.msra.mxu0 %v8116
        %8160 = vmatmul.f32.gmra.mxu0 %v8133
        %v8161 = vpop.f32.mrf.mxu0
        %v8162 = vadd.f32 0.0, %v8161
        %8163 = vmatmul.f32.gmra.mxu0 %v8136
        %v8164 = vpop.f32.mrf.mxu0
        %v8165 = vadd.f32 0.0, %v8164
        %8166 = vmatmul.f32.gmra.mxu0 %v8139
        %v8167 = vpop.f32.mrf.mxu0
        %v8168 = vadd.f32 0.0, %v8167
        %8169 = vmatmul.f32.gmra.mxu0 %v8142
        %v8170 = vpop.f32.mrf.mxu0
        %v8171 = vadd.f32 0.0, %v8170
        %8172 = vdwg.mxu0
        %8173 = vmatpush.msra.mxu0 0.0
        %8174 = vmatpush.msra.mxu0 0.0
        %8175 = vmatpush.msra.mxu0 0.0
        %8176 = vmatpush.msra.mxu0 0.0
        %8177 = vmatpush.msra.mxu0 0.0
        %8178 = vmatpush.msra.mxu0 0.0
        %8179 = vmatpush.msra.mxu0 0.0
        %8180 = vmatpush.msra.mxu0 0.0
        %8181 = vmatpush.msra.mxu0 0.0
        %8182 = vmatpush.msra.mxu0 0.0
        %8183 = vmatpush.msra.mxu0 0.0
        %8184 = vmatpush.msra.mxu0 0.0
        %8185 = vmatpush.msra.mxu0 %v8123
        %8186 = vmatpush.msra.mxu0 %v8121
        %8187 = vmatpush.msra.mxu0 %v8119
        %8188 = vmatpush.msra.mxu0 %v8117
        %8189 = vmatmul.f32.gmra.mxu0 %v8133
        %v8190 = vpop.f32.mrf.mxu0
        %v8191 = vadd.f32 0.0, %v8190
        %8192 = vmatmul.f32.gmra.mxu0 %v8136
        %v8193 = vpop.f32.mrf.mxu0
        %v8194 = vadd.f32 0.0, %v8193
        %8195 = vmatmul.f32.gmra.mxu0 %v8139
        %v8196 = vpop.f32.mrf.mxu0
        %v8197 = vadd.f32 0.0, %v8196
        %8198 = vmatmul.f32.gmra.mxu0 %v8142
        %v8199 = vpop.f32.mrf.mxu0
        %v8200 = vadd.f32 0.0, %v8199
        %8201 = vdwg.mxu0
        %v8202 = vadd.f32 %v8067, %v8162
        %v8203 = vadd.f32 %v8068, %v8191
        %v8204 = vadd.f32 %v8069, %v8165
        %v8205 = vadd.f32 %v8070, %v8194
        %v8206 = vadd.f32 %v8071, %v8168
        %v8207 = vadd.f32 %v8072, %v8197
        %v8208 = vadd.f32 %v8073, %v8171
        %v8209 = vadd.f32 %v8074, %v8200
        %v8210 = vld [vmem:[%s3982] ss:$8 sm:$0x3]
        %v8212 = vperm.slane %v8210, 0
        %v8213 = vperm.slane %v8210, 1
        %8214 = vrot.lane.b32.xlu0 %v8212, 65
        %v8215 = vpop.permute.xlu0 %8214
        %8216 = vrot.lane.b32.xlu0 %v8213, 65
        %v8217 = vpop.permute.xlu0 %8216
        %v8218 = vsel %vm953, %v8215, %v8217
        %v8222 = vmul.f32 %v6791, %v8215
        %v8223 = vmul.f32 %v6792, %v8218
        %v8224 = vmul.f32 %v6793, %v8217
        %v8225 = vmul.f32 %v6794, %v8215
        %v8226 = vmul.f32 %v6795, %v8218
        %v8227 = vmul.f32 %v6796, %v8217
        %v8228 = vmul.f32 %v6797, %v8215
        %v8229 = vmul.f32 %v6798, %v8218
        %v8230 = vmul.f32 %v6799, %v8217
        %v8231 = vmul.f32 %v6800, %v8215
        %v8232 = vmul.f32 %v6801, %v8218
        %v8233 = vmul.f32 %v6802, %v8217
        %s8234 = scalar_lea.vmem [#allocation6], 736
        %v8235 = vld [vmem:[%s8234] sm:$0xff]
        %v8236 = vld [vmem:[%s8234 + $0x8] sm:$0xff]
        %v8237 = vld [vmem:[%s8234 + $0x10] sm:$0xff]
        %v8238 = vld [vmem:[%s8234 + $0x18] sm:$0xff]
        %8251 = vrot.lane.b32.xlu0 %v8222, 63
        %v8252 = vpop.permute.xlu0 %8251
        %8253 = vrot.lane.b32.xlu0 %v8223, 63
        %v8254 = vpop.permute.xlu0 %8253
        %8255 = vrot.lane.b32.xlu0 %v8224, 63
        %v8256 = vpop.permute.xlu0 %8255
        %8257 = vrot.lane.b32.xlu0 %v8225, 63
        %v8258 = vpop.permute.xlu0 %8257
        %8259 = vrot.lane.b32.xlu0 %v8226, 63
        %v8260 = vpop.permute.xlu0 %8259
        %8261 = vrot.lane.b32.xlu0 %v8227, 63
        %v8262 = vpop.permute.xlu0 %8261
        %8263 = vrot.lane.b32.xlu0 %v8228, 63
        %v8264 = vpop.permute.xlu0 %8263
        %8265 = vrot.lane.b32.xlu0 %v8229, 63
        %v8266 = vpop.permute.xlu0 %8265
        %8267 = vrot.lane.b32.xlu0 %v8230, 63
        %v8268 = vpop.permute.xlu0 %8267
        %8269 = vrot.lane.b32.xlu0 %v8231, 63
        %v8270 = vpop.permute.xlu0 %8269
        %8271 = vrot.lane.b32.xlu0 %v8232, 63
        %v8272 = vpop.permute.xlu0 %8271
        %8273 = vrot.lane.b32.xlu0 %v8233, 63
        %v8274 = vpop.permute.xlu0 %8273
        %v8275 = vsel %vm895, %v8252, %v8254
        %v8276 = vsel %vm895, %v8254, %v8256
        %v8277 = vsel %vm895, %v8258, %v8260
        %v8278 = vsel %vm895, %v8260, %v8262
        %v8279 = vsel %vm895, %v8264, %v8266
        %v8280 = vsel %vm895, %v8266, %v8268
        %v8281 = vsel %vm895, %v8270, %v8272
        %v8282 = vsel %vm895, %v8272, %v8274
        %v8292 = vsel %vm530, %v8235, 0
        %v8295 = vsel %vm530, %v8236, 0
        %v8298 = vsel %vm530, %v8237, 0
        %v8301 = vsel %vm530, %v8238, 0
        %8303 = vmatpush.msra.mxu0 0.0
        %8304 = vmatpush.msra.mxu0 0.0
        %8305 = vmatpush.msra.mxu0 0.0
        %8306 = vmatpush.msra.mxu0 0.0
        %8307 = vmatpush.msra.mxu0 0.0
        %8308 = vmatpush.msra.mxu0 0.0
        %8309 = vmatpush.msra.mxu0 0.0
        %8310 = vmatpush.msra.mxu0 0.0
        %8311 = vmatpush.msra.mxu0 0.0
        %8312 = vmatpush.msra.mxu0 0.0
        %8313 = vmatpush.msra.mxu0 0.0
        %8314 = vmatpush.msra.mxu0 0.0
        %8315 = vmatpush.msra.mxu0 %v8281
        %8316 = vmatpush.msra.mxu0 %v8279
        %8317 = vmatpush.msra.mxu0 %v8277
        %8318 = vmatpush.msra.mxu0 %v8275
        %8319 = vmatmul.f32.gmra.mxu0 %v8292
        %v8320 = vpop.f32.mrf.mxu0
        %v8321 = vadd.f32 0.0, %v8320
        %8322 = vmatmul.f32.gmra.mxu0 %v8295
        %v8323 = vpop.f32.mrf.mxu0
        %v8324 = vadd.f32 0.0, %v8323
        %8325 = vmatmul.f32.gmra.mxu0 %v8298
        %v8326 = vpop.f32.mrf.mxu0
        %v8327 = vadd.f32 0.0, %v8326
        %8328 = vmatmul.f32.gmra.mxu0 %v8301
        %v8329 = vpop.f32.mrf.mxu0
        %v8330 = vadd.f32 0.0, %v8329
        %8331 = vdwg.mxu0
        %8332 = vmatpush.msra.mxu0 0.0
        %8333 = vmatpush.msra.mxu0 0.0
        %8334 = vmatpush.msra.mxu0 0.0
        %8335 = vmatpush.msra.mxu0 0.0
        %8336 = vmatpush.msra.mxu0 0.0
        %8337 = vmatpush.msra.mxu0 0.0
        %8338 = vmatpush.msra.mxu0 0.0
        %8339 = vmatpush.msra.mxu0 0.0
        %8340 = vmatpush.msra.mxu0 0.0
        %8341 = vmatpush.msra.mxu0 0.0
        %8342 = vmatpush.msra.mxu0 0.0
        %8343 = vmatpush.msra.mxu0 0.0
        %8344 = vmatpush.msra.mxu0 %v8282
        %8345 = vmatpush.msra.mxu0 %v8280
        %8346 = vmatpush.msra.mxu0 %v8278
        %8347 = vmatpush.msra.mxu0 %v8276
        %8348 = vmatmul.f32.gmra.mxu0 %v8292
        %v8349 = vpop.f32.mrf.mxu0
        %v8350 = vadd.f32 0.0, %v8349
        %8351 = vmatmul.f32.gmra.mxu0 %v8295
        %v8352 = vpop.f32.mrf.mxu0
        %v8353 = vadd.f32 0.0, %v8352
        %8354 = vmatmul.f32.gmra.mxu0 %v8298
        %v8355 = vpop.f32.mrf.mxu0
        %v8356 = vadd.f32 0.0, %v8355
        %8357 = vmatmul.f32.gmra.mxu0 %v8301
        %v8358 = vpop.f32.mrf.mxu0
        %v8359 = vadd.f32 0.0, %v8358
        %8360 = vdwg.mxu0
        %v8361 = vadd.f32 %v8202, %v8321
        %v8362 = vadd.f32 %v8203, %v8350
        %v8363 = vadd.f32 %v8204, %v8324
        %v8364 = vadd.f32 %v8205, %v8353
        %v8365 = vadd.f32 %v8206, %v8327
        %v8366 = vadd.f32 %v8207, %v8356
        %v8367 = vadd.f32 %v8208, %v8330
        %v8368 = vadd.f32 %v8209, %v8359
        %v8369 = vld [vmem:[%s4142] ss:$8 sm:$0x3]
        %v8371 = vperm.slane %v8369, 0
        %v8372 = vperm.slane %v8369, 1
        %8373 = vrot.lane.b32.xlu0 %v8371, 71
        %v8374 = vpop.permute.xlu0 %8373
        %8375 = vrot.lane.b32.xlu0 %v8372, 71
        %v8376 = vpop.permute.xlu0 %8375
        %v8377 = vsel %vm791, %v8374, %v8376
        %v8381 = vmul.f32 %v6791, %v8374
        %v8382 = vmul.f32 %v6792, %v8377
        %v8383 = vmul.f32 %v6793, %v8376
        %v8384 = vmul.f32 %v6794, %v8374
        %v8385 = vmul.f32 %v6795, %v8377
        %v8386 = vmul.f32 %v6796, %v8376
        %v8387 = vmul.f32 %v6797, %v8374
        %v8388 = vmul.f32 %v6798, %v8377
        %v8389 = vmul.f32 %v6799, %v8376
        %v8390 = vmul.f32 %v6800, %v8374
        %v8391 = vmul.f32 %v6801, %v8377
        %v8392 = vmul.f32 %v6802, %v8376
        %s8393 = scalar_lea.vmem [#allocation6], 768
        %v8394 = vld [vmem:[%s8393] sm:$0xff]
        %v8395 = vld [vmem:[%s8393 + $0x8] sm:$0xff]
        %v8396 = vld [vmem:[%s8393 + $0x10] sm:$0xff]
        %v8397 = vld [vmem:[%s8393 + $0x18] sm:$0xff]
        %8410 = vrot.lane.b32.xlu0 %v8381, 57
        %v8411 = vpop.permute.xlu0 %8410
        %8412 = vrot.lane.b32.xlu0 %v8382, 57
        %v8413 = vpop.permute.xlu0 %8412
        %8414 = vrot.lane.b32.xlu0 %v8383, 57
        %v8415 = vpop.permute.xlu0 %8414
        %8416 = vrot.lane.b32.xlu0 %v8384, 57
        %v8417 = vpop.permute.xlu0 %8416
        %8418 = vrot.lane.b32.xlu0 %v8385, 57
        %v8419 = vpop.permute.xlu0 %8418
        %8420 = vrot.lane.b32.xlu0 %v8386, 57
        %v8421 = vpop.permute.xlu0 %8420
        %8422 = vrot.lane.b32.xlu0 %v8387, 57
        %v8423 = vpop.permute.xlu0 %8422
        %8424 = vrot.lane.b32.xlu0 %v8388, 57
        %v8425 = vpop.permute.xlu0 %8424
        %8426 = vrot.lane.b32.xlu0 %v8389, 57
        %v8427 = vpop.permute.xlu0 %8426
        %8428 = vrot.lane.b32.xlu0 %v8390, 57
        %v8429 = vpop.permute.xlu0 %8428
        %8430 = vrot.lane.b32.xlu0 %v8391, 57
        %v8431 = vpop.permute.xlu0 %8430
        %8432 = vrot.lane.b32.xlu0 %v8392, 57
        %v8433 = vpop.permute.xlu0 %8432
        %v8434 = vsel %vm733, %v8411, %v8413
        %v8435 = vsel %vm733, %v8413, %v8415
        %v8436 = vsel %vm733, %v8417, %v8419
        %v8437 = vsel %vm733, %v8419, %v8421
        %v8438 = vsel %vm733, %v8423, %v8425
        %v8439 = vsel %vm733, %v8425, %v8427
        %v8440 = vsel %vm733, %v8429, %v8431
        %v8441 = vsel %vm733, %v8431, %v8433
        %v8451 = vsel %vm530, %v8394, 0
        %v8454 = vsel %vm530, %v8395, 0
        %v8457 = vsel %vm530, %v8396, 0
        %v8460 = vsel %vm530, %v8397, 0
        %8462 = vmatpush.msra.mxu0 0.0
        %8463 = vmatpush.msra.mxu0 0.0
        %8464 = vmatpush.msra.mxu0 0.0
        %8465 = vmatpush.msra.mxu0 0.0
        %8466 = vmatpush.msra.mxu0 0.0
        %8467 = vmatpush.msra.mxu0 0.0
        %8468 = vmatpush.msra.mxu0 0.0
        %8469 = vmatpush.msra.mxu0 0.0
        %8470 = vmatpush.msra.mxu0 0.0
        %8471 = vmatpush.msra.mxu0 0.0
        %8472 = vmatpush.msra.mxu0 0.0
        %8473 = vmatpush.msra.mxu0 0.0
        %8474 = vmatpush.msra.mxu0 %v8440
        %8475 = vmatpush.msra.mxu0 %v8438
        %8476 = vmatpush.msra.mxu0 %v8436
        %8477 = vmatpush.msra.mxu0 %v8434
        %8478 = vmatmul.f32.gmra.mxu0 %v8451
        %v8479 = vpop.f32.mrf.mxu0
        %v8480 = vadd.f32 0.0, %v8479
        %8481 = vmatmul.f32.gmra.mxu0 %v8454
        %v8482 = vpop.f32.mrf.mxu0
        %v8483 = vadd.f32 0.0, %v8482
        %8484 = vmatmul.f32.gmra.mxu0 %v8457
        %v8485 = vpop.f32.mrf.mxu0
        %v8486 = vadd.f32 0.0, %v8485
        %8487 = vmatmul.f32.gmra.mxu0 %v8460
        %v8488 = vpop.f32.mrf.mxu0
        %v8489 = vadd.f32 0.0, %v8488
        %8490 = vdwg.mxu0
        %8491 = vmatpush.msra.mxu0 0.0
        %8492 = vmatpush.msra.mxu0 0.0
        %8493 = vmatpush.msra.mxu0 0.0
        %8494 = vmatpush.msra.mxu0 0.0
        %8495 = vmatpush.msra.mxu0 0.0
        %8496 = vmatpush.msra.mxu0 0.0
        %8497 = vmatpush.msra.mxu0 0.0
        %8498 = vmatpush.msra.mxu0 0.0
        %8499 = vmatpush.msra.mxu0 0.0
        %8500 = vmatpush.msra.mxu0 0.0
        %8501 = vmatpush.msra.mxu0 0.0
        %8502 = vmatpush.msra.mxu0 0.0
        %8503 = vmatpush.msra.mxu0 %v8441
        %8504 = vmatpush.msra.mxu0 %v8439
        %8505 = vmatpush.msra.mxu0 %v8437
        %8506 = vmatpush.msra.mxu0 %v8435
        %8507 = vmatmul.f32.gmra.mxu0 %v8451
        %v8508 = vpop.f32.mrf.mxu0
        %v8509 = vadd.f32 0.0, %v8508
        %8510 = vmatmul.f32.gmra.mxu0 %v8454
        %v8511 = vpop.f32.mrf.mxu0
        %v8512 = vadd.f32 0.0, %v8511
        %8513 = vmatmul.f32.gmra.mxu0 %v8457
        %v8514 = vpop.f32.mrf.mxu0
        %v8515 = vadd.f32 0.0, %v8514
        %8516 = vmatmul.f32.gmra.mxu0 %v8460
        %v8517 = vpop.f32.mrf.mxu0
        %v8518 = vadd.f32 0.0, %v8517
        %8519 = vdwg.mxu0
        %v8520 = vadd.f32 %v8361, %v8480
        %v8521 = vadd.f32 %v8362, %v8509
        %v8522 = vadd.f32 %v8363, %v8483
        %v8523 = vadd.f32 %v8364, %v8512
        %v8524 = vadd.f32 %v8365, %v8486
        %v8525 = vadd.f32 %v8366, %v8515
        %v8526 = vadd.f32 %v8367, %v8489
        %v8527 = vadd.f32 %v8368, %v8518
        %v8528 = vld [vmem:[%s4302] ss:$8 sm:$0x3]
        %v8530 = vperm.slane %v8528, 0
        %v8531 = vperm.slane %v8528, 1
        %8532 = vrot.lane.b32.xlu0 %v8530, 72
        %v8533 = vpop.permute.xlu0 %8532
        %8534 = vrot.lane.b32.xlu0 %v8531, 72
        %v8535 = vpop.permute.xlu0 %8534
        %v8536 = vsel %vm513, %v8533, %v8535
        %v8540 = vmul.f32 %v6791, %v8533
        %v8541 = vmul.f32 %v6792, %v8536
        %v8542 = vmul.f32 %v6793, %v8535
        %v8543 = vmul.f32 %v6794, %v8533
        %v8544 = vmul.f32 %v6795, %v8536
        %v8545 = vmul.f32 %v6796, %v8535
        %v8546 = vmul.f32 %v6797, %v8533
        %v8547 = vmul.f32 %v6798, %v8536
        %v8548 = vmul.f32 %v6799, %v8535
        %v8549 = vmul.f32 %v6800, %v8533
        %v8550 = vmul.f32 %v6801, %v8536
        %v8551 = vmul.f32 %v6802, %v8535
        %s8552 = scalar_lea.vmem [#allocation6], 800
        %v8553 = vld [vmem:[%s8552] sm:$0xff]
        %v8554 = vld [vmem:[%s8552 + $0x8] sm:$0xff]
        %v8555 = vld [vmem:[%s8552 + $0x10] sm:$0xff]
        %v8556 = vld [vmem:[%s8552 + $0x18] sm:$0xff]
        %8569 = vrot.lane.b32.xlu0 %v8540, 56
        %v8570 = vpop.permute.xlu0 %8569
        %8571 = vrot.lane.b32.xlu0 %v8541, 56
        %v8572 = vpop.permute.xlu0 %8571
        %8573 = vrot.lane.b32.xlu0 %v8542, 56
        %v8574 = vpop.permute.xlu0 %8573
        %8575 = vrot.lane.b32.xlu0 %v8543, 56
        %v8576 = vpop.permute.xlu0 %8575
        %8577 = vrot.lane.b32.xlu0 %v8544, 56
        %v8578 = vpop.permute.xlu0 %8577
        %8579 = vrot.lane.b32.xlu0 %v8545, 56
        %v8580 = vpop.permute.xlu0 %8579
        %8581 = vrot.lane.b32.xlu0 %v8546, 56
        %v8582 = vpop.permute.xlu0 %8581
        %8583 = vrot.lane.b32.xlu0 %v8547, 56
        %v8584 = vpop.permute.xlu0 %8583
        %8585 = vrot.lane.b32.xlu0 %v8548, 56
        %v8586 = vpop.permute.xlu0 %8585
        %8587 = vrot.lane.b32.xlu0 %v8549, 56
        %v8588 = vpop.permute.xlu0 %8587
        %8589 = vrot.lane.b32.xlu0 %v8550, 56
        %v8590 = vpop.permute.xlu0 %8589
        %8591 = vrot.lane.b32.xlu0 %v8551, 56
        %v8592 = vpop.permute.xlu0 %8591
        %v8593 = vsel %vm455, %v8570, %v8572
        %v8594 = vsel %vm455, %v8572, %v8574
        %v8595 = vsel %vm455, %v8576, %v8578
        %v8596 = vsel %vm455, %v8578, %v8580
        %v8597 = vsel %vm455, %v8582, %v8584
        %v8598 = vsel %vm455, %v8584, %v8586
        %v8599 = vsel %vm455, %v8588, %v8590
        %v8600 = vsel %vm455, %v8590, %v8592
        %v8610 = vsel %vm530, %v8553, 0
        %v8613 = vsel %vm530, %v8554, 0
        %v8616 = vsel %vm530, %v8555, 0
        %v8619 = vsel %vm530, %v8556, 0
        %8621 = vmatpush.msra.mxu0 0.0
        %8622 = vmatpush.msra.mxu0 0.0
        %8623 = vmatpush.msra.mxu0 0.0
        %8624 = vmatpush.msra.mxu0 0.0
        %8625 = vmatpush.msra.mxu0 0.0
        %8626 = vmatpush.msra.mxu0 0.0
        %8627 = vmatpush.msra.mxu0 0.0
        %8628 = vmatpush.msra.mxu0 0.0
        %8629 = vmatpush.msra.mxu0 0.0
        %8630 = vmatpush.msra.mxu0 0.0
        %8631 = vmatpush.msra.mxu0 0.0
        %8632 = vmatpush.msra.mxu0 0.0
        %8633 = vmatpush.msra.mxu0 %v8599
        %8634 = vmatpush.msra.mxu0 %v8597
        %8635 = vmatpush.msra.mxu0 %v8595
        %8636 = vmatpush.msra.mxu0 %v8593
        %8637 = vmatmul.f32.gmra.mxu0 %v8610
        %v8638 = vpop.f32.mrf.mxu0
        %v8639 = vadd.f32 0.0, %v8638
        %8640 = vmatmul.f32.gmra.mxu0 %v8613
        %v8641 = vpop.f32.mrf.mxu0
        %v8642 = vadd.f32 0.0, %v8641
        %8643 = vmatmul.f32.gmra.mxu0 %v8616
        %v8644 = vpop.f32.mrf.mxu0
        %v8645 = vadd.f32 0.0, %v8644
        %8646 = vmatmul.f32.gmra.mxu0 %v8619
        %v8647 = vpop.f32.mrf.mxu0
        %v8648 = vadd.f32 0.0, %v8647
        %8649 = vdwg.mxu0
        %8650 = vmatpush.msra.mxu0 0.0
        %8651 = vmatpush.msra.mxu0 0.0
        %8652 = vmatpush.msra.mxu0 0.0
        %8653 = vmatpush.msra.mxu0 0.0
        %8654 = vmatpush.msra.mxu0 0.0
        %8655 = vmatpush.msra.mxu0 0.0
        %8656 = vmatpush.msra.mxu0 0.0
        %8657 = vmatpush.msra.mxu0 0.0
        %8658 = vmatpush.msra.mxu0 0.0
        %8659 = vmatpush.msra.mxu0 0.0
        %8660 = vmatpush.msra.mxu0 0.0
        %8661 = vmatpush.msra.mxu0 0.0
        %8662 = vmatpush.msra.mxu0 %v8600
        %8663 = vmatpush.msra.mxu0 %v8598
        %8664 = vmatpush.msra.mxu0 %v8596
        %8665 = vmatpush.msra.mxu0 %v8594
        %8666 = vmatmul.f32.gmra.mxu0 %v8610
        %v8667 = vpop.f32.mrf.mxu0
        %v8668 = vadd.f32 0.0, %v8667
        %8669 = vmatmul.f32.gmra.mxu0 %v8613
        %v8670 = vpop.f32.mrf.mxu0
        %v8671 = vadd.f32 0.0, %v8670
        %8672 = vmatmul.f32.gmra.mxu0 %v8616
        %v8673 = vpop.f32.mrf.mxu0
        %v8674 = vadd.f32 0.0, %v8673
        %8675 = vmatmul.f32.gmra.mxu0 %v8619
        %v8676 = vpop.f32.mrf.mxu0
        %v8677 = vadd.f32 0.0, %v8676
        %8678 = vdwg.mxu0
        %v8679 = vadd.f32 %v8520, %v8639
        %v8680 = vadd.f32 %v8521, %v8668
        %v8681 = vadd.f32 %v8522, %v8642
        %v8682 = vadd.f32 %v8523, %v8671
        %v8683 = vadd.f32 %v8524, %v8645
        %v8684 = vadd.f32 %v8525, %v8674
        %v8685 = vadd.f32 %v8526, %v8648
        %v8686 = vadd.f32 %v8527, %v8677
        %v8687 = vld [vmem:[%s4462] ss:$8 sm:$0x3]
        %v8689 = vperm.slane %v8687, 0
        %v8690 = vperm.slane %v8687, 1
        %8691 = vrot.lane.b32.xlu0 %v8689, 73
        %v8692 = vpop.permute.xlu0 %8691
        %8693 = vrot.lane.b32.xlu0 %v8690, 73
        %v8694 = vpop.permute.xlu0 %8693
        %v8695 = vsel %vm637, %v8692, %v8694
        %v8699 = vmul.f32 %v6791, %v8692
        %v8700 = vmul.f32 %v6792, %v8695
        %v8701 = vmul.f32 %v6793, %v8694
        %v8702 = vmul.f32 %v6794, %v8692
        %v8703 = vmul.f32 %v6795, %v8695
        %v8704 = vmul.f32 %v6796, %v8694
        %v8705 = vmul.f32 %v6797, %v8692
        %v8706 = vmul.f32 %v6798, %v8695
        %v8707 = vmul.f32 %v6799, %v8694
        %v8708 = vmul.f32 %v6800, %v8692
        %v8709 = vmul.f32 %v6801, %v8695
        %v8710 = vmul.f32 %v6802, %v8694
        %s8711 = scalar_lea.vmem [#allocation6], 832
        %v8712 = vld [vmem:[%s8711] sm:$0xff]
        %v8713 = vld [vmem:[%s8711 + $0x8] sm:$0xff]
        %v8714 = vld [vmem:[%s8711 + $0x10] sm:$0xff]
        %v8715 = vld [vmem:[%s8711 + $0x18] sm:$0xff]
        %8728 = vrot.lane.b32.xlu0 %v8699, 55
        %v8729 = vpop.permute.xlu0 %8728
        %8730 = vrot.lane.b32.xlu0 %v8700, 55
        %v8731 = vpop.permute.xlu0 %8730
        %8732 = vrot.lane.b32.xlu0 %v8701, 55
        %v8733 = vpop.permute.xlu0 %8732
        %8734 = vrot.lane.b32.xlu0 %v8702, 55
        %v8735 = vpop.permute.xlu0 %8734
        %8736 = vrot.lane.b32.xlu0 %v8703, 55
        %v8737 = vpop.permute.xlu0 %8736
        %8738 = vrot.lane.b32.xlu0 %v8704, 55
        %v8739 = vpop.permute.xlu0 %8738
        %8740 = vrot.lane.b32.xlu0 %v8705, 55
        %v8741 = vpop.permute.xlu0 %8740
        %8742 = vrot.lane.b32.xlu0 %v8706, 55
        %v8743 = vpop.permute.xlu0 %8742
        %8744 = vrot.lane.b32.xlu0 %v8707, 55
        %v8745 = vpop.permute.xlu0 %8744
        %8746 = vrot.lane.b32.xlu0 %v8708, 55
        %v8747 = vpop.permute.xlu0 %8746
        %8748 = vrot.lane.b32.xlu0 %v8709, 55
        %v8749 = vpop.permute.xlu0 %8748
        %8750 = vrot.lane.b32.xlu0 %v8710, 55
        %v8751 = vpop.permute.xlu0 %8750
        %v8752 = vsel %vm425, %v8729, %v8731
        %v8753 = vsel %vm425, %v8731, %v8733
        %v8754 = vsel %vm425, %v8735, %v8737
        %v8755 = vsel %vm425, %v8737, %v8739
        %v8756 = vsel %vm425, %v8741, %v8743
        %v8757 = vsel %vm425, %v8743, %v8745
        %v8758 = vsel %vm425, %v8747, %v8749
        %v8759 = vsel %vm425, %v8749, %v8751
        %v8769 = vsel %vm530, %v8712, 0
        %v8772 = vsel %vm530, %v8713, 0
        %v8775 = vsel %vm530, %v8714, 0
        %v8778 = vsel %vm530, %v8715, 0
        %8780 = vmatpush.msra.mxu0 0.0
        %8781 = vmatpush.msra.mxu0 0.0
        %8782 = vmatpush.msra.mxu0 0.0
        %8783 = vmatpush.msra.mxu0 0.0
        %8784 = vmatpush.msra.mxu0 0.0
        %8785 = vmatpush.msra.mxu0 0.0
        %8786 = vmatpush.msra.mxu0 0.0
        %8787 = vmatpush.msra.mxu0 0.0
        %8788 = vmatpush.msra.mxu0 0.0
        %8789 = vmatpush.msra.mxu0 0.0
        %8790 = vmatpush.msra.mxu0 0.0
        %8791 = vmatpush.msra.mxu0 0.0
        %8792 = vmatpush.msra.mxu0 %v8758
        %8793 = vmatpush.msra.mxu0 %v8756
        %8794 = vmatpush.msra.mxu0 %v8754
        %8795 = vmatpush.msra.mxu0 %v8752
        %8796 = vmatmul.f32.gmra.mxu0 %v8769
        %v8797 = vpop.f32.mrf.mxu0
        %v8798 = vadd.f32 0.0, %v8797
        %8799 = vmatmul.f32.gmra.mxu0 %v8772
        %v8800 = vpop.f32.mrf.mxu0
        %v8801 = vadd.f32 0.0, %v8800
        %8802 = vmatmul.f32.gmra.mxu0 %v8775
        %v8803 = vpop.f32.mrf.mxu0
        %v8804 = vadd.f32 0.0, %v8803
        %8805 = vmatmul.f32.gmra.mxu0 %v8778
        %v8806 = vpop.f32.mrf.mxu0
        %v8807 = vadd.f32 0.0, %v8806
        %8808 = vdwg.mxu0
        %8809 = vmatpush.msra.mxu0 0.0
        %8810 = vmatpush.msra.mxu0 0.0
        %8811 = vmatpush.msra.mxu0 0.0
        %8812 = vmatpush.msra.mxu0 0.0
        %8813 = vmatpush.msra.mxu0 0.0
        %8814 = vmatpush.msra.mxu0 0.0
        %8815 = vmatpush.msra.mxu0 0.0
        %8816 = vmatpush.msra.mxu0 0.0
        %8817 = vmatpush.msra.mxu0 0.0
        %8818 = vmatpush.msra.mxu0 0.0
        %8819 = vmatpush.msra.mxu0 0.0
        %8820 = vmatpush.msra.mxu0 0.0
        %8821 = vmatpush.msra.mxu0 %v8759
        %8822 = vmatpush.msra.mxu0 %v8757
        %8823 = vmatpush.msra.mxu0 %v8755
        %8824 = vmatpush.msra.mxu0 %v8753
        %8825 = vmatmul.f32.gmra.mxu0 %v8769
        %v8826 = vpop.f32.mrf.mxu0
        %v8827 = vadd.f32 0.0, %v8826
        %8828 = vmatmul.f32.gmra.mxu0 %v8772
        %v8829 = vpop.f32.mrf.mxu0
        %v8830 = vadd.f32 0.0, %v8829
        %8831 = vmatmul.f32.gmra.mxu0 %v8775
        %v8832 = vpop.f32.mrf.mxu0
        %v8833 = vadd.f32 0.0, %v8832
        %8834 = vmatmul.f32.gmra.mxu0 %v8778
        %v8835 = vpop.f32.mrf.mxu0
        %v8836 = vadd.f32 0.0, %v8835
        %8837 = vdwg.mxu0
        %v8838 = vadd.f32 %v8679, %v8798
        %v8839 = vadd.f32 %v8680, %v8827
        %v8840 = vadd.f32 %v8681, %v8801
        %v8841 = vadd.f32 %v8682, %v8830
        %v8842 = vadd.f32 %v8683, %v8804
        %v8843 = vadd.f32 %v8684, %v8833
        %v8844 = vadd.f32 %v8685, %v8807
        %v8845 = vadd.f32 %v8686, %v8836
        %v8846 = vld [vmem:[%s4] sm:$0xff]
        %v8847 = vld [vmem:[%s4 + $0x8] sm:$0xff]
        %v8848 = vld [vmem:[%s4 + $0x10] sm:$0xff]
        %v8849 = vld [vmem:[%s4 + $0x18] sm:$0xff]
        %8851 = vset.pattern.permute.xlu0 0
        %8852 = vperm.xlu0 %8851, %v8846
        %v8853 = vpop.permute.xlu0 %8852
        %8856 = vset.pattern.permute.xlu0 0
        %8857 = vperm.xlu0 %8856, %v8847
        %v8858 = vpop.permute.xlu0 %8857
        %8861 = vset.pattern.permute.xlu0 0
        %8862 = vperm.xlu0 %8861, %v8848
        %v8863 = vpop.permute.xlu0 %8862
        %8866 = vset.pattern.permute.xlu0 0
        %8867 = vperm.xlu0 %8866, %v8849
        %v8868 = vpop.permute.xlu0 %8867
        %v8870 = vadd.f32 %v8838, %v8853
        %v8871 = vadd.f32 %v8839, %v8853
        %v8872 = vadd.f32 %v8840, %v8858
        %v8873 = vadd.f32 %v8841, %v8858
        %v8874 = vadd.f32 %v8842, %v8863
        %v8875 = vadd.f32 %v8843, %v8863
        %v8876 = vadd.f32 %v8844, %v8868
        %v8877 = vadd.f32 %v8845, %v8868
        %v8878 = vmax.f32 %v8870, 0.0
        %v8879 = vmax.f32 %v8871, 0.0
        %v8880 = vmax.f32 %v8872, 0.0
        %v8881 = vmax.f32 %v8873, 0.0
        %v8882 = vmax.f32 %v8874, 0.0
        %v8883 = vmax.f32 %v8875, 0.0
        %v8884 = vmax.f32 %v8876, 0.0
        %v8885 = vmax.f32 %v8877, 0.0
        %v8886 = vld [vmem:[%s6] sm:$0xf]
        %v8887 = vld [vmem:[#allocation8] sm:$0xff]
        %v8888 = vld [vmem:[#allocation8 + $0x8] sm:$0xff]
        %v8889 = vld [vmem:[#allocation8 + $0x10] sm:$0xff]
        %v8890 = vld [vmem:[#allocation8 + $0x18] sm:$0xff]
        %v8891 = vld [vmem:[#allocation8 + $0x20] sm:$0xff]
        %v8892 = vld [vmem:[#allocation8 + $0x28] sm:$0xff]
        %v8893 = vld [vmem:[#allocation8 + $0x30] sm:$0xff]
        %v8894 = vld [vmem:[#allocation8 + $0x38] sm:$0xff]
        %v8895 = vld [vmem:[#allocation8 + $0x40] sm:$0xff]
        %v8896 = vld [vmem:[#allocation8 + $0x48] sm:$0xff]
        %v8897 = vld [vmem:[#allocation8 + $0x50] sm:$0xff]
        %v8898 = vld [vmem:[#allocation8 + $0x58] sm:$0xff]
        %v8899 = vld [vmem:[#allocation8 + $0x60] sm:$0xff]
        %v8900 = vld [vmem:[#allocation8 + $0x68] sm:$0xff]
        %v8901 = vld [vmem:[#allocation8 + $0x70] sm:$0xff]
        %v8902 = vld [vmem:[#allocation8 + $0x78] sm:$0xff]
        %v8903 = vld [vmem:[#allocation8 + $0x80] sm:$0xff]
        %v8904 = vld [vmem:[#allocation8 + $0x88] sm:$0xff]
        %v8905 = vld [vmem:[#allocation8 + $0x90] sm:$0xff]
        %v8906 = vld [vmem:[#allocation8 + $0x98] sm:$0xff]
        %v8907 = vld [vmem:[#allocation8 + $0xa0] sm:$0xff]
        %v8908 = vld [vmem:[#allocation8 + $0xa8] sm:$0xff]
        %v8909 = vld [vmem:[#allocation8 + $0xb0] sm:$0xff]
        %v8910 = vld [vmem:[#allocation8 + $0xb8] sm:$0xff]
        %v8911 = vld [vmem:[#allocation8 + $0xc0] sm:$0xff]
        %v8912 = vld [vmem:[#allocation8 + $0xc8] sm:$0xff]
        %v8913 = vld [vmem:[#allocation8 + $0xd0] sm:$0xff]
        %v8914 = vld [vmem:[#allocation8 + $0xd8] sm:$0xff]
        %v8915 = vld [vmem:[#allocation8 + $0xe0] sm:$0xff]
        %v8916 = vld [vmem:[#allocation8 + $0xe8] sm:$0xff]
        %v8917 = vld [vmem:[#allocation8 + $0xf0] sm:$0xff]
        %v8918 = vld [vmem:[#allocation8 + $0xf8] sm:$0xff]
        %8919 = vmatpush.msra.mxu0 %v8902
        %8920 = vmatpush.msra.mxu0 %v8901
        %8921 = vmatpush.msra.mxu0 %v8900
        %8922 = vmatpush.msra.mxu0 %v8899
        %8923 = vmatpush.msra.mxu0 %v8898
        %8924 = vmatpush.msra.mxu0 %v8897
        %8925 = vmatpush.msra.mxu0 %v8896
        %8926 = vmatpush.msra.mxu0 %v8895
        %8927 = vmatpush.msra.mxu0 %v8894
        %8928 = vmatpush.msra.mxu0 %v8893
        %8929 = vmatpush.msra.mxu0 %v8892
        %8930 = vmatpush.msra.mxu0 %v8891
        %8931 = vmatpush.msra.mxu0 %v8890
        %8932 = vmatpush.msra.mxu0 %v8889
        %8933 = vmatpush.msra.mxu0 %v8888
        %8934 = vmatpush.msra.mxu0 %v8887
        %8935 = vmatmul.f32.gmra.mxu0 %v8878
        %v8936 = vpop.f32.mrf.mxu0
        %v8937 = vadd.f32 0.0, %v8936
        %8938 = vmatmul.f32.gmra.mxu0 %v8880
        %v8939 = vpop.f32.mrf.mxu0
        %v8940 = vadd.f32 0.0, %v8939
        %8941 = vmatmul.f32.gmra.mxu0 %v8882
        %v8942 = vpop.f32.mrf.mxu0
        %v8943 = vadd.f32 0.0, %v8942
        %8944 = vmatmul.f32.gmra.mxu0 %v8884
        %v8945 = vpop.f32.mrf.mxu0
        %v8946 = vadd.f32 0.0, %v8945
        %8947 = vdwg.mxu0
        %8948 = vmatpush.msra.mxu0 %v8918
        %8949 = vmatpush.msra.mxu0 %v8917
        %8950 = vmatpush.msra.mxu0 %v8916
        %8951 = vmatpush.msra.mxu0 %v8915
        %8952 = vmatpush.msra.mxu0 %v8914
        %8953 = vmatpush.msra.mxu0 %v8913
        %8954 = vmatpush.msra.mxu0 %v8912
        %8955 = vmatpush.msra.mxu0 %v8911
        %8956 = vmatpush.msra.mxu0 %v8910
        %8957 = vmatpush.msra.mxu0 %v8909
        %8958 = vmatpush.msra.mxu0 %v8908
        %8959 = vmatpush.msra.mxu0 %v8907
        %8960 = vmatpush.msra.mxu0 %v8906
        %8961 = vmatpush.msra.mxu0 %v8905
        %8962 = vmatpush.msra.mxu0 %v8904
        %8963 = vmatpush.msra.mxu0 %v8903
        %8964 = vmatmul.f32.gmra.mxu0 %v8879
        %v8965 = vpop.f32.mrf.mxu0
        %v8966 = vadd.f32 %v8937, %v8965
        %8967 = vmatmul.f32.gmra.mxu0 %v8881
        %v8968 = vpop.f32.mrf.mxu0
        %v8969 = vadd.f32 %v8940, %v8968
        %8970 = vmatmul.f32.gmra.mxu0 %v8883
        %v8971 = vpop.f32.mrf.mxu0
        %v8972 = vadd.f32 %v8943, %v8971
        %8973 = vmatmul.f32.gmra.mxu0 %v8885
        %v8974 = vpop.f32.mrf.mxu0
        %v8975 = vadd.f32 %v8946, %v8974
        %8976 = vdwg.mxu0
        %v8977 = vld [vmem:[%s5] sm:$0xf]
        %v8979 = vsel %vm530, %v8977, 0
        %8981 = vmatpush.msra.mxu0 0.0
        %8982 = vmatpush.msra.mxu0 0.0
        %8983 = vmatpush.msra.mxu0 0.0
        %8984 = vmatpush.msra.mxu0 0.0
        %8985 = vmatpush.msra.mxu0 0.0
        %8986 = vmatpush.msra.mxu0 0.0
        %8987 = vmatpush.msra.mxu0 0.0
        %8988 = vmatpush.msra.mxu0 0.0
        %8989 = vmatpush.msra.mxu0 0.0
        %8990 = vmatpush.msra.mxu0 0.0
        %8991 = vmatpush.msra.mxu0 0.0
        %8992 = vmatpush.msra.mxu0 0.0
        %8993 = vmatpush.msra.mxu0 %v8975
        %8994 = vmatpush.msra.mxu0 %v8972
        %8995 = vmatpush.msra.mxu0 %v8969
        %8996 = vmatpush.msra.mxu0 %v8966
        %8997 = vmatmul.f32.gmra.mxu0 %v8979
        %v8998 = vpop.f32.mrf.mxu0
        %v8999 = vadd.f32 0.0, %v8998
        %9000 = vdwg.mxu0
        %9002 = vset.pattern.permute.xlu0 0
        %9003 = vperm.xlu0 %9002, %v8886
        %v9004 = vpop.permute.xlu0 %9003
        %v9006 = vadd.f32 %v9004, %v8999
        %s9007 = scalar_lea.vmem [#allocation8], 256
        %v9008 = vld [vmem:[%s9007] sm:$0xff]
        %v9009 = vld [vmem:[%s9007 + $0x8] sm:$0xff]
        %v9010 = vld [vmem:[%s9007 + $0x10] sm:$0xff]
        %v9011 = vld [vmem:[%s9007 + $0x18] sm:$0xff]
        %v9012 = vld [vmem:[%s9007 + $0x20] sm:$0xff]
        %v9013 = vld [vmem:[%s9007 + $0x28] sm:$0xff]
        %v9014 = vld [vmem:[%s9007 + $0x30] sm:$0xff]
        %v9015 = vld [vmem:[%s9007 + $0x38] sm:$0xff]
        %v9016 = vld [vmem:[%s9007 + $0x40] sm:$0xff]
        %v9017 = vld [vmem:[%s9007 + $0x48] sm:$0xff]
        %v9018 = vld [vmem:[%s9007 + $0x50] sm:$0xff]
        %v9019 = vld [vmem:[%s9007 + $0x58] sm:$0xff]
        %v9020 = vld [vmem:[%s9007 + $0x60] sm:$0xff]
        %v9021 = vld [vmem:[%s9007 + $0x68] sm:$0xff]
        %v9022 = vld [vmem:[%s9007 + $0x70] sm:$0xff]
        %v9023 = vld [vmem:[%s9007 + $0x78] sm:$0xff]
        %v9024 = vld [vmem:[%s9007 + $0x80] sm:$0xff]
        %v9025 = vld [vmem:[%s9007 + $0x88] sm:$0xff]
        %v9026 = vld [vmem:[%s9007 + $0x90] sm:$0xff]
        %v9027 = vld [vmem:[%s9007 + $0x98] sm:$0xff]
        %v9028 = vld [vmem:[%s9007 + $0xa0] sm:$0xff]
        %v9029 = vld [vmem:[%s9007 + $0xa8] sm:$0xff]
        %v9030 = vld [vmem:[%s9007 + $0xb0] sm:$0xff]
        %v9031 = vld [vmem:[%s9007 + $0xb8] sm:$0xff]
        %v9032 = vld [vmem:[%s9007 + $0xc0] sm:$0xff]
        %v9033 = vld [vmem:[%s9007 + $0xc8] sm:$0xff]
        %v9034 = vld [vmem:[%s9007 + $0xd0] sm:$0xff]
        %v9035 = vld [vmem:[%s9007 + $0xd8] sm:$0xff]
        %v9036 = vld [vmem:[%s9007 + $0xe0] sm:$0xff]
        %v9037 = vld [vmem:[%s9007 + $0xe8] sm:$0xff]
        %v9038 = vld [vmem:[%s9007 + $0xf0] sm:$0xff]
        %v9039 = vld [vmem:[%s9007 + $0xf8] sm:$0xff]
        %9040 = vmatpush.msra.mxu0 %v9023
        %9041 = vmatpush.msra.mxu0 %v9022
        %9042 = vmatpush.msra.mxu0 %v9021
        %9043 = vmatpush.msra.mxu0 %v9020
        %9044 = vmatpush.msra.mxu0 %v9019
        %9045 = vmatpush.msra.mxu0 %v9018
        %9046 = vmatpush.msra.mxu0 %v9017
        %9047 = vmatpush.msra.mxu0 %v9016
        %9048 = vmatpush.msra.mxu0 %v9015
        %9049 = vmatpush.msra.mxu0 %v9014
        %9050 = vmatpush.msra.mxu0 %v9013
        %9051 = vmatpush.msra.mxu0 %v9012
        %9052 = vmatpush.msra.mxu0 %v9011
        %9053 = vmatpush.msra.mxu0 %v9010
        %9054 = vmatpush.msra.mxu0 %v9009
        %9055 = vmatpush.msra.mxu0 %v9008
        %9056 = vmatmul.f32.gmra.mxu0 %v8878
        %v9057 = vpop.f32.mrf.mxu0
        %v9058 = vadd.f32 0.0, %v9057
        %9059 = vmatmul.f32.gmra.mxu0 %v8880
        %v9060 = vpop.f32.mrf.mxu0
        %v9061 = vadd.f32 0.0, %v9060
        %9062 = vmatmul.f32.gmra.mxu0 %v8882
        %v9063 = vpop.f32.mrf.mxu0
        %v9064 = vadd.f32 0.0, %v9063
        %9065 = vmatmul.f32.gmra.mxu0 %v8884
        %v9066 = vpop.f32.mrf.mxu0
        %v9067 = vadd.f32 0.0, %v9066
        %9068 = vdwg.mxu0
        %9069 = vmatpush.msra.mxu0 %v9039
        %9070 = vmatpush.msra.mxu0 %v9038
        %9071 = vmatpush.msra.mxu0 %v9037
        %9072 = vmatpush.msra.mxu0 %v9036
        %9073 = vmatpush.msra.mxu0 %v9035
        %9074 = vmatpush.msra.mxu0 %v9034
        %9075 = vmatpush.msra.mxu0 %v9033
        %9076 = vmatpush.msra.mxu0 %v9032
        %9077 = vmatpush.msra.mxu0 %v9031
        %9078 = vmatpush.msra.mxu0 %v9030
        %9079 = vmatpush.msra.mxu0 %v9029
        %9080 = vmatpush.msra.mxu0 %v9028
        %9081 = vmatpush.msra.mxu0 %v9027
        %9082 = vmatpush.msra.mxu0 %v9026
        %9083 = vmatpush.msra.mxu0 %v9025
        %9084 = vmatpush.msra.mxu0 %v9024
        %9085 = vmatmul.f32.gmra.mxu0 %v8879
        %v9086 = vpop.f32.mrf.mxu0
        %v9087 = vadd.f32 %v9058, %v9086
        %9088 = vmatmul.f32.gmra.mxu0 %v8881
        %v9089 = vpop.f32.mrf.mxu0
        %v9090 = vadd.f32 %v9061, %v9089
        %9091 = vmatmul.f32.gmra.mxu0 %v8883
        %v9092 = vpop.f32.mrf.mxu0
        %v9093 = vadd.f32 %v9064, %v9092
        %9094 = vmatmul.f32.gmra.mxu0 %v8885
        %v9095 = vpop.f32.mrf.mxu0
        %v9096 = vadd.f32 %v9067, %v9095
        %9097 = vdwg.mxu0
        %s9098 = scalar_lea.vmem %s5, 4
        %v9099 = vld [vmem:[%s9098] sm:$0xf]
        %v9101 = vsel %vm530, %v9099, 0
        %9103 = vmatpush.msra.mxu0 0.0
        %9104 = vmatpush.msra.mxu0 0.0
        %9105 = vmatpush.msra.mxu0 0.0
        %9106 = vmatpush.msra.mxu0 0.0
        %9107 = vmatpush.msra.mxu0 0.0
        %9108 = vmatpush.msra.mxu0 0.0
        %9109 = vmatpush.msra.mxu0 0.0
        %9110 = vmatpush.msra.mxu0 0.0
        %9111 = vmatpush.msra.mxu0 0.0
        %9112 = vmatpush.msra.mxu0 0.0
        %9113 = vmatpush.msra.mxu0 0.0
        %9114 = vmatpush.msra.mxu0 0.0
        %9115 = vmatpush.msra.mxu0 %v9096
        %9116 = vmatpush.msra.mxu0 %v9093
        %9117 = vmatpush.msra.mxu0 %v9090
        %9118 = vmatpush.msra.mxu0 %v9087
        %9119 = vmatmul.f32.gmra.mxu0 %v9101
        %v9120 = vpop.f32.mrf.mxu0
        %v9121 = vadd.f32 0.0, %v9120
        %9122 = vdwg.mxu0
        %v9123 = vadd.f32 %v9006, %v9121
        %s9124 = scalar_lea.vmem [#allocation8], 512
        %v9125 = vld [vmem:[%s9124] sm:$0xff]
        %v9126 = vld [vmem:[%s9124 + $0x8] sm:$0xff]
        %v9127 = vld [vmem:[%s9124 + $0x10] sm:$0xff]
        %v9128 = vld [vmem:[%s9124 + $0x18] sm:$0xff]
        %v9129 = vld [vmem:[%s9124 + $0x20] sm:$0xff]
        %v9130 = vld [vmem:[%s9124 + $0x28] sm:$0xff]
        %v9131 = vld [vmem:[%s9124 + $0x30] sm:$0xff]
        %v9132 = vld [vmem:[%s9124 + $0x38] sm:$0xff]
        %v9133 = vld [vmem:[%s9124 + $0x40] sm:$0xff]
        %v9134 = vld [vmem:[%s9124 + $0x48] sm:$0xff]
        %v9135 = vld [vmem:[%s9124 + $0x50] sm:$0xff]
        %v9136 = vld [vmem:[%s9124 + $0x58] sm:$0xff]
        %v9137 = vld [vmem:[%s9124 + $0x60] sm:$0xff]
        %v9138 = vld [vmem:[%s9124 + $0x68] sm:$0xff]
        %v9139 = vld [vmem:[%s9124 + $0x70] sm:$0xff]
        %v9140 = vld [vmem:[%s9124 + $0x78] sm:$0xff]
        %v9141 = vld [vmem:[%s9124 + $0x80] sm:$0xff]
        %v9142 = vld [vmem:[%s9124 + $0x88] sm:$0xff]
        %v9143 = vld [vmem:[%s9124 + $0x90] sm:$0xff]
        %v9144 = vld [vmem:[%s9124 + $0x98] sm:$0xff]
        %v9145 = vld [vmem:[%s9124 + $0xa0] sm:$0xff]
        %v9146 = vld [vmem:[%s9124 + $0xa8] sm:$0xff]
        %v9147 = vld [vmem:[%s9124 + $0xb0] sm:$0xff]
        %v9148 = vld [vmem:[%s9124 + $0xb8] sm:$0xff]
        %v9149 = vld [vmem:[%s9124 + $0xc0] sm:$0xff]
        %v9150 = vld [vmem:[%s9124 + $0xc8] sm:$0xff]
        %v9151 = vld [vmem:[%s9124 + $0xd0] sm:$0xff]
        %v9152 = vld [vmem:[%s9124 + $0xd8] sm:$0xff]
        %v9153 = vld [vmem:[%s9124 + $0xe0] sm:$0xff]
        %v9154 = vld [vmem:[%s9124 + $0xe8] sm:$0xff]
        %v9155 = vld [vmem:[%s9124 + $0xf0] sm:$0xff]
        %v9156 = vld [vmem:[%s9124 + $0xf8] sm:$0xff]
        %9157 = vmatpush.msra.mxu0 %v9140
        %9158 = vmatpush.msra.mxu0 %v9139
        %9159 = vmatpush.msra.mxu0 %v9138
        %9160 = vmatpush.msra.mxu0 %v9137
        %9161 = vmatpush.msra.mxu0 %v9136
        %9162 = vmatpush.msra.mxu0 %v9135
        %9163 = vmatpush.msra.mxu0 %v9134
        %9164 = vmatpush.msra.mxu0 %v9133
        %9165 = vmatpush.msra.mxu0 %v9132
        %9166 = vmatpush.msra.mxu0 %v9131
        %9167 = vmatpush.msra.mxu0 %v9130
        %9168 = vmatpush.msra.mxu0 %v9129
        %9169 = vmatpush.msra.mxu0 %v9128
        %9170 = vmatpush.msra.mxu0 %v9127
        %9171 = vmatpush.msra.mxu0 %v9126
        %9172 = vmatpush.msra.mxu0 %v9125
        %9173 = vmatmul.f32.gmra.mxu0 %v8878
        %v9174 = vpop.f32.mrf.mxu0
        %v9175 = vadd.f32 0.0, %v9174
        %9176 = vmatmul.f32.gmra.mxu0 %v8880
        %v9177 = vpop.f32.mrf.mxu0
        %v9178 = vadd.f32 0.0, %v9177
        %9179 = vmatmul.f32.gmra.mxu0 %v8882
        %v9180 = vpop.f32.mrf.mxu0
        %v9181 = vadd.f32 0.0, %v9180
        %9182 = vmatmul.f32.gmra.mxu0 %v8884
        %v9183 = vpop.f32.mrf.mxu0
        %v9184 = vadd.f32 0.0, %v9183
        %9185 = vdwg.mxu0
        %9186 = vmatpush.msra.mxu0 %v9156
        %9187 = vmatpush.msra.mxu0 %v9155
        %9188 = vmatpush.msra.mxu0 %v9154
        %9189 = vmatpush.msra.mxu0 %v9153
        %9190 = vmatpush.msra.mxu0 %v9152
        %9191 = vmatpush.msra.mxu0 %v9151
        %9192 = vmatpush.msra.mxu0 %v9150
        %9193 = vmatpush.msra.mxu0 %v9149
        %9194 = vmatpush.msra.mxu0 %v9148
        %9195 = vmatpush.msra.mxu0 %v9147
        %9196 = vmatpush.msra.mxu0 %v9146
        %9197 = vmatpush.msra.mxu0 %v9145
        %9198 = vmatpush.msra.mxu0 %v9144
        %9199 = vmatpush.msra.mxu0 %v9143
        %9200 = vmatpush.msra.mxu0 %v9142
        %9201 = vmatpush.msra.mxu0 %v9141
        %9202 = vmatmul.f32.gmra.mxu0 %v8879
        %v9203 = vpop.f32.mrf.mxu0
        %v9204 = vadd.f32 %v9175, %v9203
        %9205 = vmatmul.f32.gmra.mxu0 %v8881
        %v9206 = vpop.f32.mrf.mxu0
        %v9207 = vadd.f32 %v9178, %v9206
        %9208 = vmatmul.f32.gmra.mxu0 %v8883
        %v9209 = vpop.f32.mrf.mxu0
        %v9210 = vadd.f32 %v9181, %v9209
        %9211 = vmatmul.f32.gmra.mxu0 %v8885
        %v9212 = vpop.f32.mrf.mxu0
        %v9213 = vadd.f32 %v9184, %v9212
        %9214 = vdwg.mxu0
        %s9215 = scalar_lea.vmem %s5, 8
        %v9216 = vld [vmem:[%s9215] sm:$0xf]
        %v9218 = vsel %vm530, %v9216, 0
        %9220 = vmatpush.msra.mxu0 0.0
        %9221 = vmatpush.msra.mxu0 0.0
        %9222 = vmatpush.msra.mxu0 0.0
        %9223 = vmatpush.msra.mxu0 0.0
        %9224 = vmatpush.msra.mxu0 0.0
        %9225 = vmatpush.msra.mxu0 0.0
        %9226 = vmatpush.msra.mxu0 0.0
        %9227 = vmatpush.msra.mxu0 0.0
        %9228 = vmatpush.msra.mxu0 0.0
        %9229 = vmatpush.msra.mxu0 0.0
        %9230 = vmatpush.msra.mxu0 0.0
        %9231 = vmatpush.msra.mxu0 0.0
        %9232 = vmatpush.msra.mxu0 %v9213
        %9233 = vmatpush.msra.mxu0 %v9210
        %9234 = vmatpush.msra.mxu0 %v9207
        %9235 = vmatpush.msra.mxu0 %v9204
        %9236 = vmatmul.f32.gmra.mxu0 %v9218
        %v9237 = vpop.f32.mrf.mxu0
        %v9238 = vadd.f32 0.0, %v9237
        %9239 = vdwg.mxu0
        %v9240 = vadd.f32 %v9123, %v9238
        %vm9241 = vcmask 27648
        %v9242 = vsel %vm9241, %v9240, -inf
        %v9243 = vrot.slane %v9242, 4
        %v9244 = vmax.f32 %v9242, %v9243
        %v9245 = vrot.slane %v9244, 2
        %v9246 = vmax.f32 %v9244, %v9245
        %v9247 = vrot.slane %v9246, 1
        %v9248 = vmax.f32 %v9246, %v9247
        %v9249 = vsub.f32 %v9240, %v9248
        %v9250 = vmul.f32 %v9249, 1.442695
        %v9251 = vpow.pop %v9250
        %v9252 = vsel %vm9241, %v9251, 0.0
        %v9253 = vrot.slane %v9252, 4
        %v9254 = vadd.f32 %v9252, %v9253
        %v9255 = vrot.slane %v9254, 2
        %v9256 = vadd.f32 %v9254, %v9255
        %v9257 = vrot.slane %v9256, 1
        %v9258 = vadd.f32 %v9256, %v9257
        %v9259 = vrcp.pop %v9258
        %v9260 = vmul.f32 %v9258, %v9259
        %v9261 = vsub.f32 1.0, %v9260
        %v9262 = vmul.f32 %v9259, %v9261
        %v9263 = vadd.f32 %v9259, %v9262
        %vm9264 = vweird.f32 %v9258
        %vm9265 = vweird.f32 %v9259
        %vm9266 = vmor %vm9264, %vm9265
        %v9267 = vsel %vm9266, %v9259, %v9263
        %v9268 = vand.u32 2147483647, %v9258
        %vm9269 = vcmp.eq.f32.partialorder %v9268, 8.507059e+37
        %v9270 = vand.u32 %v9258, 2147483648
        %v9271 = vor.u32 1.1754944e-38, %v9270
        %v9272 = vsel %vm9269, %v9271, %v9267
        %v9273 = vmul.f32 %v9251, %v9272
        %9274 = vst.msk [vmem:[%s375] sm:$0xf] %vm9241, %v9273
        %s9275 = sand.u32 %s227, 1
        %s9276 = scalar_lea.sflag [#allocation5], %s9275
        %s9277 = sand.u32 %s227, 1
        %s9278 = smul.addr %s9277, 4
        %s9279 = scalar_lea.vmem [#allocation9], %s9278
        // Predicated region
        $region69: #{gating_pallas.1} parent=55 // pred_check
          %p9280 = pneg %p237
        $region70: #{gating_pallas.1} parent=55 // pred_check_branch
          %9282 = sbr.rel (%p9280) target = $region72
        $region71: #{gating_pallas.1} parent=55 // pred_region
          %9284 = vsyncadd %s9276, 0
          %s9285 = smul.addr %s25, 4
          %s9286 = scalar_lea.hbm %s9, %s9285
          %s9288 = sshll.u32 %s9279, 4
          %s9289 = int_to_ptr.vmem [resolvable:$true] %s9288
          %s9290 = sshll.u32 %s9286, 4
          %s9291 = int_to_ptr.hbm [resolvable:$true] %s9290
          %9293 = dma.vmem_to_hbm [thread:$0]  %s9289, 64, %s9291, %s9276
        $region72: #{gating_pallas.1} parent=55 // pred_fallthru
          _
      $region56: #{gating_pallas.1} parent=5 // pred_fallthru
        _
      %p9294 = scmp.le.s32.totalorder 2, %s20
      // Predicated region
      $region73: #{gating_pallas.1} parent=5 // pred_check
        %p9295 = pneg %p9294
      $region74: #{gating_pallas.1} parent=5 // pred_check_branch
        %9297 = sbr.rel (%p9295) target = $region76
      $region75: #{gating_pallas.1} parent=5 // pred_region
        %s9298 = ssub.s32 %s20, 2
        // Predicated region
        $region77: #{gating_pallas.1} parent=75 // pred_check
          %p9299 = pneg %p243
        $region78: #{gating_pallas.1} parent=75 // pred_check_branch
          %9301 = sbr.rel (%p9299) target = $region80
        $region79: #{gating_pallas.1} parent=75 // pred_region
          %s9302 = sand.u32 %s228, 1
          %s9303 = scalar_lea.sflag [#allocation5], %s9302
          %s9304 = sand.u32 %s228, 1
          %s9305 = smul.addr %s9304, 4
          %s9306 = scalar_lea.vmem [#allocation9], %s9305
          %9308 = dma.done %s9303, 64
        $region80: #{gating_pallas.1} parent=75 // pred_fallthru
          _
      $region76: #{gating_pallas.1} parent=5 // pred_fallthru
        _
    $region6: #{gating_pallas.1} parent=1 // loop_footer
      %s24 = sadd.s32 1, %s20
    $region7: #{gating_pallas.1} parent=1 // loop_footer_branch
      %19 = sbr.rel target = $region3
    $region8: #{gating_pallas.1} parent=1 // loop_exit
      _
    %9309 = vsyncpa [#allocation4], 1
    %s9310 = scalar_lea.sflag [#allocation4], 1
    %9311 = vsyncpa %s9310, 1
    %9312 = vsyncpa [#allocation7], 1
    %9313 = vsyncpa [#allocation5], 1
    %s9314 = scalar_lea.sflag [#allocation5], 1
    %9315 = vsyncpa %s9314, 1

</llo_original>
